<compile_context>
chip_gen: v6e
topology: v6e:2x2x1
jax: 0.10.0
libtpu: 0.0.40
codegen_flags: <defaults>
</compile_context>

<pallas_src>
import functools

import jax
import jax.numpy as jnp
from jax import lax
from jax.experimental import pallas as pl
from jax.experimental.pallas import tpu as pltpu


# ----------------------------------------------------------------------------
# Helpers
# ----------------------------------------------------------------------------
def _round_up(x, m):
    return (x + m - 1) // m * m


def _pick_hw_tile(hw, cap=2048):
    """Largest spatial tile that divides hw, is <= cap and sublane-aligned."""
    if hw <= cap:
        return hw  # full axis (always legal as a block dim)
    for t in range(cap, 7, -1):
        if hw % t == 0 and t % 8 == 0:
            return t
    return hw  # fallback: whole axis


# ----------------------------------------------------------------------------
# Pallas kernel: tiled matmul + fused bias (conv core)
# ----------------------------------------------------------------------------
def _matmul_bias_kernel(x_ref, w_ref, b_ref, o_ref, acc_ref):
    # x: (tm, tk) bf16, w: (tk, tn) bf16, b: (1, tn) f32 -> o: (tm, tn) f32
    k = pl.program_id(2)

    @pl.when(k == 0)
    def _():
        acc_ref[...] = jnp.zeros_like(acc_ref)

    acc_ref[...] += jnp.dot(x_ref[...], w_ref[...],
                            preferred_element_type=jnp.float32)

    @pl.when(k == pl.num_programs(2) - 1)
    def _():
        # Bias added exactly once, in the finalize step.
        o_ref[...] = (acc_ref[...] + b_ref[...]).astype(o_ref.dtype)


def _conv_matmul(patches, w_mat, b):
    # patches: [M, K] (bf16), w_mat: [K, Cout], b: [Cout] -> [M, Cout] f32
    M, K = patches.shape
    Cout = w_mat.shape[1]

    tm = min(512, _round_up(M, 128))
    tn = min(256, _round_up(Cout, 128))
    tk = min(512, _round_up(K, 128))
    Mp = _round_up(M, tm)
    Kp = _round_up(K, tk)
    Np = _round_up(Cout, tn)

    xp = jnp.pad(patches.astype(jnp.bfloat16), ((0, Mp - M), (0, Kp - K)))
    wp = jnp.pad(w_mat.astype(jnp.bfloat16), ((0, Kp - K), (0, Np - Cout)))
    bp = jnp.pad(b.astype(jnp.float32).reshape(1, Cout),
                 ((0, 0), (0, Np - Cout)))

    out = pl.pallas_call(
        _matmul_bias_kernel,
        out_shape=jax.ShapeDtypeStruct((Mp, Np), jnp.float32),
        grid_spec=pltpu.PrefetchScalarGridSpec(
            num_scalar_prefetch=0,
            grid=(Mp // tm, Np // tn, Kp // tk),
            in_specs=[
                pl.BlockSpec((tm, tk), lambda i, j, k: (i, k)),
                pl.BlockSpec((tk, tn), lambda i, j, k: (k, j)),
                pl.BlockSpec((1, tn), lambda i, j, k: (0, j)),
            ],
            out_specs=pl.BlockSpec((tm, tn), lambda i, j, k: (i, j)),
            scratch_shapes=[pltpu.VMEM((tm, tn), jnp.float32)],
        ),
        compiler_params=pltpu.CompilerParams(
            dimension_semantics=("parallel", "parallel", "arbitrary")),
    )(xp, wp, bp)
    return out[:M, :Cout]


# ----------------------------------------------------------------------------
# Pallas kernels: tiled instance norm (stats pass + apply pass)
# ----------------------------------------------------------------------------
def _inorm_stats_kernel(y_ref, mean_ref, rstd_ref, sum_ref, ssq_ref,
                        *, inv_hw, eps):
    # y: (1, thw, C) f32.  One-pass sum / sum-of-squares accumulation in f32.
    j = pl.program_id(1)

    @pl.when(j == 0)
    def _():
        sum_ref[...] = jnp.zeros_like(sum_ref)
        ssq_ref[...] = jnp.zeros_like(ssq_ref)

    y = y_ref[...]
    sum_ref[...] += jnp.sum(y, axis=1, keepdims=True)
    ssq_ref[...] += jnp.sum(y * y, axis=1, keepdims=True)

    @pl.when(j == pl.num_programs(1) - 1)
    def _():
        mean = sum_ref[...] * inv_hw
        var = ssq_ref[...] * inv_hw - mean * mean
        mean_ref[...] = mean
        rstd_ref[...] = lax.rsqrt(jnp.maximum(var, 0.0) + eps)


def _inorm_apply_kernel(y_ref, mean_ref, rstd_ref, o_ref, *, relu):
    z = (y_ref[...] - mean_ref[...]) * rstd_ref[...]
    if relu:
        z = jnp.maximum(z, 0.0)
    o_ref[...] = z


def _inorm_apply_residual_kernel(y_ref, mean_ref, rstd_ref, r_ref, o_ref):
    # out = residual + instance_norm(y)   (second half of a ResnetBlock)
    o_ref[...] = r_ref[...] + (y_ref[...] - mean_ref[...]) * rstd_ref[...]


def _instance_norm_stats(y, *, eps=1e-5):
    N, HW, C = y.shape
    thw = _pick_hw_tile(HW)
    return pl.pallas_call(
        functools.partial(_inorm_stats_kernel, inv_hw=1.0 / HW, eps=eps),
        out_shape=(jax.ShapeDtypeStruct((N, 1, C), jnp.float32),
                   jax.ShapeDtypeStruct((N, 1, C), jnp.float32)),
        grid=(N, HW // thw),
        in_specs=[pl.BlockSpec((1, thw, C), lambda n, j: (n, j, 0))],
        out_specs=(pl.BlockSpec((1, 1, C), lambda n, j: (n, 0, 0)),
                   pl.BlockSpec((1, 1, C), lambda n, j: (n, 0, 0))),
        scratch_shapes=[pltpu.VMEM((1, 1, C), jnp.float32),
                        pltpu.VMEM((1, 1, C), jnp.float32)],
        compiler_params=pltpu.CompilerParams(
            dimension_semantics=("parallel", "arbitrary")),
    )(y)


def _instance_norm(y, *, relu):
    # y: [N, HW, C] f32
    N, HW, C = y.shape
    mean, rstd = _instance_norm_stats(y)
    thw = _pick_hw_tile(HW)
    return pl.pallas_call(
        functools.partial(_inorm_apply_kernel, relu=relu),
        out_shape=jax.ShapeDtypeStruct((N, HW, C), jnp.float32),
        grid=(N, HW // thw),
        in_specs=[pl.BlockSpec((1, thw, C), lambda n, j: (n, j, 0)),
                  pl.BlockSpec((1, 1, C), lambda n, j: (n, 0, 0)),
                  pl.BlockSpec((1, 1, C), lambda n, j: (n, 0, 0))],
        out_specs=pl.BlockSpec((1, thw, C), lambda n, j: (n, j, 0)),
        compiler_params=pltpu.CompilerParams(
            dimension_semantics=("parallel", "parallel")),
    )(y, mean, rstd)


def _instance_norm_residual(y, r):
    # y, r: [N, HW, C] f32; returns r + IN(y)
    N, HW, C = y.shape
    mean, rstd = _instance_norm_stats(y)
    thw = _pick_hw_tile(HW)
    return pl.pallas_call(
        _inorm_apply_residual_kernel,
        out_shape=jax.ShapeDtypeStruct((N, HW, C), jnp.float32),
        grid=(N, HW // thw),
        in_specs=[pl.BlockSpec((1, thw, C), lambda n, j: (n, j, 0)),
                  pl.BlockSpec((1, 1, C), lambda n, j: (n, 0, 0)),
                  pl.BlockSpec((1, 1, C), lambda n, j: (n, 0, 0)),
                  pl.BlockSpec((1, thw, C), lambda n, j: (n, j, 0))],
        out_specs=pl.BlockSpec((1, thw, C), lambda n, j: (n, j, 0)),
        compiler_params=pltpu.CompilerParams(
            dimension_semantics=("parallel", "parallel")),
    )(y, mean, rstd, r)


# ----------------------------------------------------------------------------
# Plain-JAX glue: padding + im2col (pure data movement / reshapes)
# ----------------------------------------------------------------------------
# TODO(synk): eliminate the HBM-materialized im2col (9x / 49x activation
# blow-up) by extracting conv windows inside the kernel (manual DMA of
# overlapping row slabs or shifted-tap accumulation); kept in plain JAX here
# for robustness, with activations cast to bf16 first to halve the traffic.
def _im2col(x, kh, kw, stride):
    # x: [N, H, W, C] (already padded) -> patches [N*OH*OW, kh*kw*C]
    N, H, W, C = x.shape
    oh = (H - kh) // stride + 1
    ow = (W - kw) // stride + 1
    cols = []
    for i in range(kh):
        for j in range(kw):
            cols.append(
                x[:, i: i + stride * oh: stride, j: j + stride * ow: stride, :])
    p = jnp.stack(cols, axis=3)  # [N, oh, ow, kh*kw, C]
    return p.reshape(N * oh * ow, kh * kw * C), N, oh, ow


def conv2d(x, w, b, *, stride=1, pad=0, pad_mode="zero"):
    # x: [N, H, W, Cin]; w: [KH, KW, Cin, Cout]; b: [Cout]
    KH, KW, Cin, Cout = w.shape
    x = x.astype(jnp.bfloat16)  # MXU input dtype; halves im2col HBM traffic
    if pad > 0:
        mode = "reflect" if pad_mode == "reflect" else "constant"
        x = jnp.pad(x, ((0, 0), (pad, pad), (pad, pad), (0, 0)), mode=mode)
    patches, N, oh, ow = _im2col(x, KH, KW, stride)
    w_mat = w.reshape(KH * KW * Cin, Cout)
    y = _conv_matmul(patches, w_mat, b)  # Pallas tiled matmul + fused bias
    return y.reshape(N, oh, ow, Cout)


# ----------------------------------------------------------------------------
# Parameter init (deterministic, PyTorch-default-like uniform fan-in scaling)
# ----------------------------------------------------------------------------
def _conv_init(key, kh, kw, cin, cout):
    k1, k2 = jax.random.split(key)
    scale = 1.0 / float(kh * kw * cin) ** 0.5
    w = jax.random.uniform(k1, (kh, kw, cin, cout), jnp.float32, -scale, scale)
    b = jax.random.uniform(k2, (cout,), jnp.float32, -scale, scale)
    return w, b


def init_encoder_params(key, input_nc, ngf, n_blocks):
    keys = jax.random.split(key, 3 + 2 * n_blocks)
    params = {}
    # stem: ReflectionPad(3) + Conv(input_nc -> ngf, 7) + IN + ReLU
    params["stem"] = _conv_init(keys[0], 7, 7, input_nc, ngf)
    # downsampling: Conv(ngf*2^i -> ngf*2^(i+1), 3, stride 2, pad 1) + IN + ReLU
    for i in range(2):
        mult = 2 ** i
        params[f"down{i}"] = _conv_init(keys[1 + i], 3, 3, ngf * mult,
                                        ngf * mult * 2)
    # resnet blocks at dim = ngf * 4
    dim = ngf * 4
    for i in range(n_blocks):
        w1, b1 = _conv_init(keys[3 + 2 * i], 3, 3, dim, dim)
        w2, b2 = _conv_init(keys[4 + 2 * i], 3, 3, dim, dim)
        params[f"block{i}"] = (w1, b1, w2, b2)
    return params


# ----------------------------------------------------------------------------
# Encoder forward
# ----------------------------------------------------------------------------
@functools.partial(jax.jit, static_argnames=("n_blocks",))
def encoder_forward(params, x_nchw, *, n_blocks):
    x = jnp.transpose(x_nchw, (0, 2, 3, 1)).astype(jnp.float32)  # NCHW -> NHWC

    # stem
    w, b = params["stem"]
    y = conv2d(x, w, b, stride=1, pad=3, pad_mode="reflect")
    N, H, W, C = y.shape
    y = _instance_norm(y.reshape(N, H * W, C), relu=True).reshape(N, H, W, C)

    # downsampling (stride-2 zero-padded convs)
    for i in range(2):
        w, b = params[f"down{i}"]
        y = conv2d(y, w, b, stride=2, pad=1, pad_mode="zero")
        N, H, W, C = y.shape
        y = _instance_norm(y.reshape(N, H * W, C), relu=True).reshape(N, H, W, C)

    # resnet blocks (reflect-padded convs, residual fused into 2nd norm)
    for i in range(n_blocks):
        w1, b1, w2, b2 = params[f"block{i}"]
        h = conv2d(y, w1, b1, stride=1, pad=1, pad_mode="reflect")
        N, H, W, C = h.shape
        h = _instance_norm(h.reshape(N, H * W, C), relu=True).reshape(N, H, W, C)
        h = conv2d(h, w2, b2, stride=1, pad=1, pad_mode="reflect")
        y = _instance_norm_residual(
            h.reshape(N, H * W, C), y.reshape(N, H * W, C)
        ).reshape(N, H, W, C)

    return jnp.transpose(y, (0, 3, 1, 2))  # back to NCHW


# ----------------------------------------------------------------------------
if __name__ == "__main__":
    # Small, forward-consistent shapes.
    batch, input_nc, spatial = 2, 3, 16
    ngf, n_blocks = 8, 2

    key = jax.random.PRNGKey(0)
    k_params, k_input = jax.random.split(key)

    params = init_encoder_params(k_params, input_nc, ngf, n_blocks)
    x = jax.random.normal(k_input, (batch, input_nc, spatial, spatial),
                          jnp.float32)

    out = encoder_forward(params, x, n_blocks=n_blocks)
    out = jax.block_until_ready(out)

    # Expected output: [batch, ngf*4, spatial/4, spatial/4]
    assert out.shape == (batch, ngf * 4, spatial // 4, spatial // 4), out.shape
    assert jnp.all(jnp.isfinite(out))
    print("KERNEL_OK")
</pallas_src>

<mosaic_0001>
module attributes {stable_mosaic.version = 11 : i64} {
  func.func @_inorm_stats_kernel(%arg0: i32, %arg1: i32, %arg2: memref<1x256x8xf32, #tpu.memory_space<vmem>>, %arg3: memref<1x1x8xf32, #tpu.memory_space<vmem>>, %arg4: memref<1x1x8xf32, #tpu.memory_space<vmem>>, %arg5: memref<1x1x8xf32, #tpu.memory_space<vmem>>, %arg6: memref<1x1x8xf32, #tpu.memory_space<vmem>>) attributes {dimension_semantics = [#tpu.dimension_semantics<parallel>, #tpu.dimension_semantics<arbitrary>], iteration_bounds = array<i64: 2, 1>, scalar_prefetch = 0 : i64, scratch_operands = 2 : i64, tpu.core_type = #tpu.core_type<tc>, window_params = [{transform_indices = @transform_0, window_bounds = array<i64: 1, 256, 8>}, {transform_indices = @transform_1, window_bounds = array<i64: 1, 1, 8>}, {transform_indices = @transform_2, window_bounds = array<i64: 1, 1, 8>}]} {
    %c0_i32 = arith.constant 0 : i32
    %0 = arith.cmpi eq, %arg1, %c0_i32 : i32
    %1 = arith.extui %0 : i1 to i32
    %c0_i32_0 = arith.constant 0 : i32
    %2 = arith.cmpi ne, %1, %c0_i32_0 : i32
    scf.if %2 {
      %cst_18 = arith.constant 0.000000e+00 : f32
      %18 = vector.broadcast %cst_18 : f32 to vector<1x1x8xf32>
      %c0_19 = arith.constant 0 : index
      %c0_20 = arith.constant 0 : index
      %c0_21 = arith.constant 0 : index
      %19 = vector.load %arg5[%c0_19, %c0_20, %c0_21] : memref<1x1x8xf32, #tpu.memory_space<vmem>>, vector<1x1x8xf32>
      tpu.vector_store %arg5[%c0_19, %c0_20, %c0_21], %18 {strides = array<i32>} : memref<1x1x8xf32, #tpu.memory_space<vmem>>, vector<1x1x8xf32>,
      %cst_22 = arith.constant 0.000000e+00 : f32
      %20 = vector.broadcast %cst_22 : f32 to vector<1x1x8xf32>
      %c0_23 = arith.constant 0 : index
      %c0_24 = arith.constant 0 : index
      %c0_25 = arith.constant 0 : index
      %21 = vector.load %arg6[%c0_23, %c0_24, %c0_25] : memref<1x1x8xf32, #tpu.memory_space<vmem>>, vector<1x1x8xf32>
      tpu.vector_store %arg6[%c0_23, %c0_24, %c0_25], %20 {strides = array<i32>} : memref<1x1x8xf32, #tpu.memory_space<vmem>>, vector<1x1x8xf32>,
    } else {
    }
    %c0 = arith.constant 0 : index
    %c0_1 = arith.constant 0 : index
    %c0_2 = arith.constant 0 : index
    %3 = vector.load %arg2[%c0, %c0_1, %c0_2] : memref<1x256x8xf32, #tpu.memory_space<vmem>>, vector<1x256x8xf32>
    %c0_3 = arith.constant 0 : index
    %c0_4 = arith.constant 0 : index
    %c0_5 = arith.constant 0 : index
    %4 = vector.load %arg5[%c0_3, %c0_4, %c0_5] : memref<1x1x8xf32, #tpu.memory_space<vmem>>, vector<1x1x8xf32>
    %cst = arith.constant dense<0.000000e+00> : vector<1x8xf32>
    %5 = vector.multi_reduction <add>, %3, %cst [1] : vector<1x256x8xf32> to vector<1x8xf32>
    %6 = vector.shape_cast %5 : vector<1x8xf32> to vector<1x1x8xf32>
    %7 = arith.addf %4, %6 : vector<1x1x8xf32>
    %c0_6 = arith.constant 0 : index
    %c0_7 = arith.constant 0 : index
    %c0_8 = arith.constant 0 : index
    %8 = vector.load %arg5[%c0_6, %c0_7, %c0_8] : memref<1x1x8xf32, #tpu.memory_space<vmem>>, vector<1x1x8xf32>
    tpu.vector_store %arg5[%c0_6, %c0_7, %c0_8], %7 {strides = array<i32>} : memref<1x1x8xf32, #tpu.memory_space<vmem>>, vector<1x1x8xf32>,
    %c0_9 = arith.constant 0 : index
    %c0_10 = arith.constant 0 : index
    %c0_11 = arith.constant 0 : index
    %9 = vector.load %arg6[%c0_9, %c0_10, %c0_11] : memref<1x1x8xf32, #tpu.memory_space<vmem>>, vector<1x1x8xf32>
    %10 = arith.mulf %3, %3 : vector<1x256x8xf32>
    %cst_12 = arith.constant dense<0.000000e+00> : vector<1x8xf32>
    %11 = vector.multi_reduction <add>, %10, %cst_12 [1] : vector<1x256x8xf32> to vector<1x8xf32>
    %12 = vector.shape_cast %11 : vector<1x8xf32> to vector<1x1x8xf32>
    %13 = arith.addf %9, %12 : vector<1x1x8xf32>
    %c0_13 = arith.constant 0 : index
    %c0_14 = arith.constant 0 : index
    %c0_15 = arith.constant 0 : index
    %14 = vector.load %arg6[%c0_13, %c0_14, %c0_15] : memref<1x1x8xf32, #tpu.memory_space<vmem>>, vector<1x1x8xf32>
    tpu.vector_store %arg6[%c0_13, %c0_14, %c0_15], %13 {strides = array<i32>} : memref<1x1x8xf32, #tpu.memory_space<vmem>>, vector<1x1x8xf32>,
    %c0_i32_16 = arith.constant 0 : i32
    %15 = arith.cmpi eq, %arg1, %c0_i32_16 : i32
    %16 = arith.extui %15 : i1 to i32
    %c0_i32_17 = arith.constant 0 : i32
    %17 = arith.cmpi ne, %16, %c0_i32_17 : i32
    scf.if %17 {
      %c0_18 = arith.constant 0 : index
      %c0_19 = arith.constant 0 : index
      %c0_20 = arith.constant 0 : index
      %18 = vector.load %arg5[%c0_18, %c0_19, %c0_20] : memref<1x1x8xf32, #tpu.memory_space<vmem>>, vector<1x1x8xf32>
      %cst_21 = arith.constant 3.906250e-03 : f32
      %19 = vector.broadcast %cst_21 : f32 to vector<1x1x8xf32>
      %20 = arith.mulf %18, %19 : vector<1x1x8xf32>
      %c0_22 = arith.constant 0 : index
      %c0_23 = arith.constant 0 : index
      %c0_24 = arith.constant 0 : index
      %21 = vector.load %arg6[%c0_22, %c0_23, %c0_24] : memref<1x1x8xf32, #tpu.memory_space<vmem>>, vector<1x1x8xf32>
      %cst_25 = arith.constant 3.906250e-03 : f32
      %22 = vector.broadcast %cst_25 : f32 to vector<1x1x8xf32>
      %23 = arith.mulf %21, %22 : vector<1x1x8xf32>
      %24 = arith.mulf %20, %20 : vector<1x1x8xf32>
      %25 = arith.subf %23, %24 : vector<1x1x8xf32>
      %c0_26 = arith.constant 0 : index
      %c0_27 = arith.constant 0 : index
      %c0_28 = arith.constant 0 : index
      %26 = vector.load %arg3[%c0_26, %c0_27, %c0_28] : memref<1x1x8xf32, #tpu.memory_space<vmem>>, vector<1x1x8xf32>
      tpu.vector_store %arg3[%c0_26, %c0_27, %c0_28], %20 {strides = array<i32>} : memref<1x1x8xf32, #tpu.memory_space<vmem>>, vector<1x1x8xf32>,
      %cst_29 = arith.constant 0.000000e+00 : f32
      %27 = vector.broadcast %cst_29 : f32 to vector<1x1x8xf32>
      %28 = arith.maximumf %25, %27 : vector<1x1x8xf32>
      %cst_30 = arith.constant 9.99999974E-6 : f32
      %29 = vector.broadcast %cst_30 : f32 to vector<1x1x8xf32>
      %30 = arith.addf %28, %29 : vector<1x1x8xf32>
      %31 = math.rsqrt %30 : vector<1x1x8xf32>
      %c0_31 = arith.constant 0 : index
      %c0_32 = arith.constant 0 : index
      %c0_33 = arith.constant 0 : index
      %32 = vector.load %arg4[%c0_31, %c0_32, %c0_33] : memref<1x1x8xf32, #tpu.memory_space<vmem>>, vector<1x1x8xf32>
      tpu.vector_store %arg4[%c0_31, %c0_32, %c0_33], %31 {strides = array<i32>} : memref<1x1x8xf32, #tpu.memory_space<vmem>>, vector<1x1x8xf32>,
    } else {
    }
    return
  }
  func.func @transform_0(%arg0: i32, %arg1: i32) -> (i32, i32, i32) {
    %c0_i32 = arith.constant 0 : i32
    %c0_i32_0 = arith.constant 0 : i32
    return %arg0, %arg1, %c0_i32 : i32, i32, i32
  }
  func.func @transform_1(%arg0: i32, %arg1: i32) -> (i32, i32, i32) {
    %c0_i32 = arith.constant 0 : i32
    %c0_i32_0 = arith.constant 0 : i32
    %c0_i32_1 = arith.constant 0 : i32
    return %arg0, %c0_i32, %c0_i32_0 : i32, i32, i32
  }
  func.func @transform_2(%arg0: i32, %arg1: i32) -> (i32, i32, i32) {
    %c0_i32 = arith.constant 0 : i32
    %c0_i32_0 = arith.constant 0 : i32
    %c0_i32_1 = arith.constant 0 : i32
    return %arg0, %c0_i32, %c0_i32_0 : i32, i32, i32
  }
}

module attributes {stable_mosaic.version = 11 : i64} {
  func.func @_matmul_bias_kernel(%arg0: i32, %arg1: i32, %arg2: i32, %arg3: memref<512x256xbf16, #tpu.memory_space<vmem>>, %arg4: memref<256x128xbf16, #tpu.memory_space<vmem>>, %arg5: memref<1x128xf32, #tpu.memory_space<vmem>>, %arg6: memref<512x128xf32, #tpu.memory_space<vmem>>, %arg7: memref<512x128xf32, #tpu.memory_space<vmem>>) attributes {dimension_semantics = [#tpu.dimension_semantics<parallel>, #tpu.dimension_semantics<parallel>, #tpu.dimension_semantics<arbitrary>], iteration_bounds = array<i64: 1, 1, 1>, scalar_prefetch = 0 : i64, scratch_operands = 1 : i64, tpu.core_type = #tpu.core_type<tc>, window_params = [{transform_indices = @transform_0, window_bounds = array<i64: 512, 256>}, {transform_indices = @transform_1, window_bounds = array<i64: 256, 128>}, {transform_indices = @transform_2, window_bounds = array<i64: 1, 128>}, {transform_indices = @transform_3, window_bounds = array<i64: 512, 128>}]} {
    %c0_i32 = arith.constant 0 : i32
    %0 = arith.cmpi eq, %arg2, %c0_i32 : i32
    %1 = arith.extui %0 : i1 to i32
    %c0_i32_0 = arith.constant 0 : i32
    %2 = arith.cmpi ne, %1, %c0_i32_0 : i32
    scf.if %2 {
      %cst_10 = arith.constant 0.000000e+00 : f32
      %12 = vector.broadcast %cst_10 : f32 to vector<512x128xf32>
      %c0_11 = arith.constant 0 : index
      %c0_12 = arith.constant 0 : index
      %13 = vector.load %arg7[%c0_11, %c0_12] : memref<512x128xf32, #tpu.memory_space<vmem>>, vector<512x128xf32>
      tpu.vector_store %arg7[%c0_11, %c0_12], %12 {strides = array<i32>} : memref<512x128xf32, #tpu.memory_space<vmem>>, vector<512x128xf32>,
    } else {
    }
    %c0 = arith.constant 0 : index
    %c0_1 = arith.constant 0 : index
    %3 = vector.load %arg7[%c0, %c0_1] : memref<512x128xf32, #tpu.memory_space<vmem>>, vector<512x128xf32>
    %c0_2 = arith.constant 0 : index
    %c0_3 = arith.constant 0 : index
    %4 = vector.load %arg3[%c0_2, %c0_3] : memref<512x256xbf16, #tpu.memory_space<vmem>>, vector<512x256xbf16>
    %c0_4 = arith.constant 0 : index
    %c0_5 = arith.constant 0 : index
    %5 = vector.load %arg4[%c0_4, %c0_5] : memref<256x128xbf16, #tpu.memory_space<vmem>>, vector<256x128xbf16>
    %cst = arith.constant dense<0.000000e+00> : vector<512x128xf32>
    %6 = tpu.matmul %4, %5, %cst {dimension_numbers = #tpu.dot_dimension_numbers<[1], [0], [0], [1], [0, 0, 1, 1], [], []>} : vector<512x256xbf16>, vector<256x128xbf16>, vector<512x128xf32> -> vector<512x128xf32>
    %7 = arith.addf %3, %6 : vector<512x128xf32>
    %c0_6 = arith.constant 0 : index
    %c0_7 = arith.constant 0 : index
    %8 = vector.load %arg7[%c0_6, %c0_7] : memref<512x128xf32, #tpu.memory_space<vmem>>, vector<512x128xf32>
    tpu.vector_store %arg7[%c0_6, %c0_7], %7 {strides = array<i32>} : memref<512x128xf32, #tpu.memory_space<vmem>>, vector<512x128xf32>,
    %c0_i32_8 = arith.constant 0 : i32
    %9 = arith.cmpi eq, %arg2, %c0_i32_8 : i32
    %10 = arith.extui %9 : i1 to i32
    %c0_i32_9 = arith.constant 0 : i32
    %11 = arith.cmpi ne, %10, %c0_i32_9 : i32
    scf.if %11 {
      %c0_10 = arith.constant 0 : index
      %c0_11 = arith.constant 0 : index
      %12 = vector.load %arg7[%c0_10, %c0_11] : memref<512x128xf32, #tpu.memory_space<vmem>>, vector<512x128xf32>
      %c0_12 = arith.constant 0 : index
      %c0_13 = arith.constant 0 : index
      %13 = vector.load %arg5[%c0_12, %c0_13] : memref<1x128xf32, #tpu.memory_space<vmem>>, vector<1x128xf32>
      %14 = vector.broadcast %13 : vector<1x128xf32> to vector<512x128xf32>
      %15 = arith.addf %12, %14 : vector<512x128xf32>
      %c0_14 = arith.constant 0 : index
      %c0_15 = arith.constant 0 : index
      %16 = vector.load %arg6[%c0_14, %c0_15] : memref<512x128xf32, #tpu.memory_space<vmem>>, vector<512x128xf32>
      tpu.vector_store %arg6[%c0_14, %c0_15], %15 {strides = array<i32>} : memref<512x128xf32, #tpu.memory_space<vmem>>, vector<512x128xf32>,
    } else {
    }
    return
  }
  func.func @transform_0(%arg0: i32, %arg1: i32, %arg2: i32) -> (i32, i32) {
    %c0_i32 = arith.constant 0 : i32
    return %arg0, %arg2 : i32, i32
  }
  func.func @transform_1(%arg0: i32, %arg1: i32, %arg2: i32) -> (i32, i32) {
    %c0_i32 = arith.constant 0 : i32
    return %arg2, %arg1 : i32, i32
  }
  func.func @transform_2(%arg0: i32, %arg1: i32, %arg2: i32) -> (i32, i32) {
    %c0_i32 = arith.constant 0 : i32
    %c0_i32_0 = arith.constant 0 : i32
    return %c0_i32, %arg1 : i32, i32
  }
  func.func @transform_3(%arg0: i32, %arg1: i32, %arg2: i32) -> (i32, i32) {
    %c0_i32 = arith.constant 0 : i32
    return %arg0, %arg1 : i32, i32
  }
}

module attributes {stable_mosaic.version = 11 : i64} {
  func.func @_inorm_apply_kernel(%arg0: i32, %arg1: i32, %arg2: memref<1x256x8xf32, #tpu.memory_space<vmem>>, %arg3: memref<1x1x8xf32, #tpu.memory_space<vmem>>, %arg4: memref<1x1x8xf32, #tpu.memory_space<vmem>>, %arg5: memref<1x256x8xf32, #tpu.memory_space<vmem>>) attributes {dimension_semantics = [#tpu.dimension_semantics<parallel>, #tpu.dimension_semantics<parallel>], iteration_bounds = array<i64: 2, 1>, scalar_prefetch = 0 : i64, scratch_operands = 0 : i64, tpu.core_type = #tpu.core_type<tc>, window_params = [{transform_indices = @transform_0, window_bounds = array<i64: 1, 256, 8>}, {transform_indices = @transform_1, window_bounds = array<i64: 1, 1, 8>}, {transform_indices = @transform_2, window_bounds = array<i64: 1, 1, 8>}, {transform_indices = @transform_3, window_bounds = array<i64: 1, 256, 8>}]} {
    %c0 = arith.constant 0 : index
    %c0_0 = arith.constant 0 : index
    %c0_1 = arith.constant 0 : index
    %0 = vector.load %arg2[%c0, %c0_0, %c0_1] : memref<1x256x8xf32, #tpu.memory_space<vmem>>, vector<1x256x8xf32>
    %c0_2 = arith.constant 0 : index
    %c0_3 = arith.constant 0 : index
    %c0_4 = arith.constant 0 : index
    %1 = vector.load %arg3[%c0_2, %c0_3, %c0_4] : memref<1x1x8xf32, #tpu.memory_space<vmem>>, vector<1x1x8xf32>
    %2 = vector.broadcast %1 : vector<1x1x8xf32> to vector<1x256x8xf32>
    %3 = arith.subf %0, %2 : vector<1x256x8xf32>
    %c0_5 = arith.constant 0 : index
    %c0_6 = arith.constant 0 : index
    %c0_7 = arith.constant 0 : index
    %4 = vector.load %arg4[%c0_5, %c0_6, %c0_7] : memref<1x1x8xf32, #tpu.memory_space<vmem>>, vector<1x1x8xf32>
    %5 = vector.broadcast %4 : vector<1x1x8xf32> to vector<1x256x8xf32>
    %6 = arith.mulf %3, %5 : vector<1x256x8xf32>
    %cst = arith.constant 0.000000e+00 : f32
    %7 = vector.broadcast %cst : f32 to vector<1x256x8xf32>
    %8 = arith.maximumf %6, %7 : vector<1x256x8xf32>
    %c0_8 = arith.constant 0 : index
    %c0_9 = arith.constant 0 : index
    %c0_10 = arith.constant 0 : index
    %9 = vector.load %arg5[%c0_8, %c0_9, %c0_10] : memref<1x256x8xf32, #tpu.memory_space<vmem>>, vector<1x256x8xf32>
    tpu.vector_store %arg5[%c0_8, %c0_9, %c0_10], %8 {strides = array<i32>} : memref<1x256x8xf32, #tpu.memory_space<vmem>>, vector<1x256x8xf32>,
    return
  }
  func.func @transform_0(%arg0: i32, %arg1: i32) -> (i32, i32, i32) {
    %c0_i32 = arith.constant 0 : i32
    %c0_i32_0 = arith.constant 0 : i32
    return %arg0, %arg1, %c0_i32 : i32, i32, i32
  }
  func.func @transform_1(%arg0: i32, %arg1: i32) -> (i32, i32, i32) {
    %c0_i32 = arith.constant 0 : i32
    %c0_i32_0 = arith.constant 0 : i32
    %c0_i32_1 = arith.constant 0 : i32
    return %arg0, %c0_i32, %c0_i32_0 : i32, i32, i32
  }
  func.func @transform_2(%arg0: i32, %arg1: i32) -> (i32, i32, i32) {
    %c0_i32 = arith.constant 0 : i32
    %c0_i32_0 = arith.constant 0 : i32
    %c0_i32_1 = arith.constant 0 : i32
    return %arg0, %c0_i32, %c0_i32_0 : i32, i32, i32
  }
  func.func @transform_3(%arg0: i32, %arg1: i32) -> (i32, i32, i32) {
    %c0_i32 = arith.constant 0 : i32
    %c0_i32_0 = arith.constant 0 : i32
    return %arg0, %arg1, %c0_i32 : i32, i32, i32
  }
}

module attributes {stable_mosaic.version = 11 : i64} {
  func.func @_matmul_bias_kernel(%arg0: i32, %arg1: i32, %arg2: i32, %arg3: memref<128x128xbf16, #tpu.memory_space<vmem>>, %arg4: memref<128x128xbf16, #tpu.memory_space<vmem>>, %arg5: memref<1x128xf32, #tpu.memory_space<vmem>>, %arg6: memref<128x128xf32, #tpu.memory_space<vmem>>, %arg7: memref<128x128xf32, #tpu.memory_space<vmem>>) attributes {dimension_semantics = [#tpu.dimension_semantics<parallel>, #tpu.dimension_semantics<parallel>, #tpu.dimension_semantics<arbitrary>], iteration_bounds = array<i64: 1, 1, 1>, scalar_prefetch = 0 : i64, scratch_operands = 1 : i64, tpu.core_type = #tpu.core_type<tc>, window_params = [{transform_indices = @transform_0, window_bounds = array<i64: 128, 128>}, {transform_indices = @transform_1, window_bounds = array<i64: 128, 128>}, {transform_indices = @transform_2, window_bounds = array<i64: 1, 128>}, {transform_indices = @transform_3, window_bounds = array<i64: 128, 128>}]} {
    %c0_i32 = arith.constant 0 : i32
    %0 = arith.cmpi eq, %arg2, %c0_i32 : i32
    %1 = arith.extui %0 : i1 to i32
    %c0_i32_0 = arith.constant 0 : i32
    %2 = arith.cmpi ne, %1, %c0_i32_0 : i32
    scf.if %2 {
      %cst_10 = arith.constant 0.000000e+00 : f32
      %12 = vector.broadcast %cst_10 : f32 to vector<128x128xf32>
      %c0_11 = arith.constant 0 : index
      %c0_12 = arith.constant 0 : index
      %13 = vector.load %arg7[%c0_11, %c0_12] : memref<128x128xf32, #tpu.memory_space<vmem>>, vector<128x128xf32>
      tpu.vector_store %arg7[%c0_11, %c0_12], %12 {strides = array<i32>} : memref<128x128xf32, #tpu.memory_space<vmem>>, vector<128x128xf32>,
    } else {
    }
    %c0 = arith.constant 0 : index
    %c0_1 = arith.constant 0 : index
    %3 = vector.load %arg7[%c0, %c0_1] : memref<128x128xf32, #tpu.memory_space<vmem>>, vector<128x128xf32>
    %c0_2 = arith.constant 0 : index
    %c0_3 = arith.constant 0 : index
    %4 = vector.load %arg3[%c0_2, %c0_3] : memref<128x128xbf16, #tpu.memory_space<vmem>>, vector<128x128xbf16>
    %c0_4 = arith.constant 0 : index
    %c0_5 = arith.constant 0 : index
    %5 = vector.load %arg4[%c0_4, %c0_5] : memref<128x128xbf16, #tpu.memory_space<vmem>>, vector<128x128xbf16>
    %cst = arith.constant dense<0.000000e+00> : vector<128x128xf32>
    %6 = tpu.matmul %4, %5, %cst {dimension_numbers = #tpu.dot_dimension_numbers<[1], [0], [0], [1], [0, 0, 1, 1], [], []>} : vector<128x128xbf16>, vector<128x128xbf16>, vector<128x128xf32> -> vector<128x128xf32>
    %7 = arith.addf %3, %6 : vector<128x128xf32>
    %c0_6 = arith.constant 0 : index
    %c0_7 = arith.constant 0 : index
    %8 = vector.load %arg7[%c0_6, %c0_7] : memref<128x128xf32, #tpu.memory_space<vmem>>, vector<128x128xf32>
    tpu.vector_store %arg7[%c0_6, %c0_7], %7 {strides = array<i32>} : memref<128x128xf32, #tpu.memory_space<vmem>>, vector<128x128xf32>,
    %c0_i32_8 = arith.constant 0 : i32
    %9 = arith.cmpi eq, %arg2, %c0_i32_8 : i32
    %10 = arith.extui %9 : i1 to i32
    %c0_i32_9 = arith.constant 0 : i32
    %11 = arith.cmpi ne, %10, %c0_i32_9 : i32
    scf.if %11 {
      %c0_10 = arith.constant 0 : index
      %c0_11 = arith.constant 0 : index
      %12 = vector.load %arg7[%c0_10, %c0_11] : memref<128x128xf32, #tpu.memory_space<vmem>>, vector<128x128xf32>
      %c0_12 = arith.constant 0 : index
      %c0_13 = arith.constant 0 : index
      %13 = vector.load %arg5[%c0_12, %c0_13] : memref<1x128xf32, #tpu.memory_space<vmem>>, vector<1x128xf32>
      %14 = vector.broadcast %13 : vector<1x128xf32> to vector<128x128xf32>
      %15 = arith.addf %12, %14 : vector<128x128xf32>
      %c0_14 = arith.constant 0 : index
      %c0_15 = arith.constant 0 : index
      %16 = vector.load %arg6[%c0_14, %c0_15] : memref<128x128xf32, #tpu.memory_space<vmem>>, vector<128x128xf32>
      tpu.vector_store %arg6[%c0_14, %c0_15], %15 {strides = array<i32>} : memref<128x128xf32, #tpu.memory_space<vmem>>, vector<128x128xf32>,
    } else {
    }
    return
  }
  func.func @transform_0(%arg0: i32, %arg1: i32, %arg2: i32) -> (i32, i32) {
    %c0_i32 = arith.constant 0 : i32
    return %arg0, %arg2 : i32, i32
  }
  func.func @transform_1(%arg0: i32, %arg1: i32, %arg2: i32) -> (i32, i32) {
    %c0_i32 = arith.constant 0 : i32
    return %arg2, %arg1 : i32, i32
  }
  func.func @transform_2(%arg0: i32, %arg1: i32, %arg2: i32) -> (i32, i32) {
    %c0_i32 = arith.constant 0 : i32
    %c0_i32_0 = arith.constant 0 : i32
    return %c0_i32, %arg1 : i32, i32
  }
  func.func @transform_3(%arg0: i32, %arg1: i32, %arg2: i32) -> (i32, i32) {
    %c0_i32 = arith.constant 0 : i32
    return %arg0, %arg1 : i32, i32
  }
}

module attributes {stable_mosaic.version = 11 : i64} {
  func.func @_inorm_stats_kernel(%arg0: i32, %arg1: i32, %arg2: memref<1x64x16xf32, #tpu.memory_space<vmem>>, %arg3: memref<1x1x16xf32, #tpu.memory_space<vmem>>, %arg4: memref<1x1x16xf32, #tpu.memory_space<vmem>>, %arg5: memref<1x1x16xf32, #tpu.memory_space<vmem>>, %arg6: memref<1x1x16xf32, #tpu.memory_space<vmem>>) attributes {dimension_semantics = [#tpu.dimension_semantics<parallel>, #tpu.dimension_semantics<arbitrary>], iteration_bounds = array<i64: 2, 1>, scalar_prefetch = 0 : i64, scratch_operands = 2 : i64, tpu.core_type = #tpu.core_type<tc>, window_params = [{transform_indices = @transform_0, window_bounds = array<i64: 1, 64, 16>}, {transform_indices = @transform_1, window_bounds = array<i64: 1, 1, 16>}, {transform_indices = @transform_2, window_bounds = array<i64: 1, 1, 16>}]} {
    %c0_i32 = arith.constant 0 : i32
    %0 = arith.cmpi eq, %arg1, %c0_i32 : i32
    %1 = arith.extui %0 : i1 to i32
    %c0_i32_0 = arith.constant 0 : i32
    %2 = arith.cmpi ne, %1, %c0_i32_0 : i32
    scf.if %2 {
      %cst_18 = arith.constant 0.000000e+00 : f32
      %18 = vector.broadcast %cst_18 : f32 to vector<1x1x16xf32>
      %c0_19 = arith.constant 0 : index
      %c0_20 = arith.constant 0 : index
      %c0_21 = arith.constant 0 : index
      %19 = vector.load %arg5[%c0_19, %c0_20, %c0_21] : memref<1x1x16xf32, #tpu.memory_space<vmem>>, vector<1x1x16xf32>
      tpu.vector_store %arg5[%c0_19, %c0_20, %c0_21], %18 {strides = array<i32>} : memref<1x1x16xf32, #tpu.memory_space<vmem>>, vector<1x1x16xf32>,
      %cst_22 = arith.constant 0.000000e+00 : f32
      %20 = vector.broadcast %cst_22 : f32 to vector<1x1x16xf32>
      %c0_23 = arith.constant 0 : index
      %c0_24 = arith.constant 0 : index
      %c0_25 = arith.constant 0 : index
      %21 = vector.load %arg6[%c0_23, %c0_24, %c0_25] : memref<1x1x16xf32, #tpu.memory_space<vmem>>, vector<1x1x16xf32>
      tpu.vector_store %arg6[%c0_23, %c0_24, %c0_25], %20 {strides = array<i32>} : memref<1x1x16xf32, #tpu.memory_space<vmem>>, vector<1x1x16xf32>,
    } else {
    }
    %c0 = arith.constant 0 : index
    %c0_1 = arith.constant 0 : index
    %c0_2 = arith.constant 0 : index
    %3 = vector.load %arg2[%c0, %c0_1, %c0_2] : memref<1x64x16xf32, #tpu.memory_space<vmem>>, vector<1x64x16xf32>
    %c0_3 = arith.constant 0 : index
    %c0_4 = arith.constant 0 : index
    %c0_5 = arith.constant 0 : index
    %4 = vector.load %arg5[%c0_3, %c0_4, %c0_5] : memref<1x1x16xf32, #tpu.memory_space<vmem>>, vector<1x1x16xf32>
    %cst = arith.constant dense<0.000000e+00> : vector<1x16xf32>
    %5 = vector.multi_reduction <add>, %3, %cst [1] : vector<1x64x16xf32> to vector<1x16xf32>
    %6 = vector.shape_cast %5 : vector<1x16xf32> to vector<1x1x16xf32>
    %7 = arith.addf %4, %6 : vector<1x1x16xf32>
    %c0_6 = arith.constant 0 : index
    %c0_7 = arith.constant 0 : index
    %c0_8 = arith.constant 0 : index
    %8 = vector.load %arg5[%c0_6, %c0_7, %c0_8] : memref<1x1x16xf32, #tpu.memory_space<vmem>>, vector<1x1x16xf32>
    tpu.vector_store %arg5[%c0_6, %c0_7, %c0_8], %7 {strides = array<i32>} : memref<1x1x16xf32, #tpu.memory_space<vmem>>, vector<1x1x16xf32>,
    %c0_9 = arith.constant 0 : index
    %c0_10 = arith.constant 0 : index
    %c0_11 = arith.constant 0 : index
    %9 = vector.load %arg6[%c0_9, %c0_10, %c0_11] : memref<1x1x16xf32, #tpu.memory_space<vmem>>, vector<1x1x16xf32>
    %10 = arith.mulf %3, %3 : vector<1x64x16xf32>
    %cst_12 = arith.constant dense<0.000000e+00> : vector<1x16xf32>
    %11 = vector.multi_reduction <add>, %10, %cst_12 [1] : vector<1x64x16xf32> to vector<1x16xf32>
    %12 = vector.shape_cast %11 : vector<1x16xf32> to vector<1x1x16xf32>
    %13 = arith.addf %9, %12 : vector<1x1x16xf32>
    %c0_13 = arith.constant 0 : index
    %c0_14 = arith.constant 0 : index
    %c0_15 = arith.constant 0 : index
    %14 = vector.load %arg6[%c0_13, %c0_14, %c0_15] : memref<1x1x16xf32, #tpu.memory_space<vmem>>, vector<1x1x16xf32>
    tpu.vector_store %arg6[%c0_13, %c0_14, %c0_15], %13 {strides = array<i32>} : memref<1x1x16xf32, #tpu.memory_space<vmem>>, vector<1x1x16xf32>,
    %c0_i32_16 = arith.constant 0 : i32
    %15 = arith.cmpi eq, %arg1, %c0_i32_16 : i32
    %16 = arith.extui %15 : i1 to i32
    %c0_i32_17 = arith.constant 0 : i32
    %17 = arith.cmpi ne, %16, %c0_i32_17 : i32
    scf.if %17 {
      %c0_18 = arith.constant 0 : index
      %c0_19 = arith.constant 0 : index
      %c0_20 = arith.constant 0 : index
      %18 = vector.load %arg5[%c0_18, %c0_19, %c0_20] : memref<1x1x16xf32, #tpu.memory_space<vmem>>, vector<1x1x16xf32>
      %cst_21 = arith.constant 1.562500e-02 : f32
      %19 = vector.broadcast %cst_21 : f32 to vector<1x1x16xf32>
      %20 = arith.mulf %18, %19 : vector<1x1x16xf32>
      %c0_22 = arith.constant 0 : index
      %c0_23 = arith.constant 0 : index
      %c0_24 = arith.constant 0 : index
      %21 = vector.load %arg6[%c0_22, %c0_23, %c0_24] : memref<1x1x16xf32, #tpu.memory_space<vmem>>, vector<1x1x16xf32>
      %cst_25 = arith.constant 1.562500e-02 : f32
      %22 = vector.broadcast %cst_25 : f32 to vector<1x1x16xf32>
      %23 = arith.mulf %21, %22 : vector<1x1x16xf32>
      %24 = arith.mulf %20, %20 : vector<1x1x16xf32>
      %25 = arith.subf %23, %24 : vector<1x1x16xf32>
      %c0_26 = arith.constant 0 : index
      %c0_27 = arith.constant 0 : index
      %c0_28 = arith.constant 0 : index
      %26 = vector.load %arg3[%c0_26, %c0_27, %c0_28] : memref<1x1x16xf32, #tpu.memory_space<vmem>>, vector<1x1x16xf32>
      tpu.vector_store %arg3[%c0_26, %c0_27, %c0_28], %20 {strides = array<i32>} : memref<1x1x16xf32, #tpu.memory_space<vmem>>, vector<1x1x16xf32>,
      %cst_29 = arith.constant 0.000000e+00 : f32
      %27 = vector.broadcast %cst_29 : f32 to vector<1x1x16xf32>
      %28 = arith.maximumf %25, %27 : vector<1x1x16xf32>
      %cst_30 = arith.constant 9.99999974E-6 : f32
      %29 = vector.broadcast %cst_30 : f32 to vector<1x1x16xf32>
      %30 = arith.addf %28, %29 : vector<1x1x16xf32>
      %31 = math.rsqrt %30 : vector<1x1x16xf32>
      %c0_31 = arith.constant 0 : index
      %c0_32 = arith.constant 0 : index
      %c0_33 = arith.constant 0 : index
      %32 = vector.load %arg4[%c0_31, %c0_32, %c0_33] : memref<1x1x16xf32, #tpu.memory_space<vmem>>, vector<1x1x16xf32>
      tpu.vector_store %arg4[%c0_31, %c0_32, %c0_33], %31 {strides = array<i32>} : memref<1x1x16xf32, #tpu.memory_space<vmem>>, vector<1x1x16xf32>,
    } else {
    }
    return
  }
  func.func @transform_0(%arg0: i32, %arg1: i32) -> (i32, i32, i32) {
    %c0_i32 = arith.constant 0 : i32
    %c0_i32_0 = arith.constant 0 : i32
    return %arg0, %arg1, %c0_i32 : i32, i32, i32
  }
  func.func @transform_1(%arg0: i32, %arg1: i32) -> (i32, i32, i32) {
    %c0_i32 = arith.constant 0 : i32
    %c0_i32_0 = arith.constant 0 : i32
    %c0_i32_1 = arith.constant 0 : i32
    return %arg0, %c0_i32, %c0_i32_0 : i32, i32, i32
  }
  func.func @transform_2(%arg0: i32, %arg1: i32) -> (i32, i32, i32) {
    %c0_i32 = arith.constant 0 : i32
    %c0_i32_0 = arith.constant 0 : i32
    %c0_i32_1 = arith.constant 0 : i32
    return %arg0, %c0_i32, %c0_i32_0 : i32, i32, i32
  }
}

module attributes {stable_mosaic.version = 11 : i64} {
  func.func @_inorm_apply_kernel(%arg0: i32, %arg1: i32, %arg2: memref<1x64x16xf32, #tpu.memory_space<vmem>>, %arg3: memref<1x1x16xf32, #tpu.memory_space<vmem>>, %arg4: memref<1x1x16xf32, #tpu.memory_space<vmem>>, %arg5: memref<1x64x16xf32, #tpu.memory_space<vmem>>) attributes {dimension_semantics = [#tpu.dimension_semantics<parallel>, #tpu.dimension_semantics<parallel>], iteration_bounds = array<i64: 2, 1>, scalar_prefetch = 0 : i64, scratch_operands = 0 : i64, tpu.core_type = #tpu.core_type<tc>, window_params = [{transform_indices = @transform_0, window_bounds = array<i64: 1, 64, 16>}, {transform_indices = @transform_1, window_bounds = array<i64: 1, 1, 16>}, {transform_indices = @transform_2, window_bounds = array<i64: 1, 1, 16>}, {transform_indices = @transform_3, window_bounds = array<i64: 1, 64, 16>}]} {
    %c0 = arith.constant 0 : index
    %c0_0 = arith.constant 0 : index
    %c0_1 = arith.constant 0 : index
    %0 = vector.load %arg2[%c0, %c0_0, %c0_1] : memref<1x64x16xf32, #tpu.memory_space<vmem>>, vector<1x64x16xf32>
    %c0_2 = arith.constant 0 : index
    %c0_3 = arith.constant 0 : index
    %c0_4 = arith.constant 0 : index
    %1 = vector.load %arg3[%c0_2, %c0_3, %c0_4] : memref<1x1x16xf32, #tpu.memory_space<vmem>>, vector<1x1x16xf32>
    %2 = vector.broadcast %1 : vector<1x1x16xf32> to vector<1x64x16xf32>
    %3 = arith.subf %0, %2 : vector<1x64x16xf32>
    %c0_5 = arith.constant 0 : index
    %c0_6 = arith.constant 0 : index
    %c0_7 = arith.constant 0 : index
    %4 = vector.load %arg4[%c0_5, %c0_6, %c0_7] : memref<1x1x16xf32, #tpu.memory_space<vmem>>, vector<1x1x16xf32>
    %5 = vector.broadcast %4 : vector<1x1x16xf32> to vector<1x64x16xf32>
    %6 = arith.mulf %3, %5 : vector<1x64x16xf32>
    %cst = arith.constant 0.000000e+00 : f32
    %7 = vector.broadcast %cst : f32 to vector<1x64x16xf32>
    %8 = arith.maximumf %6, %7 : vector<1x64x16xf32>
    %c0_8 = arith.constant 0 : index
    %c0_9 = arith.constant 0 : index
    %c0_10 = arith.constant 0 : index
    %9 = vector.load %arg5[%c0_8, %c0_9, %c0_10] : memref<1x64x16xf32, #tpu.memory_space<vmem>>, vector<1x64x16xf32>
    tpu.vector_store %arg5[%c0_8, %c0_9, %c0_10], %8 {strides = array<i32>} : memref<1x64x16xf32, #tpu.memory_space<vmem>>, vector<1x64x16xf32>,
    return
  }
  func.func @transform_0(%arg0: i32, %arg1: i32) -> (i32, i32, i32) {
    %c0_i32 = arith.constant 0 : i32
    %c0_i32_0 = arith.constant 0 : i32
    return %arg0, %arg1, %c0_i32 : i32, i32, i32
  }
  func.func @transform_1(%arg0: i32, %arg1: i32) -> (i32, i32, i32) {
    %c0_i32 = arith.constant 0 : i32
    %c0_i32_0 = arith.constant 0 : i32
    %c0_i32_1 = arith.constant 0 : i32
    return %arg0, %c0_i32, %c0_i32_0 : i32, i32, i32
  }
  func.func @transform_2(%arg0: i32, %arg1: i32) -> (i32, i32, i32) {
    %c0_i32 = arith.constant 0 : i32
    %c0_i32_0 = arith.constant 0 : i32
    %c0_i32_1 = arith.constant 0 : i32
    return %arg0, %c0_i32, %c0_i32_0 : i32, i32, i32
  }
  func.func @transform_3(%arg0: i32, %arg1: i32) -> (i32, i32, i32) {
    %c0_i32 = arith.constant 0 : i32
    %c0_i32_0 = arith.constant 0 : i32
    return %arg0, %arg1, %c0_i32 : i32, i32, i32
  }
}

module attributes {stable_mosaic.version = 11 : i64} {
  func.func @_matmul_bias_kernel(%arg0: i32, %arg1: i32, %arg2: i32, %arg3: memref<128x256xbf16, #tpu.memory_space<vmem>>, %arg4: memref<256x128xbf16, #tpu.memory_space<vmem>>, %arg5: memref<1x128xf32, #tpu.memory_space<vmem>>, %arg6: memref<128x128xf32, #tpu.memory_space<vmem>>, %arg7: memref<128x128xf32, #tpu.memory_space<vmem>>) attributes {dimension_semantics = [#tpu.dimension_semantics<parallel>, #tpu.dimension_semantics<parallel>, #tpu.dimension_semantics<arbitrary>], iteration_bounds = array<i64: 1, 1, 1>, scalar_prefetch = 0 : i64, scratch_operands = 1 : i64, tpu.core_type = #tpu.core_type<tc>, window_params = [{transform_indices = @transform_0, window_bounds = array<i64: 128, 256>}, {transform_indices = @transform_1, window_bounds = array<i64: 256, 128>}, {transform_indices = @transform_2, window_bounds = array<i64: 1, 128>}, {transform_indices = @transform_3, window_bounds = array<i64: 128, 128>}]} {
    %c0_i32 = arith.constant 0 : i32
    %0 = arith.cmpi eq, %arg2, %c0_i32 : i32
    %1 = arith.extui %0 : i1 to i32
    %c0_i32_0 = arith.constant 0 : i32
    %2 = arith.cmpi ne, %1, %c0_i32_0 : i32
    scf.if %2 {
      %cst_10 = arith.constant 0.000000e+00 : f32
      %12 = vector.broadcast %cst_10 : f32 to vector<128x128xf32>
      %c0_11 = arith.constant 0 : index
      %c0_12 = arith.constant 0 : index
      %13 = vector.load %arg7[%c0_11, %c0_12] : memref<128x128xf32, #tpu.memory_space<vmem>>, vector<128x128xf32>
      tpu.vector_store %arg7[%c0_11, %c0_12], %12 {strides = array<i32>} : memref<128x128xf32, #tpu.memory_space<vmem>>, vector<128x128xf32>,
    } else {
    }
    %c0 = arith.constant 0 : index
    %c0_1 = arith.constant 0 : index
    %3 = vector.load %arg7[%c0, %c0_1] : memref<128x128xf32, #tpu.memory_space<vmem>>, vector<128x128xf32>
    %c0_2 = arith.constant 0 : index
    %c0_3 = arith.constant 0 : index
    %4 = vector.load %arg3[%c0_2, %c0_3] : memref<128x256xbf16, #tpu.memory_space<vmem>>, vector<128x256xbf16>
    %c0_4 = arith.constant 0 : index
    %c0_5 = arith.constant 0 : index
    %5 = vector.load %arg4[%c0_4, %c0_5] : memref<256x128xbf16, #tpu.memory_space<vmem>>, vector<256x128xbf16>
    %cst = arith.constant dense<0.000000e+00> : vector<128x128xf32>
    %6 = tpu.matmul %4, %5, %cst {dimension_numbers = #tpu.dot_dimension_numbers<[1], [0], [0], [1], [0, 0, 1, 1], [], []>} : vector<128x256xbf16>, vector<256x128xbf16>, vector<128x128xf32> -> vector<128x128xf32>
    %7 = arith.addf %3, %6 : vector<128x128xf32>
    %c0_6 = arith.constant 0 : index
    %c0_7 = arith.constant 0 : index
    %8 = vector.load %arg7[%c0_6, %c0_7] : memref<128x128xf32, #tpu.memory_space<vmem>>, vector<128x128xf32>
    tpu.vector_store %arg7[%c0_6, %c0_7], %7 {strides = array<i32>} : memref<128x128xf32, #tpu.memory_space<vmem>>, vector<128x128xf32>,
    %c0_i32_8 = arith.constant 0 : i32
    %9 = arith.cmpi eq, %arg2, %c0_i32_8 : i32
    %10 = arith.extui %9 : i1 to i32
    %c0_i32_9 = arith.constant 0 : i32
    %11 = arith.cmpi ne, %10, %c0_i32_9 : i32
    scf.if %11 {
      %c0_10 = arith.constant 0 : index
      %c0_11 = arith.constant 0 : index
      %12 = vector.load %arg7[%c0_10, %c0_11] : memref<128x128xf32, #tpu.memory_space<vmem>>, vector<128x128xf32>
      %c0_12 = arith.constant 0 : index
      %c0_13 = arith.constant 0 : index
      %13 = vector.load %arg5[%c0_12, %c0_13] : memref<1x128xf32, #tpu.memory_space<vmem>>, vector<1x128xf32>
      %14 = vector.broadcast %13 : vector<1x128xf32> to vector<128x128xf32>
      %15 = arith.addf %12, %14 : vector<128x128xf32>
      %c0_14 = arith.constant 0 : index
      %c0_15 = arith.constant 0 : index
      %16 = vector.load %arg6[%c0_14, %c0_15] : memref<128x128xf32, #tpu.memory_space<vmem>>, vector<128x128xf32>
      tpu.vector_store %arg6[%c0_14, %c0_15], %15 {strides = array<i32>} : memref<128x128xf32, #tpu.memory_space<vmem>>, vector<128x128xf32>,
    } else {
    }
    return
  }
  func.func @transform_0(%arg0: i32, %arg1: i32, %arg2: i32) -> (i32, i32) {
    %c0_i32 = arith.constant 0 : i32
    return %arg0, %arg2 : i32, i32
  }
  func.func @transform_1(%arg0: i32, %arg1: i32, %arg2: i32) -> (i32, i32) {
    %c0_i32 = arith.constant 0 : i32
    return %arg2, %arg1 : i32, i32
  }
  func.func @transform_2(%arg0: i32, %arg1: i32, %arg2: i32) -> (i32, i32) {
    %c0_i32 = arith.constant 0 : i32
    %c0_i32_0 = arith.constant 0 : i32
    return %c0_i32, %arg1 : i32, i32
  }
  func.func @transform_3(%arg0: i32, %arg1: i32, %arg2: i32) -> (i32, i32) {
    %c0_i32 = arith.constant 0 : i32
    return %arg0, %arg1 : i32, i32
  }
}

module attributes {stable_mosaic.version = 11 : i64} {
  func.func @_inorm_stats_kernel(%arg0: i32, %arg1: i32, %arg2: memref<1x16x32xf32, #tpu.memory_space<vmem>>, %arg3: memref<1x1x32xf32, #tpu.memory_space<vmem>>, %arg4: memref<1x1x32xf32, #tpu.memory_space<vmem>>, %arg5: memref<1x1x32xf32, #tpu.memory_space<vmem>>, %arg6: memref<1x1x32xf32, #tpu.memory_space<vmem>>) attributes {dimension_semantics = [#tpu.dimension_semantics<parallel>, #tpu.dimension_semantics<arbitrary>], iteration_bounds = array<i64: 2, 1>, scalar_prefetch = 0 : i64, scratch_operands = 2 : i64, tpu.core_type = #tpu.core_type<tc>, window_params = [{transform_indices = @transform_0, window_bounds = array<i64: 1, 16, 32>}, {transform_indices = @transform_1, window_bounds = array<i64: 1, 1, 32>}, {transform_indices = @transform_2, window_bounds = array<i64: 1, 1, 32>}]} {
    %c0_i32 = arith.constant 0 : i32
    %0 = arith.cmpi eq, %arg1, %c0_i32 : i32
    %1 = arith.extui %0 : i1 to i32
    %c0_i32_0 = arith.constant 0 : i32
    %2 = arith.cmpi ne, %1, %c0_i32_0 : i32
    scf.if %2 {
      %cst_18 = arith.constant 0.000000e+00 : f32
      %18 = vector.broadcast %cst_18 : f32 to vector<1x1x32xf32>
      %c0_19 = arith.constant 0 : index
      %c0_20 = arith.constant 0 : index
      %c0_21 = arith.constant 0 : index
      %19 = vector.load %arg5[%c0_19, %c0_20, %c0_21] : memref<1x1x32xf32, #tpu.memory_space<vmem>>, vector<1x1x32xf32>
      tpu.vector_store %arg5[%c0_19, %c0_20, %c0_21], %18 {strides = array<i32>} : memref<1x1x32xf32, #tpu.memory_space<vmem>>, vector<1x1x32xf32>,
      %cst_22 = arith.constant 0.000000e+00 : f32
      %20 = vector.broadcast %cst_22 : f32 to vector<1x1x32xf32>
      %c0_23 = arith.constant 0 : index
      %c0_24 = arith.constant 0 : index
      %c0_25 = arith.constant 0 : index
      %21 = vector.load %arg6[%c0_23, %c0_24, %c0_25] : memref<1x1x32xf32, #tpu.memory_space<vmem>>, vector<1x1x32xf32>
      tpu.vector_store %arg6[%c0_23, %c0_24, %c0_25], %20 {strides = array<i32>} : memref<1x1x32xf32, #tpu.memory_space<vmem>>, vector<1x1x32xf32>,
    } else {
    }
    %c0 = arith.constant 0 : index
    %c0_1 = arith.constant 0 : index
    %c0_2 = arith.constant 0 : index
    %3 = vector.load %arg2[%c0, %c0_1, %c0_2] : memref<1x16x32xf32, #tpu.memory_space<vmem>>, vector<1x16x32xf32>
    %c0_3 = arith.constant 0 : index
    %c0_4 = arith.constant 0 : index
    %c0_5 = arith.constant 0 : index
    %4 = vector.load %arg5[%c0_3, %c0_4, %c0_5] : memref<1x1x32xf32, #tpu.memory_space<vmem>>, vector<1x1x32xf32>
    %cst = arith.constant dense<0.000000e+00> : vector<1x32xf32>
    %5 = vector.multi_reduction <add>, %3, %cst [1] : vector<1x16x32xf32> to vector<1x32xf32>
    %6 = vector.shape_cast %5 : vector<1x32xf32> to vector<1x1x32xf32>
    %7 = arith.addf %4, %6 : vector<1x1x32xf32>
    %c0_6 = arith.constant 0 : index
    %c0_7 = arith.constant 0 : index
    %c0_8 = arith.constant 0 : index
    %8 = vector.load %arg5[%c0_6, %c0_7, %c0_8] : memref<1x1x32xf32, #tpu.memory_space<vmem>>, vector<1x1x32xf32>
    tpu.vector_store %arg5[%c0_6, %c0_7, %c0_8], %7 {strides = array<i32>} : memref<1x1x32xf32, #tpu.memory_space<vmem>>, vector<1x1x32xf32>,
    %c0_9 = arith.constant 0 : index
    %c0_10 = arith.constant 0 : index
    %c0_11 = arith.constant 0 : index
    %9 = vector.load %arg6[%c0_9, %c0_10, %c0_11] : memref<1x1x32xf32, #tpu.memory_space<vmem>>, vector<1x1x32xf32>
    %10 = arith.mulf %3, %3 : vector<1x16x32xf32>
    %cst_12 = arith.constant dense<0.000000e+00> : vector<1x32xf32>
    %11 = vector.multi_reduction <add>, %10, %cst_12 [1] : vector<1x16x32xf32> to vector<1x32xf32>
    %12 = vector.shape_cast %11 : vector<1x32xf32> to vector<1x1x32xf32>
    %13 = arith.addf %9, %12 : vector<1x1x32xf32>
    %c0_13 = arith.constant 0 : index
    %c0_14 = arith.constant 0 : index
    %c0_15 = arith.constant 0 : index
    %14 = vector.load %arg6[%c0_13, %c0_14, %c0_15] : memref<1x1x32xf32, #tpu.memory_space<vmem>>, vector<1x1x32xf32>
    tpu.vector_store %arg6[%c0_13, %c0_14, %c0_15], %13 {strides = array<i32>} : memref<1x1x32xf32, #tpu.memory_space<vmem>>, vector<1x1x32xf32>,
    %c0_i32_16 = arith.constant 0 : i32
    %15 = arith.cmpi eq, %arg1, %c0_i32_16 : i32
    %16 = arith.extui %15 : i1 to i32
    %c0_i32_17 = arith.constant 0 : i32
    %17 = arith.cmpi ne, %16, %c0_i32_17 : i32
    scf.if %17 {
      %c0_18 = arith.constant 0 : index
      %c0_19 = arith.constant 0 : index
      %c0_20 = arith.constant 0 : index
      %18 = vector.load %arg5[%c0_18, %c0_19, %c0_20] : memref<1x1x32xf32, #tpu.memory_space<vmem>>, vector<1x1x32xf32>
      %cst_21 = arith.constant 6.250000e-02 : f32
      %19 = vector.broadcast %cst_21 : f32 to vector<1x1x32xf32>
      %20 = arith.mulf %18, %19 : vector<1x1x32xf32>
      %c0_22 = arith.constant 0 : index
      %c0_23 = arith.constant 0 : index
      %c0_24 = arith.constant 0 : index
      %21 = vector.load %arg6[%c0_22, %c0_23, %c0_24] : memref<1x1x32xf32, #tpu.memory_space<vmem>>, vector<1x1x32xf32>
      %cst_25 = arith.constant 6.250000e-02 : f32
      %22 = vector.broadcast %cst_25 : f32 to vector<1x1x32xf32>
      %23 = arith.mulf %21, %22 : vector<1x1x32xf32>
      %24 = arith.mulf %20, %20 : vector<1x1x32xf32>
      %25 = arith.subf %23, %24 : vector<1x1x32xf32>
      %c0_26 = arith.constant 0 : index
      %c0_27 = arith.constant 0 : index
      %c0_28 = arith.constant 0 : index
      %26 = vector.load %arg3[%c0_26, %c0_27, %c0_28] : memref<1x1x32xf32, #tpu.memory_space<vmem>>, vector<1x1x32xf32>
      tpu.vector_store %arg3[%c0_26, %c0_27, %c0_28], %20 {strides = array<i32>} : memref<1x1x32xf32, #tpu.memory_space<vmem>>, vector<1x1x32xf32>,
      %cst_29 = arith.constant 0.000000e+00 : f32
      %27 = vector.broadcast %cst_29 : f32 to vector<1x1x32xf32>
      %28 = arith.maximumf %25, %27 : vector<1x1x32xf32>
      %cst_30 = arith.constant 9.99999974E-6 : f32
      %29 = vector.broadcast %cst_30 : f32 to vector<1x1x32xf32>
      %30 = arith.addf %28, %29 : vector<1x1x32xf32>
      %31 = math.rsqrt %30 : vector<1x1x32xf32>
      %c0_31 = arith.constant 0 : index
      %c0_32 = arith.constant 0 : index
      %c0_33 = arith.constant 0 : index
      %32 = vector.load %arg4[%c0_31, %c0_32, %c0_33] : memref<1x1x32xf32, #tpu.memory_space<vmem>>, vector<1x1x32xf32>
      tpu.vector_store %arg4[%c0_31, %c0_32, %c0_33], %31 {strides = array<i32>} : memref<1x1x32xf32, #tpu.memory_space<vmem>>, vector<1x1x32xf32>,
    } else {
    }
    return
  }
  func.func @transform_0(%arg0: i32, %arg1: i32) -> (i32, i32, i32) {
    %c0_i32 = arith.constant 0 : i32
    %c0_i32_0 = arith.constant 0 : i32
    return %arg0, %arg1, %c0_i32 : i32, i32, i32
  }
  func.func @transform_1(%arg0: i32, %arg1: i32) -> (i32, i32, i32) {
    %c0_i32 = arith.constant 0 : i32
    %c0_i32_0 = arith.constant 0 : i32
    %c0_i32_1 = arith.constant 0 : i32
    return %arg0, %c0_i32, %c0_i32_0 : i32, i32, i32
  }
  func.func @transform_2(%arg0: i32, %arg1: i32) -> (i32, i32, i32) {
    %c0_i32 = arith.constant 0 : i32
    %c0_i32_0 = arith.constant 0 : i32
    %c0_i32_1 = arith.constant 0 : i32
    return %arg0, %c0_i32, %c0_i32_0 : i32, i32, i32
  }
}

module attributes {stable_mosaic.version = 11 : i64} {
  func.func @_inorm_apply_kernel(%arg0: i32, %arg1: i32, %arg2: memref<1x16x32xf32, #tpu.memory_space<vmem>>, %arg3: memref<1x1x32xf32, #tpu.memory_space<vmem>>, %arg4: memref<1x1x32xf32, #tpu.memory_space<vmem>>, %arg5: memref<1x16x32xf32, #tpu.memory_space<vmem>>) attributes {dimension_semantics = [#tpu.dimension_semantics<parallel>, #tpu.dimension_semantics<parallel>], iteration_bounds = array<i64: 2, 1>, scalar_prefetch = 0 : i64, scratch_operands = 0 : i64, tpu.core_type = #tpu.core_type<tc>, window_params = [{transform_indices = @transform_0, window_bounds = array<i64: 1, 16, 32>}, {transform_indices = @transform_1, window_bounds = array<i64: 1, 1, 32>}, {transform_indices = @transform_2, window_bounds = array<i64: 1, 1, 32>}, {transform_indices = @transform_3, window_bounds = array<i64: 1, 16, 32>}]} {
    %c0 = arith.constant 0 : index
    %c0_0 = arith.constant 0 : index
    %c0_1 = arith.constant 0 : index
    %0 = vector.load %arg2[%c0, %c0_0, %c0_1] : memref<1x16x32xf32, #tpu.memory_space<vmem>>, vector<1x16x32xf32>
    %c0_2 = arith.constant 0 : index
    %c0_3 = arith.constant 0 : index
    %c0_4 = arith.constant 0 : index
    %1 = vector.load %arg3[%c0_2, %c0_3, %c0_4] : memref<1x1x32xf32, #tpu.memory_space<vmem>>, vector<1x1x32xf32>
    %2 = vector.broadcast %1 : vector<1x1x32xf32> to vector<1x16x32xf32>
    %3 = arith.subf %0, %2 : vector<1x16x32xf32>
    %c0_5 = arith.constant 0 : index
    %c0_6 = arith.constant 0 : index
    %c0_7 = arith.constant 0 : index
    %4 = vector.load %arg4[%c0_5, %c0_6, %c0_7] : memref<1x1x32xf32, #tpu.memory_space<vmem>>, vector<1x1x32xf32>
    %5 = vector.broadcast %4 : vector<1x1x32xf32> to vector<1x16x32xf32>
    %6 = arith.mulf %3, %5 : vector<1x16x32xf32>
    %cst = arith.constant 0.000000e+00 : f32
    %7 = vector.broadcast %cst : f32 to vector<1x16x32xf32>
    %8 = arith.maximumf %6, %7 : vector<1x16x32xf32>
    %c0_8 = arith.constant 0 : index
    %c0_9 = arith.constant 0 : index
    %c0_10 = arith.constant 0 : index
    %9 = vector.load %arg5[%c0_8, %c0_9, %c0_10] : memref<1x16x32xf32, #tpu.memory_space<vmem>>, vector<1x16x32xf32>
    tpu.vector_store %arg5[%c0_8, %c0_9, %c0_10], %8 {strides = array<i32>} : memref<1x16x32xf32, #tpu.memory_space<vmem>>, vector<1x16x32xf32>,
    return
  }
  func.func @transform_0(%arg0: i32, %arg1: i32) -> (i32, i32, i32) {
    %c0_i32 = arith.constant 0 : i32
    %c0_i32_0 = arith.constant 0 : i32
    return %arg0, %arg1, %c0_i32 : i32, i32, i32
  }
  func.func @transform_1(%arg0: i32, %arg1: i32) -> (i32, i32, i32) {
    %c0_i32 = arith.constant 0 : i32
    %c0_i32_0 = arith.constant 0 : i32
    %c0_i32_1 = arith.constant 0 : i32
    return %arg0, %c0_i32, %c0_i32_0 : i32, i32, i32
  }
  func.func @transform_2(%arg0: i32, %arg1: i32) -> (i32, i32, i32) {
    %c0_i32 = arith.constant 0 : i32
    %c0_i32_0 = arith.constant 0 : i32
    %c0_i32_1 = arith.constant 0 : i32
    return %arg0, %c0_i32, %c0_i32_0 : i32, i32, i32
  }
  func.func @transform_3(%arg0: i32, %arg1: i32) -> (i32, i32, i32) {
    %c0_i32 = arith.constant 0 : i32
    %c0_i32_0 = arith.constant 0 : i32
    return %arg0, %arg1, %c0_i32 : i32, i32, i32
  }
}

module attributes {stable_mosaic.version = 11 : i64} {
  func.func @_matmul_bias_kernel(%arg0: i32, %arg1: i32, %arg2: i32, %arg3: memref<128x384xbf16, #tpu.memory_space<vmem>>, %arg4: memref<384x128xbf16, #tpu.memory_space<vmem>>, %arg5: memref<1x128xf32, #tpu.memory_space<vmem>>, %arg6: memref<128x128xf32, #tpu.memory_space<vmem>>, %arg7: memref<128x128xf32, #tpu.memory_space<vmem>>) attributes {dimension_semantics = [#tpu.dimension_semantics<parallel>, #tpu.dimension_semantics<parallel>, #tpu.dimension_semantics<arbitrary>], iteration_bounds = array<i64: 1, 1, 1>, scalar_prefetch = 0 : i64, scratch_operands = 1 : i64, tpu.core_type = #tpu.core_type<tc>, window_params = [{transform_indices = @transform_0, window_bounds = array<i64: 128, 384>}, {transform_indices = @transform_1, window_bounds = array<i64: 384, 128>}, {transform_indices = @transform_2, window_bounds = array<i64: 1, 128>}, {transform_indices = @transform_3, window_bounds = array<i64: 128, 128>}]} {
    %c0_i32 = arith.constant 0 : i32
    %0 = arith.cmpi eq, %arg2, %c0_i32 : i32
    %1 = arith.extui %0 : i1 to i32
    %c0_i32_0 = arith.constant 0 : i32
    %2 = arith.cmpi ne, %1, %c0_i32_0 : i32
    scf.if %2 {
      %cst_10 = arith.constant 0.000000e+00 : f32
      %12 = vector.broadcast %cst_10 : f32 to vector<128x128xf32>
      %c0_11 = arith.constant 0 : index
      %c0_12 = arith.constant 0 : index
      %13 = vector.load %arg7[%c0_11, %c0_12] : memref<128x128xf32, #tpu.memory_space<vmem>>, vector<128x128xf32>
      tpu.vector_store %arg7[%c0_11, %c0_12], %12 {strides = array<i32>} : memref<128x128xf32, #tpu.memory_space<vmem>>, vector<128x128xf32>,
    } else {
    }
    %c0 = arith.constant 0 : index
    %c0_1 = arith.constant 0 : index
    %3 = vector.load %arg7[%c0, %c0_1] : memref<128x128xf32, #tpu.memory_space<vmem>>, vector<128x128xf32>
    %c0_2 = arith.constant 0 : index
    %c0_3 = arith.constant 0 : index
    %4 = vector.load %arg3[%c0_2, %c0_3] : memref<128x384xbf16, #tpu.memory_space<vmem>>, vector<128x384xbf16>
    %c0_4 = arith.constant 0 : index
    %c0_5 = arith.constant 0 : index
    %5 = vector.load %arg4[%c0_4, %c0_5] : memref<384x128xbf16, #tpu.memory_space<vmem>>, vector<384x128xbf16>
    %cst = arith.constant dense<0.000000e+00> : vector<128x128xf32>
    %6 = tpu.matmul %4, %5, %cst {dimension_numbers = #tpu.dot_dimension_numbers<[1], [0], [0], [1], [0, 0, 1, 1], [], []>} : vector<128x384xbf16>, vector<384x128xbf16>, vector<128x128xf32> -> vector<128x128xf32>
    %7 = arith.addf %3, %6 : vector<128x128xf32>
    %c0_6 = arith.constant 0 : index
    %c0_7 = arith.constant 0 : index
    %8 = vector.load %arg7[%c0_6, %c0_7] : memref<128x128xf32, #tpu.memory_space<vmem>>, vector<128x128xf32>
    tpu.vector_store %arg7[%c0_6, %c0_7], %7 {strides = array<i32>} : memref<128x128xf32, #tpu.memory_space<vmem>>, vector<128x128xf32>,
    %c0_i32_8 = arith.constant 0 : i32
    %9 = arith.cmpi eq, %arg2, %c0_i32_8 : i32
    %10 = arith.extui %9 : i1 to i32
    %c0_i32_9 = arith.constant 0 : i32
    %11 = arith.cmpi ne, %10, %c0_i32_9 : i32
    scf.if %11 {
      %c0_10 = arith.constant 0 : index
      %c0_11 = arith.constant 0 : index
      %12 = vector.load %arg7[%c0_10, %c0_11] : memref<128x128xf32, #tpu.memory_space<vmem>>, vector<128x128xf32>
      %c0_12 = arith.constant 0 : index
      %c0_13 = arith.constant 0 : index
      %13 = vector.load %arg5[%c0_12, %c0_13] : memref<1x128xf32, #tpu.memory_space<vmem>>, vector<1x128xf32>
      %14 = vector.broadcast %13 : vector<1x128xf32> to vector<128x128xf32>
      %15 = arith.addf %12, %14 : vector<128x128xf32>
      %c0_14 = arith.constant 0 : index
      %c0_15 = arith.constant 0 : index
      %16 = vector.load %arg6[%c0_14, %c0_15] : memref<128x128xf32, #tpu.memory_space<vmem>>, vector<128x128xf32>
      tpu.vector_store %arg6[%c0_14, %c0_15], %15 {strides = array<i32>} : memref<128x128xf32, #tpu.memory_space<vmem>>, vector<128x128xf32>,
    } else {
    }
    return
  }
  func.func @transform_0(%arg0: i32, %arg1: i32, %arg2: i32) -> (i32, i32) {
    %c0_i32 = arith.constant 0 : i32
    return %arg0, %arg2 : i32, i32
  }
  func.func @transform_1(%arg0: i32, %arg1: i32, %arg2: i32) -> (i32, i32) {
    %c0_i32 = arith.constant 0 : i32
    return %arg2, %arg1 : i32, i32
  }
  func.func @transform_2(%arg0: i32, %arg1: i32, %arg2: i32) -> (i32, i32) {
    %c0_i32 = arith.constant 0 : i32
    %c0_i32_0 = arith.constant 0 : i32
    return %c0_i32, %arg1 : i32, i32
  }
  func.func @transform_3(%arg0: i32, %arg1: i32, %arg2: i32) -> (i32, i32) {
    %c0_i32 = arith.constant 0 : i32
    return %arg0, %arg1 : i32, i32
  }
}

module attributes {stable_mosaic.version = 11 : i64} {
  func.func @_inorm_apply_residual_kernel(%arg0: i32, %arg1: i32, %arg2: memref<1x16x32xf32, #tpu.memory_space<vmem>>, %arg3: memref<1x1x32xf32, #tpu.memory_space<vmem>>, %arg4: memref<1x1x32xf32, #tpu.memory_space<vmem>>, %arg5: memref<1x16x32xf32, #tpu.memory_space<vmem>>, %arg6: memref<1x16x32xf32, #tpu.memory_space<vmem>>) attributes {dimension_semantics = [#tpu.dimension_semantics<parallel>, #tpu.dimension_semantics<parallel>], iteration_bounds = array<i64: 2, 1>, scalar_prefetch = 0 : i64, scratch_operands = 0 : i64, tpu.core_type = #tpu.core_type<tc>, window_params = [{transform_indices = @transform_0, window_bounds = array<i64: 1, 16, 32>}, {transform_indices = @transform_1, window_bounds = array<i64: 1, 1, 32>}, {transform_indices = @transform_2, window_bounds = array<i64: 1, 1, 32>}, {transform_indices = @transform_3, window_bounds = array<i64: 1, 16, 32>}, {transform_indices = @transform_4, window_bounds = array<i64: 1, 16, 32>}]} {
    %c0 = arith.constant 0 : index
    %c0_0 = arith.constant 0 : index
    %c0_1 = arith.constant 0 : index
    %0 = vector.load %arg5[%c0, %c0_0, %c0_1] : memref<1x16x32xf32, #tpu.memory_space<vmem>>, vector<1x16x32xf32>
    %c0_2 = arith.constant 0 : index
    %c0_3 = arith.constant 0 : index
    %c0_4 = arith.constant 0 : index
    %1 = vector.load %arg2[%c0_2, %c0_3, %c0_4] : memref<1x16x32xf32, #tpu.memory_space<vmem>>, vector<1x16x32xf32>
    %c0_5 = arith.constant 0 : index
    %c0_6 = arith.constant 0 : index
    %c0_7 = arith.constant 0 : index
    %2 = vector.load %arg3[%c0_5, %c0_6, %c0_7] : memref<1x1x32xf32, #tpu.memory_space<vmem>>, vector<1x1x32xf32>
    %3 = vector.broadcast %2 : vector<1x1x32xf32> to vector<1x16x32xf32>
    %4 = arith.subf %1, %3 : vector<1x16x32xf32>
    %c0_8 = arith.constant 0 : index
    %c0_9 = arith.constant 0 : index
    %c0_10 = arith.constant 0 : index
    %5 = vector.load %arg4[%c0_8, %c0_9, %c0_10] : memref<1x1x32xf32, #tpu.memory_space<vmem>>, vector<1x1x32xf32>
    %6 = vector.broadcast %5 : vector<1x1x32xf32> to vector<1x16x32xf32>
    %7 = arith.mulf %4, %6 : vector<1x16x32xf32>
    %8 = arith.addf %0, %7 : vector<1x16x32xf32>
    %c0_11 = arith.constant 0 : index
    %c0_12 = arith.constant 0 : index
    %c0_13 = arith.constant 0 : index
    %9 = vector.load %arg6[%c0_11, %c0_12, %c0_13] : memref<1x16x32xf32, #tpu.memory_space<vmem>>, vector<1x16x32xf32>
    tpu.vector_store %arg6[%c0_11, %c0_12, %c0_13], %8 {strides = array<i32>} : memref<1x16x32xf32, #tpu.memory_space<vmem>>, vector<1x16x32xf32>,
    return
  }
  func.func @transform_0(%arg0: i32, %arg1: i32) -> (i32, i32, i32) {
    %c0_i32 = arith.constant 0 : i32
    %c0_i32_0 = arith.constant 0 : i32
    return %arg0, %arg1, %c0_i32 : i32, i32, i32
  }
  func.func @transform_1(%arg0: i32, %arg1: i32) -> (i32, i32, i32) {
    %c0_i32 = arith.constant 0 : i32
    %c0_i32_0 = arith.constant 0 : i32
    %c0_i32_1 = arith.constant 0 : i32
    return %arg0, %c0_i32, %c0_i32_0 : i32, i32, i32
  }
  func.func @transform_2(%arg0: i32, %arg1: i32) -> (i32, i32, i32) {
    %c0_i32 = arith.constant 0 : i32
    %c0_i32_0 = arith.constant 0 : i32
    %c0_i32_1 = arith.constant 0 : i32
    return %arg0, %c0_i32, %c0_i32_0 : i32, i32, i32
  }
  func.func @transform_3(%arg0: i32, %arg1: i32) -> (i32, i32, i32) {
    %c0_i32 = arith.constant 0 : i32
    %c0_i32_0 = arith.constant 0 : i32
    return %arg0, %arg1, %c0_i32 : i32, i32, i32
  }
  func.func @transform_4(%arg0: i32, %arg1: i32) -> (i32, i32, i32) {
    %c0_i32 = arith.constant 0 : i32
    %c0_i32_0 = arith.constant 0 : i32
    return %arg0, %arg1, %c0_i32 : i32, i32, i32
  }
}

module attributes {stable_mosaic.version = 11 : i64} {
  func.func @_inorm_apply_residual_kernel(%arg0: i32, %arg1: i32, %arg2: memref<1x16x32xf32, #tpu.memory_space<vmem>>, %arg3: memref<1x1x32xf32, #tpu.memory_space<vmem>>, %arg4: memref<1x1x32xf32, #tpu.memory_space<vmem>>, %arg5: memref<1x16x32xf32, #tpu.memory_space<vmem>>, %arg6: memref<1x16x32xf32, #tpu.memory_space<vmem>>) attributes {dimension_semantics = [#tpu.dimension_semantics<parallel>, #tpu.dimension_semantics<parallel>], iteration_bounds = array<i64: 2, 1>, scalar_prefetch = 0 : i64, scratch_operands = 0 : i64, tpu.core_type = #tpu.core_type<tc>, window_params = [{transform_indices = @transform_0, window_bounds = array<i64: 1, 16, 32>}, {transform_indices = @transform_1, window_bounds = array<i64: 1, 1, 32>}, {transform_indices = @transform_2, window_bounds = array<i64: 1, 1, 32>}, {transform_indices = @transform_3, window_bounds = array<i64: 1, 16, 32>}, {transform_indices = @transform_4, window_bounds = array<i64: 1, 16, 32>}]} {
    %c0 = arith.constant 0 : index
    %c0_0 = arith.constant 0 : index
    %c0_1 = arith.constant 0 : index
    %0 = vector.load %arg5[%c0, %c0_0, %c0_1] : memref<1x16x32xf32, #tpu.memory_space<vmem>>, vector<1x16x32xf32>
    %c0_2 = arith.constant 0 : index
    %c0_3 = arith.constant 0 : index
    %c0_4 = arith.constant 0 : index
    %1 = vector.load %arg2[%c0_2, %c0_3, %c0_4] : memref<1x16x32xf32, #tpu.memory_space<vmem>>, vector<1x16x32xf32>
    %c0_5 = arith.constant 0 : index
    %c0_6 = arith.constant 0 : index
    %c0_7 = arith.constant 0 : index
    %2 = vector.load %arg3[%c0_5, %c0_6, %c0_7] : memref<1x1x32xf32, #tpu.memory_space<vmem>>, vector<1x1x32xf32>
    %3 = vector.broadcast %2 : vector<1x1x32xf32> to vector<1x16x32xf32>
    %4 = arith.subf %1, %3 : vector<1x16x32xf32>
    %c0_8 = arith.constant 0 : index
    %c0_9 = arith.constant 0 : index
    %c0_10 = arith.constant 0 : index
    %5 = vector.load %arg4[%c0_8, %c0_9, %c0_10] : memref<1x1x32xf32, #tpu.memory_space<vmem>>, vector<1x1x32xf32>
    %6 = vector.broadcast %5 : vector<1x1x32xf32> to vector<1x16x32xf32>
    %7 = arith.mulf %4, %6 : vector<1x16x32xf32>
    %8 = arith.addf %0, %7 : vector<1x16x32xf32>
    %c0_11 = arith.constant 0 : index
    %c0_12 = arith.constant 0 : index
    %c0_13 = arith.constant 0 : index
    %9 = vector.load %arg6[%c0_11, %c0_12, %c0_13] : memref<1x16x32xf32, #tpu.memory_space<vmem>>, vector<1x16x32xf32>
    tpu.vector_store %arg6[%c0_11, %c0_12, %c0_13], %8 {strides = array<i32>} : memref<1x16x32xf32, #tpu.memory_space<vmem>>, vector<1x16x32xf32>,
    return
  }
  func.func @transform_0(%arg0: i32, %arg1: i32) -> (i32, i32, i32) {
    %c0_i32 = arith.constant 0 : i32
    %c0_i32_0 = arith.constant 0 : i32
    return %arg0, %arg1, %c0_i32 : i32, i32, i32
  }
  func.func @transform_1(%arg0: i32, %arg1: i32) -> (i32, i32, i32) {
    %c0_i32 = arith.constant 0 : i32
    %c0_i32_0 = arith.constant 0 : i32
    %c0_i32_1 = arith.constant 0 : i32
    return %arg0, %c0_i32, %c0_i32_0 : i32, i32, i32
  }
  func.func @transform_2(%arg0: i32, %arg1: i32) -> (i32, i32, i32) {
    %c0_i32 = arith.constant 0 : i32
    %c0_i32_0 = arith.constant 0 : i32
    %c0_i32_1 = arith.constant 0 : i32
    return %arg0, %c0_i32, %c0_i32_0 : i32, i32, i32
  }
  func.func @transform_3(%arg0: i32, %arg1: i32) -> (i32, i32, i32) {
    %c0_i32 = arith.constant 0 : i32
    %c0_i32_0 = arith.constant 0 : i32
    return %arg0, %arg1, %c0_i32 : i32, i32, i32
  }
  func.func @transform_4(%arg0: i32, %arg1: i32) -> (i32, i32, i32) {
    %c0_i32 = arith.constant 0 : i32
    %c0_i32_0 = arith.constant 0 : i32
    return %arg0, %arg1, %c0_i32 : i32, i32, i32
  }
}

</mosaic_0001>

<llo_original>
// kernel: encoder_forward.22
$region0: #{encoder_forward.22}
  #allocation0 [shape = 'u32[]', space=smem, size = 0x4, offset = 0x4, fixed_abs, tag = 'smem constant byte address 0x4 - core index']
  #allocation1 [shape = 'u32[144,128]{1,0:T(1,128)}', space=vmem, size = 0x12000, scoped, tag = 'internal scratch']
  #allocation2 [shape = 'f32[1,1,8]{2,1,0:T(1,128)}', space=vmem, size = 0x200, scoped, tag = 'scratch operand']
  #allocation3 [shape = 'f32[1,1,8]{2,1,0:T(1,128)}', space=vmem, size = 0x200, scoped, tag = 'scratch operand']
  %s0 = inlined_call_operand.vmem [shape: f32[2,256,8], index: 0, kind: input, shape index: {}]
  %s1 = inlined_call_operand.vmem [shape: f32[2,1,8], index: 1, kind: output, shape index: {0}]
  %s2 = inlined_call_operand.vmem [shape: f32[2,1,8], index: 2, kind: output, shape index: {1}]
  %3 = xla_tuple %s1, %s2
  %s4 = sld [smem:[#allocation0]]
  $region53: #{encoder_forward.22} parent=0
    _
  %s6 = ssub.s32 1, %s4
  %s7 = scalar_select 0, %s6, %s4
  loop: start=0, step=1, limit=4
  $region2: #{encoder_forward.22} parent=0 // loop_pre_header
    _
  $region3: #{encoder_forward.22} parent=0 // loop_header
    %s9 = sphi 0, %s13
    %p10 = scmp.ge.s32.totalorder %s9, 4
    %s16 = sphi 0, %s28
    %s17 = sphi 0, %s24
    %s18 = sphi 0, %s16
    %s19 = sphi 0, %s17
    %s20 = sphi 0, %s18
    %s21 = sphi 0, %s19
    %s33 = sphi 0, %s35
    %s36 = sphi 0, %s33
    %s37 = sphi 0, %s36
    %s53 = sphi 0, %s37
    %s59 = sphi 0, %s61
    %s62 = sphi 0, %s59
    %s63 = sphi 0, %s62
    %s79 = sphi 0, %s63
    %s85 = sphi 0, %s87
    %s88 = sphi 0, %s85
    %s89 = sphi 0, %s88
    %s105 = sphi 0, %s89
  $region4: #{encoder_forward.22} parent=0 // loop_header_branch
    %12 = sbr.rel (%p10) target = $region8
  $region5: #{encoder_forward.22} parent=0 // loop_body
    %s14 = ssub.s32 %s9, 1
    %s15 = ssub.s32 %s9, 2
    %s22 = sadd.s32 1, %s17
    %p23 = scmp.ge.s32.totalorder %s22, 1
    %s24 = scalar_select %p23, 0, %s22
    %s25 = sadd.s32 1, %s16
    %s26 = scalar_select %p23, %s25, %s16
    %p27 = scmp.ge.s32.totalorder %s26, 2
    %s28 = scalar_select %p27, 0, %s26
    %s29 = ssub.s32 %s16, %s28
    %s30 = ssub.s32 %s17, %s24
    %s31 = sor.u32 %s29, %s30
    %p32 = scmp.eq.s32.totalorder %s31, 0
    %s34 = sadd.s32 %s33, 1
    %s35 = scalar_select %p32, %s33, %s34
    %p38 = pneg %p32
    %p39 = scmp.eq.s32.totalorder %s9, 1
    %p40 = por %p38, %p39
    %p41 = scmp.ne.s32.totalorder %s33, %s36
    %p42 = scmp.eq.s32.totalorder %s9, 0
    %p43 = por %p41, %p42
    %p44 = scmp.ne.s32.totalorder %s33, %s36
    %p45 = scmp.eq.s32.totalorder %s14, 1
    %p46 = por %p44, %p45
    %p47 = scmp.ne.s32.totalorder %s36, %s37
    %p48 = scmp.eq.s32.totalorder %s14, 0
    %p49 = por %p47, %p48
    %p50 = scmp.ne.s32.totalorder %s36, %s37
    %p51 = scmp.eq.s32.totalorder %s15, 1
    %p52 = por %p50, %p51
    %p54 = scmp.ne.s32.totalorder %s37, %s53
    %p55 = scmp.eq.s32.totalorder %s15, 0
    %p56 = por %p54, %p55
    %s57 = ssub.s32 %s16, %s28
    %p58 = scmp.eq.s32.totalorder %s57, 0
    %s60 = sadd.s32 %s59, 1
    %s61 = scalar_select %p58, %s59, %s60
    %p64 = pneg %p58
    %p65 = scmp.eq.s32.totalorder %s9, 1
    %p66 = por %p64, %p65
    %p67 = scmp.ne.s32.totalorder %s59, %s62
    %p68 = scmp.eq.s32.totalorder %s9, 0
    %p69 = por %p67, %p68
    %p70 = scmp.ne.s32.totalorder %s59, %s62
    %p71 = scmp.eq.s32.totalorder %s14, 1
    %p72 = por %p70, %p71
    %p73 = scmp.ne.s32.totalorder %s62, %s63
    %p74 = scmp.eq.s32.totalorder %s14, 0
    %p75 = por %p73, %p74
    %p76 = scmp.ne.s32.totalorder %s62, %s63
    %p77 = scmp.eq.s32.totalorder %s15, 1
    %p78 = por %p76, %p77
    %p80 = scmp.ne.s32.totalorder %s63, %s79
    %p81 = scmp.eq.s32.totalorder %s15, 0
    %p82 = por %p80, %p81
    %s83 = ssub.s32 %s16, %s28
    %p84 = scmp.eq.s32.totalorder %s83, 0
    %s86 = sadd.s32 %s85, 1
    %s87 = scalar_select %p84, %s85, %s86
    %p90 = pneg %p84
    %p91 = scmp.eq.s32.totalorder %s9, 1
    %p92 = por %p90, %p91
    %p93 = scmp.ne.s32.totalorder %s85, %s88
    %p94 = scmp.eq.s32.totalorder %s9, 0
    %p95 = por %p93, %p94
    %p96 = scmp.ne.s32.totalorder %s85, %s88
    %p97 = scmp.eq.s32.totalorder %s14, 1
    %p98 = por %p96, %p97
    %p99 = scmp.ne.s32.totalorder %s88, %s89
    %p100 = scmp.eq.s32.totalorder %s14, 0
    %p101 = por %p99, %p100
    %p102 = scmp.ne.s32.totalorder %s88, %s89
    %p103 = scmp.eq.s32.totalorder %s15, 1
    %p104 = por %p102, %p103
    %p106 = scmp.ne.s32.totalorder %s89, %s105
    %p107 = scmp.eq.s32.totalorder %s15, 0
    %p108 = por %p106, %p107
    %p109 = scmp.le.s32.totalorder 1, %s9
    %p110 = scmp.lt.s32.totalorder %s9, 3
    %p111 = pnand %p109, %p110
    %p112 = pneg %p111
    // Predicated region
    $region9: #{encoder_forward.22} parent=5 // pred_check
      _
    $region10: #{encoder_forward.22} parent=5 // pred_check_branch
      %114 = sbr.rel (%p111) target = $region12
    $region11: #{encoder_forward.22} parent=5 // pred_region
      %s115 = ssub.s32 %s9, 1
    $region12: #{encoder_forward.22} parent=5 // pred_fallthru
      _
    %p116 = scmp.lt.s32.totalorder %s9, 2
    // Predicated region
    $region13: #{encoder_forward.22} parent=5 // pred_check
      %p117 = pneg %p116
    $region14: #{encoder_forward.22} parent=5 // pred_check_branch
      %119 = sbr.rel (%p117) target = $region16
    $region15: #{encoder_forward.22} parent=5 // pred_region
      // Predicated region
      $region17: #{encoder_forward.22} parent=15 // pred_check
        %p120 = pneg %p43
      $region18: #{encoder_forward.22} parent=15 // pred_check_branch
        %122 = sbr.rel (%p120) target = $region20
      $region19: #{encoder_forward.22} parent=15 // pred_region
        %s123 = smul.u32 32, %s17
        %p124 = scmp.lt.s32.totalorder %s16, 1
        %s125 = scalar_select %p124, %s16, 1
        %p126 = scmp.lt.s32.totalorder %s123, 31
        %s127 = scalar_select %p126, %s123, 31
        %s128 = smul.addr %s125, 32
        %s129 = sadd.s32 %s127, %s128
        %s130 = smul.addr %s129, 8
        %s131 = scalar_lea.vmem %s0, %s130
        %s132 = smul.u32 32, %s17
      $region20: #{encoder_forward.22} parent=15 // pred_fallthru
        _
    $region16: #{encoder_forward.22} parent=5 // pred_fallthru
      _
    %p133 = scmp.le.s32.totalorder 1, %s9
    %p134 = scmp.lt.s32.totalorder %s9, 3
    %p135 = pnand %p133, %p134
    %p136 = pneg %p135
    // Predicated region
    $region21: #{encoder_forward.22} parent=5 // pred_check
      _
    $region22: #{encoder_forward.22} parent=5 // pred_check_branch
      %138 = sbr.rel (%p135) target = $region24
    $region23: #{encoder_forward.22} parent=5 // pred_region
      %s139 = ssub.s32 %s9, 1
      %s140 = smul.u32 32, %s19
      %p141 = scmp.lt.s32.totalorder %s18, 1
      %s142 = scalar_select %p141, %s18, 1
      %p143 = scmp.lt.s32.totalorder %s140, 31
      %s144 = scalar_select %p143, %s140, 31
      %s145 = smul.addr %s142, 32
      %s146 = sadd.s32 %s144, %s145
      %s147 = smul.addr %s146, 8
      %s148 = scalar_lea.vmem %s0, %s147
      %p149 = pneg %p49
      %p150 = pneg %p46
      %p151 = pneg %p75
      %p152 = pneg %p72
      %p153 = scmp.lt.s32.totalorder %s18, 1
      %s154 = scalar_select %p153, %s18, 1
      %s155 = scalar_lea.vmem %s1, %s154
      %p156 = pneg %p101
      %p157 = pneg %p98
      %p158 = scmp.lt.s32.totalorder %s18, 1
      %s159 = scalar_select %p158, %s18, 1
      %s160 = scalar_lea.vmem %s2, %s159
      %s161 = smul.u32 32, %s19
      %p162 = scmp.lt.s32.totalorder %s18, 1
      %s163 = scalar_select %p162, %s18, 1
      %p164 = scmp.lt.s32.totalorder %s161, 31
      %s165 = scalar_select %p164, %s161, 31
      %s166 = smul.addr %s163, 32
      %s167 = sadd.s32 %s165, %s166
      %s168 = smul.addr %s167, 8
      %s169 = scalar_lea.vmem %s0, %s168
      %s170 = smul.u32 32, %s19
      %p171 = scmp.lt.s32.totalorder %s18, 1
      %s172 = scalar_select %p171, %s18, 1
      %s173 = scalar_lea.vmem %s1, %s172
      %p174 = scmp.lt.s32.totalorder %s18, 1
      %s175 = scalar_select %p174, %s18, 1
      %s176 = scalar_lea.vmem %s2, %s175
      %p177 = scmp.eq.s32.totalorder %s19, 0
      // Predicated region
      $region25: #{encoder_forward.22} parent=23 // pred_check
        %p178 = pneg %p177
      $region26: #{encoder_forward.22} parent=23 // pred_check_branch
        %180 = sbr.rel (%p178) target = $region28
      $region27: #{encoder_forward.22} parent=23 // pred_region
        %vm181 = vcmask 57344
        %182 = vst.msk [vmem:[#allocation2] sm:$0x1] %vm181, 0.0
        %183 = vst.msk [vmem:[#allocation3] sm:$0x1] %vm181, 0.0
      $region28: #{encoder_forward.22} parent=23 // pred_fallthru
        _
      %v184 = vld [vmem:[%s169] sm:$0xff]
      %v185 = vld [vmem:[%s169 + $0x8] sm:$0xff]
      %v186 = vld [vmem:[%s169 + $0x10] sm:$0xff]
      %v187 = vld [vmem:[%s169 + $0x18] sm:$0xff]
      %v188 = vld [vmem:[%s169 + $0x20] sm:$0xff]
      %v189 = vld [vmem:[%s169 + $0x28] sm:$0xff]
      %v190 = vld [vmem:[%s169 + $0x30] sm:$0xff]
      %v191 = vld [vmem:[%s169 + $0x38] sm:$0xff]
      %v192 = vld [vmem:[%s169 + $0x40] sm:$0xff]
      %v193 = vld [vmem:[%s169 + $0x48] sm:$0xff]
      %v194 = vld [vmem:[%s169 + $0x50] sm:$0xff]
      %v195 = vld [vmem:[%s169 + $0x58] sm:$0xff]
      %v196 = vld [vmem:[%s169 + $0x60] sm:$0xff]
      %v197 = vld [vmem:[%s169 + $0x68] sm:$0xff]
      %v198 = vld [vmem:[%s169 + $0x70] sm:$0xff]
      %v199 = vld [vmem:[%s169 + $0x78] sm:$0xff]
      %v200 = vld [vmem:[%s169 + $0x80] sm:$0xff]
      %v201 = vld [vmem:[%s169 + $0x88] sm:$0xff]
      %v202 = vld [vmem:[%s169 + $0x90] sm:$0xff]
      %v203 = vld [vmem:[%s169 + $0x98] sm:$0xff]
      %v204 = vld [vmem:[%s169 + $0xa0] sm:$0xff]
      %v205 = vld [vmem:[%s169 + $0xa8] sm:$0xff]
      %v206 = vld [vmem:[%s169 + $0xb0] sm:$0xff]
      %v207 = vld [vmem:[%s169 + $0xb8] sm:$0xff]
      %v208 = vld [vmem:[%s169 + $0xc0] sm:$0xff]
      %v209 = vld [vmem:[%s169 + $0xc8] sm:$0xff]
      %v210 = vld [vmem:[%s169 + $0xd0] sm:$0xff]
      %v211 = vld [vmem:[%s169 + $0xd8] sm:$0xff]
      %v212 = vld [vmem:[%s169 + $0xe0] sm:$0xff]
      %v213 = vld [vmem:[%s169 + $0xe8] sm:$0xff]
      %v214 = vld [vmem:[%s169 + $0xf0] sm:$0xff]
      %v215 = vld [vmem:[%s169 + $0xf8] sm:$0xff]
      %v216 = vld [vmem:[#allocation2] sm:$0x1]
      %vm217 = vcmask 64512
      %v218 = vsel %vm217, %v184, 0.0
      %v219 = vsel %vm217, %v185, 0.0
      %v220 = vadd.f32 %v218, %v219
      %v221 = vsel %vm217, %v186, 0.0
      %v222 = vadd.f32 %v220, %v221
      %v223 = vsel %vm217, %v187, 0.0
      %v224 = vadd.f32 %v222, %v223
      %v225 = vsel %vm217, %v188, 0.0
      %v226 = vadd.f32 %v224, %v225
      %v227 = vsel %vm217, %v189, 0.0
      %v228 = vadd.f32 %v226, %v227
      %v229 = vsel %vm217, %v190, 0.0
      %v230 = vadd.f32 %v228, %v229
      %v231 = vsel %vm217, %v191, 0.0
      %v232 = vadd.f32 %v230, %v231
      %v233 = vsel %vm217, %v192, 0.0
      %v234 = vadd.f32 %v232, %v233
      %v235 = vsel %vm217, %v193, 0.0
      %v236 = vadd.f32 %v234, %v235
      %v237 = vsel %vm217, %v194, 0.0
      %v238 = vadd.f32 %v236, %v237
      %v239 = vsel %vm217, %v195, 0.0
      %v240 = vadd.f32 %v238, %v239
      %v241 = vsel %vm217, %v196, 0.0
      %v242 = vadd.f32 %v240, %v241
      %v243 = vsel %vm217, %v197, 0.0
      %v244 = vadd.f32 %v242, %v243
      %v245 = vsel %vm217, %v198, 0.0
      %v246 = vadd.f32 %v244, %v245
      %v247 = vsel %vm217, %v199, 0.0
      %v248 = vadd.f32 %v246, %v247
      %v249 = vsel %vm217, %v200, 0.0
      %v250 = vadd.f32 %v248, %v249
      %v251 = vsel %vm217, %v201, 0.0
      %v252 = vadd.f32 %v250, %v251
      %v253 = vsel %vm217, %v202, 0.0
      %v254 = vadd.f32 %v252, %v253
      %v255 = vsel %vm217, %v203, 0.0
      %v256 = vadd.f32 %v254, %v255
      %v257 = vsel %vm217, %v204, 0.0
      %v258 = vadd.f32 %v256, %v257
      %v259 = vsel %vm217, %v205, 0.0
      %v260 = vadd.f32 %v258, %v259
      %v261 = vsel %vm217, %v206, 0.0
      %v262 = vadd.f32 %v260, %v261
      %v263 = vsel %vm217, %v207, 0.0
      %v264 = vadd.f32 %v262, %v263
      %v265 = vsel %vm217, %v208, 0.0
      %v266 = vadd.f32 %v264, %v265
      %v267 = vsel %vm217, %v209, 0.0
      %v268 = vadd.f32 %v266, %v267
      %v269 = vsel %vm217, %v210, 0.0
      %v270 = vadd.f32 %v268, %v269
      %v271 = vsel %vm217, %v211, 0.0
      %v272 = vadd.f32 %v270, %v271
      %v273 = vsel %vm217, %v212, 0.0
      %v274 = vadd.f32 %v272, %v273
      %v275 = vsel %vm217, %v213, 0.0
      %v276 = vadd.f32 %v274, %v275
      %v277 = vsel %vm217, %v214, 0.0
      %v278 = vadd.f32 %v276, %v277
      %v279 = vsel %vm217, %v215, 0.0
      %v280 = vadd.f32 %v278, %v279
      %v281 = vrot.slane %v280, 4
      %v282 = vadd.f32 %v280, %v281
      %v283 = vrot.slane %v282, 2
      %v284 = vadd.f32 %v282, %v283
      %v285 = vrot.slane %v284, 1
      %v286 = vadd.f32 %v284, %v285
      %v287 = vadd.f32 %v216, %v286
      %vm288 = vcmask 57344
      %289 = vst.msk [vmem:[#allocation2] sm:$0x1] %vm288, %v287
      %v290 = vld [vmem:[#allocation3] sm:$0x1]
      %v291 = vmul.f32 %v184, %v184
      %v292 = vmul.f32 %v185, %v185
      %v293 = vmul.f32 %v186, %v186
      %v294 = vmul.f32 %v187, %v187
      %v295 = vmul.f32 %v188, %v188
      %v296 = vmul.f32 %v189, %v189
      %v297 = vmul.f32 %v190, %v190
      %v298 = vmul.f32 %v191, %v191
      %v299 = vmul.f32 %v192, %v192
      %v300 = vmul.f32 %v193, %v193
      %v301 = vmul.f32 %v194, %v194
      %v302 = vmul.f32 %v195, %v195
      %v303 = vmul.f32 %v196, %v196
      %v304 = vmul.f32 %v197, %v197
      %v305 = vmul.f32 %v198, %v198
      %v306 = vmul.f32 %v199, %v199
      %v307 = vmul.f32 %v200, %v200
      %v308 = vmul.f32 %v201, %v201
      %v309 = vmul.f32 %v202, %v202
      %v310 = vmul.f32 %v203, %v203
      %v311 = vmul.f32 %v204, %v204
      %v312 = vmul.f32 %v205, %v205
      %v313 = vmul.f32 %v206, %v206
      %v314 = vmul.f32 %v207, %v207
      %v315 = vmul.f32 %v208, %v208
      %v316 = vmul.f32 %v209, %v209
      %v317 = vmul.f32 %v210, %v210
      %v318 = vmul.f32 %v211, %v211
      %v319 = vmul.f32 %v212, %v212
      %v320 = vmul.f32 %v213, %v213
      %v321 = vmul.f32 %v214, %v214
      %v322 = vmul.f32 %v215, %v215
      %v323 = vsel %vm217, %v291, 0.0
      %v324 = vsel %vm217, %v292, 0.0
      %v325 = vadd.f32 %v323, %v324
      %v326 = vsel %vm217, %v293, 0.0
      %v327 = vadd.f32 %v325, %v326
      %v328 = vsel %vm217, %v294, 0.0
      %v329 = vadd.f32 %v327, %v328
      %v330 = vsel %vm217, %v295, 0.0
      %v331 = vadd.f32 %v329, %v330
      %v332 = vsel %vm217, %v296, 0.0
      %v333 = vadd.f32 %v331, %v332
      %v334 = vsel %vm217, %v297, 0.0
      %v335 = vadd.f32 %v333, %v334
      %v336 = vsel %vm217, %v298, 0.0
      %v337 = vadd.f32 %v335, %v336
      %v338 = vsel %vm217, %v299, 0.0
      %v339 = vadd.f32 %v337, %v338
      %v340 = vsel %vm217, %v300, 0.0
      %v341 = vadd.f32 %v339, %v340
      %v342 = vsel %vm217, %v301, 0.0
      %v343 = vadd.f32 %v341, %v342
      %v344 = vsel %vm217, %v302, 0.0
      %v345 = vadd.f32 %v343, %v344
      %v346 = vsel %vm217, %v303, 0.0
      %v347 = vadd.f32 %v345, %v346
      %v348 = vsel %vm217, %v304, 0.0
      %v349 = vadd.f32 %v347, %v348
      %v350 = vsel %vm217, %v305, 0.0
      %v351 = vadd.f32 %v349, %v350
      %v352 = vsel %vm217, %v306, 0.0
      %v353 = vadd.f32 %v351, %v352
      %v354 = vsel %vm217, %v307, 0.0
      %v355 = vadd.f32 %v353, %v354
      %v356 = vsel %vm217, %v308, 0.0
      %v357 = vadd.f32 %v355, %v356
      %v358 = vsel %vm217, %v309, 0.0
      %v359 = vadd.f32 %v357, %v358
      %v360 = vsel %vm217, %v310, 0.0
      %v361 = vadd.f32 %v359, %v360
      %v362 = vsel %vm217, %v311, 0.0
      %v363 = vadd.f32 %v361, %v362
      %v364 = vsel %vm217, %v312, 0.0
      %v365 = vadd.f32 %v363, %v364
      %v366 = vsel %vm217, %v313, 0.0
      %v367 = vadd.f32 %v365, %v366
      %v368 = vsel %vm217, %v314, 0.0
      %v369 = vadd.f32 %v367, %v368
      %v370 = vsel %vm217, %v315, 0.0
      %v371 = vadd.f32 %v369, %v370
      %v372 = vsel %vm217, %v316, 0.0
      %v373 = vadd.f32 %v371, %v372
      %v374 = vsel %vm217, %v317, 0.0
      %v375 = vadd.f32 %v373, %v374
      %v376 = vsel %vm217, %v318, 0.0
      %v377 = vadd.f32 %v375, %v376
      %v378 = vsel %vm217, %v319, 0.0
      %v379 = vadd.f32 %v377, %v378
      %v380 = vsel %vm217, %v320, 0.0
      %v381 = vadd.f32 %v379, %v380
      %v382 = vsel %vm217, %v321, 0.0
      %v383 = vadd.f32 %v381, %v382
      %v384 = vsel %vm217, %v322, 0.0
      %v385 = vadd.f32 %v383, %v384
      %v386 = vrot.slane %v385, 4
      %v387 = vadd.f32 %v385, %v386
      %v388 = vrot.slane %v387, 2
      %v389 = vadd.f32 %v387, %v388
      %v390 = vrot.slane %v389, 1
      %v391 = vadd.f32 %v389, %v390
      %v392 = vadd.f32 %v290, %v391
      %393 = vst.msk [vmem:[#allocation3] sm:$0x1] %vm288, %v392
      // Predicated region
      $region29: #{encoder_forward.22} parent=23 // pred_check
        %p394 = pneg %p177
      $region30: #{encoder_forward.22} parent=23 // pred_check_branch
        %396 = sbr.rel (%p394) target = $region32
      $region31: #{encoder_forward.22} parent=23 // pred_region
        %v397 = vld [vmem:[#allocation2] sm:$0x1]
        %v398 = vmul.f32 %v397, 0.00390625
        %v399 = vld [vmem:[#allocation3] sm:$0x1]
        %v400 = vmul.f32 %v399, 0.00390625
        %v401 = vmul.f32 %v398, %v398
        %v402 = vsub.f32 %v400, %v401
        %403 = vst.msk [vmem:[%s173] sm:$0x1] %vm288, %v398
        %v404 = vmax.f32 %v402, 0.0
        %v405 = vadd.f32 %v404, 1e-05
        %v406 = vrsqrt.pop %v405
        %407 = vst.msk [vmem:[%s176] sm:$0x1] %vm288, %v406
      $region32: #{encoder_forward.22} parent=23 // pred_fallthru
        _
      %p408 = scmp.lt.s32.totalorder %s18, 1
      %s409 = scalar_select %p408, %s18, 1
      %s410 = scalar_lea.vmem %s1, %s409
      %p411 = scmp.lt.s32.totalorder %s18, 1
      %s412 = scalar_select %p411, %s18, 1
      %s413 = scalar_lea.vmem %s2, %s412
      // Predicated region
      $region33: #{encoder_forward.22} parent=23 // pred_check
        %p414 = pneg %p72
      $region34: #{encoder_forward.22} parent=23 // pred_check_branch
        %416 = sbr.rel (%p414) target = $region36
      $region35: #{encoder_forward.22} parent=23 // pred_region
        _
      $region36: #{encoder_forward.22} parent=23 // pred_fallthru
        _
      // Predicated region
      $region37: #{encoder_forward.22} parent=23 // pred_check
        %p417 = pneg %p98
      $region38: #{encoder_forward.22} parent=23 // pred_check_branch
        %419 = sbr.rel (%p417) target = $region40
      $region39: #{encoder_forward.22} parent=23 // pred_region
        _
      $region40: #{encoder_forward.22} parent=23 // pred_fallthru
        _
    $region24: #{encoder_forward.22} parent=5 // pred_fallthru
      _
    %p420 = scmp.le.s32.totalorder 2, %s9
    // Predicated region
    $region41: #{encoder_forward.22} parent=5 // pred_check
      %p421 = pneg %p420
    $region42: #{encoder_forward.22} parent=5 // pred_check_branch
      %423 = sbr.rel (%p421) target = $region44
    $region43: #{encoder_forward.22} parent=5 // pred_region
      %s424 = ssub.s32 %s9, 2
      // Predicated region
      $region45: #{encoder_forward.22} parent=43 // pred_check
        %p425 = pneg %p78
      $region46: #{encoder_forward.22} parent=43 // pred_check_branch
        %427 = sbr.rel (%p425) target = $region48
      $region47: #{encoder_forward.22} parent=43 // pred_region
        %p428 = scmp.lt.s32.totalorder %s20, 1
        %s429 = scalar_select %p428, %s20, 1
        %s430 = scalar_lea.vmem %s1, %s429
      $region48: #{encoder_forward.22} parent=43 // pred_fallthru
        _
      // Predicated region
      $region49: #{encoder_forward.22} parent=43 // pred_check
        %p431 = pneg %p104
      $region50: #{encoder_forward.22} parent=43 // pred_check_branch
        %433 = sbr.rel (%p431) target = $region52
      $region51: #{encoder_forward.22} parent=43 // pred_region
        %p434 = scmp.lt.s32.totalorder %s20, 1
        %s435 = scalar_select %p434, %s20, 1
        %s436 = scalar_lea.vmem %s2, %s435
      $region52: #{encoder_forward.22} parent=43 // pred_fallthru
        _
    $region44: #{encoder_forward.22} parent=5 // pred_fallthru
      _
  $region6: #{encoder_forward.22} parent=0 // loop_footer
    %s13 = sadd.s32 1, %s9
  $region7: #{encoder_forward.22} parent=0 // loop_footer_branch
    %8 = sbr.rel target = $region3
  $region8: #{encoder_forward.22} parent=0 // loop_exit
    _

// kernel: encoder_forward.23
$region0: #{encoder_forward.23}
  #allocation0 [shape = 'u32[]', space=smem, size = 0x4, offset = 0x4, fixed_abs, tag = 'smem constant byte address 0x4 - core index']
  #allocation1 [shape = 'u32[144,128]{1,0:T(1,128)}', space=vmem, size = 0x12000, scoped, tag = 'internal scratch']
  %s0 = inlined_call_operand.vmem [shape: f32[2,256,8], index: 0, kind: input, shape index: {}]
  %s1 = inlined_call_operand.vmem [shape: f32[2,1,8], index: 1, kind: input, shape index: {}]
  %s2 = inlined_call_operand.vmem [shape: f32[2,1,8], index: 2, kind: input, shape index: {}]
  %s3 = inlined_call_operand.vmem [shape: f32[2,256,8], index: 3, kind: output, shape index: {}]
  %s4 = sld [smem:[#allocation0]]
  $region45: #{encoder_forward.23} parent=0
    _
  %s6 = ssub.s32 1, %s4
  %s7 = scalar_select 0, %s6, %s4
  loop: start=0, step=1, limit=4
  $region2: #{encoder_forward.23} parent=0 // loop_pre_header
    _
  $region3: #{encoder_forward.23} parent=0 // loop_header
    %s9 = sphi 0, %s13
    %p10 = scmp.ge.s32.totalorder %s9, 4
    %s16 = sphi 0, %s28
    %s17 = sphi 0, %s24
    %s18 = sphi 0, %s16
    %s19 = sphi 0, %s17
    %s20 = sphi 0, %s18
    %s21 = sphi 0, %s19
    %s33 = sphi 0, %s35
    %s36 = sphi 0, %s33
    %s37 = sphi 0, %s36
    %s53 = sphi 0, %s37
    %s59 = sphi 0, %s61
    %s62 = sphi 0, %s59
    %s63 = sphi 0, %s62
    %s79 = sphi 0, %s63
    %s85 = sphi 0, %s87
    %s88 = sphi 0, %s85
    %s89 = sphi 0, %s88
    %s105 = sphi 0, %s89
    %s113 = sphi 0, %s115
    %s116 = sphi 0, %s113
    %s117 = sphi 0, %s116
    %s133 = sphi 0, %s117
  $region4: #{encoder_forward.23} parent=0 // loop_header_branch
    %12 = sbr.rel (%p10) target = $region8
  $region5: #{encoder_forward.23} parent=0 // loop_body
    %s14 = ssub.s32 %s9, 1
    %s15 = ssub.s32 %s9, 2
    %s22 = sadd.s32 1, %s17
    %p23 = scmp.ge.s32.totalorder %s22, 1
    %s24 = scalar_select %p23, 0, %s22
    %s25 = sadd.s32 1, %s16
    %s26 = scalar_select %p23, %s25, %s16
    %p27 = scmp.ge.s32.totalorder %s26, 2
    %s28 = scalar_select %p27, 0, %s26
    %s29 = ssub.s32 %s16, %s28
    %s30 = ssub.s32 %s17, %s24
    %s31 = sor.u32 %s29, %s30
    %p32 = scmp.eq.s32.totalorder %s31, 0
    %s34 = sadd.s32 %s33, 1
    %s35 = scalar_select %p32, %s33, %s34
    %p38 = pneg %p32
    %p39 = scmp.eq.s32.totalorder %s9, 1
    %p40 = por %p38, %p39
    %p41 = scmp.ne.s32.totalorder %s33, %s36
    %p42 = scmp.eq.s32.totalorder %s9, 0
    %p43 = por %p41, %p42
    %p44 = scmp.ne.s32.totalorder %s33, %s36
    %p45 = scmp.eq.s32.totalorder %s14, 1
    %p46 = por %p44, %p45
    %p47 = scmp.ne.s32.totalorder %s36, %s37
    %p48 = scmp.eq.s32.totalorder %s14, 0
    %p49 = por %p47, %p48
    %p50 = scmp.ne.s32.totalorder %s36, %s37
    %p51 = scmp.eq.s32.totalorder %s15, 1
    %p52 = por %p50, %p51
    %p54 = scmp.ne.s32.totalorder %s37, %s53
    %p55 = scmp.eq.s32.totalorder %s15, 0
    %p56 = por %p54, %p55
    %s57 = ssub.s32 %s16, %s28
    %p58 = scmp.eq.s32.totalorder %s57, 0
    %s60 = sadd.s32 %s59, 1
    %s61 = scalar_select %p58, %s59, %s60
    %p64 = pneg %p58
    %p65 = scmp.eq.s32.totalorder %s9, 1
    %p66 = por %p64, %p65
    %p67 = scmp.ne.s32.totalorder %s59, %s62
    %p68 = scmp.eq.s32.totalorder %s9, 0
    %p69 = por %p67, %p68
    %p70 = scmp.ne.s32.totalorder %s59, %s62
    %p71 = scmp.eq.s32.totalorder %s14, 1
    %p72 = por %p70, %p71
    %p73 = scmp.ne.s32.totalorder %s62, %s63
    %p74 = scmp.eq.s32.totalorder %s14, 0
    %p75 = por %p73, %p74
    %p76 = scmp.ne.s32.totalorder %s62, %s63
    %p77 = scmp.eq.s32.totalorder %s15, 1
    %p78 = por %p76, %p77
    %p80 = scmp.ne.s32.totalorder %s63, %s79
    %p81 = scmp.eq.s32.totalorder %s15, 0
    %p82 = por %p80, %p81
    %s83 = ssub.s32 %s16, %s28
    %p84 = scmp.eq.s32.totalorder %s83, 0
    %s86 = sadd.s32 %s85, 1
    %s87 = scalar_select %p84, %s85, %s86
    %p90 = pneg %p84
    %p91 = scmp.eq.s32.totalorder %s9, 1
    %p92 = por %p90, %p91
    %p93 = scmp.ne.s32.totalorder %s85, %s88
    %p94 = scmp.eq.s32.totalorder %s9, 0
    %p95 = por %p93, %p94
    %p96 = scmp.ne.s32.totalorder %s85, %s88
    %p97 = scmp.eq.s32.totalorder %s14, 1
    %p98 = por %p96, %p97
    %p99 = scmp.ne.s32.totalorder %s88, %s89
    %p100 = scmp.eq.s32.totalorder %s14, 0
    %p101 = por %p99, %p100
    %p102 = scmp.ne.s32.totalorder %s88, %s89
    %p103 = scmp.eq.s32.totalorder %s15, 1
    %p104 = por %p102, %p103
    %p106 = scmp.ne.s32.totalorder %s89, %s105
    %p107 = scmp.eq.s32.totalorder %s15, 0
    %p108 = por %p106, %p107
    %s109 = ssub.s32 %s16, %s28
    %s110 = ssub.s32 %s17, %s24
    %s111 = sor.u32 %s109, %s110
    %p112 = scmp.eq.s32.totalorder %s111, 0
    %s114 = sadd.s32 %s113, 1
    %s115 = scalar_select %p112, %s113, %s114
    %p118 = pneg %p112
    %p119 = scmp.eq.s32.totalorder %s9, 1
    %p120 = por %p118, %p119
    %p121 = scmp.ne.s32.totalorder %s113, %s116
    %p122 = scmp.eq.s32.totalorder %s9, 0
    %p123 = por %p121, %p122
    %p124 = scmp.ne.s32.totalorder %s113, %s116
    %p125 = scmp.eq.s32.totalorder %s14, 1
    %p126 = por %p124, %p125
    %p127 = scmp.ne.s32.totalorder %s116, %s117
    %p128 = scmp.eq.s32.totalorder %s14, 0
    %p129 = por %p127, %p128
    %p130 = scmp.ne.s32.totalorder %s116, %s117
    %p131 = scmp.eq.s32.totalorder %s15, 1
    %p132 = por %p130, %p131
    %p134 = scmp.ne.s32.totalorder %s117, %s133
    %p135 = scmp.eq.s32.totalorder %s15, 0
    %p136 = por %p134, %p135
    %p137 = scmp.le.s32.totalorder 1, %s9
    %p138 = scmp.lt.s32.totalorder %s9, 3
    %p139 = pnand %p137, %p138
    %p140 = pneg %p139
    // Predicated region
    $region9: #{encoder_forward.23} parent=5 // pred_check
      _
    $region10: #{encoder_forward.23} parent=5 // pred_check_branch
      %142 = sbr.rel (%p139) target = $region12
    $region11: #{encoder_forward.23} parent=5 // pred_region
      %s143 = ssub.s32 %s9, 1
    $region12: #{encoder_forward.23} parent=5 // pred_fallthru
      _
    %p144 = scmp.lt.s32.totalorder %s9, 2
    // Predicated region
    $region13: #{encoder_forward.23} parent=5 // pred_check
      %p145 = pneg %p144
    $region14: #{encoder_forward.23} parent=5 // pred_check_branch
      %147 = sbr.rel (%p145) target = $region16
    $region15: #{encoder_forward.23} parent=5 // pred_region
      // Predicated region
      $region17: #{encoder_forward.23} parent=15 // pred_check
        %p148 = pneg %p43
      $region18: #{encoder_forward.23} parent=15 // pred_check_branch
        %150 = sbr.rel (%p148) target = $region20
      $region19: #{encoder_forward.23} parent=15 // pred_region
        %s151 = smul.u32 32, %s17
        %p152 = scmp.lt.s32.totalorder %s16, 1
        %s153 = scalar_select %p152, %s16, 1
        %p154 = scmp.lt.s32.totalorder %s151, 31
        %s155 = scalar_select %p154, %s151, 31
        %s156 = smul.addr %s153, 32
        %s157 = sadd.s32 %s155, %s156
        %s158 = smul.addr %s157, 8
        %s159 = scalar_lea.vmem %s0, %s158
        %s160 = smul.u32 32, %s17
      $region20: #{encoder_forward.23} parent=15 // pred_fallthru
        _
      // Predicated region
      $region21: #{encoder_forward.23} parent=15 // pred_check
        %p161 = pneg %p69
      $region22: #{encoder_forward.23} parent=15 // pred_check_branch
        %163 = sbr.rel (%p161) target = $region24
      $region23: #{encoder_forward.23} parent=15 // pred_region
        %p164 = scmp.lt.s32.totalorder %s16, 1
        %s165 = scalar_select %p164, %s16, 1
        %s166 = scalar_lea.vmem %s1, %s165
      $region24: #{encoder_forward.23} parent=15 // pred_fallthru
        _
      // Predicated region
      $region25: #{encoder_forward.23} parent=15 // pred_check
        %p167 = pneg %p95
      $region26: #{encoder_forward.23} parent=15 // pred_check_branch
        %169 = sbr.rel (%p167) target = $region28
      $region27: #{encoder_forward.23} parent=15 // pred_region
        %p170 = scmp.lt.s32.totalorder %s16, 1
        %s171 = scalar_select %p170, %s16, 1
        %s172 = scalar_lea.vmem %s2, %s171
      $region28: #{encoder_forward.23} parent=15 // pred_fallthru
        _
    $region16: #{encoder_forward.23} parent=5 // pred_fallthru
      _
    %p173 = scmp.le.s32.totalorder 1, %s9
    %p174 = scmp.lt.s32.totalorder %s9, 3
    %p175 = pnand %p173, %p174
    %p176 = pneg %p175
    // Predicated region
    $region29: #{encoder_forward.23} parent=5 // pred_check
      _
    $region30: #{encoder_forward.23} parent=5 // pred_check_branch
      %178 = sbr.rel (%p175) target = $region32
    $region31: #{encoder_forward.23} parent=5 // pred_region
      %s179 = ssub.s32 %s9, 1
      %s180 = smul.u32 32, %s19
      %p181 = scmp.lt.s32.totalorder %s18, 1
      %s182 = scalar_select %p181, %s18, 1
      %p183 = scmp.lt.s32.totalorder %s180, 31
      %s184 = scalar_select %p183, %s180, 31
      %s185 = smul.addr %s182, 32
      %s186 = sadd.s32 %s184, %s185
      %s187 = smul.addr %s186, 8
      %s188 = scalar_lea.vmem %s0, %s187
      %p189 = pneg %p49
      %p190 = pneg %p46
      %p191 = scmp.lt.s32.totalorder %s18, 1
      %s192 = scalar_select %p191, %s18, 1
      %s193 = scalar_lea.vmem %s1, %s192
      %p194 = pneg %p75
      %p195 = pneg %p72
      %p196 = scmp.lt.s32.totalorder %s18, 1
      %s197 = scalar_select %p196, %s18, 1
      %s198 = scalar_lea.vmem %s2, %s197
      %p199 = pneg %p101
      %p200 = pneg %p98
      %p201 = pneg %p129
      %p202 = pneg %p126
      %s203 = smul.u32 32, %s19
      %p204 = scmp.lt.s32.totalorder %s18, 1
      %s205 = scalar_select %p204, %s18, 1
      %p206 = scmp.lt.s32.totalorder %s203, 31
      %s207 = scalar_select %p206, %s203, 31
      %s208 = smul.addr %s205, 32
      %s209 = sadd.s32 %s207, %s208
      %s210 = smul.addr %s209, 8
      %s211 = scalar_lea.vmem %s3, %s210
      %s212 = smul.u32 32, %s19
      %p213 = scmp.lt.s32.totalorder %s18, 1
      %s214 = scalar_select %p213, %s18, 1
      %p215 = scmp.lt.s32.totalorder %s212, 31
      %s216 = scalar_select %p215, %s212, 31
      %s217 = smul.addr %s214, 32
      %s218 = sadd.s32 %s216, %s217
      %s219 = smul.addr %s218, 8
      %s220 = scalar_lea.vmem %s0, %s219
      %s221 = smul.u32 32, %s19
      %p222 = scmp.lt.s32.totalorder %s18, 1
      %s223 = scalar_select %p222, %s18, 1
      %s224 = scalar_lea.vmem %s1, %s223
      %p225 = scmp.lt.s32.totalorder %s18, 1
      %s226 = scalar_select %p225, %s18, 1
      %s227 = scalar_lea.vmem %s2, %s226
      %s228 = smul.u32 32, %s19
      %p229 = scmp.lt.s32.totalorder %s18, 1
      %s230 = scalar_select %p229, %s18, 1
      %p231 = scmp.lt.s32.totalorder %s228, 31
      %s232 = scalar_select %p231, %s228, 31
      %s233 = smul.addr %s230, 32
      %s234 = sadd.s32 %s232, %s233
      %s235 = smul.addr %s234, 8
      %s236 = scalar_lea.vmem %s3, %s235
      %s237 = smul.u32 32, %s19
      %v238 = vld [vmem:[%s220] sm:$0xff]
      %v239 = vld [vmem:[%s220 + $0x8] sm:$0xff]
      %v240 = vld [vmem:[%s220 + $0x10] sm:$0xff]
      %v241 = vld [vmem:[%s220 + $0x18] sm:$0xff]
      %v242 = vld [vmem:[%s220 + $0x20] sm:$0xff]
      %v243 = vld [vmem:[%s220 + $0x28] sm:$0xff]
      %v244 = vld [vmem:[%s220 + $0x30] sm:$0xff]
      %v245 = vld [vmem:[%s220 + $0x38] sm:$0xff]
      %v246 = vld [vmem:[%s220 + $0x40] sm:$0xff]
      %v247 = vld [vmem:[%s220 + $0x48] sm:$0xff]
      %v248 = vld [vmem:[%s220 + $0x50] sm:$0xff]
      %v249 = vld [vmem:[%s220 + $0x58] sm:$0xff]
      %v250 = vld [vmem:[%s220 + $0x60] sm:$0xff]
      %v251 = vld [vmem:[%s220 + $0x68] sm:$0xff]
      %v252 = vld [vmem:[%s220 + $0x70] sm:$0xff]
      %v253 = vld [vmem:[%s220 + $0x78] sm:$0xff]
      %v254 = vld [vmem:[%s220 + $0x80] sm:$0xff]
      %v255 = vld [vmem:[%s220 + $0x88] sm:$0xff]
      %v256 = vld [vmem:[%s220 + $0x90] sm:$0xff]
      %v257 = vld [vmem:[%s220 + $0x98] sm:$0xff]
      %v258 = vld [vmem:[%s220 + $0xa0] sm:$0xff]
      %v259 = vld [vmem:[%s220 + $0xa8] sm:$0xff]
      %v260 = vld [vmem:[%s220 + $0xb0] sm:$0xff]
      %v261 = vld [vmem:[%s220 + $0xb8] sm:$0xff]
      %v262 = vld [vmem:[%s220 + $0xc0] sm:$0xff]
      %v263 = vld [vmem:[%s220 + $0xc8] sm:$0xff]
      %v264 = vld [vmem:[%s220 + $0xd0] sm:$0xff]
      %v265 = vld [vmem:[%s220 + $0xd8] sm:$0xff]
      %v266 = vld [vmem:[%s220 + $0xe0] sm:$0xff]
      %v267 = vld [vmem:[%s220 + $0xe8] sm:$0xff]
      %v268 = vld [vmem:[%s220 + $0xf0] sm:$0xff]
      %v269 = vld [vmem:[%s220 + $0xf8] sm:$0xff]
      %v270 = vld [vmem:[%s224] sm:$0x1]
      %v272 = vlaneseq
      %v273 = vshrl.u32 %v272, 7
      %v274 = vsub.s32 0, %v273
      %v275 = vrot.slane %v270, %v274
      %v277 = vsub.f32 %v238, %v275
      %v278 = vsub.f32 %v239, %v275
      %v279 = vsub.f32 %v240, %v275
      %v280 = vsub.f32 %v241, %v275
      %v281 = vsub.f32 %v242, %v275
      %v282 = vsub.f32 %v243, %v275
      %v283 = vsub.f32 %v244, %v275
      %v284 = vsub.f32 %v245, %v275
      %v285 = vsub.f32 %v246, %v275
      %v286 = vsub.f32 %v247, %v275
      %v287 = vsub.f32 %v248, %v275
      %v288 = vsub.f32 %v249, %v275
      %v289 = vsub.f32 %v250, %v275
      %v290 = vsub.f32 %v251, %v275
      %v291 = vsub.f32 %v252, %v275
      %v292 = vsub.f32 %v253, %v275
      %v293 = vsub.f32 %v254, %v275
      %v294 = vsub.f32 %v255, %v275
      %v295 = vsub.f32 %v256, %v275
      %v296 = vsub.f32 %v257, %v275
      %v297 = vsub.f32 %v258, %v275
      %v298 = vsub.f32 %v259, %v275
      %v299 = vsub.f32 %v260, %v275
      %v300 = vsub.f32 %v261, %v275
      %v301 = vsub.f32 %v262, %v275
      %v302 = vsub.f32 %v263, %v275
      %v303 = vsub.f32 %v264, %v275
      %v304 = vsub.f32 %v265, %v275
      %v305 = vsub.f32 %v266, %v275
      %v306 = vsub.f32 %v267, %v275
      %v307 = vsub.f32 %v268, %v275
      %v308 = vsub.f32 %v269, %v275
      %v309 = vld [vmem:[%s227] sm:$0x1]
      %v311 = vlaneseq
      %v312 = vshrl.u32 %v311, 7
      %v313 = vsub.s32 0, %v312
      %v314 = vrot.slane %v309, %v313
      %v316 = vmul.f32 %v277, %v314
      %v317 = vmul.f32 %v278, %v314
      %v318 = vmul.f32 %v279, %v314
      %v319 = vmul.f32 %v280, %v314
      %v320 = vmul.f32 %v281, %v314
      %v321 = vmul.f32 %v282, %v314
      %v322 = vmul.f32 %v283, %v314
      %v323 = vmul.f32 %v284, %v314
      %v324 = vmul.f32 %v285, %v314
      %v325 = vmul.f32 %v286, %v314
      %v326 = vmul.f32 %v287, %v314
      %v327 = vmul.f32 %v288, %v314
      %v328 = vmul.f32 %v289, %v314
      %v329 = vmul.f32 %v290, %v314
      %v330 = vmul.f32 %v291, %v314
      %v331 = vmul.f32 %v292, %v314
      %v332 = vmul.f32 %v293, %v314
      %v333 = vmul.f32 %v294, %v314
      %v334 = vmul.f32 %v295, %v314
      %v335 = vmul.f32 %v296, %v314
      %v336 = vmul.f32 %v297, %v314
      %v337 = vmul.f32 %v298, %v314
      %v338 = vmul.f32 %v299, %v314
      %v339 = vmul.f32 %v300, %v314
      %v340 = vmul.f32 %v301, %v314
      %v341 = vmul.f32 %v302, %v314
      %v342 = vmul.f32 %v303, %v314
      %v343 = vmul.f32 %v304, %v314
      %v344 = vmul.f32 %v305, %v314
      %v345 = vmul.f32 %v306, %v314
      %v346 = vmul.f32 %v307, %v314
      %v347 = vmul.f32 %v308, %v314
      %v348 = vmax.f32 %v316, 0.0
      %v349 = vmax.f32 %v317, 0.0
      %v350 = vmax.f32 %v318, 0.0
      %v351 = vmax.f32 %v319, 0.0
      %v352 = vmax.f32 %v320, 0.0
      %v353 = vmax.f32 %v321, 0.0
      %v354 = vmax.f32 %v322, 0.0
      %v355 = vmax.f32 %v323, 0.0
      %v356 = vmax.f32 %v324, 0.0
      %v357 = vmax.f32 %v325, 0.0
      %v358 = vmax.f32 %v326, 0.0
      %v359 = vmax.f32 %v327, 0.0
      %v360 = vmax.f32 %v328, 0.0
      %v361 = vmax.f32 %v329, 0.0
      %v362 = vmax.f32 %v330, 0.0
      %v363 = vmax.f32 %v331, 0.0
      %v364 = vmax.f32 %v332, 0.0
      %v365 = vmax.f32 %v333, 0.0
      %v366 = vmax.f32 %v334, 0.0
      %v367 = vmax.f32 %v335, 0.0
      %v368 = vmax.f32 %v336, 0.0
      %v369 = vmax.f32 %v337, 0.0
      %v370 = vmax.f32 %v338, 0.0
      %v371 = vmax.f32 %v339, 0.0
      %v372 = vmax.f32 %v340, 0.0
      %v373 = vmax.f32 %v341, 0.0
      %v374 = vmax.f32 %v342, 0.0
      %v375 = vmax.f32 %v343, 0.0
      %v376 = vmax.f32 %v344, 0.0
      %v377 = vmax.f32 %v345, 0.0
      %v378 = vmax.f32 %v346, 0.0
      %v379 = vmax.f32 %v347, 0.0
      %vm380 = vcmask 64512
      %381 = vst.msk [vmem:[%s236] sm:$0xff] %vm380, %v348
      %382 = vst.msk [vmem:[%s236 + $0x8] sm:$0xff] %vm380, %v349
      %383 = vst.msk [vmem:[%s236 + $0x10] sm:$0xff] %vm380, %v350
      %384 = vst.msk [vmem:[%s236 + $0x18] sm:$0xff] %vm380, %v351
      %385 = vst.msk [vmem:[%s236 + $0x20] sm:$0xff] %vm380, %v352
      %386 = vst.msk [vmem:[%s236 + $0x28] sm:$0xff] %vm380, %v353
      %387 = vst.msk [vmem:[%s236 + $0x30] sm:$0xff] %vm380, %v354
      %388 = vst.msk [vmem:[%s236 + $0x38] sm:$0xff] %vm380, %v355
      %389 = vst.msk [vmem:[%s236 + $0x40] sm:$0xff] %vm380, %v356
      %390 = vst.msk [vmem:[%s236 + $0x48] sm:$0xff] %vm380, %v357
      %391 = vst.msk [vmem:[%s236 + $0x50] sm:$0xff] %vm380, %v358
      %392 = vst.msk [vmem:[%s236 + $0x58] sm:$0xff] %vm380, %v359
      %393 = vst.msk [vmem:[%s236 + $0x60] sm:$0xff] %vm380, %v360
      %394 = vst.msk [vmem:[%s236 + $0x68] sm:$0xff] %vm380, %v361
      %395 = vst.msk [vmem:[%s236 + $0x70] sm:$0xff] %vm380, %v362
      %396 = vst.msk [vmem:[%s236 + $0x78] sm:$0xff] %vm380, %v363
      %397 = vst.msk [vmem:[%s236 + $0x80] sm:$0xff] %vm380, %v364
      %398 = vst.msk [vmem:[%s236 + $0x88] sm:$0xff] %vm380, %v365
      %399 = vst.msk [vmem:[%s236 + $0x90] sm:$0xff] %vm380, %v366
      %400 = vst.msk [vmem:[%s236 + $0x98] sm:$0xff] %vm380, %v367
      %401 = vst.msk [vmem:[%s236 + $0xa0] sm:$0xff] %vm380, %v368
      %402 = vst.msk [vmem:[%s236 + $0xa8] sm:$0xff] %vm380, %v369
      %403 = vst.msk [vmem:[%s236 + $0xb0] sm:$0xff] %vm380, %v370
      %404 = vst.msk [vmem:[%s236 + $0xb8] sm:$0xff] %vm380, %v371
      %405 = vst.msk [vmem:[%s236 + $0xc0] sm:$0xff] %vm380, %v372
      %406 = vst.msk [vmem:[%s236 + $0xc8] sm:$0xff] %vm380, %v373
      %407 = vst.msk [vmem:[%s236 + $0xd0] sm:$0xff] %vm380, %v374
      %408 = vst.msk [vmem:[%s236 + $0xd8] sm:$0xff] %vm380, %v375
      %409 = vst.msk [vmem:[%s236 + $0xe0] sm:$0xff] %vm380, %v376
      %410 = vst.msk [vmem:[%s236 + $0xe8] sm:$0xff] %vm380, %v377
      %411 = vst.msk [vmem:[%s236 + $0xf0] sm:$0xff] %vm380, %v378
      %412 = vst.msk [vmem:[%s236 + $0xf8] sm:$0xff] %vm380, %v379
      %s413 = smul.u32 32, %s19
      %p414 = scmp.lt.s32.totalorder %s18, 1
      %s415 = scalar_select %p414, %s18, 1
      %p416 = scmp.lt.s32.totalorder %s413, 31
      %s417 = scalar_select %p416, %s413, 31
      %s418 = smul.addr %s415, 32
      %s419 = sadd.s32 %s417, %s418
      %s420 = smul.addr %s419, 8
      %s421 = scalar_lea.vmem %s3, %s420
      // Predicated region
      $region33: #{encoder_forward.23} parent=31 // pred_check
        %p422 = pneg %p126
      $region34: #{encoder_forward.23} parent=31 // pred_check_branch
        %424 = sbr.rel (%p422) target = $region36
      $region35: #{encoder_forward.23} parent=31 // pred_region
        %s425 = smul.u32 32, %s19
      $region36: #{encoder_forward.23} parent=31 // pred_fallthru
        _
    $region32: #{encoder_forward.23} parent=5 // pred_fallthru
      _
    %p426 = scmp.le.s32.totalorder 2, %s9
    // Predicated region
    $region37: #{encoder_forward.23} parent=5 // pred_check
      %p427 = pneg %p426
    $region38: #{encoder_forward.23} parent=5 // pred_check_branch
      %429 = sbr.rel (%p427) target = $region40
    $region39: #{encoder_forward.23} parent=5 // pred_region
      %s430 = ssub.s32 %s9, 2
      // Predicated region
      $region41: #{encoder_forward.23} parent=39 // pred_check
        %p431 = pneg %p132
      $region42: #{encoder_forward.23} parent=39 // pred_check_branch
        %433 = sbr.rel (%p431) target = $region44
      $region43: #{encoder_forward.23} parent=39 // pred_region
        %s434 = smul.u32 32, %s21
        %p435 = scmp.lt.s32.totalorder %s20, 1
        %s436 = scalar_select %p435, %s20, 1
        %p437 = scmp.lt.s32.totalorder %s434, 31
        %s438 = scalar_select %p437, %s434, 31
        %s439 = smul.addr %s436, 32
        %s440 = sadd.s32 %s438, %s439
        %s441 = smul.addr %s440, 8
        %s442 = scalar_lea.vmem %s3, %s441
      $region44: #{encoder_forward.23} parent=39 // pred_fallthru
        _
    $region40: #{encoder_forward.23} parent=5 // pred_fallthru
      _
  $region6: #{encoder_forward.23} parent=0 // loop_footer
    %s13 = sadd.s32 1, %s9
  $region7: #{encoder_forward.23} parent=0 // loop_footer_branch
    %8 = sbr.rel target = $region3
  $region8: #{encoder_forward.23} parent=0 // loop_exit
    _

// kernel: encoder_forward.21
$region0: #{encoder_forward.21}
  #allocation0 [shape = 'u32[]', space=smem, size = 0x4, offset = 0x4, fixed_abs, tag = 'smem constant byte address 0x4 - core index']
  #allocation1 [shape = 'u32[144,128]{1,0:T(1,128)}', space=vmem, size = 0x12000, scoped, tag = 'internal scratch']
  #allocation2 [shape = 'f32[512,128]{1,0:T(8,128)}', space=vmem, size = 0x40000, scoped, tag = 'scratch operand']
  %s0 = inlined_call_operand.vmem [shape: bf16[512,256], index: 0, kind: input, shape index: {}]
  %s1 = inlined_call_operand.vmem [shape: bf16[256,128], index: 1, kind: input, shape index: {}]
  %s2 = inlined_call_operand.vmem [shape: f32[1,128], index: 2, kind: input, shape index: {}]
  %s3 = inlined_call_operand.vmem [shape: f32[512,128], index: 3, kind: output, shape index: {}]
  %s4 = sld [smem:[#allocation0]]
  $region30: #{encoder_forward.21} parent=0
    _
  %s6 = ssub.s32 1, %s4
  %s7 = scalar_select 0, %s6, %s4
  // Predicated region
  $region2: #{encoder_forward.21} parent=0 // pred_check
    _
  $region3: #{encoder_forward.21} parent=0 // pred_check_branch
    %9 = sbr.rel (0) target = $region5
  $region4: #{encoder_forward.21} parent=0 // pred_region
    _
  $region5: #{encoder_forward.21} parent=0 // pred_fallthru
    _
  // Predicated region
  $region6: #{encoder_forward.21} parent=0 // pred_check
    _
  $region7: #{encoder_forward.21} parent=0 // pred_check_branch
    %11 = sbr.rel (0) target = $region9
  $region8: #{encoder_forward.21} parent=0 // pred_region
    _
  $region9: #{encoder_forward.21} parent=0 // pred_fallthru
    _
  // Predicated region
  $region10: #{encoder_forward.21} parent=0 // pred_check
    _
  $region11: #{encoder_forward.21} parent=0 // pred_check_branch
    %13 = sbr.rel (0) target = $region13
  $region12: #{encoder_forward.21} parent=0 // pred_region
    _
  $region13: #{encoder_forward.21} parent=0 // pred_fallthru
    _
  %p15 = scmp.eq.s32.totalorder 0, 0
  // Predicated region
  $region14: #{encoder_forward.21} parent=0 // pred_check
    %p16 = pneg %p15
  $region15: #{encoder_forward.21} parent=0 // pred_check_branch
    %18 = sbr.rel (%p16) target = $region17
  $region16: #{encoder_forward.21} parent=0 // pred_region
    %19 = vst [vmem:[#allocation2] sm:$0xff] 0.0
    %20 = vst [vmem:[#allocation2 + $0x8] sm:$0xff] 0.0
    %21 = vst [vmem:[#allocation2 + $0x10] sm:$0xff] 0.0
    %22 = vst [vmem:[#allocation2 + $0x18] sm:$0xff] 0.0
    %23 = vst [vmem:[#allocation2 + $0x20] sm:$0xff] 0.0
    %24 = vst [vmem:[#allocation2 + $0x28] sm:$0xff] 0.0
    %25 = vst [vmem:[#allocation2 + $0x30] sm:$0xff] 0.0
    %26 = vst [vmem:[#allocation2 + $0x38] sm:$0xff] 0.0
    %27 = vst [vmem:[#allocation2 + $0x40] sm:$0xff] 0.0
    %28 = vst [vmem:[#allocation2 + $0x48] sm:$0xff] 0.0
    %29 = vst [vmem:[#allocation2 + $0x50] sm:$0xff] 0.0
    %30 = vst [vmem:[#allocation2 + $0x58] sm:$0xff] 0.0
    %31 = vst [vmem:[#allocation2 + $0x60] sm:$0xff] 0.0
    %32 = vst [vmem:[#allocation2 + $0x68] sm:$0xff] 0.0
    %33 = vst [vmem:[#allocation2 + $0x70] sm:$0xff] 0.0
    %34 = vst [vmem:[#allocation2 + $0x78] sm:$0xff] 0.0
    %35 = vst [vmem:[#allocation2 + $0x80] sm:$0xff] 0.0
    %36 = vst [vmem:[#allocation2 + $0x88] sm:$0xff] 0.0
    %37 = vst [vmem:[#allocation2 + $0x90] sm:$0xff] 0.0
    %38 = vst [vmem:[#allocation2 + $0x98] sm:$0xff] 0.0
    %39 = vst [vmem:[#allocation2 + $0xa0] sm:$0xff] 0.0
    %40 = vst [vmem:[#allocation2 + $0xa8] sm:$0xff] 0.0
    %41 = vst [vmem:[#allocation2 + $0xb0] sm:$0xff] 0.0
    %42 = vst [vmem:[#allocation2 + $0xb8] sm:$0xff] 0.0
    %43 = vst [vmem:[#allocation2 + $0xc0] sm:$0xff] 0.0
    %44 = vst [vmem:[#allocation2 + $0xc8] sm:$0xff] 0.0
    %45 = vst [vmem:[#allocation2 + $0xd0] sm:$0xff] 0.0
    %46 = vst [vmem:[#allocation2 + $0xd8] sm:$0xff] 0.0
    %47 = vst [vmem:[#allocation2 + $0xe0] sm:$0xff] 0.0
    %48 = vst [vmem:[#allocation2 + $0xe8] sm:$0xff] 0.0
    %49 = vst [vmem:[#allocation2 + $0xf0] sm:$0xff] 0.0
    %50 = vst [vmem:[#allocation2 + $0xf8] sm:$0xff] 0.0
    %51 = vst [vmem:[#allocation2 + $0x100] sm:$0xff] 0.0
    %52 = vst [vmem:[#allocation2 + $0x108] sm:$0xff] 0.0
    %53 = vst [vmem:[#allocation2 + $0x110] sm:$0xff] 0.0
    %54 = vst [vmem:[#allocation2 + $0x118] sm:$0xff] 0.0
    %55 = vst [vmem:[#allocation2 + $0x120] sm:$0xff] 0.0
    %56 = vst [vmem:[#allocation2 + $0x128] sm:$0xff] 0.0
    %57 = vst [vmem:[#allocation2 + $0x130] sm:$0xff] 0.0
    %58 = vst [vmem:[#allocation2 + $0x138] sm:$0xff] 0.0
    %59 = vst [vmem:[#allocation2 + $0x140] sm:$0xff] 0.0
    %60 = vst [vmem:[#allocation2 + $0x148] sm:$0xff] 0.0
    %61 = vst [vmem:[#allocation2 + $0x150] sm:$0xff] 0.0
    %62 = vst [vmem:[#allocation2 + $0x158] sm:$0xff] 0.0
    %63 = vst [vmem:[#allocation2 + $0x160] sm:$0xff] 0.0
    %64 = vst [vmem:[#allocation2 + $0x168] sm:$0xff] 0.0
    %65 = vst [vmem:[#allocation2 + $0x170] sm:$0xff] 0.0
    %66 = vst [vmem:[#allocation2 + $0x178] sm:$0xff] 0.0
    %67 = vst [vmem:[#allocation2 + $0x180] sm:$0xff] 0.0
    %68 = vst [vmem:[#allocation2 + $0x188] sm:$0xff] 0.0
    %69 = vst [vmem:[#allocation2 + $0x190] sm:$0xff] 0.0
    %70 = vst [vmem:[#allocation2 + $0x198] sm:$0xff] 0.0
    %71 = vst [vmem:[#allocation2 + $0x1a0] sm:$0xff] 0.0
    %72 = vst [vmem:[#allocation2 + $0x1a8] sm:$0xff] 0.0
    %73 = vst [vmem:[#allocation2 + $0x1b0] sm:$0xff] 0.0
    %74 = vst [vmem:[#allocation2 + $0x1b8] sm:$0xff] 0.0
    %75 = vst [vmem:[#allocation2 + $0x1c0] sm:$0xff] 0.0
    %76 = vst [vmem:[#allocation2 + $0x1c8] sm:$0xff] 0.0
    %77 = vst [vmem:[#allocation2 + $0x1d0] sm:$0xff] 0.0
    %78 = vst [vmem:[#allocation2 + $0x1d8] sm:$0xff] 0.0
    %79 = vst [vmem:[#allocation2 + $0x1e0] sm:$0xff] 0.0
    %80 = vst [vmem:[#allocation2 + $0x1e8] sm:$0xff] 0.0
    %81 = vst [vmem:[#allocation2 + $0x1f0] sm:$0xff] 0.0
    %82 = vst [vmem:[#allocation2 + $0x1f8] sm:$0xff] 0.0
  $region17: #{encoder_forward.21} parent=0 // pred_fallthru
    _
  %v83 = vld [vmem:[#allocation2] sm:$0xff]
  %v84 = vld [vmem:[#allocation2 + $0x8] sm:$0xff]
  %v85 = vld [vmem:[#allocation2 + $0x10] sm:$0xff]
  %v86 = vld [vmem:[#allocation2 + $0x18] sm:$0xff]
  %v87 = vld [vmem:[#allocation2 + $0x20] sm:$0xff]
  %v88 = vld [vmem:[#allocation2 + $0x28] sm:$0xff]
  %v89 = vld [vmem:[#allocation2 + $0x30] sm:$0xff]
  %v90 = vld [vmem:[#allocation2 + $0x38] sm:$0xff]
  %v91 = vld [vmem:[#allocation2 + $0x40] sm:$0xff]
  %v92 = vld [vmem:[#allocation2 + $0x48] sm:$0xff]
  %v93 = vld [vmem:[#allocation2 + $0x50] sm:$0xff]
  %v94 = vld [vmem:[#allocation2 + $0x58] sm:$0xff]
  %v95 = vld [vmem:[#allocation2 + $0x60] sm:$0xff]
  %v96 = vld [vmem:[#allocation2 + $0x68] sm:$0xff]
  %v97 = vld [vmem:[#allocation2 + $0x70] sm:$0xff]
  %v98 = vld [vmem:[#allocation2 + $0x78] sm:$0xff]
  %v99 = vld [vmem:[#allocation2 + $0x80] sm:$0xff]
  %v100 = vld [vmem:[#allocation2 + $0x88] sm:$0xff]
  %v101 = vld [vmem:[#allocation2 + $0x90] sm:$0xff]
  %v102 = vld [vmem:[#allocation2 + $0x98] sm:$0xff]
  %v103 = vld [vmem:[#allocation2 + $0xa0] sm:$0xff]
  %v104 = vld [vmem:[#allocation2 + $0xa8] sm:$0xff]
  %v105 = vld [vmem:[#allocation2 + $0xb0] sm:$0xff]
  %v106 = vld [vmem:[#allocation2 + $0xb8] sm:$0xff]
  %v107 = vld [vmem:[#allocation2 + $0xc0] sm:$0xff]
  %v108 = vld [vmem:[#allocation2 + $0xc8] sm:$0xff]
  %v109 = vld [vmem:[#allocation2 + $0xd0] sm:$0xff]
  %v110 = vld [vmem:[#allocation2 + $0xd8] sm:$0xff]
  %v111 = vld [vmem:[#allocation2 + $0xe0] sm:$0xff]
  %v112 = vld [vmem:[#allocation2 + $0xe8] sm:$0xff]
  %v113 = vld [vmem:[#allocation2 + $0xf0] sm:$0xff]
  %v114 = vld [vmem:[#allocation2 + $0xf8] sm:$0xff]
  %v115 = vld [vmem:[#allocation2 + $0x100] sm:$0xff]
  %v116 = vld [vmem:[#allocation2 + $0x108] sm:$0xff]
  %v117 = vld [vmem:[#allocation2 + $0x110] sm:$0xff]
  %v118 = vld [vmem:[#allocation2 + $0x118] sm:$0xff]
  %v119 = vld [vmem:[#allocation2 + $0x120] sm:$0xff]
  %v120 = vld [vmem:[#allocation2 + $0x128] sm:$0xff]
  %v121 = vld [vmem:[#allocation2 + $0x130] sm:$0xff]
  %v122 = vld [vmem:[#allocation2 + $0x138] sm:$0xff]
  %v123 = vld [vmem:[#allocation2 + $0x140] sm:$0xff]
  %v124 = vld [vmem:[#allocation2 + $0x148] sm:$0xff]
  %v125 = vld [vmem:[#allocation2 + $0x150] sm:$0xff]
  %v126 = vld [vmem:[#allocation2 + $0x158] sm:$0xff]
  %v127 = vld [vmem:[#allocation2 + $0x160] sm:$0xff]
  %v128 = vld [vmem:[#allocation2 + $0x168] sm:$0xff]
  %v129 = vld [vmem:[#allocation2 + $0x170] sm:$0xff]
  %v130 = vld [vmem:[#allocation2 + $0x178] sm:$0xff]
  %v131 = vld [vmem:[#allocation2 + $0x180] sm:$0xff]
  %v132 = vld [vmem:[#allocation2 + $0x188] sm:$0xff]
  %v133 = vld [vmem:[#allocation2 + $0x190] sm:$0xff]
  %v134 = vld [vmem:[#allocation2 + $0x198] sm:$0xff]
  %v135 = vld [vmem:[#allocation2 + $0x1a0] sm:$0xff]
  %v136 = vld [vmem:[#allocation2 + $0x1a8] sm:$0xff]
  %v137 = vld [vmem:[#allocation2 + $0x1b0] sm:$0xff]
  %v138 = vld [vmem:[#allocation2 + $0x1b8] sm:$0xff]
  %v139 = vld [vmem:[#allocation2 + $0x1c0] sm:$0xff]
  %v140 = vld [vmem:[#allocation2 + $0x1c8] sm:$0xff]
  %v141 = vld [vmem:[#allocation2 + $0x1d0] sm:$0xff]
  %v142 = vld [vmem:[#allocation2 + $0x1d8] sm:$0xff]
  %v143 = vld [vmem:[#allocation2 + $0x1e0] sm:$0xff]
  %v144 = vld [vmem:[#allocation2 + $0x1e8] sm:$0xff]
  %v145 = vld [vmem:[#allocation2 + $0x1f0] sm:$0xff]
  %v146 = vld [vmem:[#allocation2 + $0x1f8] sm:$0xff]
  %v147 = vld [vmem:[%s0] sm:$0xff]
  %v148 = vld [vmem:[%s0 + $0x8] sm:$0xff]
  %v149 = vld [vmem:[%s0 + $0x10] sm:$0xff]
  %v150 = vld [vmem:[%s0 + $0x18] sm:$0xff]
  %v151 = vld [vmem:[%s0 + $0x20] sm:$0xff]
  %v152 = vld [vmem:[%s0 + $0x28] sm:$0xff]
  %v153 = vld [vmem:[%s0 + $0x30] sm:$0xff]
  %v154 = vld [vmem:[%s0 + $0x38] sm:$0xff]
  %v155 = vld [vmem:[%s0 + $0x40] sm:$0xff]
  %v156 = vld [vmem:[%s0 + $0x48] sm:$0xff]
  %v157 = vld [vmem:[%s0 + $0x50] sm:$0xff]
  %v158 = vld [vmem:[%s0 + $0x58] sm:$0xff]
  %v159 = vld [vmem:[%s0 + $0x60] sm:$0xff]
  %v160 = vld [vmem:[%s0 + $0x68] sm:$0xff]
  %v161 = vld [vmem:[%s0 + $0x70] sm:$0xff]
  %v162 = vld [vmem:[%s0 + $0x78] sm:$0xff]
  %v163 = vld [vmem:[%s0 + $0x80] sm:$0xff]
  %v164 = vld [vmem:[%s0 + $0x88] sm:$0xff]
  %v165 = vld [vmem:[%s0 + $0x90] sm:$0xff]
  %v166 = vld [vmem:[%s0 + $0x98] sm:$0xff]
  %v167 = vld [vmem:[%s0 + $0xa0] sm:$0xff]
  %v168 = vld [vmem:[%s0 + $0xa8] sm:$0xff]
  %v169 = vld [vmem:[%s0 + $0xb0] sm:$0xff]
  %v170 = vld [vmem:[%s0 + $0xb8] sm:$0xff]
  %v171 = vld [vmem:[%s0 + $0xc0] sm:$0xff]
  %v172 = vld [vmem:[%s0 + $0xc8] sm:$0xff]
  %v173 = vld [vmem:[%s0 + $0xd0] sm:$0xff]
  %v174 = vld [vmem:[%s0 + $0xd8] sm:$0xff]
  %v175 = vld [vmem:[%s0 + $0xe0] sm:$0xff]
  %v176 = vld [vmem:[%s0 + $0xe8] sm:$0xff]
  %v177 = vld [vmem:[%s0 + $0xf0] sm:$0xff]
  %v178 = vld [vmem:[%s0 + $0xf8] sm:$0xff]
  %v179 = vld [vmem:[%s0 + $0x100] sm:$0xff]
  %v180 = vld [vmem:[%s0 + $0x108] sm:$0xff]
  %v181 = vld [vmem:[%s0 + $0x110] sm:$0xff]
  %v182 = vld [vmem:[%s0 + $0x118] sm:$0xff]
  %v183 = vld [vmem:[%s0 + $0x120] sm:$0xff]
  %v184 = vld [vmem:[%s0 + $0x128] sm:$0xff]
  %v185 = vld [vmem:[%s0 + $0x130] sm:$0xff]
  %v186 = vld [vmem:[%s0 + $0x138] sm:$0xff]
  %v187 = vld [vmem:[%s0 + $0x140] sm:$0xff]
  %v188 = vld [vmem:[%s0 + $0x148] sm:$0xff]
  %v189 = vld [vmem:[%s0 + $0x150] sm:$0xff]
  %v190 = vld [vmem:[%s0 + $0x158] sm:$0xff]
  %v191 = vld [vmem:[%s0 + $0x160] sm:$0xff]
  %v192 = vld [vmem:[%s0 + $0x168] sm:$0xff]
  %v193 = vld [vmem:[%s0 + $0x170] sm:$0xff]
  %v194 = vld [vmem:[%s0 + $0x178] sm:$0xff]
  %v195 = vld [vmem:[%s0 + $0x180] sm:$0xff]
  %v196 = vld [vmem:[%s0 + $0x188] sm:$0xff]
  %v197 = vld [vmem:[%s0 + $0x190] sm:$0xff]
  %v198 = vld [vmem:[%s0 + $0x198] sm:$0xff]
  %v199 = vld [vmem:[%s0 + $0x1a0] sm:$0xff]
  %v200 = vld [vmem:[%s0 + $0x1a8] sm:$0xff]
  %v201 = vld [vmem:[%s0 + $0x1b0] sm:$0xff]
  %v202 = vld [vmem:[%s0 + $0x1b8] sm:$0xff]
  %v203 = vld [vmem:[%s0 + $0x1c0] sm:$0xff]
  %v204 = vld [vmem:[%s0 + $0x1c8] sm:$0xff]
  %v205 = vld [vmem:[%s0 + $0x1d0] sm:$0xff]
  %v206 = vld [vmem:[%s0 + $0x1d8] sm:$0xff]
  %v207 = vld [vmem:[%s0 + $0x1e0] sm:$0xff]
  %v208 = vld [vmem:[%s0 + $0x1e8] sm:$0xff]
  %v209 = vld [vmem:[%s0 + $0x1f0] sm:$0xff]
  %v210 = vld [vmem:[%s0 + $0x1f8] sm:$0xff]
  %v211 = vld [vmem:[%s1] sm:$0xf]
  %v212 = vld [vmem:[%s1 + $0x4] sm:$0xf]
  %v213 = vld [vmem:[%s1 + $0x8] sm:$0xf]
  %v214 = vld [vmem:[%s1 + $0xc] sm:$0xf]
  %v215 = vld [vmem:[%s1 + $0x10] sm:$0xf]
  %v216 = vld [vmem:[%s1 + $0x14] sm:$0xf]
  %v217 = vld [vmem:[%s1 + $0x18] sm:$0xf]
  %v218 = vld [vmem:[%s1 + $0x1c] sm:$0xf]
  %v219 = vld [vmem:[%s1 + $0x20] sm:$0xf]
  %v220 = vld [vmem:[%s1 + $0x24] sm:$0xf]
  %v221 = vld [vmem:[%s1 + $0x28] sm:$0xf]
  %v222 = vld [vmem:[%s1 + $0x2c] sm:$0xf]
  %v223 = vld [vmem:[%s1 + $0x30] sm:$0xf]
  %v224 = vld [vmem:[%s1 + $0x34] sm:$0xf]
  %v225 = vld [vmem:[%s1 + $0x38] sm:$0xf]
  %v226 = vld [vmem:[%s1 + $0x3c] sm:$0xf]
  %v227 = vld [vmem:[%s1 + $0x40] sm:$0xf]
  %v228 = vld [vmem:[%s1 + $0x44] sm:$0xf]
  %v229 = vld [vmem:[%s1 + $0x48] sm:$0xf]
  %v230 = vld [vmem:[%s1 + $0x4c] sm:$0xf]
  %v231 = vld [vmem:[%s1 + $0x50] sm:$0xf]
  %v232 = vld [vmem:[%s1 + $0x54] sm:$0xf]
  %v233 = vld [vmem:[%s1 + $0x58] sm:$0xf]
  %v234 = vld [vmem:[%s1 + $0x5c] sm:$0xf]
  %v235 = vld [vmem:[%s1 + $0x60] sm:$0xf]
  %v236 = vld [vmem:[%s1 + $0x64] sm:$0xf]
  %v237 = vld [vmem:[%s1 + $0x68] sm:$0xf]
  %v238 = vld [vmem:[%s1 + $0x6c] sm:$0xf]
  %v239 = vld [vmem:[%s1 + $0x70] sm:$0xf]
  %v240 = vld [vmem:[%s1 + $0x74] sm:$0xf]
  %v241 = vld [vmem:[%s1 + $0x78] sm:$0xf]
  %v242 = vld [vmem:[%s1 + $0x7c] sm:$0xf]
  %v307 = vunpack.c.l.b16 %v147
  %v308 = vunpack.c.h.b16 %v147
  %v309 = vunpack.c.l.b16 %v148
  %v310 = vunpack.c.h.b16 %v148
  %v311 = vunpack.c.l.b16 %v149
  %v312 = vunpack.c.h.b16 %v149
  %v313 = vunpack.c.l.b16 %v150
  %v314 = vunpack.c.h.b16 %v150
  %v315 = vunpack.c.l.b16 %v151
  %v316 = vunpack.c.h.b16 %v151
  %v317 = vunpack.c.l.b16 %v152
  %v318 = vunpack.c.h.b16 %v152
  %v319 = vunpack.c.l.b16 %v153
  %v320 = vunpack.c.h.b16 %v153
  %v321 = vunpack.c.l.b16 %v154
  %v322 = vunpack.c.h.b16 %v154
  %v323 = vunpack.c.l.b16 %v155
  %v324 = vunpack.c.h.b16 %v155
  %v325 = vunpack.c.l.b16 %v156
  %v326 = vunpack.c.h.b16 %v156
  %v327 = vunpack.c.l.b16 %v157
  %v328 = vunpack.c.h.b16 %v157
  %v329 = vunpack.c.l.b16 %v158
  %v330 = vunpack.c.h.b16 %v158
  %v331 = vunpack.c.l.b16 %v159
  %v332 = vunpack.c.h.b16 %v159
  %v333 = vunpack.c.l.b16 %v160
  %v334 = vunpack.c.h.b16 %v160
  %v335 = vunpack.c.l.b16 %v161
  %v336 = vunpack.c.h.b16 %v161
  %v337 = vunpack.c.l.b16 %v162
  %v338 = vunpack.c.h.b16 %v162
  %v339 = vunpack.c.l.b16 %v163
  %v340 = vunpack.c.h.b16 %v163
  %v341 = vunpack.c.l.b16 %v164
  %v342 = vunpack.c.h.b16 %v164
  %v343 = vunpack.c.l.b16 %v165
  %v344 = vunpack.c.h.b16 %v165
  %v345 = vunpack.c.l.b16 %v166
  %v346 = vunpack.c.h.b16 %v166
  %v347 = vunpack.c.l.b16 %v167
  %v348 = vunpack.c.h.b16 %v167
  %v349 = vunpack.c.l.b16 %v168
  %v350 = vunpack.c.h.b16 %v168
  %v351 = vunpack.c.l.b16 %v169
  %v352 = vunpack.c.h.b16 %v169
  %v353 = vunpack.c.l.b16 %v170
  %v354 = vunpack.c.h.b16 %v170
  %v355 = vunpack.c.l.b16 %v171
  %v356 = vunpack.c.h.b16 %v171
  %v357 = vunpack.c.l.b16 %v172
  %v358 = vunpack.c.h.b16 %v172
  %v359 = vunpack.c.l.b16 %v173
  %v360 = vunpack.c.h.b16 %v173
  %v361 = vunpack.c.l.b16 %v174
  %v362 = vunpack.c.h.b16 %v174
  %v363 = vunpack.c.l.b16 %v175
  %v364 = vunpack.c.h.b16 %v175
  %v365 = vunpack.c.l.b16 %v176
  %v366 = vunpack.c.h.b16 %v176
  %v367 = vunpack.c.l.b16 %v177
  %v368 = vunpack.c.h.b16 %v177
  %v369 = vunpack.c.l.b16 %v178
  %v370 = vunpack.c.h.b16 %v178
  %v371 = vunpack.c.l.b16 %v179
  %v372 = vunpack.c.h.b16 %v179
  %v373 = vunpack.c.l.b16 %v180
  %v374 = vunpack.c.h.b16 %v180
  %v375 = vunpack.c.l.b16 %v181
  %v376 = vunpack.c.h.b16 %v181
  %v377 = vunpack.c.l.b16 %v182
  %v378 = vunpack.c.h.b16 %v182
  %v379 = vunpack.c.l.b16 %v183
  %v380 = vunpack.c.h.b16 %v183
  %v381 = vunpack.c.l.b16 %v184
  %v382 = vunpack.c.h.b16 %v184
  %v383 = vunpack.c.l.b16 %v185
  %v384 = vunpack.c.h.b16 %v185
  %v385 = vunpack.c.l.b16 %v186
  %v386 = vunpack.c.h.b16 %v186
  %v387 = vunpack.c.l.b16 %v187
  %v388 = vunpack.c.h.b16 %v187
  %v389 = vunpack.c.l.b16 %v188
  %v390 = vunpack.c.h.b16 %v188
  %v391 = vunpack.c.l.b16 %v189
  %v392 = vunpack.c.h.b16 %v189
  %v393 = vunpack.c.l.b16 %v190
  %v394 = vunpack.c.h.b16 %v190
  %v395 = vunpack.c.l.b16 %v191
  %v396 = vunpack.c.h.b16 %v191
  %v397 = vunpack.c.l.b16 %v192
  %v398 = vunpack.c.h.b16 %v192
  %v399 = vunpack.c.l.b16 %v193
  %v400 = vunpack.c.h.b16 %v193
  %v401 = vunpack.c.l.b16 %v194
  %v402 = vunpack.c.h.b16 %v194
  %v403 = vunpack.c.l.b16 %v195
  %v404 = vunpack.c.h.b16 %v195
  %v405 = vunpack.c.l.b16 %v196
  %v406 = vunpack.c.h.b16 %v196
  %v407 = vunpack.c.l.b16 %v197
  %v408 = vunpack.c.h.b16 %v197
  %v409 = vunpack.c.l.b16 %v198
  %v410 = vunpack.c.h.b16 %v198
  %v411 = vunpack.c.l.b16 %v199
  %v412 = vunpack.c.h.b16 %v199
  %v413 = vunpack.c.l.b16 %v200
  %v414 = vunpack.c.h.b16 %v200
  %v415 = vunpack.c.l.b16 %v201
  %v416 = vunpack.c.h.b16 %v201
  %v417 = vunpack.c.l.b16 %v202
  %v418 = vunpack.c.h.b16 %v202
  %v419 = vunpack.c.l.b16 %v203
  %v420 = vunpack.c.h.b16 %v203
  %v421 = vunpack.c.l.b16 %v204
  %v422 = vunpack.c.h.b16 %v204
  %v423 = vunpack.c.l.b16 %v205
  %v424 = vunpack.c.h.b16 %v205
  %v425 = vunpack.c.l.b16 %v206
  %v426 = vunpack.c.h.b16 %v206
  %v427 = vunpack.c.l.b16 %v207
  %v428 = vunpack.c.h.b16 %v207
  %v429 = vunpack.c.l.b16 %v208
  %v430 = vunpack.c.h.b16 %v208
  %v431 = vunpack.c.l.b16 %v209
  %v432 = vunpack.c.h.b16 %v209
  %v433 = vunpack.c.l.b16 %v210
  %v434 = vunpack.c.h.b16 %v210
  %v435 = vpack.c.b16 %v309, %v307
  %v436 = vpack.c.b16 %v310, %v308
  %v437 = vpack.c.b16 %v313, %v311
  %v438 = vpack.c.b16 %v314, %v312
  %v439 = vpack.c.b16 %v317, %v315
  %v440 = vpack.c.b16 %v318, %v316
  %v441 = vpack.c.b16 %v321, %v319
  %v442 = vpack.c.b16 %v322, %v320
  %v443 = vpack.c.b16 %v325, %v323
  %v444 = vpack.c.b16 %v326, %v324
  %v445 = vpack.c.b16 %v329, %v327
  %v446 = vpack.c.b16 %v330, %v328
  %v447 = vpack.c.b16 %v333, %v331
  %v448 = vpack.c.b16 %v334, %v332
  %v449 = vpack.c.b16 %v337, %v335
  %v450 = vpack.c.b16 %v338, %v336
  %v451 = vpack.c.b16 %v341, %v339
  %v452 = vpack.c.b16 %v342, %v340
  %v453 = vpack.c.b16 %v345, %v343
  %v454 = vpack.c.b16 %v346, %v344
  %v455 = vpack.c.b16 %v349, %v347
  %v456 = vpack.c.b16 %v350, %v348
  %v457 = vpack.c.b16 %v353, %v351
  %v458 = vpack.c.b16 %v354, %v352
  %v459 = vpack.c.b16 %v357, %v355
  %v460 = vpack.c.b16 %v358, %v356
  %v461 = vpack.c.b16 %v361, %v359
  %v462 = vpack.c.b16 %v362, %v360
  %v463 = vpack.c.b16 %v365, %v363
  %v464 = vpack.c.b16 %v366, %v364
  %v465 = vpack.c.b16 %v369, %v367
  %v466 = vpack.c.b16 %v370, %v368
  %v467 = vpack.c.b16 %v373, %v371
  %v468 = vpack.c.b16 %v374, %v372
  %v469 = vpack.c.b16 %v377, %v375
  %v470 = vpack.c.b16 %v378, %v376
  %v471 = vpack.c.b16 %v381, %v379
  %v472 = vpack.c.b16 %v382, %v380
  %v473 = vpack.c.b16 %v385, %v383
  %v474 = vpack.c.b16 %v386, %v384
  %v475 = vpack.c.b16 %v389, %v387
  %v476 = vpack.c.b16 %v390, %v388
  %v477 = vpack.c.b16 %v393, %v391
  %v478 = vpack.c.b16 %v394, %v392
  %v479 = vpack.c.b16 %v397, %v395
  %v480 = vpack.c.b16 %v398, %v396
  %v481 = vpack.c.b16 %v401, %v399
  %v482 = vpack.c.b16 %v402, %v400
  %v483 = vpack.c.b16 %v405, %v403
  %v484 = vpack.c.b16 %v406, %v404
  %v485 = vpack.c.b16 %v409, %v407
  %v486 = vpack.c.b16 %v410, %v408
  %v487 = vpack.c.b16 %v413, %v411
  %v488 = vpack.c.b16 %v414, %v412
  %v489 = vpack.c.b16 %v417, %v415
  %v490 = vpack.c.b16 %v418, %v416
  %v491 = vpack.c.b16 %v421, %v419
  %v492 = vpack.c.b16 %v422, %v420
  %v493 = vpack.c.b16 %v425, %v423
  %v494 = vpack.c.b16 %v426, %v424
  %v495 = vpack.c.b16 %v429, %v427
  %v496 = vpack.c.b16 %v430, %v428
  %v497 = vpack.c.b16 %v433, %v431
  %v498 = vpack.c.b16 %v434, %v432
  %v595 = vunpack.c.l.b16 %v211
  %v596 = vunpack.c.l.b16 %v212
  %v597 = vunpack.c.l.b16 %v213
  %v598 = vunpack.c.l.b16 %v214
  %v599 = vunpack.c.l.b16 %v215
  %v600 = vunpack.c.l.b16 %v216
  %v601 = vunpack.c.l.b16 %v217
  %v602 = vunpack.c.l.b16 %v218
  %v603 = vunpack.c.l.b16 %v219
  %v604 = vunpack.c.l.b16 %v220
  %v605 = vunpack.c.l.b16 %v221
  %v606 = vunpack.c.l.b16 %v222
  %v607 = vunpack.c.l.b16 %v223
  %v608 = vunpack.c.l.b16 %v224
  %v609 = vunpack.c.l.b16 %v225
  %v610 = vunpack.c.l.b16 %v226
  %v611 = vunpack.c.l.b16 %v227
  %v612 = vunpack.c.l.b16 %v228
  %v613 = vunpack.c.l.b16 %v229
  %v614 = vunpack.c.l.b16 %v230
  %v615 = vunpack.c.l.b16 %v231
  %v616 = vunpack.c.l.b16 %v232
  %v617 = vunpack.c.l.b16 %v233
  %v618 = vunpack.c.l.b16 %v234
  %v619 = vunpack.c.l.b16 %v235
  %v620 = vunpack.c.l.b16 %v236
  %v621 = vunpack.c.l.b16 %v237
  %v622 = vunpack.c.l.b16 %v238
  %v623 = vunpack.c.l.b16 %v239
  %v624 = vunpack.c.l.b16 %v240
  %v625 = vunpack.c.l.b16 %v241
  %v626 = vunpack.c.l.b16 %v242
  %v627 = vpack.c.b16 %v596, %v595
  %v628 = vpack.c.b16 %v598, %v597
  %v629 = vpack.c.b16 %v600, %v599
  %v630 = vpack.c.b16 %v602, %v601
  %v631 = vpack.c.b16 %v604, %v603
  %v632 = vpack.c.b16 %v606, %v605
  %v633 = vpack.c.b16 %v608, %v607
  %v634 = vpack.c.b16 %v610, %v609
  %v635 = vpack.c.b16 %v612, %v611
  %v636 = vpack.c.b16 %v614, %v613
  %v637 = vpack.c.b16 %v616, %v615
  %v638 = vpack.c.b16 %v618, %v617
  %v639 = vpack.c.b16 %v620, %v619
  %v640 = vpack.c.b16 %v622, %v621
  %v641 = vpack.c.b16 %v624, %v623
  %v642 = vpack.c.b16 %v626, %v625
  %659 = vmatprep.subr.bf16.mxu0 0
  %660 = vmatpush1.bf16.msra.mxu0 %v634
  %661 = vmatprep.subr.bf16.mxu0 0
  %662 = vmatpush1.bf16.msra.mxu0 %v633
  %663 = vmatprep.subr.bf16.mxu0 0
  %664 = vmatpush1.bf16.msra.mxu0 %v632
  %665 = vmatprep.subr.bf16.mxu0 0
  %666 = vmatpush1.bf16.msra.mxu0 %v631
  %667 = vmatprep.subr.bf16.mxu0 0
  %668 = vmatpush1.bf16.msra.mxu0 %v630
  %669 = vmatprep.subr.bf16.mxu0 0
  %670 = vmatpush1.bf16.msra.mxu0 %v629
  %671 = vmatprep.subr.bf16.mxu0 0
  %672 = vmatpush1.bf16.msra.mxu0 %v628
  %673 = vmatprep.subr.bf16.mxu0 0
  %674 = vmatpush1.bf16.msra.mxu0 %v627
  %675 = vmatprep.subr.bf16.mxu0 0
  %676 = vmatpush2.bf16.msra.mxu0 %v642
  %677 = vmatprep.subr.bf16.mxu0 0
  %678 = vmatpush2.bf16.msra.mxu0 %v641
  %679 = vmatprep.subr.bf16.mxu0 0
  %680 = vmatpush2.bf16.msra.mxu0 %v640
  %681 = vmatprep.subr.bf16.mxu0 0
  %682 = vmatpush2.bf16.msra.mxu0 %v639
  %683 = vmatprep.subr.bf16.mxu0 0
  %684 = vmatpush2.bf16.msra.mxu0 %v638
  %685 = vmatprep.subr.bf16.mxu0 0
  %686 = vmatpush2.bf16.msra.mxu0 %v637
  %687 = vmatprep.subr.bf16.mxu0 0
  %688 = vmatpush2.bf16.msra.mxu0 %v636
  %689 = vmatprep.subr.bf16.mxu0 0
  %690 = vmatpush2.bf16.msra.mxu0 %v635
  %691 = vmatprep.mubr.bf16.mxu0 %v436
  %692 = vmatmul.mubr.bf16.gmra.mxu0 %v435
  %v693 = vpop.f32.mrf.mxu0
  %v694 = vadd.f32 0.0, %v693
  %v695 = vpop.f32.mrf.mxu0
  %v696 = vpop.f32.mrf.mxu0
  %v697 = vadd.f32 0.0, %v696
  %v698 = vpop.f32.mrf.mxu0
  %699 = vmatprep.mubr.bf16.mxu0 %v438
  %700 = vmatmul.mubr.bf16.gmra.mxu0 %v437
  %v701 = vpop.f32.mrf.mxu0
  %v702 = vadd.f32 0.0, %v701
  %v703 = vpop.f32.mrf.mxu0
  %v704 = vpop.f32.mrf.mxu0
  %v705 = vadd.f32 0.0, %v704
  %v706 = vpop.f32.mrf.mxu0
  %707 = vmatprep.mubr.bf16.mxu0 %v440
  %708 = vmatmul.mubr.bf16.gmra.mxu0 %v439
  %v709 = vpop.f32.mrf.mxu0
  %v710 = vadd.f32 0.0, %v709
  %v711 = vpop.f32.mrf.mxu0
  %v712 = vpop.f32.mrf.mxu0
  %v713 = vadd.f32 0.0, %v712
  %v714 = vpop.f32.mrf.mxu0
  %715 = vmatprep.mubr.bf16.mxu0 %v442
  %716 = vmatmul.mubr.bf16.gmra.mxu0 %v441
  %v717 = vpop.f32.mrf.mxu0
  %v718 = vadd.f32 0.0, %v717
  %v719 = vpop.f32.mrf.mxu0
  %v720 = vpop.f32.mrf.mxu0
  %v721 = vadd.f32 0.0, %v720
  %v722 = vpop.f32.mrf.mxu0
  %723 = vmatprep.mubr.bf16.mxu0 %v444
  %724 = vmatmul.mubr.bf16.gmra.mxu0 %v443
  %v725 = vpop.f32.mrf.mxu0
  %v726 = vadd.f32 0.0, %v725
  %v727 = vpop.f32.mrf.mxu0
  %v728 = vpop.f32.mrf.mxu0
  %v729 = vadd.f32 0.0, %v728
  %v730 = vpop.f32.mrf.mxu0
  %731 = vmatprep.mubr.bf16.mxu0 %v446
  %732 = vmatmul.mubr.bf16.gmra.mxu0 %v445
  %v733 = vpop.f32.mrf.mxu0
  %v734 = vadd.f32 0.0, %v733
  %v735 = vpop.f32.mrf.mxu0
  %v736 = vpop.f32.mrf.mxu0
  %v737 = vadd.f32 0.0, %v736
  %v738 = vpop.f32.mrf.mxu0
  %739 = vmatprep.mubr.bf16.mxu0 %v448
  %740 = vmatmul.mubr.bf16.gmra.mxu0 %v447
  %v741 = vpop.f32.mrf.mxu0
  %v742 = vadd.f32 0.0, %v741
  %v743 = vpop.f32.mrf.mxu0
  %v744 = vpop.f32.mrf.mxu0
  %v745 = vadd.f32 0.0, %v744
  %v746 = vpop.f32.mrf.mxu0
  %747 = vmatprep.mubr.bf16.mxu0 %v450
  %748 = vmatmul.mubr.bf16.gmra.mxu0 %v449
  %v749 = vpop.f32.mrf.mxu0
  %v750 = vadd.f32 0.0, %v749
  %v751 = vpop.f32.mrf.mxu0
  %v752 = vpop.f32.mrf.mxu0
  %v753 = vadd.f32 0.0, %v752
  %v754 = vpop.f32.mrf.mxu0
  %755 = vmatprep.mubr.bf16.mxu0 %v452
  %756 = vmatmul.mubr.bf16.gmra.mxu0 %v451
  %v757 = vpop.f32.mrf.mxu0
  %v758 = vadd.f32 0.0, %v757
  %v759 = vpop.f32.mrf.mxu0
  %v760 = vpop.f32.mrf.mxu0
  %v761 = vadd.f32 0.0, %v760
  %v762 = vpop.f32.mrf.mxu0
  %763 = vmatprep.mubr.bf16.mxu0 %v454
  %764 = vmatmul.mubr.bf16.gmra.mxu0 %v453
  %v765 = vpop.f32.mrf.mxu0
  %v766 = vadd.f32 0.0, %v765
  %v767 = vpop.f32.mrf.mxu0
  %v768 = vpop.f32.mrf.mxu0
  %v769 = vadd.f32 0.0, %v768
  %v770 = vpop.f32.mrf.mxu0
  %771 = vmatprep.mubr.bf16.mxu0 %v456
  %772 = vmatmul.mubr.bf16.gmra.mxu0 %v455
  %v773 = vpop.f32.mrf.mxu0
  %v774 = vadd.f32 0.0, %v773
  %v775 = vpop.f32.mrf.mxu0
  %v776 = vpop.f32.mrf.mxu0
  %v777 = vadd.f32 0.0, %v776
  %v778 = vpop.f32.mrf.mxu0
  %779 = vmatprep.mubr.bf16.mxu0 %v458
  %780 = vmatmul.mubr.bf16.gmra.mxu0 %v457
  %v781 = vpop.f32.mrf.mxu0
  %v782 = vadd.f32 0.0, %v781
  %v783 = vpop.f32.mrf.mxu0
  %v784 = vpop.f32.mrf.mxu0
  %v785 = vadd.f32 0.0, %v784
  %v786 = vpop.f32.mrf.mxu0
  %787 = vmatprep.mubr.bf16.mxu0 %v460
  %788 = vmatmul.mubr.bf16.gmra.mxu0 %v459
  %v789 = vpop.f32.mrf.mxu0
  %v790 = vadd.f32 0.0, %v789
  %v791 = vpop.f32.mrf.mxu0
  %v792 = vpop.f32.mrf.mxu0
  %v793 = vadd.f32 0.0, %v792
  %v794 = vpop.f32.mrf.mxu0
  %795 = vmatprep.mubr.bf16.mxu0 %v462
  %796 = vmatmul.mubr.bf16.gmra.mxu0 %v461
  %v797 = vpop.f32.mrf.mxu0
  %v798 = vadd.f32 0.0, %v797
  %v799 = vpop.f32.mrf.mxu0
  %v800 = vpop.f32.mrf.mxu0
  %v801 = vadd.f32 0.0, %v800
  %v802 = vpop.f32.mrf.mxu0
  %803 = vmatprep.mubr.bf16.mxu0 %v464
  %804 = vmatmul.mubr.bf16.gmra.mxu0 %v463
  %v805 = vpop.f32.mrf.mxu0
  %v806 = vadd.f32 0.0, %v805
  %v807 = vpop.f32.mrf.mxu0
  %v808 = vpop.f32.mrf.mxu0
  %v809 = vadd.f32 0.0, %v808
  %v810 = vpop.f32.mrf.mxu0
  %811 = vmatprep.mubr.bf16.mxu0 %v466
  %812 = vmatmul.mubr.bf16.gmra.mxu0 %v465
  %v813 = vpop.f32.mrf.mxu0
  %v814 = vadd.f32 0.0, %v813
  %v815 = vpop.f32.mrf.mxu0
  %v816 = vpop.f32.mrf.mxu0
  %v817 = vadd.f32 0.0, %v816
  %v818 = vpop.f32.mrf.mxu0
  %819 = vmatprep.mubr.bf16.mxu0 %v468
  %820 = vmatmul.mubr.bf16.gmra.mxu0 %v467
  %v821 = vpop.f32.mrf.mxu0
  %v822 = vadd.f32 0.0, %v821
  %v823 = vpop.f32.mrf.mxu0
  %v824 = vpop.f32.mrf.mxu0
  %v825 = vadd.f32 0.0, %v824
  %v826 = vpop.f32.mrf.mxu0
  %827 = vmatprep.mubr.bf16.mxu0 %v470
  %828 = vmatmul.mubr.bf16.gmra.mxu0 %v469
  %v829 = vpop.f32.mrf.mxu0
  %v830 = vadd.f32 0.0, %v829
  %v831 = vpop.f32.mrf.mxu0
  %v832 = vpop.f32.mrf.mxu0
  %v833 = vadd.f32 0.0, %v832
  %v834 = vpop.f32.mrf.mxu0
  %835 = vmatprep.mubr.bf16.mxu0 %v472
  %836 = vmatmul.mubr.bf16.gmra.mxu0 %v471
  %v837 = vpop.f32.mrf.mxu0
  %v838 = vadd.f32 0.0, %v837
  %v839 = vpop.f32.mrf.mxu0
  %v840 = vpop.f32.mrf.mxu0
  %v841 = vadd.f32 0.0, %v840
  %v842 = vpop.f32.mrf.mxu0
  %843 = vmatprep.mubr.bf16.mxu0 %v474
  %844 = vmatmul.mubr.bf16.gmra.mxu0 %v473
  %v845 = vpop.f32.mrf.mxu0
  %v846 = vadd.f32 0.0, %v845
  %v847 = vpop.f32.mrf.mxu0
  %v848 = vpop.f32.mrf.mxu0
  %v849 = vadd.f32 0.0, %v848
  %v850 = vpop.f32.mrf.mxu0
  %851 = vmatprep.mubr.bf16.mxu0 %v476
  %852 = vmatmul.mubr.bf16.gmra.mxu0 %v475
  %v853 = vpop.f32.mrf.mxu0
  %v854 = vadd.f32 0.0, %v853
  %v855 = vpop.f32.mrf.mxu0
  %v856 = vpop.f32.mrf.mxu0
  %v857 = vadd.f32 0.0, %v856
  %v858 = vpop.f32.mrf.mxu0
  %859 = vmatprep.mubr.bf16.mxu0 %v478
  %860 = vmatmul.mubr.bf16.gmra.mxu0 %v477
  %v861 = vpop.f32.mrf.mxu0
  %v862 = vadd.f32 0.0, %v861
  %v863 = vpop.f32.mrf.mxu0
  %v864 = vpop.f32.mrf.mxu0
  %v865 = vadd.f32 0.0, %v864
  %v866 = vpop.f32.mrf.mxu0
  %867 = vmatprep.mubr.bf16.mxu0 %v480
  %868 = vmatmul.mubr.bf16.gmra.mxu0 %v479
  %v869 = vpop.f32.mrf.mxu0
  %v870 = vadd.f32 0.0, %v869
  %v871 = vpop.f32.mrf.mxu0
  %v872 = vpop.f32.mrf.mxu0
  %v873 = vadd.f32 0.0, %v872
  %v874 = vpop.f32.mrf.mxu0
  %875 = vmatprep.mubr.bf16.mxu0 %v482
  %876 = vmatmul.mubr.bf16.gmra.mxu0 %v481
  %v877 = vpop.f32.mrf.mxu0
  %v878 = vadd.f32 0.0, %v877
  %v879 = vpop.f32.mrf.mxu0
  %v880 = vpop.f32.mrf.mxu0
  %v881 = vadd.f32 0.0, %v880
  %v882 = vpop.f32.mrf.mxu0
  %883 = vmatprep.mubr.bf16.mxu0 %v484
  %884 = vmatmul.mubr.bf16.gmra.mxu0 %v483
  %v885 = vpop.f32.mrf.mxu0
  %v886 = vadd.f32 0.0, %v885
  %v887 = vpop.f32.mrf.mxu0
  %v888 = vpop.f32.mrf.mxu0
  %v889 = vadd.f32 0.0, %v888
  %v890 = vpop.f32.mrf.mxu0
  %891 = vmatprep.mubr.bf16.mxu0 %v486
  %892 = vmatmul.mubr.bf16.gmra.mxu0 %v485
  %v893 = vpop.f32.mrf.mxu0
  %v894 = vadd.f32 0.0, %v893
  %v895 = vpop.f32.mrf.mxu0
  %v896 = vpop.f32.mrf.mxu0
  %v897 = vadd.f32 0.0, %v896
  %v898 = vpop.f32.mrf.mxu0
  %899 = vmatprep.mubr.bf16.mxu0 %v488
  %900 = vmatmul.mubr.bf16.gmra.mxu0 %v487
  %v901 = vpop.f32.mrf.mxu0
  %v902 = vadd.f32 0.0, %v901
  %v903 = vpop.f32.mrf.mxu0
  %v904 = vpop.f32.mrf.mxu0
  %v905 = vadd.f32 0.0, %v904
  %v906 = vpop.f32.mrf.mxu0
  %907 = vmatprep.mubr.bf16.mxu0 %v490
  %908 = vmatmul.mubr.bf16.gmra.mxu0 %v489
  %v909 = vpop.f32.mrf.mxu0
  %v910 = vadd.f32 0.0, %v909
  %v911 = vpop.f32.mrf.mxu0
  %v912 = vpop.f32.mrf.mxu0
  %v913 = vadd.f32 0.0, %v912
  %v914 = vpop.f32.mrf.mxu0
  %915 = vmatprep.mubr.bf16.mxu0 %v492
  %916 = vmatmul.mubr.bf16.gmra.mxu0 %v491
  %v917 = vpop.f32.mrf.mxu0
  %v918 = vadd.f32 0.0, %v917
  %v919 = vpop.f32.mrf.mxu0
  %v920 = vpop.f32.mrf.mxu0
  %v921 = vadd.f32 0.0, %v920
  %v922 = vpop.f32.mrf.mxu0
  %923 = vmatprep.mubr.bf16.mxu0 %v494
  %924 = vmatmul.mubr.bf16.gmra.mxu0 %v493
  %v925 = vpop.f32.mrf.mxu0
  %v926 = vadd.f32 0.0, %v925
  %v927 = vpop.f32.mrf.mxu0
  %v928 = vpop.f32.mrf.mxu0
  %v929 = vadd.f32 0.0, %v928
  %v930 = vpop.f32.mrf.mxu0
  %931 = vmatprep.mubr.bf16.mxu0 %v496
  %932 = vmatmul.mubr.bf16.gmra.mxu0 %v495
  %v933 = vpop.f32.mrf.mxu0
  %v934 = vadd.f32 0.0, %v933
  %v935 = vpop.f32.mrf.mxu0
  %v936 = vpop.f32.mrf.mxu0
  %v937 = vadd.f32 0.0, %v936
  %v938 = vpop.f32.mrf.mxu0
  %939 = vmatprep.mubr.bf16.mxu0 %v498
  %940 = vmatmul.mubr.bf16.gmra.mxu0 %v497
  %v941 = vpop.f32.mrf.mxu0
  %v942 = vadd.f32 0.0, %v941
  %v943 = vpop.f32.mrf.mxu0
  %v944 = vpop.f32.mrf.mxu0
  %v945 = vadd.f32 0.0, %v944
  %v946 = vpop.f32.mrf.mxu0
  %947 = vdwg.mxu0
  %v948 = vadd.f32 %v83, %v694
  %v949 = vadd.f32 %v84, %v697
  %v950 = vadd.f32 %v85, %v702
  %v951 = vadd.f32 %v86, %v705
  %v952 = vadd.f32 %v87, %v710
  %v953 = vadd.f32 %v88, %v713
  %v954 = vadd.f32 %v89, %v718
  %v955 = vadd.f32 %v90, %v721
  %v956 = vadd.f32 %v91, %v726
  %v957 = vadd.f32 %v92, %v729
  %v958 = vadd.f32 %v93, %v734
  %v959 = vadd.f32 %v94, %v737
  %v960 = vadd.f32 %v95, %v742
  %v961 = vadd.f32 %v96, %v745
  %v962 = vadd.f32 %v97, %v750
  %v963 = vadd.f32 %v98, %v753
  %v964 = vadd.f32 %v99, %v758
  %v965 = vadd.f32 %v100, %v761
  %v966 = vadd.f32 %v101, %v766
  %v967 = vadd.f32 %v102, %v769
  %v968 = vadd.f32 %v103, %v774
  %v969 = vadd.f32 %v104, %v777
  %v970 = vadd.f32 %v105, %v782
  %v971 = vadd.f32 %v106, %v785
  %v972 = vadd.f32 %v107, %v790
  %v973 = vadd.f32 %v108, %v793
  %v974 = vadd.f32 %v109, %v798
  %v975 = vadd.f32 %v110, %v801
  %v976 = vadd.f32 %v111, %v806
  %v977 = vadd.f32 %v112, %v809
  %v978 = vadd.f32 %v113, %v814
  %v979 = vadd.f32 %v114, %v817
  %v980 = vadd.f32 %v115, %v822
  %v981 = vadd.f32 %v116, %v825
  %v982 = vadd.f32 %v117, %v830
  %v983 = vadd.f32 %v118, %v833
  %v984 = vadd.f32 %v119, %v838
  %v985 = vadd.f32 %v120, %v841
  %v986 = vadd.f32 %v121, %v846
  %v987 = vadd.f32 %v122, %v849
  %v988 = vadd.f32 %v123, %v854
  %v989 = vadd.f32 %v124, %v857
  %v990 = vadd.f32 %v125, %v862
  %v991 = vadd.f32 %v126, %v865
  %v992 = vadd.f32 %v127, %v870
  %v993 = vadd.f32 %v128, %v873
  %v994 = vadd.f32 %v129, %v878
  %v995 = vadd.f32 %v130, %v881
  %v996 = vadd.f32 %v131, %v886
  %v997 = vadd.f32 %v132, %v889
  %v998 = vadd.f32 %v133, %v894
  %v999 = vadd.f32 %v134, %v897
  %v1000 = vadd.f32 %v135, %v902
  %v1001 = vadd.f32 %v136, %v905
  %v1002 = vadd.f32 %v137, %v910
  %v1003 = vadd.f32 %v138, %v913
  %v1004 = vadd.f32 %v139, %v918
  %v1005 = vadd.f32 %v140, %v921
  %v1006 = vadd.f32 %v141, %v926
  %v1007 = vadd.f32 %v142, %v929
  %v1008 = vadd.f32 %v143, %v934
  %v1009 = vadd.f32 %v144, %v937
  %v1010 = vadd.f32 %v145, %v942
  %v1011 = vadd.f32 %v146, %v945
  %1012 = vst [vmem:[#allocation2] sm:$0xff] %v948
  %1013 = vst [vmem:[#allocation2 + $0x8] sm:$0xff] %v949
  %1014 = vst [vmem:[#allocation2 + $0x10] sm:$0xff] %v950
  %1015 = vst [vmem:[#allocation2 + $0x18] sm:$0xff] %v951
  %1016 = vst [vmem:[#allocation2 + $0x20] sm:$0xff] %v952
  %1017 = vst [vmem:[#allocation2 + $0x28] sm:$0xff] %v953
  %1018 = vst [vmem:[#allocation2 + $0x30] sm:$0xff] %v954
  %1019 = vst [vmem:[#allocation2 + $0x38] sm:$0xff] %v955
  %1020 = vst [vmem:[#allocation2 + $0x40] sm:$0xff] %v956
  %1021 = vst [vmem:[#allocation2 + $0x48] sm:$0xff] %v957
  %1022 = vst [vmem:[#allocation2 + $0x50] sm:$0xff] %v958
  %1023 = vst [vmem:[#allocation2 + $0x58] sm:$0xff] %v959
  %1024 = vst [vmem:[#allocation2 + $0x60] sm:$0xff] %v960
  %1025 = vst [vmem:[#allocation2 + $0x68] sm:$0xff] %v961
  %1026 = vst [vmem:[#allocation2 + $0x70] sm:$0xff] %v962
  %1027 = vst [vmem:[#allocation2 + $0x78] sm:$0xff] %v963
  %1028 = vst [vmem:[#allocation2 + $0x80] sm:$0xff] %v964
  %1029 = vst [vmem:[#allocation2 + $0x88] sm:$0xff] %v965
  %1030 = vst [vmem:[#allocation2 + $0x90] sm:$0xff] %v966
  %1031 = vst [vmem:[#allocation2 + $0x98] sm:$0xff] %v967
  %1032 = vst [vmem:[#allocation2 + $0xa0] sm:$0xff] %v968
  %1033 = vst [vmem:[#allocation2 + $0xa8] sm:$0xff] %v969
  %1034 = vst [vmem:[#allocation2 + $0xb0] sm:$0xff] %v970
  %1035 = vst [vmem:[#allocation2 + $0xb8] sm:$0xff] %v971
  %1036 = vst [vmem:[#allocation2 + $0xc0] sm:$0xff] %v972
  %1037 = vst [vmem:[#allocation2 + $0xc8] sm:$0xff] %v973
  %1038 = vst [vmem:[#allocation2 + $0xd0] sm:$0xff] %v974
  %1039 = vst [vmem:[#allocation2 + $0xd8] sm:$0xff] %v975
  %1040 = vst [vmem:[#allocation2 + $0xe0] sm:$0xff] %v976
  %1041 = vst [vmem:[#allocation2 + $0xe8] sm:$0xff] %v977
  %1042 = vst [vmem:[#allocation2 + $0xf0] sm:$0xff] %v978
  %1043 = vst [vmem:[#allocation2 + $0xf8] sm:$0xff] %v979
  %1044 = vst [vmem:[#allocation2 + $0x100] sm:$0xff] %v980
  %1045 = vst [vmem:[#allocation2 + $0x108] sm:$0xff] %v981
  %1046 = vst [vmem:[#allocation2 + $0x110] sm:$0xff] %v982
  %1047 = vst [vmem:[#allocation2 + $0x118] sm:$0xff] %v983
  %1048 = vst [vmem:[#allocation2 + $0x120] sm:$0xff] %v984
  %1049 = vst [vmem:[#allocation2 + $0x128] sm:$0xff] %v985
  %1050 = vst [vmem:[#allocation2 + $0x130] sm:$0xff] %v986
  %1051 = vst [vmem:[#allocation2 + $0x138] sm:$0xff] %v987
  %1052 = vst [vmem:[#allocation2 + $0x140] sm:$0xff] %v988
  %1053 = vst [vmem:[#allocation2 + $0x148] sm:$0xff] %v989
  %1054 = vst [vmem:[#allocation2 + $0x150] sm:$0xff] %v990
  %1055 = vst [vmem:[#allocation2 + $0x158] sm:$0xff] %v991
  %1056 = vst [vmem:[#allocation2 + $0x160] sm:$0xff] %v992
  %1057 = vst [vmem:[#allocation2 + $0x168] sm:$0xff] %v993
  %1058 = vst [vmem:[#allocation2 + $0x170] sm:$0xff] %v994
  %1059 = vst [vmem:[#allocation2 + $0x178] sm:$0xff] %v995
  %1060 = vst [vmem:[#allocation2 + $0x180] sm:$0xff] %v996
  %1061 = vst [vmem:[#allocation2 + $0x188] sm:$0xff] %v997
  %1062 = vst [vmem:[#allocation2 + $0x190] sm:$0xff] %v998
  %1063 = vst [vmem:[#allocation2 + $0x198] sm:$0xff] %v999
  %1064 = vst [vmem:[#allocation2 + $0x1a0] sm:$0xff] %v1000
  %1065 = vst [vmem:[#allocation2 + $0x1a8] sm:$0xff] %v1001
  %1066 = vst [vmem:[#allocation2 + $0x1b0] sm:$0xff] %v1002
  %1067 = vst [vmem:[#allocation2 + $0x1b8] sm:$0xff] %v1003
  %1068 = vst [vmem:[#allocation2 + $0x1c0] sm:$0xff] %v1004
  %1069 = vst [vmem:[#allocation2 + $0x1c8] sm:$0xff] %v1005
  %1070 = vst [vmem:[#allocation2 + $0x1d0] sm:$0xff] %v1006
  %1071 = vst [vmem:[#allocation2 + $0x1d8] sm:$0xff] %v1007
  %1072 = vst [vmem:[#allocation2 + $0x1e0] sm:$0xff] %v1008
  %1073 = vst [vmem:[#allocation2 + $0x1e8] sm:$0xff] %v1009
  %1074 = vst [vmem:[#allocation2 + $0x1f0] sm:$0xff] %v1010
  %1075 = vst [vmem:[#allocation2 + $0x1f8] sm:$0xff] %v1011
  // Predicated region
  $region18: #{encoder_forward.21} parent=0 // pred_check
    %p1076 = pneg %p15
  $region19: #{encoder_forward.21} parent=0 // pred_check_branch
    %1078 = sbr.rel (%p1076) target = $region21
  $region20: #{encoder_forward.21} parent=0 // pred_region
    %v1079 = vld [vmem:[#allocation2] sm:$0xff]
    %v1080 = vld [vmem:[#allocation2 + $0x8] sm:$0xff]
    %v1081 = vld [vmem:[#allocation2 + $0x10] sm:$0xff]
    %v1082 = vld [vmem:[#allocation2 + $0x18] sm:$0xff]
    %v1083 = vld [vmem:[#allocation2 + $0x20] sm:$0xff]
    %v1084 = vld [vmem:[#allocation2 + $0x28] sm:$0xff]
    %v1085 = vld [vmem:[#allocation2 + $0x30] sm:$0xff]
    %v1086 = vld [vmem:[#allocation2 + $0x38] sm:$0xff]
    %v1087 = vld [vmem:[#allocation2 + $0x40] sm:$0xff]
    %v1088 = vld [vmem:[#allocation2 + $0x48] sm:$0xff]
    %v1089 = vld [vmem:[#allocation2 + $0x50] sm:$0xff]
    %v1090 = vld [vmem:[#allocation2 + $0x58] sm:$0xff]
    %v1091 = vld [vmem:[#allocation2 + $0x60] sm:$0xff]
    %v1092 = vld [vmem:[#allocation2 + $0x68] sm:$0xff]
    %v1093 = vld [vmem:[#allocation2 + $0x70] sm:$0xff]
    %v1094 = vld [vmem:[#allocation2 + $0x78] sm:$0xff]
    %v1095 = vld [vmem:[#allocation2 + $0x80] sm:$0xff]
    %v1096 = vld [vmem:[#allocation2 + $0x88] sm:$0xff]
    %v1097 = vld [vmem:[#allocation2 + $0x90] sm:$0xff]
    %v1098 = vld [vmem:[#allocation2 + $0x98] sm:$0xff]
    %v1099 = vld [vmem:[#allocation2 + $0xa0] sm:$0xff]
    %v1100 = vld [vmem:[#allocation2 + $0xa8] sm:$0xff]
    %v1101 = vld [vmem:[#allocation2 + $0xb0] sm:$0xff]
    %v1102 = vld [vmem:[#allocation2 + $0xb8] sm:$0xff]
    %v1103 = vld [vmem:[#allocation2 + $0xc0] sm:$0xff]
    %v1104 = vld [vmem:[#allocation2 + $0xc8] sm:$0xff]
    %v1105 = vld [vmem:[#allocation2 + $0xd0] sm:$0xff]
    %v1106 = vld [vmem:[#allocation2 + $0xd8] sm:$0xff]
    %v1107 = vld [vmem:[#allocation2 + $0xe0] sm:$0xff]
    %v1108 = vld [vmem:[#allocation2 + $0xe8] sm:$0xff]
    %v1109 = vld [vmem:[#allocation2 + $0xf0] sm:$0xff]
    %v1110 = vld [vmem:[#allocation2 + $0xf8] sm:$0xff]
    %v1111 = vld [vmem:[#allocation2 + $0x100] sm:$0xff]
    %v1112 = vld [vmem:[#allocation2 + $0x108] sm:$0xff]
    %v1113 = vld [vmem:[#allocation2 + $0x110] sm:$0xff]
    %v1114 = vld [vmem:[#allocation2 + $0x118] sm:$0xff]
    %v1115 = vld [vmem:[#allocation2 + $0x120] sm:$0xff]
    %v1116 = vld [vmem:[#allocation2 + $0x128] sm:$0xff]
    %v1117 = vld [vmem:[#allocation2 + $0x130] sm:$0xff]
    %v1118 = vld [vmem:[#allocation2 + $0x138] sm:$0xff]
    %v1119 = vld [vmem:[#allocation2 + $0x140] sm:$0xff]
    %v1120 = vld [vmem:[#allocation2 + $0x148] sm:$0xff]
    %v1121 = vld [vmem:[#allocation2 + $0x150] sm:$0xff]
    %v1122 = vld [vmem:[#allocation2 + $0x158] sm:$0xff]
    %v1123 = vld [vmem:[#allocation2 + $0x160] sm:$0xff]
    %v1124 = vld [vmem:[#allocation2 + $0x168] sm:$0xff]
    %v1125 = vld [vmem:[#allocation2 + $0x170] sm:$0xff]
    %v1126 = vld [vmem:[#allocation2 + $0x178] sm:$0xff]
    %v1127 = vld [vmem:[#allocation2 + $0x180] sm:$0xff]
    %v1128 = vld [vmem:[#allocation2 + $0x188] sm:$0xff]
    %v1129 = vld [vmem:[#allocation2 + $0x190] sm:$0xff]
    %v1130 = vld [vmem:[#allocation2 + $0x198] sm:$0xff]
    %v1131 = vld [vmem:[#allocation2 + $0x1a0] sm:$0xff]
    %v1132 = vld [vmem:[#allocation2 + $0x1a8] sm:$0xff]
    %v1133 = vld [vmem:[#allocation2 + $0x1b0] sm:$0xff]
    %v1134 = vld [vmem:[#allocation2 + $0x1b8] sm:$0xff]
    %v1135 = vld [vmem:[#allocation2 + $0x1c0] sm:$0xff]
    %v1136 = vld [vmem:[#allocation2 + $0x1c8] sm:$0xff]
    %v1137 = vld [vmem:[#allocation2 + $0x1d0] sm:$0xff]
    %v1138 = vld [vmem:[#allocation2 + $0x1d8] sm:$0xff]
    %v1139 = vld [vmem:[#allocation2 + $0x1e0] sm:$0xff]
    %v1140 = vld [vmem:[#allocation2 + $0x1e8] sm:$0xff]
    %v1141 = vld [vmem:[#allocation2 + $0x1f0] sm:$0xff]
    %v1142 = vld [vmem:[#allocation2 + $0x1f8] sm:$0xff]
    %v1143 = vld [vmem:[%s2] sm:$0x1]
    %v1145 = vlaneseq
    %v1146 = vshrl.u32 %v1145, 7
    %v1147 = vsub.s32 0, %v1146
    %v1148 = vrot.slane %v1143, %v1147
    %v1150 = vadd.f32 %v1079, %v1148
    %v1151 = vadd.f32 %v1080, %v1148
    %v1152 = vadd.f32 %v1081, %v1148
    %v1153 = vadd.f32 %v1082, %v1148
    %v1154 = vadd.f32 %v1083, %v1148
    %v1155 = vadd.f32 %v1084, %v1148
    %v1156 = vadd.f32 %v1085, %v1148
    %v1157 = vadd.f32 %v1086, %v1148
    %v1158 = vadd.f32 %v1087, %v1148
    %v1159 = vadd.f32 %v1088, %v1148
    %v1160 = vadd.f32 %v1089, %v1148
    %v1161 = vadd.f32 %v1090, %v1148
    %v1162 = vadd.f32 %v1091, %v1148
    %v1163 = vadd.f32 %v1092, %v1148
    %v1164 = vadd.f32 %v1093, %v1148
    %v1165 = vadd.f32 %v1094, %v1148
    %v1166 = vadd.f32 %v1095, %v1148
    %v1167 = vadd.f32 %v1096, %v1148
    %v1168 = vadd.f32 %v1097, %v1148
    %v1169 = vadd.f32 %v1098, %v1148
    %v1170 = vadd.f32 %v1099, %v1148
    %v1171 = vadd.f32 %v1100, %v1148
    %v1172 = vadd.f32 %v1101, %v1148
    %v1173 = vadd.f32 %v1102, %v1148
    %v1174 = vadd.f32 %v1103, %v1148
    %v1175 = vadd.f32 %v1104, %v1148
    %v1176 = vadd.f32 %v1105, %v1148
    %v1177 = vadd.f32 %v1106, %v1148
    %v1178 = vadd.f32 %v1107, %v1148
    %v1179 = vadd.f32 %v1108, %v1148
    %v1180 = vadd.f32 %v1109, %v1148
    %v1181 = vadd.f32 %v1110, %v1148
    %v1182 = vadd.f32 %v1111, %v1148
    %v1183 = vadd.f32 %v1112, %v1148
    %v1184 = vadd.f32 %v1113, %v1148
    %v1185 = vadd.f32 %v1114, %v1148
    %v1186 = vadd.f32 %v1115, %v1148
    %v1187 = vadd.f32 %v1116, %v1148
    %v1188 = vadd.f32 %v1117, %v1148
    %v1189 = vadd.f32 %v1118, %v1148
    %v1190 = vadd.f32 %v1119, %v1148
    %v1191 = vadd.f32 %v1120, %v1148
    %v1192 = vadd.f32 %v1121, %v1148
    %v1193 = vadd.f32 %v1122, %v1148
    %v1194 = vadd.f32 %v1123, %v1148
    %v1195 = vadd.f32 %v1124, %v1148
    %v1196 = vadd.f32 %v1125, %v1148
    %v1197 = vadd.f32 %v1126, %v1148
    %v1198 = vadd.f32 %v1127, %v1148
    %v1199 = vadd.f32 %v1128, %v1148
    %v1200 = vadd.f32 %v1129, %v1148
    %v1201 = vadd.f32 %v1130, %v1148
    %v1202 = vadd.f32 %v1131, %v1148
    %v1203 = vadd.f32 %v1132, %v1148
    %v1204 = vadd.f32 %v1133, %v1148
    %v1205 = vadd.f32 %v1134, %v1148
    %v1206 = vadd.f32 %v1135, %v1148
    %v1207 = vadd.f32 %v1136, %v1148
    %v1208 = vadd.f32 %v1137, %v1148
    %v1209 = vadd.f32 %v1138, %v1148
    %v1210 = vadd.f32 %v1139, %v1148
    %v1211 = vadd.f32 %v1140, %v1148
    %v1212 = vadd.f32 %v1141, %v1148
    %v1213 = vadd.f32 %v1142, %v1148
    %1214 = vst [vmem:[%s3] sm:$0xff] %v1150
    %1215 = vst [vmem:[%s3 + $0x8] sm:$0xff] %v1151
    %1216 = vst [vmem:[%s3 + $0x10] sm:$0xff] %v1152
    %1217 = vst [vmem:[%s3 + $0x18] sm:$0xff] %v1153
    %1218 = vst [vmem:[%s3 + $0x20] sm:$0xff] %v1154
    %1219 = vst [vmem:[%s3 + $0x28] sm:$0xff] %v1155
    %1220 = vst [vmem:[%s3 + $0x30] sm:$0xff] %v1156
    %1221 = vst [vmem:[%s3 + $0x38] sm:$0xff] %v1157
    %1222 = vst [vmem:[%s3 + $0x40] sm:$0xff] %v1158
    %1223 = vst [vmem:[%s3 + $0x48] sm:$0xff] %v1159
    %1224 = vst [vmem:[%s3 + $0x50] sm:$0xff] %v1160
    %1225 = vst [vmem:[%s3 + $0x58] sm:$0xff] %v1161
    %1226 = vst [vmem:[%s3 + $0x60] sm:$0xff] %v1162
    %1227 = vst [vmem:[%s3 + $0x68] sm:$0xff] %v1163
    %1228 = vst [vmem:[%s3 + $0x70] sm:$0xff] %v1164
    %1229 = vst [vmem:[%s3 + $0x78] sm:$0xff] %v1165
    %1230 = vst [vmem:[%s3 + $0x80] sm:$0xff] %v1166
    %1231 = vst [vmem:[%s3 + $0x88] sm:$0xff] %v1167
    %1232 = vst [vmem:[%s3 + $0x90] sm:$0xff] %v1168
    %1233 = vst [vmem:[%s3 + $0x98] sm:$0xff] %v1169
    %1234 = vst [vmem:[%s3 + $0xa0] sm:$0xff] %v1170
    %1235 = vst [vmem:[%s3 + $0xa8] sm:$0xff] %v1171
    %1236 = vst [vmem:[%s3 + $0xb0] sm:$0xff] %v1172
    %1237 = vst [vmem:[%s3 + $0xb8] sm:$0xff] %v1173
    %1238 = vst [vmem:[%s3 + $0xc0] sm:$0xff] %v1174
    %1239 = vst [vmem:[%s3 + $0xc8] sm:$0xff] %v1175
    %1240 = vst [vmem:[%s3 + $0xd0] sm:$0xff] %v1176
    %1241 = vst [vmem:[%s3 + $0xd8] sm:$0xff] %v1177
    %1242 = vst [vmem:[%s3 + $0xe0] sm:$0xff] %v1178
    %1243 = vst [vmem:[%s3 + $0xe8] sm:$0xff] %v1179
    %1244 = vst [vmem:[%s3 + $0xf0] sm:$0xff] %v1180
    %1245 = vst [vmem:[%s3 + $0xf8] sm:$0xff] %v1181
    %1246 = vst [vmem:[%s3 + $0x100] sm:$0xff] %v1182
    %1247 = vst [vmem:[%s3 + $0x108] sm:$0xff] %v1183
    %1248 = vst [vmem:[%s3 + $0x110] sm:$0xff] %v1184
    %1249 = vst [vmem:[%s3 + $0x118] sm:$0xff] %v1185
    %1250 = vst [vmem:[%s3 + $0x120] sm:$0xff] %v1186
    %1251 = vst [vmem:[%s3 + $0x128] sm:$0xff] %v1187
    %1252 = vst [vmem:[%s3 + $0x130] sm:$0xff] %v1188
    %1253 = vst [vmem:[%s3 + $0x138] sm:$0xff] %v1189
    %1254 = vst [vmem:[%s3 + $0x140] sm:$0xff] %v1190
    %1255 = vst [vmem:[%s3 + $0x148] sm:$0xff] %v1191
    %1256 = vst [vmem:[%s3 + $0x150] sm:$0xff] %v1192
    %1257 = vst [vmem:[%s3 + $0x158] sm:$0xff] %v1193
    %1258 = vst [vmem:[%s3 + $0x160] sm:$0xff] %v1194
    %1259 = vst [vmem:[%s3 + $0x168] sm:$0xff] %v1195
    %1260 = vst [vmem:[%s3 + $0x170] sm:$0xff] %v1196
    %1261 = vst [vmem:[%s3 + $0x178] sm:$0xff] %v1197
    %1262 = vst [vmem:[%s3 + $0x180] sm:$0xff] %v1198
    %1263 = vst [vmem:[%s3 + $0x188] sm:$0xff] %v1199
    %1264 = vst [vmem:[%s3 + $0x190] sm:$0xff] %v1200
    %1265 = vst [vmem:[%s3 + $0x198] sm:$0xff] %v1201
    %1266 = vst [vmem:[%s3 + $0x1a0] sm:$0xff] %v1202
    %1267 = vst [vmem:[%s3 + $0x1a8] sm:$0xff] %v1203
    %1268 = vst [vmem:[%s3 + $0x1b0] sm:$0xff] %v1204
    %1269 = vst [vmem:[%s3 + $0x1b8] sm:$0xff] %v1205
    %1270 = vst [vmem:[%s3 + $0x1c0] sm:$0xff] %v1206
    %1271 = vst [vmem:[%s3 + $0x1c8] sm:$0xff] %v1207
    %1272 = vst [vmem:[%s3 + $0x1d0] sm:$0xff] %v1208
    %1273 = vst [vmem:[%s3 + $0x1d8] sm:$0xff] %v1209
    %1274 = vst [vmem:[%s3 + $0x1e0] sm:$0xff] %v1210
    %1275 = vst [vmem:[%s3 + $0x1e8] sm:$0xff] %v1211
    %1276 = vst [vmem:[%s3 + $0x1f0] sm:$0xff] %v1212
    %1277 = vst [vmem:[%s3 + $0x1f8] sm:$0xff] %v1213
  $region21: #{encoder_forward.21} parent=0 // pred_fallthru
    _
  // Predicated region
  $region22: #{encoder_forward.21} parent=0 // pred_check
    _
  $region23: #{encoder_forward.21} parent=0 // pred_check_branch
    %1279 = sbr.rel (0) target = $region25
  $region24: #{encoder_forward.21} parent=0 // pred_region
    _
  $region25: #{encoder_forward.21} parent=0 // pred_fallthru
    _
  // Predicated region
  $region26: #{encoder_forward.21} parent=0 // pred_check
    _
  $region27: #{encoder_forward.21} parent=0 // pred_check_branch
    %1281 = sbr.rel (0) target = $region29
  $region28: #{encoder_forward.21} parent=0 // pred_region
    _
  $region29: #{encoder_forward.21} parent=0 // pred_fallthru
    _

// kernel: encoder_forward.24
$region0: #{encoder_forward.24}
  #allocation0 [shape = 'u32[]', space=smem, size = 0x4, offset = 0x4, fixed_abs, tag = 'smem constant byte address 0x4 - core index']
  #allocation1 [shape = 'u32[144,128]{1,0:T(1,128)}', space=vmem, size = 0x12000, scoped, tag = 'internal scratch']
  #allocation2 [shape = 'f32[128,128]{1,0:T(8,128)}', space=vmem, size = 0x10000, scoped, tag = 'scratch operand']
  %s0 = inlined_call_operand.vmem [shape: bf16[128,128], index: 0, kind: input, shape index: {}]
  %s1 = inlined_call_operand.vmem [shape: bf16[128,128], index: 1, kind: input, shape index: {}]
  %s2 = inlined_call_operand.vmem [shape: f32[1,128], index: 2, kind: input, shape index: {}]
  %s3 = inlined_call_operand.vmem [shape: f32[128,128], index: 3, kind: output, shape index: {}]
  %s4 = sld [smem:[#allocation0]]
  $region30: #{encoder_forward.24} parent=0
    _
  %s6 = ssub.s32 1, %s4
  %s7 = scalar_select 0, %s6, %s4
  // Predicated region
  $region2: #{encoder_forward.24} parent=0 // pred_check
    _
  $region3: #{encoder_forward.24} parent=0 // pred_check_branch
    %9 = sbr.rel (0) target = $region5
  $region4: #{encoder_forward.24} parent=0 // pred_region
    _
  $region5: #{encoder_forward.24} parent=0 // pred_fallthru
    _
  // Predicated region
  $region6: #{encoder_forward.24} parent=0 // pred_check
    _
  $region7: #{encoder_forward.24} parent=0 // pred_check_branch
    %11 = sbr.rel (0) target = $region9
  $region8: #{encoder_forward.24} parent=0 // pred_region
    _
  $region9: #{encoder_forward.24} parent=0 // pred_fallthru
    _
  // Predicated region
  $region10: #{encoder_forward.24} parent=0 // pred_check
    _
  $region11: #{encoder_forward.24} parent=0 // pred_check_branch
    %13 = sbr.rel (0) target = $region13
  $region12: #{encoder_forward.24} parent=0 // pred_region
    _
  $region13: #{encoder_forward.24} parent=0 // pred_fallthru
    _
  %p15 = scmp.eq.s32.totalorder 0, 0
  // Predicated region
  $region14: #{encoder_forward.24} parent=0 // pred_check
    %p16 = pneg %p15
  $region15: #{encoder_forward.24} parent=0 // pred_check_branch
    %18 = sbr.rel (%p16) target = $region17
  $region16: #{encoder_forward.24} parent=0 // pred_region
    %19 = vst [vmem:[#allocation2] sm:$0xff] 0.0
    %20 = vst [vmem:[#allocation2 + $0x8] sm:$0xff] 0.0
    %21 = vst [vmem:[#allocation2 + $0x10] sm:$0xff] 0.0
    %22 = vst [vmem:[#allocation2 + $0x18] sm:$0xff] 0.0
    %23 = vst [vmem:[#allocation2 + $0x20] sm:$0xff] 0.0
    %24 = vst [vmem:[#allocation2 + $0x28] sm:$0xff] 0.0
    %25 = vst [vmem:[#allocation2 + $0x30] sm:$0xff] 0.0
    %26 = vst [vmem:[#allocation2 + $0x38] sm:$0xff] 0.0
    %27 = vst [vmem:[#allocation2 + $0x40] sm:$0xff] 0.0
    %28 = vst [vmem:[#allocation2 + $0x48] sm:$0xff] 0.0
    %29 = vst [vmem:[#allocation2 + $0x50] sm:$0xff] 0.0
    %30 = vst [vmem:[#allocation2 + $0x58] sm:$0xff] 0.0
    %31 = vst [vmem:[#allocation2 + $0x60] sm:$0xff] 0.0
    %32 = vst [vmem:[#allocation2 + $0x68] sm:$0xff] 0.0
    %33 = vst [vmem:[#allocation2 + $0x70] sm:$0xff] 0.0
    %34 = vst [vmem:[#allocation2 + $0x78] sm:$0xff] 0.0
  $region17: #{encoder_forward.24} parent=0 // pred_fallthru
    _
  %v35 = vld [vmem:[#allocation2] sm:$0xff]
  %v36 = vld [vmem:[#allocation2 + $0x8] sm:$0xff]
  %v37 = vld [vmem:[#allocation2 + $0x10] sm:$0xff]
  %v38 = vld [vmem:[#allocation2 + $0x18] sm:$0xff]
  %v39 = vld [vmem:[#allocation2 + $0x20] sm:$0xff]
  %v40 = vld [vmem:[#allocation2 + $0x28] sm:$0xff]
  %v41 = vld [vmem:[#allocation2 + $0x30] sm:$0xff]
  %v42 = vld [vmem:[#allocation2 + $0x38] sm:$0xff]
  %v43 = vld [vmem:[#allocation2 + $0x40] sm:$0xff]
  %v44 = vld [vmem:[#allocation2 + $0x48] sm:$0xff]
  %v45 = vld [vmem:[#allocation2 + $0x50] sm:$0xff]
  %v46 = vld [vmem:[#allocation2 + $0x58] sm:$0xff]
  %v47 = vld [vmem:[#allocation2 + $0x60] sm:$0xff]
  %v48 = vld [vmem:[#allocation2 + $0x68] sm:$0xff]
  %v49 = vld [vmem:[#allocation2 + $0x70] sm:$0xff]
  %v50 = vld [vmem:[#allocation2 + $0x78] sm:$0xff]
  %v51 = vld [vmem:[%s0] sm:$0xf]
  %v52 = vld [vmem:[%s0 + $0x4] sm:$0xf]
  %v53 = vld [vmem:[%s0 + $0x8] sm:$0xf]
  %v54 = vld [vmem:[%s0 + $0xc] sm:$0xf]
  %v55 = vld [vmem:[%s0 + $0x10] sm:$0xf]
  %v56 = vld [vmem:[%s0 + $0x14] sm:$0xf]
  %v57 = vld [vmem:[%s0 + $0x18] sm:$0xf]
  %v58 = vld [vmem:[%s0 + $0x1c] sm:$0xf]
  %v59 = vld [vmem:[%s0 + $0x20] sm:$0xf]
  %v60 = vld [vmem:[%s0 + $0x24] sm:$0xf]
  %v61 = vld [vmem:[%s0 + $0x28] sm:$0xf]
  %v62 = vld [vmem:[%s0 + $0x2c] sm:$0xf]
  %v63 = vld [vmem:[%s0 + $0x30] sm:$0xf]
  %v64 = vld [vmem:[%s0 + $0x34] sm:$0xf]
  %v65 = vld [vmem:[%s0 + $0x38] sm:$0xf]
  %v66 = vld [vmem:[%s0 + $0x3c] sm:$0xf]
  %v67 = vld [vmem:[%s1] sm:$0xf]
  %v68 = vld [vmem:[%s1 + $0x4] sm:$0xf]
  %v69 = vld [vmem:[%s1 + $0x8] sm:$0xf]
  %v70 = vld [vmem:[%s1 + $0xc] sm:$0xf]
  %v71 = vld [vmem:[%s1 + $0x10] sm:$0xf]
  %v72 = vld [vmem:[%s1 + $0x14] sm:$0xf]
  %v73 = vld [vmem:[%s1 + $0x18] sm:$0xf]
  %v74 = vld [vmem:[%s1 + $0x1c] sm:$0xf]
  %v75 = vld [vmem:[%s1 + $0x20] sm:$0xf]
  %v76 = vld [vmem:[%s1 + $0x24] sm:$0xf]
  %v77 = vld [vmem:[%s1 + $0x28] sm:$0xf]
  %v78 = vld [vmem:[%s1 + $0x2c] sm:$0xf]
  %v79 = vld [vmem:[%s1 + $0x30] sm:$0xf]
  %v80 = vld [vmem:[%s1 + $0x34] sm:$0xf]
  %v81 = vld [vmem:[%s1 + $0x38] sm:$0xf]
  %v82 = vld [vmem:[%s1 + $0x3c] sm:$0xf]
  %v99 = vunpack.c.l.b16 %v51
  %v100 = vunpack.c.l.b16 %v52
  %v101 = vunpack.c.l.b16 %v53
  %v102 = vunpack.c.l.b16 %v54
  %v103 = vunpack.c.l.b16 %v55
  %v104 = vunpack.c.l.b16 %v56
  %v105 = vunpack.c.l.b16 %v57
  %v106 = vunpack.c.l.b16 %v58
  %v107 = vunpack.c.l.b16 %v59
  %v108 = vunpack.c.l.b16 %v60
  %v109 = vunpack.c.l.b16 %v61
  %v110 = vunpack.c.l.b16 %v62
  %v111 = vunpack.c.l.b16 %v63
  %v112 = vunpack.c.l.b16 %v64
  %v113 = vunpack.c.l.b16 %v65
  %v114 = vunpack.c.l.b16 %v66
  %v115 = vpack.c.b16 %v100, %v99
  %v116 = vpack.c.b16 %v102, %v101
  %v117 = vpack.c.b16 %v104, %v103
  %v118 = vpack.c.b16 %v106, %v105
  %v119 = vpack.c.b16 %v108, %v107
  %v120 = vpack.c.b16 %v110, %v109
  %v121 = vpack.c.b16 %v112, %v111
  %v122 = vpack.c.b16 %v114, %v113
  %v147 = vunpack.c.l.b16 %v67
  %v148 = vunpack.c.l.b16 %v68
  %v149 = vunpack.c.l.b16 %v69
  %v150 = vunpack.c.l.b16 %v70
  %v151 = vunpack.c.l.b16 %v71
  %v152 = vunpack.c.l.b16 %v72
  %v153 = vunpack.c.l.b16 %v73
  %v154 = vunpack.c.l.b16 %v74
  %v155 = vunpack.c.l.b16 %v75
  %v156 = vunpack.c.l.b16 %v76
  %v157 = vunpack.c.l.b16 %v77
  %v158 = vunpack.c.l.b16 %v78
  %v159 = vunpack.c.l.b16 %v79
  %v160 = vunpack.c.l.b16 %v80
  %v161 = vunpack.c.l.b16 %v81
  %v162 = vunpack.c.l.b16 %v82
  %v163 = vpack.c.b16 %v148, %v147
  %v164 = vpack.c.b16 %v150, %v149
  %v165 = vpack.c.b16 %v152, %v151
  %v166 = vpack.c.b16 %v154, %v153
  %v167 = vpack.c.b16 %v156, %v155
  %v168 = vpack.c.b16 %v158, %v157
  %v169 = vpack.c.b16 %v160, %v159
  %v170 = vpack.c.b16 %v162, %v161
  %179 = vmatprep.subr.bf16.mxu0 0
  %180 = vmatpush1.bf16.msra.mxu0 %v170
  %181 = vmatprep.subr.bf16.mxu0 0
  %182 = vmatpush1.bf16.msra.mxu0 %v169
  %183 = vmatprep.subr.bf16.mxu0 0
  %184 = vmatpush1.bf16.msra.mxu0 %v168
  %185 = vmatprep.subr.bf16.mxu0 0
  %186 = vmatpush1.bf16.msra.mxu0 %v167
  %187 = vmatprep.subr.bf16.mxu0 0
  %188 = vmatpush1.bf16.msra.mxu0 %v166
  %189 = vmatprep.subr.bf16.mxu0 0
  %190 = vmatpush1.bf16.msra.mxu0 %v165
  %191 = vmatprep.subr.bf16.mxu0 0
  %192 = vmatpush1.bf16.msra.mxu0 %v164
  %193 = vmatprep.subr.bf16.mxu0 0
  %194 = vmatpush1.bf16.msra.mxu0 %v163
  %195 = vmatprep.subr.bf16.mxu0 0
  %196 = vmatpush2.bf16.msra.mxu0 0
  %197 = vmatprep.subr.bf16.mxu0 0
  %198 = vmatpush2.bf16.msra.mxu0 0
  %199 = vmatprep.subr.bf16.mxu0 0
  %200 = vmatpush2.bf16.msra.mxu0 0
  %201 = vmatprep.subr.bf16.mxu0 0
  %202 = vmatpush2.bf16.msra.mxu0 0
  %203 = vmatprep.subr.bf16.mxu0 0
  %204 = vmatpush2.bf16.msra.mxu0 0
  %205 = vmatprep.subr.bf16.mxu0 0
  %206 = vmatpush2.bf16.msra.mxu0 0
  %207 = vmatprep.subr.bf16.mxu0 0
  %208 = vmatpush2.bf16.msra.mxu0 0
  %209 = vmatprep.subr.bf16.mxu0 0
  %210 = vmatpush2.bf16.msra.mxu0 0
  %211 = vmatprep.mubr.bf16.mxu0 0
  %212 = vmatmul.mubr.bf16.gmra.mxu0 %v115
  %v213 = vpop.f32.mrf.mxu0
  %v214 = vadd.f32 0.0, %v213
  %v215 = vpop.f32.mrf.mxu0
  %v216 = vpop.f32.mrf.mxu0
  %v217 = vadd.f32 0.0, %v216
  %v218 = vpop.f32.mrf.mxu0
  %219 = vmatprep.mubr.bf16.mxu0 0
  %220 = vmatmul.mubr.bf16.gmra.mxu0 %v116
  %v221 = vpop.f32.mrf.mxu0
  %v222 = vadd.f32 0.0, %v221
  %v223 = vpop.f32.mrf.mxu0
  %v224 = vpop.f32.mrf.mxu0
  %v225 = vadd.f32 0.0, %v224
  %v226 = vpop.f32.mrf.mxu0
  %227 = vmatprep.mubr.bf16.mxu0 0
  %228 = vmatmul.mubr.bf16.gmra.mxu0 %v117
  %v229 = vpop.f32.mrf.mxu0
  %v230 = vadd.f32 0.0, %v229
  %v231 = vpop.f32.mrf.mxu0
  %v232 = vpop.f32.mrf.mxu0
  %v233 = vadd.f32 0.0, %v232
  %v234 = vpop.f32.mrf.mxu0
  %235 = vmatprep.mubr.bf16.mxu0 0
  %236 = vmatmul.mubr.bf16.gmra.mxu0 %v118
  %v237 = vpop.f32.mrf.mxu0
  %v238 = vadd.f32 0.0, %v237
  %v239 = vpop.f32.mrf.mxu0
  %v240 = vpop.f32.mrf.mxu0
  %v241 = vadd.f32 0.0, %v240
  %v242 = vpop.f32.mrf.mxu0
  %243 = vmatprep.mubr.bf16.mxu0 0
  %244 = vmatmul.mubr.bf16.gmra.mxu0 %v119
  %v245 = vpop.f32.mrf.mxu0
  %v246 = vadd.f32 0.0, %v245
  %v247 = vpop.f32.mrf.mxu0
  %v248 = vpop.f32.mrf.mxu0
  %v249 = vadd.f32 0.0, %v248
  %v250 = vpop.f32.mrf.mxu0
  %251 = vmatprep.mubr.bf16.mxu0 0
  %252 = vmatmul.mubr.bf16.gmra.mxu0 %v120
  %v253 = vpop.f32.mrf.mxu0
  %v254 = vadd.f32 0.0, %v253
  %v255 = vpop.f32.mrf.mxu0
  %v256 = vpop.f32.mrf.mxu0
  %v257 = vadd.f32 0.0, %v256
  %v258 = vpop.f32.mrf.mxu0
  %259 = vmatprep.mubr.bf16.mxu0 0
  %260 = vmatmul.mubr.bf16.gmra.mxu0 %v121
  %v261 = vpop.f32.mrf.mxu0
  %v262 = vadd.f32 0.0, %v261
  %v263 = vpop.f32.mrf.mxu0
  %v264 = vpop.f32.mrf.mxu0
  %v265 = vadd.f32 0.0, %v264
  %v266 = vpop.f32.mrf.mxu0
  %267 = vmatprep.mubr.bf16.mxu0 0
  %268 = vmatmul.mubr.bf16.gmra.mxu0 %v122
  %v269 = vpop.f32.mrf.mxu0
  %v270 = vadd.f32 0.0, %v269
  %v271 = vpop.f32.mrf.mxu0
  %v272 = vpop.f32.mrf.mxu0
  %v273 = vadd.f32 0.0, %v272
  %v274 = vpop.f32.mrf.mxu0
  %275 = vdwg.mxu0
  %v276 = vadd.f32 %v35, %v214
  %v277 = vadd.f32 %v36, %v217
  %v278 = vadd.f32 %v37, %v222
  %v279 = vadd.f32 %v38, %v225
  %v280 = vadd.f32 %v39, %v230
  %v281 = vadd.f32 %v40, %v233
  %v282 = vadd.f32 %v41, %v238
  %v283 = vadd.f32 %v42, %v241
  %v284 = vadd.f32 %v43, %v246
  %v285 = vadd.f32 %v44, %v249
  %v286 = vadd.f32 %v45, %v254
  %v287 = vadd.f32 %v46, %v257
  %v288 = vadd.f32 %v47, %v262
  %v289 = vadd.f32 %v48, %v265
  %v290 = vadd.f32 %v49, %v270
  %v291 = vadd.f32 %v50, %v273
  %292 = vst [vmem:[#allocation2] sm:$0xff] %v276
  %293 = vst [vmem:[#allocation2 + $0x8] sm:$0xff] %v277
  %294 = vst [vmem:[#allocation2 + $0x10] sm:$0xff] %v278
  %295 = vst [vmem:[#allocation2 + $0x18] sm:$0xff] %v279
  %296 = vst [vmem:[#allocation2 + $0x20] sm:$0xff] %v280
  %297 = vst [vmem:[#allocation2 + $0x28] sm:$0xff] %v281
  %298 = vst [vmem:[#allocation2 + $0x30] sm:$0xff] %v282
  %299 = vst [vmem:[#allocation2 + $0x38] sm:$0xff] %v283
  %300 = vst [vmem:[#allocation2 + $0x40] sm:$0xff] %v284
  %301 = vst [vmem:[#allocation2 + $0x48] sm:$0xff] %v285
  %302 = vst [vmem:[#allocation2 + $0x50] sm:$0xff] %v286
  %303 = vst [vmem:[#allocation2 + $0x58] sm:$0xff] %v287
  %304 = vst [vmem:[#allocation2 + $0x60] sm:$0xff] %v288
  %305 = vst [vmem:[#allocation2 + $0x68] sm:$0xff] %v289
  %306 = vst [vmem:[#allocation2 + $0x70] sm:$0xff] %v290
  %307 = vst [vmem:[#allocation2 + $0x78] sm:$0xff] %v291
  // Predicated region
  $region18: #{encoder_forward.24} parent=0 // pred_check
    %p308 = pneg %p15
  $region19: #{encoder_forward.24} parent=0 // pred_check_branch
    %310 = sbr.rel (%p308) target = $region21
  $region20: #{encoder_forward.24} parent=0 // pred_region
    %v311 = vld [vmem:[#allocation2] sm:$0xff]
    %v312 = vld [vmem:[#allocation2 + $0x8] sm:$0xff]
    %v313 = vld [vmem:[#allocation2 + $0x10] sm:$0xff]
    %v314 = vld [vmem:[#allocation2 + $0x18] sm:$0xff]
    %v315 = vld [vmem:[#allocation2 + $0x20] sm:$0xff]
    %v316 = vld [vmem:[#allocation2 + $0x28] sm:$0xff]
    %v317 = vld [vmem:[#allocation2 + $0x30] sm:$0xff]
    %v318 = vld [vmem:[#allocation2 + $0x38] sm:$0xff]
    %v319 = vld [vmem:[#allocation2 + $0x40] sm:$0xff]
    %v320 = vld [vmem:[#allocation2 + $0x48] sm:$0xff]
    %v321 = vld [vmem:[#allocation2 + $0x50] sm:$0xff]
    %v322 = vld [vmem:[#allocation2 + $0x58] sm:$0xff]
    %v323 = vld [vmem:[#allocation2 + $0x60] sm:$0xff]
    %v324 = vld [vmem:[#allocation2 + $0x68] sm:$0xff]
    %v325 = vld [vmem:[#allocation2 + $0x70] sm:$0xff]
    %v326 = vld [vmem:[#allocation2 + $0x78] sm:$0xff]
    %v327 = vld [vmem:[%s2] sm:$0x1]
    %v329 = vlaneseq
    %v330 = vshrl.u32 %v329, 7
    %v331 = vsub.s32 0, %v330
    %v332 = vrot.slane %v327, %v331
    %v334 = vadd.f32 %v311, %v332
    %v335 = vadd.f32 %v312, %v332
    %v336 = vadd.f32 %v313, %v332
    %v337 = vadd.f32 %v314, %v332
    %v338 = vadd.f32 %v315, %v332
    %v339 = vadd.f32 %v316, %v332
    %v340 = vadd.f32 %v317, %v332
    %v341 = vadd.f32 %v318, %v332
    %v342 = vadd.f32 %v319, %v332
    %v343 = vadd.f32 %v320, %v332
    %v344 = vadd.f32 %v321, %v332
    %v345 = vadd.f32 %v322, %v332
    %v346 = vadd.f32 %v323, %v332
    %v347 = vadd.f32 %v324, %v332
    %v348 = vadd.f32 %v325, %v332
    %v349 = vadd.f32 %v326, %v332
    %350 = vst [vmem:[%s3] sm:$0xff] %v334
    %351 = vst [vmem:[%s3 + $0x8] sm:$0xff] %v335
    %352 = vst [vmem:[%s3 + $0x10] sm:$0xff] %v336
    %353 = vst [vmem:[%s3 + $0x18] sm:$0xff] %v337
    %354 = vst [vmem:[%s3 + $0x20] sm:$0xff] %v338
    %355 = vst [vmem:[%s3 + $0x28] sm:$0xff] %v339
    %356 = vst [vmem:[%s3 + $0x30] sm:$0xff] %v340
    %357 = vst [vmem:[%s3 + $0x38] sm:$0xff] %v341
    %358 = vst [vmem:[%s3 + $0x40] sm:$0xff] %v342
    %359 = vst [vmem:[%s3 + $0x48] sm:$0xff] %v343
    %360 = vst [vmem:[%s3 + $0x50] sm:$0xff] %v344
    %361 = vst [vmem:[%s3 + $0x58] sm:$0xff] %v345
    %362 = vst [vmem:[%s3 + $0x60] sm:$0xff] %v346
    %363 = vst [vmem:[%s3 + $0x68] sm:$0xff] %v347
    %364 = vst [vmem:[%s3 + $0x70] sm:$0xff] %v348
    %365 = vst [vmem:[%s3 + $0x78] sm:$0xff] %v349
  $region21: #{encoder_forward.24} parent=0 // pred_fallthru
    _
  // Predicated region
  $region22: #{encoder_forward.24} parent=0 // pred_check
    _
  $region23: #{encoder_forward.24} parent=0 // pred_check_branch
    %367 = sbr.rel (0) target = $region25
  $region24: #{encoder_forward.24} parent=0 // pred_region
    _
  $region25: #{encoder_forward.24} parent=0 // pred_fallthru
    _
  // Predicated region
  $region26: #{encoder_forward.24} parent=0 // pred_check
    _
  $region27: #{encoder_forward.24} parent=0 // pred_check_branch
    %369 = sbr.rel (0) target = $region29
  $region28: #{encoder_forward.24} parent=0 // pred_region
    _
  $region29: #{encoder_forward.24} parent=0 // pred_fallthru
    _

// kernel: encoder_forward.25
$region0: #{encoder_forward.25}
  #allocation0 [shape = 'u32[]', space=smem, size = 0x4, offset = 0x4, fixed_abs, tag = 'smem constant byte address 0x4 - core index']
  #allocation1 [shape = 'u32[144,128]{1,0:T(1,128)}', space=vmem, size = 0x12000, scoped, tag = 'internal scratch']
  #allocation2 [shape = 'f32[1,1,16]{2,1,0:T(1,128)}', space=vmem, size = 0x200, scoped, tag = 'scratch operand']
  #allocation3 [shape = 'f32[1,1,16]{2,1,0:T(1,128)}', space=vmem, size = 0x200, scoped, tag = 'scratch operand']
  %s0 = inlined_call_operand.vmem [shape: f32[2,64,16], index: 0, kind: input, shape index: {}]
  %s1 = inlined_call_operand.vmem [shape: f32[2,1,16], index: 1, kind: output, shape index: {0}]
  %s2 = inlined_call_operand.vmem [shape: f32[2,1,16], index: 2, kind: output, shape index: {1}]
  %3 = xla_tuple %s1, %s2
  %s4 = sld [smem:[#allocation0]]
  $region53: #{encoder_forward.25} parent=0
    _
  %s6 = ssub.s32 1, %s4
  %s7 = scalar_select 0, %s6, %s4
  loop: start=0, step=1, limit=4
  $region2: #{encoder_forward.25} parent=0 // loop_pre_header
    _
  $region3: #{encoder_forward.25} parent=0 // loop_header
    %s9 = sphi 0, %s13
    %p10 = scmp.ge.s32.totalorder %s9, 4
    %s16 = sphi 0, %s28
    %s17 = sphi 0, %s24
    %s18 = sphi 0, %s16
    %s19 = sphi 0, %s17
    %s20 = sphi 0, %s18
    %s21 = sphi 0, %s19
    %s33 = sphi 0, %s35
    %s36 = sphi 0, %s33
    %s37 = sphi 0, %s36
    %s53 = sphi 0, %s37
    %s59 = sphi 0, %s61
    %s62 = sphi 0, %s59
    %s63 = sphi 0, %s62
    %s79 = sphi 0, %s63
    %s85 = sphi 0, %s87
    %s88 = sphi 0, %s85
    %s89 = sphi 0, %s88
    %s105 = sphi 0, %s89
  $region4: #{encoder_forward.25} parent=0 // loop_header_branch
    %12 = sbr.rel (%p10) target = $region8
  $region5: #{encoder_forward.25} parent=0 // loop_body
    %s14 = ssub.s32 %s9, 1
    %s15 = ssub.s32 %s9, 2
    %s22 = sadd.s32 1, %s17
    %p23 = scmp.ge.s32.totalorder %s22, 1
    %s24 = scalar_select %p23, 0, %s22
    %s25 = sadd.s32 1, %s16
    %s26 = scalar_select %p23, %s25, %s16
    %p27 = scmp.ge.s32.totalorder %s26, 2
    %s28 = scalar_select %p27, 0, %s26
    %s29 = ssub.s32 %s16, %s28
    %s30 = ssub.s32 %s17, %s24
    %s31 = sor.u32 %s29, %s30
    %p32 = scmp.eq.s32.totalorder %s31, 0
    %s34 = sadd.s32 %s33, 1
    %s35 = scalar_select %p32, %s33, %s34
    %p38 = pneg %p32
    %p39 = scmp.eq.s32.totalorder %s9, 1
    %p40 = por %p38, %p39
    %p41 = scmp.ne.s32.totalorder %s33, %s36
    %p42 = scmp.eq.s32.totalorder %s9, 0
    %p43 = por %p41, %p42
    %p44 = scmp.ne.s32.totalorder %s33, %s36
    %p45 = scmp.eq.s32.totalorder %s14, 1
    %p46 = por %p44, %p45
    %p47 = scmp.ne.s32.totalorder %s36, %s37
    %p48 = scmp.eq.s32.totalorder %s14, 0
    %p49 = por %p47, %p48
    %p50 = scmp.ne.s32.totalorder %s36, %s37
    %p51 = scmp.eq.s32.totalorder %s15, 1
    %p52 = por %p50, %p51
    %p54 = scmp.ne.s32.totalorder %s37, %s53
    %p55 = scmp.eq.s32.totalorder %s15, 0
    %p56 = por %p54, %p55
    %s57 = ssub.s32 %s16, %s28
    %p58 = scmp.eq.s32.totalorder %s57, 0
    %s60 = sadd.s32 %s59, 1
    %s61 = scalar_select %p58, %s59, %s60
    %p64 = pneg %p58
    %p65 = scmp.eq.s32.totalorder %s9, 1
    %p66 = por %p64, %p65
    %p67 = scmp.ne.s32.totalorder %s59, %s62
    %p68 = scmp.eq.s32.totalorder %s9, 0
    %p69 = por %p67, %p68
    %p70 = scmp.ne.s32.totalorder %s59, %s62
    %p71 = scmp.eq.s32.totalorder %s14, 1
    %p72 = por %p70, %p71
    %p73 = scmp.ne.s32.totalorder %s62, %s63
    %p74 = scmp.eq.s32.totalorder %s14, 0
    %p75 = por %p73, %p74
    %p76 = scmp.ne.s32.totalorder %s62, %s63
    %p77 = scmp.eq.s32.totalorder %s15, 1
    %p78 = por %p76, %p77
    %p80 = scmp.ne.s32.totalorder %s63, %s79
    %p81 = scmp.eq.s32.totalorder %s15, 0
    %p82 = por %p80, %p81
    %s83 = ssub.s32 %s16, %s28
    %p84 = scmp.eq.s32.totalorder %s83, 0
    %s86 = sadd.s32 %s85, 1
    %s87 = scalar_select %p84, %s85, %s86
    %p90 = pneg %p84
    %p91 = scmp.eq.s32.totalorder %s9, 1
    %p92 = por %p90, %p91
    %p93 = scmp.ne.s32.totalorder %s85, %s88
    %p94 = scmp.eq.s32.totalorder %s9, 0
    %p95 = por %p93, %p94
    %p96 = scmp.ne.s32.totalorder %s85, %s88
    %p97 = scmp.eq.s32.totalorder %s14, 1
    %p98 = por %p96, %p97
    %p99 = scmp.ne.s32.totalorder %s88, %s89
    %p100 = scmp.eq.s32.totalorder %s14, 0
    %p101 = por %p99, %p100
    %p102 = scmp.ne.s32.totalorder %s88, %s89
    %p103 = scmp.eq.s32.totalorder %s15, 1
    %p104 = por %p102, %p103
    %p106 = scmp.ne.s32.totalorder %s89, %s105
    %p107 = scmp.eq.s32.totalorder %s15, 0
    %p108 = por %p106, %p107
    %p109 = scmp.le.s32.totalorder 1, %s9
    %p110 = scmp.lt.s32.totalorder %s9, 3
    %p111 = pnand %p109, %p110
    %p112 = pneg %p111
    // Predicated region
    $region9: #{encoder_forward.25} parent=5 // pred_check
      _
    $region10: #{encoder_forward.25} parent=5 // pred_check_branch
      %114 = sbr.rel (%p111) target = $region12
    $region11: #{encoder_forward.25} parent=5 // pred_region
      %s115 = ssub.s32 %s9, 1
    $region12: #{encoder_forward.25} parent=5 // pred_fallthru
      _
    %p116 = scmp.lt.s32.totalorder %s9, 2
    // Predicated region
    $region13: #{encoder_forward.25} parent=5 // pred_check
      %p117 = pneg %p116
    $region14: #{encoder_forward.25} parent=5 // pred_check_branch
      %119 = sbr.rel (%p117) target = $region16
    $region15: #{encoder_forward.25} parent=5 // pred_region
      // Predicated region
      $region17: #{encoder_forward.25} parent=15 // pred_check
        %p120 = pneg %p43
      $region18: #{encoder_forward.25} parent=15 // pred_check_branch
        %122 = sbr.rel (%p120) target = $region20
      $region19: #{encoder_forward.25} parent=15 // pred_region
        %s123 = smul.u32 8, %s17
        %p124 = scmp.lt.s32.totalorder %s16, 1
        %s125 = scalar_select %p124, %s16, 1
        %p126 = scmp.lt.s32.totalorder %s123, 7
        %s127 = scalar_select %p126, %s123, 7
        %s128 = smul.addr %s125, 8
        %s129 = sadd.s32 %s127, %s128
        %s130 = smul.addr %s129, 8
        %s131 = scalar_lea.vmem %s0, %s130
        %s132 = smul.u32 8, %s17
      $region20: #{encoder_forward.25} parent=15 // pred_fallthru
        _
    $region16: #{encoder_forward.25} parent=5 // pred_fallthru
      _
    %p133 = scmp.le.s32.totalorder 1, %s9
    %p134 = scmp.lt.s32.totalorder %s9, 3
    %p135 = pnand %p133, %p134
    %p136 = pneg %p135
    // Predicated region
    $region21: #{encoder_forward.25} parent=5 // pred_check
      _
    $region22: #{encoder_forward.25} parent=5 // pred_check_branch
      %138 = sbr.rel (%p135) target = $region24
    $region23: #{encoder_forward.25} parent=5 // pred_region
      %s139 = ssub.s32 %s9, 1
      %s140 = smul.u32 8, %s19
      %p141 = scmp.lt.s32.totalorder %s18, 1
      %s142 = scalar_select %p141, %s18, 1
      %p143 = scmp.lt.s32.totalorder %s140, 7
      %s144 = scalar_select %p143, %s140, 7
      %s145 = smul.addr %s142, 8
      %s146 = sadd.s32 %s144, %s145
      %s147 = smul.addr %s146, 8
      %s148 = scalar_lea.vmem %s0, %s147
      %p149 = pneg %p49
      %p150 = pneg %p46
      %p151 = pneg %p75
      %p152 = pneg %p72
      %p153 = scmp.lt.s32.totalorder %s18, 1
      %s154 = scalar_select %p153, %s18, 1
      %s155 = scalar_lea.vmem %s1, %s154
      %p156 = pneg %p101
      %p157 = pneg %p98
      %p158 = scmp.lt.s32.totalorder %s18, 1
      %s159 = scalar_select %p158, %s18, 1
      %s160 = scalar_lea.vmem %s2, %s159
      %s161 = smul.u32 8, %s19
      %p162 = scmp.lt.s32.totalorder %s18, 1
      %s163 = scalar_select %p162, %s18, 1
      %p164 = scmp.lt.s32.totalorder %s161, 7
      %s165 = scalar_select %p164, %s161, 7
      %s166 = smul.addr %s163, 8
      %s167 = sadd.s32 %s165, %s166
      %s168 = smul.addr %s167, 8
      %s169 = scalar_lea.vmem %s0, %s168
      %s170 = smul.u32 8, %s19
      %p171 = scmp.lt.s32.totalorder %s18, 1
      %s172 = scalar_select %p171, %s18, 1
      %s173 = scalar_lea.vmem %s1, %s172
      %p174 = scmp.lt.s32.totalorder %s18, 1
      %s175 = scalar_select %p174, %s18, 1
      %s176 = scalar_lea.vmem %s2, %s175
      %p177 = scmp.eq.s32.totalorder %s19, 0
      // Predicated region
      $region25: #{encoder_forward.25} parent=23 // pred_check
        %p178 = pneg %p177
      $region26: #{encoder_forward.25} parent=23 // pred_check_branch
        %180 = sbr.rel (%p178) target = $region28
      $region27: #{encoder_forward.25} parent=23 // pred_region
        %vm181 = vcmask 122880
        %182 = vst.msk [vmem:[#allocation2] sm:$0x1] %vm181, 0.0
        %183 = vst.msk [vmem:[#allocation3] sm:$0x1] %vm181, 0.0
      $region28: #{encoder_forward.25} parent=23 // pred_fallthru
        _
      %v184 = vld [vmem:[%s169] sm:$0xff]
      %v185 = vld [vmem:[%s169 + $0x8] sm:$0xff]
      %v186 = vld [vmem:[%s169 + $0x10] sm:$0xff]
      %v187 = vld [vmem:[%s169 + $0x18] sm:$0xff]
      %v188 = vld [vmem:[%s169 + $0x20] sm:$0xff]
      %v189 = vld [vmem:[%s169 + $0x28] sm:$0xff]
      %v190 = vld [vmem:[%s169 + $0x30] sm:$0xff]
      %v191 = vld [vmem:[%s169 + $0x38] sm:$0xff]
      %v192 = vld [vmem:[#allocation2] sm:$0x1]
      %vm193 = vcmask 130048
      %v194 = vsel %vm193, %v184, 0.0
      %v195 = vsel %vm193, %v185, 0.0
      %v196 = vadd.f32 %v194, %v195
      %v197 = vsel %vm193, %v186, 0.0
      %v198 = vadd.f32 %v196, %v197
      %v199 = vsel %vm193, %v187, 0.0
      %v200 = vadd.f32 %v198, %v199
      %v201 = vsel %vm193, %v188, 0.0
      %v202 = vadd.f32 %v200, %v201
      %v203 = vsel %vm193, %v189, 0.0
      %v204 = vadd.f32 %v202, %v203
      %v205 = vsel %vm193, %v190, 0.0
      %v206 = vadd.f32 %v204, %v205
      %v207 = vsel %vm193, %v191, 0.0
      %v208 = vadd.f32 %v206, %v207
      %v209 = vrot.slane %v208, 4
      %v210 = vadd.f32 %v208, %v209
      %v211 = vrot.slane %v210, 2
      %v212 = vadd.f32 %v210, %v211
      %v213 = vrot.slane %v212, 1
      %v214 = vadd.f32 %v212, %v213
      %v215 = vadd.f32 %v192, %v214
      %vm216 = vcmask 122880
      %217 = vst.msk [vmem:[#allocation2] sm:$0x1] %vm216, %v215
      %v218 = vld [vmem:[#allocation3] sm:$0x1]
      %v219 = vmul.f32 %v184, %v184
      %v220 = vmul.f32 %v185, %v185
      %v221 = vmul.f32 %v186, %v186
      %v222 = vmul.f32 %v187, %v187
      %v223 = vmul.f32 %v188, %v188
      %v224 = vmul.f32 %v189, %v189
      %v225 = vmul.f32 %v190, %v190
      %v226 = vmul.f32 %v191, %v191
      %v227 = vsel %vm193, %v219, 0.0
      %v228 = vsel %vm193, %v220, 0.0
      %v229 = vadd.f32 %v227, %v228
      %v230 = vsel %vm193, %v221, 0.0
      %v231 = vadd.f32 %v229, %v230
      %v232 = vsel %vm193, %v222, 0.0
      %v233 = vadd.f32 %v231, %v232
      %v234 = vsel %vm193, %v223, 0.0
      %v235 = vadd.f32 %v233, %v234
      %v236 = vsel %vm193, %v224, 0.0
      %v237 = vadd.f32 %v235, %v236
      %v238 = vsel %vm193, %v225, 0.0
      %v239 = vadd.f32 %v237, %v238
      %v240 = vsel %vm193, %v226, 0.0
      %v241 = vadd.f32 %v239, %v240
      %v242 = vrot.slane %v241, 4
      %v243 = vadd.f32 %v241, %v242
      %v244 = vrot.slane %v243, 2
      %v245 = vadd.f32 %v243, %v244
      %v246 = vrot.slane %v245, 1
      %v247 = vadd.f32 %v245, %v246
      %v248 = vadd.f32 %v218, %v247
      %249 = vst.msk [vmem:[#allocation3] sm:$0x1] %vm216, %v248
      // Predicated region
      $region29: #{encoder_forward.25} parent=23 // pred_check
        %p250 = pneg %p177
      $region30: #{encoder_forward.25} parent=23 // pred_check_branch
        %252 = sbr.rel (%p250) target = $region32
      $region31: #{encoder_forward.25} parent=23 // pred_region
        %v253 = vld [vmem:[#allocation2] sm:$0x1]
        %v254 = vmul.f32 %v253, 0.015625
        %v255 = vld [vmem:[#allocation3] sm:$0x1]
        %v256 = vmul.f32 %v255, 0.015625
        %v257 = vmul.f32 %v254, %v254
        %v258 = vsub.f32 %v256, %v257
        %259 = vst.msk [vmem:[%s173] sm:$0x1] %vm216, %v254
        %v260 = vmax.f32 %v258, 0.0
        %v261 = vadd.f32 %v260, 1e-05
        %v262 = vrsqrt.pop %v261
        %263 = vst.msk [vmem:[%s176] sm:$0x1] %vm216, %v262
      $region32: #{encoder_forward.25} parent=23 // pred_fallthru
        _
      %p264 = scmp.lt.s32.totalorder %s18, 1
      %s265 = scalar_select %p264, %s18, 1
      %s266 = scalar_lea.vmem %s1, %s265
      %p267 = scmp.lt.s32.totalorder %s18, 1
      %s268 = scalar_select %p267, %s18, 1
      %s269 = scalar_lea.vmem %s2, %s268
      // Predicated region
      $region33: #{encoder_forward.25} parent=23 // pred_check
        %p270 = pneg %p72
      $region34: #{encoder_forward.25} parent=23 // pred_check_branch
        %272 = sbr.rel (%p270) target = $region36
      $region35: #{encoder_forward.25} parent=23 // pred_region
        _
      $region36: #{encoder_forward.25} parent=23 // pred_fallthru
        _
      // Predicated region
      $region37: #{encoder_forward.25} parent=23 // pred_check
        %p273 = pneg %p98
      $region38: #{encoder_forward.25} parent=23 // pred_check_branch
        %275 = sbr.rel (%p273) target = $region40
      $region39: #{encoder_forward.25} parent=23 // pred_region
        _
      $region40: #{encoder_forward.25} parent=23 // pred_fallthru
        _
    $region24: #{encoder_forward.25} parent=5 // pred_fallthru
      _
    %p276 = scmp.le.s32.totalorder 2, %s9
    // Predicated region
    $region41: #{encoder_forward.25} parent=5 // pred_check
      %p277 = pneg %p276
    $region42: #{encoder_forward.25} parent=5 // pred_check_branch
      %279 = sbr.rel (%p277) target = $region44
    $region43: #{encoder_forward.25} parent=5 // pred_region
      %s280 = ssub.s32 %s9, 2
      // Predicated region
      $region45: #{encoder_forward.25} parent=43 // pred_check
        %p281 = pneg %p78
      $region46: #{encoder_forward.25} parent=43 // pred_check_branch
        %283 = sbr.rel (%p281) target = $region48
      $region47: #{encoder_forward.25} parent=43 // pred_region
        %p284 = scmp.lt.s32.totalorder %s20, 1
        %s285 = scalar_select %p284, %s20, 1
        %s286 = scalar_lea.vmem %s1, %s285
      $region48: #{encoder_forward.25} parent=43 // pred_fallthru
        _
      // Predicated region
      $region49: #{encoder_forward.25} parent=43 // pred_check
        %p287 = pneg %p104
      $region50: #{encoder_forward.25} parent=43 // pred_check_branch
        %289 = sbr.rel (%p287) target = $region52
      $region51: #{encoder_forward.25} parent=43 // pred_region
        %p290 = scmp.lt.s32.totalorder %s20, 1
        %s291 = scalar_select %p290, %s20, 1
        %s292 = scalar_lea.vmem %s2, %s291
      $region52: #{encoder_forward.25} parent=43 // pred_fallthru
        _
    $region44: #{encoder_forward.25} parent=5 // pred_fallthru
      _
  $region6: #{encoder_forward.25} parent=0 // loop_footer
    %s13 = sadd.s32 1, %s9
  $region7: #{encoder_forward.25} parent=0 // loop_footer_branch
    %8 = sbr.rel target = $region3
  $region8: #{encoder_forward.25} parent=0 // loop_exit
    _

// kernel: encoder_forward.26
$region0: #{encoder_forward.26}
  #allocation0 [shape = 'u32[]', space=smem, size = 0x4, offset = 0x4, fixed_abs, tag = 'smem constant byte address 0x4 - core index']
  #allocation1 [shape = 'u32[144,128]{1,0:T(1,128)}', space=vmem, size = 0x12000, scoped, tag = 'internal scratch']
  %s0 = inlined_call_operand.vmem [shape: f32[2,64,16], index: 0, kind: input, shape index: {}]
  %s1 = inlined_call_operand.vmem [shape: f32[2,1,16], index: 1, kind: input, shape index: {}]
  %s2 = inlined_call_operand.vmem [shape: f32[2,1,16], index: 2, kind: input, shape index: {}]
  %s3 = inlined_call_operand.vmem [shape: f32[2,64,16], index: 3, kind: output, shape index: {}]
  %s4 = sld [smem:[#allocation0]]
  $region45: #{encoder_forward.26} parent=0
    _
  %s6 = ssub.s32 1, %s4
  %s7 = scalar_select 0, %s6, %s4
  loop: start=0, step=1, limit=4
  $region2: #{encoder_forward.26} parent=0 // loop_pre_header
    _
  $region3: #{encoder_forward.26} parent=0 // loop_header
    %s9 = sphi 0, %s13
    %p10 = scmp.ge.s32.totalorder %s9, 4
    %s16 = sphi 0, %s28
    %s17 = sphi 0, %s24
    %s18 = sphi 0, %s16
    %s19 = sphi 0, %s17
    %s20 = sphi 0, %s18
    %s21 = sphi 0, %s19
    %s33 = sphi 0, %s35
    %s36 = sphi 0, %s33
    %s37 = sphi 0, %s36
    %s53 = sphi 0, %s37
    %s59 = sphi 0, %s61
    %s62 = sphi 0, %s59
    %s63 = sphi 0, %s62
    %s79 = sphi 0, %s63
    %s85 = sphi 0, %s87
    %s88 = sphi 0, %s85
    %s89 = sphi 0, %s88
    %s105 = sphi 0, %s89
    %s113 = sphi 0, %s115
    %s116 = sphi 0, %s113
    %s117 = sphi 0, %s116
    %s133 = sphi 0, %s117
  $region4: #{encoder_forward.26} parent=0 // loop_header_branch
    %12 = sbr.rel (%p10) target = $region8
  $region5: #{encoder_forward.26} parent=0 // loop_body
    %s14 = ssub.s32 %s9, 1
    %s15 = ssub.s32 %s9, 2
    %s22 = sadd.s32 1, %s17
    %p23 = scmp.ge.s32.totalorder %s22, 1
    %s24 = scalar_select %p23, 0, %s22
    %s25 = sadd.s32 1, %s16
    %s26 = scalar_select %p23, %s25, %s16
    %p27 = scmp.ge.s32.totalorder %s26, 2
    %s28 = scalar_select %p27, 0, %s26
    %s29 = ssub.s32 %s16, %s28
    %s30 = ssub.s32 %s17, %s24
    %s31 = sor.u32 %s29, %s30
    %p32 = scmp.eq.s32.totalorder %s31, 0
    %s34 = sadd.s32 %s33, 1
    %s35 = scalar_select %p32, %s33, %s34
    %p38 = pneg %p32
    %p39 = scmp.eq.s32.totalorder %s9, 1
    %p40 = por %p38, %p39
    %p41 = scmp.ne.s32.totalorder %s33, %s36
    %p42 = scmp.eq.s32.totalorder %s9, 0
    %p43 = por %p41, %p42
    %p44 = scmp.ne.s32.totalorder %s33, %s36
    %p45 = scmp.eq.s32.totalorder %s14, 1
    %p46 = por %p44, %p45
    %p47 = scmp.ne.s32.totalorder %s36, %s37
    %p48 = scmp.eq.s32.totalorder %s14, 0
    %p49 = por %p47, %p48
    %p50 = scmp.ne.s32.totalorder %s36, %s37
    %p51 = scmp.eq.s32.totalorder %s15, 1
    %p52 = por %p50, %p51
    %p54 = scmp.ne.s32.totalorder %s37, %s53
    %p55 = scmp.eq.s32.totalorder %s15, 0
    %p56 = por %p54, %p55
    %s57 = ssub.s32 %s16, %s28
    %p58 = scmp.eq.s32.totalorder %s57, 0
    %s60 = sadd.s32 %s59, 1
    %s61 = scalar_select %p58, %s59, %s60
    %p64 = pneg %p58
    %p65 = scmp.eq.s32.totalorder %s9, 1
    %p66 = por %p64, %p65
    %p67 = scmp.ne.s32.totalorder %s59, %s62
    %p68 = scmp.eq.s32.totalorder %s9, 0
    %p69 = por %p67, %p68
    %p70 = scmp.ne.s32.totalorder %s59, %s62
    %p71 = scmp.eq.s32.totalorder %s14, 1
    %p72 = por %p70, %p71
    %p73 = scmp.ne.s32.totalorder %s62, %s63
    %p74 = scmp.eq.s32.totalorder %s14, 0
    %p75 = por %p73, %p74
    %p76 = scmp.ne.s32.totalorder %s62, %s63
    %p77 = scmp.eq.s32.totalorder %s15, 1
    %p78 = por %p76, %p77
    %p80 = scmp.ne.s32.totalorder %s63, %s79
    %p81 = scmp.eq.s32.totalorder %s15, 0
    %p82 = por %p80, %p81
    %s83 = ssub.s32 %s16, %s28
    %p84 = scmp.eq.s32.totalorder %s83, 0
    %s86 = sadd.s32 %s85, 1
    %s87 = scalar_select %p84, %s85, %s86
    %p90 = pneg %p84
    %p91 = scmp.eq.s32.totalorder %s9, 1
    %p92 = por %p90, %p91
    %p93 = scmp.ne.s32.totalorder %s85, %s88
    %p94 = scmp.eq.s32.totalorder %s9, 0
    %p95 = por %p93, %p94
    %p96 = scmp.ne.s32.totalorder %s85, %s88
    %p97 = scmp.eq.s32.totalorder %s14, 1
    %p98 = por %p96, %p97
    %p99 = scmp.ne.s32.totalorder %s88, %s89
    %p100 = scmp.eq.s32.totalorder %s14, 0
    %p101 = por %p99, %p100
    %p102 = scmp.ne.s32.totalorder %s88, %s89
    %p103 = scmp.eq.s32.totalorder %s15, 1
    %p104 = por %p102, %p103
    %p106 = scmp.ne.s32.totalorder %s89, %s105
    %p107 = scmp.eq.s32.totalorder %s15, 0
    %p108 = por %p106, %p107
    %s109 = ssub.s32 %s16, %s28
    %s110 = ssub.s32 %s17, %s24
    %s111 = sor.u32 %s109, %s110
    %p112 = scmp.eq.s32.totalorder %s111, 0
    %s114 = sadd.s32 %s113, 1
    %s115 = scalar_select %p112, %s113, %s114
    %p118 = pneg %p112
    %p119 = scmp.eq.s32.totalorder %s9, 1
    %p120 = por %p118, %p119
    %p121 = scmp.ne.s32.totalorder %s113, %s116
    %p122 = scmp.eq.s32.totalorder %s9, 0
    %p123 = por %p121, %p122
    %p124 = scmp.ne.s32.totalorder %s113, %s116
    %p125 = scmp.eq.s32.totalorder %s14, 1
    %p126 = por %p124, %p125
    %p127 = scmp.ne.s32.totalorder %s116, %s117
    %p128 = scmp.eq.s32.totalorder %s14, 0
    %p129 = por %p127, %p128
    %p130 = scmp.ne.s32.totalorder %s116, %s117
    %p131 = scmp.eq.s32.totalorder %s15, 1
    %p132 = por %p130, %p131
    %p134 = scmp.ne.s32.totalorder %s117, %s133
    %p135 = scmp.eq.s32.totalorder %s15, 0
    %p136 = por %p134, %p135
    %p137 = scmp.le.s32.totalorder 1, %s9
    %p138 = scmp.lt.s32.totalorder %s9, 3
    %p139 = pnand %p137, %p138
    %p140 = pneg %p139
    // Predicated region
    $region9: #{encoder_forward.26} parent=5 // pred_check
      _
    $region10: #{encoder_forward.26} parent=5 // pred_check_branch
      %142 = sbr.rel (%p139) target = $region12
    $region11: #{encoder_forward.26} parent=5 // pred_region
      %s143 = ssub.s32 %s9, 1
    $region12: #{encoder_forward.26} parent=5 // pred_fallthru
      _
    %p144 = scmp.lt.s32.totalorder %s9, 2
    // Predicated region
    $region13: #{encoder_forward.26} parent=5 // pred_check
      %p145 = pneg %p144
    $region14: #{encoder_forward.26} parent=5 // pred_check_branch
      %147 = sbr.rel (%p145) target = $region16
    $region15: #{encoder_forward.26} parent=5 // pred_region
      // Predicated region
      $region17: #{encoder_forward.26} parent=15 // pred_check
        %p148 = pneg %p43
      $region18: #{encoder_forward.26} parent=15 // pred_check_branch
        %150 = sbr.rel (%p148) target = $region20
      $region19: #{encoder_forward.26} parent=15 // pred_region
        %s151 = smul.u32 8, %s17
        %p152 = scmp.lt.s32.totalorder %s16, 1
        %s153 = scalar_select %p152, %s16, 1
        %p154 = scmp.lt.s32.totalorder %s151, 7
        %s155 = scalar_select %p154, %s151, 7
        %s156 = smul.addr %s153, 8
        %s157 = sadd.s32 %s155, %s156
        %s158 = smul.addr %s157, 8
        %s159 = scalar_lea.vmem %s0, %s158
        %s160 = smul.u32 8, %s17
      $region20: #{encoder_forward.26} parent=15 // pred_fallthru
        _
      // Predicated region
      $region21: #{encoder_forward.26} parent=15 // pred_check
        %p161 = pneg %p69
      $region22: #{encoder_forward.26} parent=15 // pred_check_branch
        %163 = sbr.rel (%p161) target = $region24
      $region23: #{encoder_forward.26} parent=15 // pred_region
        %p164 = scmp.lt.s32.totalorder %s16, 1
        %s165 = scalar_select %p164, %s16, 1
        %s166 = scalar_lea.vmem %s1, %s165
      $region24: #{encoder_forward.26} parent=15 // pred_fallthru
        _
      // Predicated region
      $region25: #{encoder_forward.26} parent=15 // pred_check
        %p167 = pneg %p95
      $region26: #{encoder_forward.26} parent=15 // pred_check_branch
        %169 = sbr.rel (%p167) target = $region28
      $region27: #{encoder_forward.26} parent=15 // pred_region
        %p170 = scmp.lt.s32.totalorder %s16, 1
        %s171 = scalar_select %p170, %s16, 1
        %s172 = scalar_lea.vmem %s2, %s171
      $region28: #{encoder_forward.26} parent=15 // pred_fallthru
        _
    $region16: #{encoder_forward.26} parent=5 // pred_fallthru
      _
    %p173 = scmp.le.s32.totalorder 1, %s9
    %p174 = scmp.lt.s32.totalorder %s9, 3
    %p175 = pnand %p173, %p174
    %p176 = pneg %p175
    // Predicated region
    $region29: #{encoder_forward.26} parent=5 // pred_check
      _
    $region30: #{encoder_forward.26} parent=5 // pred_check_branch
      %178 = sbr.rel (%p175) target = $region32
    $region31: #{encoder_forward.26} parent=5 // pred_region
      %s179 = ssub.s32 %s9, 1
      %s180 = smul.u32 8, %s19
      %p181 = scmp.lt.s32.totalorder %s18, 1
      %s182 = scalar_select %p181, %s18, 1
      %p183 = scmp.lt.s32.totalorder %s180, 7
      %s184 = scalar_select %p183, %s180, 7
      %s185 = smul.addr %s182, 8
      %s186 = sadd.s32 %s184, %s185
      %s187 = smul.addr %s186, 8
      %s188 = scalar_lea.vmem %s0, %s187
      %p189 = pneg %p49
      %p190 = pneg %p46
      %p191 = scmp.lt.s32.totalorder %s18, 1
      %s192 = scalar_select %p191, %s18, 1
      %s193 = scalar_lea.vmem %s1, %s192
      %p194 = pneg %p75
      %p195 = pneg %p72
      %p196 = scmp.lt.s32.totalorder %s18, 1
      %s197 = scalar_select %p196, %s18, 1
      %s198 = scalar_lea.vmem %s2, %s197
      %p199 = pneg %p101
      %p200 = pneg %p98
      %p201 = pneg %p129
      %p202 = pneg %p126
      %s203 = smul.u32 8, %s19
      %p204 = scmp.lt.s32.totalorder %s18, 1
      %s205 = scalar_select %p204, %s18, 1
      %p206 = scmp.lt.s32.totalorder %s203, 7
      %s207 = scalar_select %p206, %s203, 7
      %s208 = smul.addr %s205, 8
      %s209 = sadd.s32 %s207, %s208
      %s210 = smul.addr %s209, 8
      %s211 = scalar_lea.vmem %s3, %s210
      %s212 = smul.u32 8, %s19
      %p213 = scmp.lt.s32.totalorder %s18, 1
      %s214 = scalar_select %p213, %s18, 1
      %p215 = scmp.lt.s32.totalorder %s212, 7
      %s216 = scalar_select %p215, %s212, 7
      %s217 = smul.addr %s214, 8
      %s218 = sadd.s32 %s216, %s217
      %s219 = smul.addr %s218, 8
      %s220 = scalar_lea.vmem %s0, %s219
      %s221 = smul.u32 8, %s19
      %p222 = scmp.lt.s32.totalorder %s18, 1
      %s223 = scalar_select %p222, %s18, 1
      %s224 = scalar_lea.vmem %s1, %s223
      %p225 = scmp.lt.s32.totalorder %s18, 1
      %s226 = scalar_select %p225, %s18, 1
      %s227 = scalar_lea.vmem %s2, %s226
      %s228 = smul.u32 8, %s19
      %p229 = scmp.lt.s32.totalorder %s18, 1
      %s230 = scalar_select %p229, %s18, 1
      %p231 = scmp.lt.s32.totalorder %s228, 7
      %s232 = scalar_select %p231, %s228, 7
      %s233 = smul.addr %s230, 8
      %s234 = sadd.s32 %s232, %s233
      %s235 = smul.addr %s234, 8
      %s236 = scalar_lea.vmem %s3, %s235
      %s237 = smul.u32 8, %s19
      %v238 = vld [vmem:[%s220] sm:$0xff]
      %v239 = vld [vmem:[%s220 + $0x8] sm:$0xff]
      %v240 = vld [vmem:[%s220 + $0x10] sm:$0xff]
      %v241 = vld [vmem:[%s220 + $0x18] sm:$0xff]
      %v242 = vld [vmem:[%s220 + $0x20] sm:$0xff]
      %v243 = vld [vmem:[%s220 + $0x28] sm:$0xff]
      %v244 = vld [vmem:[%s220 + $0x30] sm:$0xff]
      %v245 = vld [vmem:[%s220 + $0x38] sm:$0xff]
      %v246 = vld [vmem:[%s224] sm:$0x1]
      %v248 = vlaneseq
      %v249 = vshrl.u32 %v248, 7
      %v250 = vsub.s32 0, %v249
      %v251 = vrot.slane %v246, %v250
      %v253 = vsub.f32 %v238, %v251
      %v254 = vsub.f32 %v239, %v251
      %v255 = vsub.f32 %v240, %v251
      %v256 = vsub.f32 %v241, %v251
      %v257 = vsub.f32 %v242, %v251
      %v258 = vsub.f32 %v243, %v251
      %v259 = vsub.f32 %v244, %v251
      %v260 = vsub.f32 %v245, %v251
      %v261 = vld [vmem:[%s227] sm:$0x1]
      %v263 = vlaneseq
      %v264 = vshrl.u32 %v263, 7
      %v265 = vsub.s32 0, %v264
      %v266 = vrot.slane %v261, %v265
      %v268 = vmul.f32 %v253, %v266
      %v269 = vmul.f32 %v254, %v266
      %v270 = vmul.f32 %v255, %v266
      %v271 = vmul.f32 %v256, %v266
      %v272 = vmul.f32 %v257, %v266
      %v273 = vmul.f32 %v258, %v266
      %v274 = vmul.f32 %v259, %v266
      %v275 = vmul.f32 %v260, %v266
      %v276 = vmax.f32 %v268, 0.0
      %v277 = vmax.f32 %v269, 0.0
      %v278 = vmax.f32 %v270, 0.0
      %v279 = vmax.f32 %v271, 0.0
      %v280 = vmax.f32 %v272, 0.0
      %v281 = vmax.f32 %v273, 0.0
      %v282 = vmax.f32 %v274, 0.0
      %v283 = vmax.f32 %v275, 0.0
      %vm284 = vcmask 130048
      %285 = vst.msk [vmem:[%s236] sm:$0xff] %vm284, %v276
      %286 = vst.msk [vmem:[%s236 + $0x8] sm:$0xff] %vm284, %v277
      %287 = vst.msk [vmem:[%s236 + $0x10] sm:$0xff] %vm284, %v278
      %288 = vst.msk [vmem:[%s236 + $0x18] sm:$0xff] %vm284, %v279
      %289 = vst.msk [vmem:[%s236 + $0x20] sm:$0xff] %vm284, %v280
      %290 = vst.msk [vmem:[%s236 + $0x28] sm:$0xff] %vm284, %v281
      %291 = vst.msk [vmem:[%s236 + $0x30] sm:$0xff] %vm284, %v282
      %292 = vst.msk [vmem:[%s236 + $0x38] sm:$0xff] %vm284, %v283
      %s293 = smul.u32 8, %s19
      %p294 = scmp.lt.s32.totalorder %s18, 1
      %s295 = scalar_select %p294, %s18, 1
      %p296 = scmp.lt.s32.totalorder %s293, 7
      %s297 = scalar_select %p296, %s293, 7
      %s298 = smul.addr %s295, 8
      %s299 = sadd.s32 %s297, %s298
      %s300 = smul.addr %s299, 8
      %s301 = scalar_lea.vmem %s3, %s300
      // Predicated region
      $region33: #{encoder_forward.26} parent=31 // pred_check
        %p302 = pneg %p126
      $region34: #{encoder_forward.26} parent=31 // pred_check_branch
        %304 = sbr.rel (%p302) target = $region36
      $region35: #{encoder_forward.26} parent=31 // pred_region
        %s305 = smul.u32 8, %s19
      $region36: #{encoder_forward.26} parent=31 // pred_fallthru
        _
    $region32: #{encoder_forward.26} parent=5 // pred_fallthru
      _
    %p306 = scmp.le.s32.totalorder 2, %s9
    // Predicated region
    $region37: #{encoder_forward.26} parent=5 // pred_check
      %p307 = pneg %p306
    $region38: #{encoder_forward.26} parent=5 // pred_check_branch
      %309 = sbr.rel (%p307) target = $region40
    $region39: #{encoder_forward.26} parent=5 // pred_region
      %s310 = ssub.s32 %s9, 2
      // Predicated region
      $region41: #{encoder_forward.26} parent=39 // pred_check
        %p311 = pneg %p132
      $region42: #{encoder_forward.26} parent=39 // pred_check_branch
        %313 = sbr.rel (%p311) target = $region44
      $region43: #{encoder_forward.26} parent=39 // pred_region
        %s314 = smul.u32 8, %s21
        %p315 = scmp.lt.s32.totalorder %s20, 1
        %s316 = scalar_select %p315, %s20, 1
        %p317 = scmp.lt.s32.totalorder %s314, 7
        %s318 = scalar_select %p317, %s314, 7
        %s319 = smul.addr %s316, 8
        %s320 = sadd.s32 %s318, %s319
        %s321 = smul.addr %s320, 8
        %s322 = scalar_lea.vmem %s3, %s321
      $region44: #{encoder_forward.26} parent=39 // pred_fallthru
        _
    $region40: #{encoder_forward.26} parent=5 // pred_fallthru
      _
  $region6: #{encoder_forward.26} parent=0 // loop_footer
    %s13 = sadd.s32 1, %s9
  $region7: #{encoder_forward.26} parent=0 // loop_footer_branch
    %8 = sbr.rel target = $region3
  $region8: #{encoder_forward.26} parent=0 // loop_exit
    _

// kernel: encoder_forward.27
$region0: #{encoder_forward.27}
  #allocation0 [shape = 'u32[]', space=smem, size = 0x4, offset = 0x4, fixed_abs, tag = 'smem constant byte address 0x4 - core index']
  #allocation1 [shape = 'u32[144,128]{1,0:T(1,128)}', space=vmem, size = 0x12000, scoped, tag = 'internal scratch']
  #allocation2 [shape = 'f32[128,128]{1,0:T(8,128)}', space=vmem, size = 0x10000, scoped, tag = 'scratch operand']
  %s0 = inlined_call_operand.vmem [shape: bf16[128,256], index: 0, kind: input, shape index: {}]
  %s1 = inlined_call_operand.vmem [shape: bf16[256,128], index: 1, kind: input, shape index: {}]
  %s2 = inlined_call_operand.vmem [shape: f32[1,128], index: 2, kind: input, shape index: {}]
  %s3 = inlined_call_operand.vmem [shape: f32[128,128], index: 3, kind: output, shape index: {}]
  %s4 = sld [smem:[#allocation0]]
  $region30: #{encoder_forward.27} parent=0
    _
  %s6 = ssub.s32 1, %s4
  %s7 = scalar_select 0, %s6, %s4
  // Predicated region
  $region2: #{encoder_forward.27} parent=0 // pred_check
    _
  $region3: #{encoder_forward.27} parent=0 // pred_check_branch
    %9 = sbr.rel (0) target = $region5
  $region4: #{encoder_forward.27} parent=0 // pred_region
    _
  $region5: #{encoder_forward.27} parent=0 // pred_fallthru
    _
  // Predicated region
  $region6: #{encoder_forward.27} parent=0 // pred_check
    _
  $region7: #{encoder_forward.27} parent=0 // pred_check_branch
    %11 = sbr.rel (0) target = $region9
  $region8: #{encoder_forward.27} parent=0 // pred_region
    _
  $region9: #{encoder_forward.27} parent=0 // pred_fallthru
    _
  // Predicated region
  $region10: #{encoder_forward.27} parent=0 // pred_check
    _
  $region11: #{encoder_forward.27} parent=0 // pred_check_branch
    %13 = sbr.rel (0) target = $region13
  $region12: #{encoder_forward.27} parent=0 // pred_region
    _
  $region13: #{encoder_forward.27} parent=0 // pred_fallthru
    _
  %p15 = scmp.eq.s32.totalorder 0, 0
  // Predicated region
  $region14: #{encoder_forward.27} parent=0 // pred_check
    %p16 = pneg %p15
  $region15: #{encoder_forward.27} parent=0 // pred_check_branch
    %18 = sbr.rel (%p16) target = $region17
  $region16: #{encoder_forward.27} parent=0 // pred_region
    %19 = vst [vmem:[#allocation2] sm:$0xff] 0.0
    %20 = vst [vmem:[#allocation2 + $0x8] sm:$0xff] 0.0
    %21 = vst [vmem:[#allocation2 + $0x10] sm:$0xff] 0.0
    %22 = vst [vmem:[#allocation2 + $0x18] sm:$0xff] 0.0
    %23 = vst [vmem:[#allocation2 + $0x20] sm:$0xff] 0.0
    %24 = vst [vmem:[#allocation2 + $0x28] sm:$0xff] 0.0
    %25 = vst [vmem:[#allocation2 + $0x30] sm:$0xff] 0.0
    %26 = vst [vmem:[#allocation2 + $0x38] sm:$0xff] 0.0
    %27 = vst [vmem:[#allocation2 + $0x40] sm:$0xff] 0.0
    %28 = vst [vmem:[#allocation2 + $0x48] sm:$0xff] 0.0
    %29 = vst [vmem:[#allocation2 + $0x50] sm:$0xff] 0.0
    %30 = vst [vmem:[#allocation2 + $0x58] sm:$0xff] 0.0
    %31 = vst [vmem:[#allocation2 + $0x60] sm:$0xff] 0.0
    %32 = vst [vmem:[#allocation2 + $0x68] sm:$0xff] 0.0
    %33 = vst [vmem:[#allocation2 + $0x70] sm:$0xff] 0.0
    %34 = vst [vmem:[#allocation2 + $0x78] sm:$0xff] 0.0
  $region17: #{encoder_forward.27} parent=0 // pred_fallthru
    _
  %v35 = vld [vmem:[#allocation2] sm:$0xff]
  %v36 = vld [vmem:[#allocation2 + $0x8] sm:$0xff]
  %v37 = vld [vmem:[#allocation2 + $0x10] sm:$0xff]
  %v38 = vld [vmem:[#allocation2 + $0x18] sm:$0xff]
  %v39 = vld [vmem:[#allocation2 + $0x20] sm:$0xff]
  %v40 = vld [vmem:[#allocation2 + $0x28] sm:$0xff]
  %v41 = vld [vmem:[#allocation2 + $0x30] sm:$0xff]
  %v42 = vld [vmem:[#allocation2 + $0x38] sm:$0xff]
  %v43 = vld [vmem:[#allocation2 + $0x40] sm:$0xff]
  %v44 = vld [vmem:[#allocation2 + $0x48] sm:$0xff]
  %v45 = vld [vmem:[#allocation2 + $0x50] sm:$0xff]
  %v46 = vld [vmem:[#allocation2 + $0x58] sm:$0xff]
  %v47 = vld [vmem:[#allocation2 + $0x60] sm:$0xff]
  %v48 = vld [vmem:[#allocation2 + $0x68] sm:$0xff]
  %v49 = vld [vmem:[#allocation2 + $0x70] sm:$0xff]
  %v50 = vld [vmem:[#allocation2 + $0x78] sm:$0xff]
  %v51 = vld [vmem:[%s0] sm:$0xff]
  %v52 = vld [vmem:[%s0 + $0x8] sm:$0xff]
  %v53 = vld [vmem:[%s0 + $0x10] sm:$0xff]
  %v54 = vld [vmem:[%s0 + $0x18] sm:$0xff]
  %v55 = vld [vmem:[%s0 + $0x20] sm:$0xff]
  %v56 = vld [vmem:[%s0 + $0x28] sm:$0xff]
  %v57 = vld [vmem:[%s0 + $0x30] sm:$0xff]
  %v58 = vld [vmem:[%s0 + $0x38] sm:$0xff]
  %v59 = vld [vmem:[%s0 + $0x40] sm:$0xff]
  %v60 = vld [vmem:[%s0 + $0x48] sm:$0xff]
  %v61 = vld [vmem:[%s0 + $0x50] sm:$0xff]
  %v62 = vld [vmem:[%s0 + $0x58] sm:$0xff]
  %v63 = vld [vmem:[%s0 + $0x60] sm:$0xff]
  %v64 = vld [vmem:[%s0 + $0x68] sm:$0xff]
  %v65 = vld [vmem:[%s0 + $0x70] sm:$0xff]
  %v66 = vld [vmem:[%s0 + $0x78] sm:$0xff]
  %v67 = vld [vmem:[%s1] sm:$0xf]
  %v68 = vld [vmem:[%s1 + $0x4] sm:$0xf]
  %v69 = vld [vmem:[%s1 + $0x8] sm:$0xf]
  %v70 = vld [vmem:[%s1 + $0xc] sm:$0xf]
  %v71 = vld [vmem:[%s1 + $0x10] sm:$0xf]
  %v72 = vld [vmem:[%s1 + $0x14] sm:$0xf]
  %v73 = vld [vmem:[%s1 + $0x18] sm:$0xf]
  %v74 = vld [vmem:[%s1 + $0x1c] sm:$0xf]
  %v75 = vld [vmem:[%s1 + $0x20] sm:$0xf]
  %v76 = vld [vmem:[%s1 + $0x24] sm:$0xf]
  %v77 = vld [vmem:[%s1 + $0x28] sm:$0xf]
  %v78 = vld [vmem:[%s1 + $0x2c] sm:$0xf]
  %v79 = vld [vmem:[%s1 + $0x30] sm:$0xf]
  %v80 = vld [vmem:[%s1 + $0x34] sm:$0xf]
  %v81 = vld [vmem:[%s1 + $0x38] sm:$0xf]
  %v82 = vld [vmem:[%s1 + $0x3c] sm:$0xf]
  %v83 = vld [vmem:[%s1 + $0x40] sm:$0xf]
  %v84 = vld [vmem:[%s1 + $0x44] sm:$0xf]
  %v85 = vld [vmem:[%s1 + $0x48] sm:$0xf]
  %v86 = vld [vmem:[%s1 + $0x4c] sm:$0xf]
  %v87 = vld [vmem:[%s1 + $0x50] sm:$0xf]
  %v88 = vld [vmem:[%s1 + $0x54] sm:$0xf]
  %v89 = vld [vmem:[%s1 + $0x58] sm:$0xf]
  %v90 = vld [vmem:[%s1 + $0x5c] sm:$0xf]
  %v91 = vld [vmem:[%s1 + $0x60] sm:$0xf]
  %v92 = vld [vmem:[%s1 + $0x64] sm:$0xf]
  %v93 = vld [vmem:[%s1 + $0x68] sm:$0xf]
  %v94 = vld [vmem:[%s1 + $0x6c] sm:$0xf]
  %v95 = vld [vmem:[%s1 + $0x70] sm:$0xf]
  %v96 = vld [vmem:[%s1 + $0x74] sm:$0xf]
  %v97 = vld [vmem:[%s1 + $0x78] sm:$0xf]
  %v98 = vld [vmem:[%s1 + $0x7c] sm:$0xf]
  %v115 = vunpack.c.l.b16 %v51
  %v116 = vunpack.c.h.b16 %v51
  %v117 = vunpack.c.l.b16 %v52
  %v118 = vunpack.c.h.b16 %v52
  %v119 = vunpack.c.l.b16 %v53
  %v120 = vunpack.c.h.b16 %v53
  %v121 = vunpack.c.l.b16 %v54
  %v122 = vunpack.c.h.b16 %v54
  %v123 = vunpack.c.l.b16 %v55
  %v124 = vunpack.c.h.b16 %v55
  %v125 = vunpack.c.l.b16 %v56
  %v126 = vunpack.c.h.b16 %v56
  %v127 = vunpack.c.l.b16 %v57
  %v128 = vunpack.c.h.b16 %v57
  %v129 = vunpack.c.l.b16 %v58
  %v130 = vunpack.c.h.b16 %v58
  %v131 = vunpack.c.l.b16 %v59
  %v132 = vunpack.c.h.b16 %v59
  %v133 = vunpack.c.l.b16 %v60
  %v134 = vunpack.c.h.b16 %v60
  %v135 = vunpack.c.l.b16 %v61
  %v136 = vunpack.c.h.b16 %v61
  %v137 = vunpack.c.l.b16 %v62
  %v138 = vunpack.c.h.b16 %v62
  %v139 = vunpack.c.l.b16 %v63
  %v140 = vunpack.c.h.b16 %v63
  %v141 = vunpack.c.l.b16 %v64
  %v142 = vunpack.c.h.b16 %v64
  %v143 = vunpack.c.l.b16 %v65
  %v144 = vunpack.c.h.b16 %v65
  %v145 = vunpack.c.l.b16 %v66
  %v146 = vunpack.c.h.b16 %v66
  %v147 = vpack.c.b16 %v117, %v115
  %v148 = vpack.c.b16 %v118, %v116
  %v149 = vpack.c.b16 %v121, %v119
  %v150 = vpack.c.b16 %v122, %v120
  %v151 = vpack.c.b16 %v125, %v123
  %v152 = vpack.c.b16 %v126, %v124
  %v153 = vpack.c.b16 %v129, %v127
  %v154 = vpack.c.b16 %v130, %v128
  %v155 = vpack.c.b16 %v133, %v131
  %v156 = vpack.c.b16 %v134, %v132
  %v157 = vpack.c.b16 %v137, %v135
  %v158 = vpack.c.b16 %v138, %v136
  %v159 = vpack.c.b16 %v141, %v139
  %v160 = vpack.c.b16 %v142, %v140
  %v161 = vpack.c.b16 %v145, %v143
  %v162 = vpack.c.b16 %v146, %v144
  %v211 = vunpack.c.l.b16 %v67
  %v212 = vunpack.c.l.b16 %v68
  %v213 = vunpack.c.l.b16 %v69
  %v214 = vunpack.c.l.b16 %v70
  %v215 = vunpack.c.l.b16 %v71
  %v216 = vunpack.c.l.b16 %v72
  %v217 = vunpack.c.l.b16 %v73
  %v218 = vunpack.c.l.b16 %v74
  %v219 = vunpack.c.l.b16 %v75
  %v220 = vunpack.c.l.b16 %v76
  %v221 = vunpack.c.l.b16 %v77
  %v222 = vunpack.c.l.b16 %v78
  %v223 = vunpack.c.l.b16 %v79
  %v224 = vunpack.c.l.b16 %v80
  %v225 = vunpack.c.l.b16 %v81
  %v226 = vunpack.c.l.b16 %v82
  %v227 = vunpack.c.l.b16 %v83
  %v228 = vunpack.c.l.b16 %v84
  %v229 = vunpack.c.l.b16 %v85
  %v230 = vunpack.c.l.b16 %v86
  %v231 = vunpack.c.l.b16 %v87
  %v232 = vunpack.c.l.b16 %v88
  %v233 = vunpack.c.l.b16 %v89
  %v234 = vunpack.c.l.b16 %v90
  %v235 = vunpack.c.l.b16 %v91
  %v236 = vunpack.c.l.b16 %v92
  %v237 = vunpack.c.l.b16 %v93
  %v238 = vunpack.c.l.b16 %v94
  %v239 = vunpack.c.l.b16 %v95
  %v240 = vunpack.c.l.b16 %v96
  %v241 = vunpack.c.l.b16 %v97
  %v242 = vunpack.c.l.b16 %v98
  %v243 = vpack.c.b16 %v212, %v211
  %v244 = vpack.c.b16 %v214, %v213
  %v245 = vpack.c.b16 %v216, %v215
  %v246 = vpack.c.b16 %v218, %v217
  %v247 = vpack.c.b16 %v220, %v219
  %v248 = vpack.c.b16 %v222, %v221
  %v249 = vpack.c.b16 %v224, %v223
  %v250 = vpack.c.b16 %v226, %v225
  %v251 = vpack.c.b16 %v228, %v227
  %v252 = vpack.c.b16 %v230, %v229
  %v253 = vpack.c.b16 %v232, %v231
  %v254 = vpack.c.b16 %v234, %v233
  %v255 = vpack.c.b16 %v236, %v235
  %v256 = vpack.c.b16 %v238, %v237
  %v257 = vpack.c.b16 %v240, %v239
  %v258 = vpack.c.b16 %v242, %v241
  %275 = vmatprep.subr.bf16.mxu0 0
  %276 = vmatpush1.bf16.msra.mxu0 %v250
  %277 = vmatprep.subr.bf16.mxu0 0
  %278 = vmatpush1.bf16.msra.mxu0 %v249
  %279 = vmatprep.subr.bf16.mxu0 0
  %280 = vmatpush1.bf16.msra.mxu0 %v248
  %281 = vmatprep.subr.bf16.mxu0 0
  %282 = vmatpush1.bf16.msra.mxu0 %v247
  %283 = vmatprep.subr.bf16.mxu0 0
  %284 = vmatpush1.bf16.msra.mxu0 %v246
  %285 = vmatprep.subr.bf16.mxu0 0
  %286 = vmatpush1.bf16.msra.mxu0 %v245
  %287 = vmatprep.subr.bf16.mxu0 0
  %288 = vmatpush1.bf16.msra.mxu0 %v244
  %289 = vmatprep.subr.bf16.mxu0 0
  %290 = vmatpush1.bf16.msra.mxu0 %v243
  %291 = vmatprep.subr.bf16.mxu0 0
  %292 = vmatpush2.bf16.msra.mxu0 %v258
  %293 = vmatprep.subr.bf16.mxu0 0
  %294 = vmatpush2.bf16.msra.mxu0 %v257
  %295 = vmatprep.subr.bf16.mxu0 0
  %296 = vmatpush2.bf16.msra.mxu0 %v256
  %297 = vmatprep.subr.bf16.mxu0 0
  %298 = vmatpush2.bf16.msra.mxu0 %v255
  %299 = vmatprep.subr.bf16.mxu0 0
  %300 = vmatpush2.bf16.msra.mxu0 %v254
  %301 = vmatprep.subr.bf16.mxu0 0
  %302 = vmatpush2.bf16.msra.mxu0 %v253
  %303 = vmatprep.subr.bf16.mxu0 0
  %304 = vmatpush2.bf16.msra.mxu0 %v252
  %305 = vmatprep.subr.bf16.mxu0 0
  %306 = vmatpush2.bf16.msra.mxu0 %v251
  %307 = vmatprep.mubr.bf16.mxu0 %v148
  %308 = vmatmul.mubr.bf16.gmra.mxu0 %v147
  %v309 = vpop.f32.mrf.mxu0
  %v310 = vadd.f32 0.0, %v309
  %v311 = vpop.f32.mrf.mxu0
  %v312 = vpop.f32.mrf.mxu0
  %v313 = vadd.f32 0.0, %v312
  %v314 = vpop.f32.mrf.mxu0
  %315 = vmatprep.mubr.bf16.mxu0 %v150
  %316 = vmatmul.mubr.bf16.gmra.mxu0 %v149
  %v317 = vpop.f32.mrf.mxu0
  %v318 = vadd.f32 0.0, %v317
  %v319 = vpop.f32.mrf.mxu0
  %v320 = vpop.f32.mrf.mxu0
  %v321 = vadd.f32 0.0, %v320
  %v322 = vpop.f32.mrf.mxu0
  %323 = vmatprep.mubr.bf16.mxu0 %v152
  %324 = vmatmul.mubr.bf16.gmra.mxu0 %v151
  %v325 = vpop.f32.mrf.mxu0
  %v326 = vadd.f32 0.0, %v325
  %v327 = vpop.f32.mrf.mxu0
  %v328 = vpop.f32.mrf.mxu0
  %v329 = vadd.f32 0.0, %v328
  %v330 = vpop.f32.mrf.mxu0
  %331 = vmatprep.mubr.bf16.mxu0 %v154
  %332 = vmatmul.mubr.bf16.gmra.mxu0 %v153
  %v333 = vpop.f32.mrf.mxu0
  %v334 = vadd.f32 0.0, %v333
  %v335 = vpop.f32.mrf.mxu0
  %v336 = vpop.f32.mrf.mxu0
  %v337 = vadd.f32 0.0, %v336
  %v338 = vpop.f32.mrf.mxu0
  %339 = vmatprep.mubr.bf16.mxu0 %v156
  %340 = vmatmul.mubr.bf16.gmra.mxu0 %v155
  %v341 = vpop.f32.mrf.mxu0
  %v342 = vadd.f32 0.0, %v341
  %v343 = vpop.f32.mrf.mxu0
  %v344 = vpop.f32.mrf.mxu0
  %v345 = vadd.f32 0.0, %v344
  %v346 = vpop.f32.mrf.mxu0
  %347 = vmatprep.mubr.bf16.mxu0 %v158
  %348 = vmatmul.mubr.bf16.gmra.mxu0 %v157
  %v349 = vpop.f32.mrf.mxu0
  %v350 = vadd.f32 0.0, %v349
  %v351 = vpop.f32.mrf.mxu0
  %v352 = vpop.f32.mrf.mxu0
  %v353 = vadd.f32 0.0, %v352
  %v354 = vpop.f32.mrf.mxu0
  %355 = vmatprep.mubr.bf16.mxu0 %v160
  %356 = vmatmul.mubr.bf16.gmra.mxu0 %v159
  %v357 = vpop.f32.mrf.mxu0
  %v358 = vadd.f32 0.0, %v357
  %v359 = vpop.f32.mrf.mxu0
  %v360 = vpop.f32.mrf.mxu0
  %v361 = vadd.f32 0.0, %v360
  %v362 = vpop.f32.mrf.mxu0
  %363 = vmatprep.mubr.bf16.mxu0 %v162
  %364 = vmatmul.mubr.bf16.gmra.mxu0 %v161
  %v365 = vpop.f32.mrf.mxu0
  %v366 = vadd.f32 0.0, %v365
  %v367 = vpop.f32.mrf.mxu0
  %v368 = vpop.f32.mrf.mxu0
  %v369 = vadd.f32 0.0, %v368
  %v370 = vpop.f32.mrf.mxu0
  %371 = vdwg.mxu0
  %v372 = vadd.f32 %v35, %v310
  %v373 = vadd.f32 %v36, %v313
  %v374 = vadd.f32 %v37, %v318
  %v375 = vadd.f32 %v38, %v321
  %v376 = vadd.f32 %v39, %v326
  %v377 = vadd.f32 %v40, %v329
  %v378 = vadd.f32 %v41, %v334
  %v379 = vadd.f32 %v42, %v337
  %v380 = vadd.f32 %v43, %v342
  %v381 = vadd.f32 %v44, %v345
  %v382 = vadd.f32 %v45, %v350
  %v383 = vadd.f32 %v46, %v353
  %v384 = vadd.f32 %v47, %v358
  %v385 = vadd.f32 %v48, %v361
  %v386 = vadd.f32 %v49, %v366
  %v387 = vadd.f32 %v50, %v369
  %388 = vst [vmem:[#allocation2] sm:$0xff] %v372
  %389 = vst [vmem:[#allocation2 + $0x8] sm:$0xff] %v373
  %390 = vst [vmem:[#allocation2 + $0x10] sm:$0xff] %v374
  %391 = vst [vmem:[#allocation2 + $0x18] sm:$0xff] %v375
  %392 = vst [vmem:[#allocation2 + $0x20] sm:$0xff] %v376
  %393 = vst [vmem:[#allocation2 + $0x28] sm:$0xff] %v377
  %394 = vst [vmem:[#allocation2 + $0x30] sm:$0xff] %v378
  %395 = vst [vmem:[#allocation2 + $0x38] sm:$0xff] %v379
  %396 = vst [vmem:[#allocation2 + $0x40] sm:$0xff] %v380
  %397 = vst [vmem:[#allocation2 + $0x48] sm:$0xff] %v381
  %398 = vst [vmem:[#allocation2 + $0x50] sm:$0xff] %v382
  %399 = vst [vmem:[#allocation2 + $0x58] sm:$0xff] %v383
  %400 = vst [vmem:[#allocation2 + $0x60] sm:$0xff] %v384
  %401 = vst [vmem:[#allocation2 + $0x68] sm:$0xff] %v385
  %402 = vst [vmem:[#allocation2 + $0x70] sm:$0xff] %v386
  %403 = vst [vmem:[#allocation2 + $0x78] sm:$0xff] %v387
  // Predicated region
  $region18: #{encoder_forward.27} parent=0 // pred_check
    %p404 = pneg %p15
  $region19: #{encoder_forward.27} parent=0 // pred_check_branch
    %406 = sbr.rel (%p404) target = $region21
  $region20: #{encoder_forward.27} parent=0 // pred_region
    %v407 = vld [vmem:[#allocation2] sm:$0xff]
    %v408 = vld [vmem:[#allocation2 + $0x8] sm:$0xff]
    %v409 = vld [vmem:[#allocation2 + $0x10] sm:$0xff]
    %v410 = vld [vmem:[#allocation2 + $0x18] sm:$0xff]
    %v411 = vld [vmem:[#allocation2 + $0x20] sm:$0xff]
    %v412 = vld [vmem:[#allocation2 + $0x28] sm:$0xff]
    %v413 = vld [vmem:[#allocation2 + $0x30] sm:$0xff]
    %v414 = vld [vmem:[#allocation2 + $0x38] sm:$0xff]
    %v415 = vld [vmem:[#allocation2 + $0x40] sm:$0xff]
    %v416 = vld [vmem:[#allocation2 + $0x48] sm:$0xff]
    %v417 = vld [vmem:[#allocation2 + $0x50] sm:$0xff]
    %v418 = vld [vmem:[#allocation2 + $0x58] sm:$0xff]
    %v419 = vld [vmem:[#allocation2 + $0x60] sm:$0xff]
    %v420 = vld [vmem:[#allocation2 + $0x68] sm:$0xff]
    %v421 = vld [vmem:[#allocation2 + $0x70] sm:$0xff]
    %v422 = vld [vmem:[#allocation2 + $0x78] sm:$0xff]
    %v423 = vld [vmem:[%s2] sm:$0x1]
    %v425 = vlaneseq
    %v426 = vshrl.u32 %v425, 7
    %v427 = vsub.s32 0, %v426
    %v428 = vrot.slane %v423, %v427
    %v430 = vadd.f32 %v407, %v428
    %v431 = vadd.f32 %v408, %v428
    %v432 = vadd.f32 %v409, %v428
    %v433 = vadd.f32 %v410, %v428
    %v434 = vadd.f32 %v411, %v428
    %v435 = vadd.f32 %v412, %v428
    %v436 = vadd.f32 %v413, %v428
    %v437 = vadd.f32 %v414, %v428
    %v438 = vadd.f32 %v415, %v428
    %v439 = vadd.f32 %v416, %v428
    %v440 = vadd.f32 %v417, %v428
    %v441 = vadd.f32 %v418, %v428
    %v442 = vadd.f32 %v419, %v428
    %v443 = vadd.f32 %v420, %v428
    %v444 = vadd.f32 %v421, %v428
    %v445 = vadd.f32 %v422, %v428
    %446 = vst [vmem:[%s3] sm:$0xff] %v430
    %447 = vst [vmem:[%s3 + $0x8] sm:$0xff] %v431
    %448 = vst [vmem:[%s3 + $0x10] sm:$0xff] %v432
    %449 = vst [vmem:[%s3 + $0x18] sm:$0xff] %v433
    %450 = vst [vmem:[%s3 + $0x20] sm:$0xff] %v434
    %451 = vst [vmem:[%s3 + $0x28] sm:$0xff] %v435
    %452 = vst [vmem:[%s3 + $0x30] sm:$0xff] %v436
    %453 = vst [vmem:[%s3 + $0x38] sm:$0xff] %v437
    %454 = vst [vmem:[%s3 + $0x40] sm:$0xff] %v438
    %455 = vst [vmem:[%s3 + $0x48] sm:$0xff] %v439
    %456 = vst [vmem:[%s3 + $0x50] sm:$0xff] %v440
    %457 = vst [vmem:[%s3 + $0x58] sm:$0xff] %v441
    %458 = vst [vmem:[%s3 + $0x60] sm:$0xff] %v442
    %459 = vst [vmem:[%s3 + $0x68] sm:$0xff] %v443
    %460 = vst [vmem:[%s3 + $0x70] sm:$0xff] %v444
    %461 = vst [vmem:[%s3 + $0x78] sm:$0xff] %v445
  $region21: #{encoder_forward.27} parent=0 // pred_fallthru
    _
  // Predicated region
  $region22: #{encoder_forward.27} parent=0 // pred_check
    _
  $region23: #{encoder_forward.27} parent=0 // pred_check_branch
    %463 = sbr.rel (0) target = $region25
  $region24: #{encoder_forward.27} parent=0 // pred_region
    _
  $region25: #{encoder_forward.27} parent=0 // pred_fallthru
    _
  // Predicated region
  $region26: #{encoder_forward.27} parent=0 // pred_check
    _
  $region27: #{encoder_forward.27} parent=0 // pred_check_branch
    %465 = sbr.rel (0) target = $region29
  $region28: #{encoder_forward.27} parent=0 // pred_region
    _
  $region29: #{encoder_forward.27} parent=0 // pred_fallthru
    _

// kernel: encoder_forward.28
$region0: #{encoder_forward.28}
  #allocation0 [shape = 'u32[]', space=smem, size = 0x4, offset = 0x4, fixed_abs, tag = 'smem constant byte address 0x4 - core index']
  #allocation1 [shape = 'u32[144,128]{1,0:T(1,128)}', space=vmem, size = 0x12000, scoped, tag = 'internal scratch']
  #allocation2 [shape = 'f32[1,1,32]{2,1,0:T(1,128)}', space=vmem, size = 0x200, scoped, tag = 'scratch operand']
  #allocation3 [shape = 'f32[1,1,32]{2,1,0:T(1,128)}', space=vmem, size = 0x200, scoped, tag = 'scratch operand']
  %s0 = inlined_call_operand.vmem [shape: f32[2,16,32], index: 0, kind: input, shape index: {}]
  %s1 = inlined_call_operand.vmem [shape: f32[2,1,32], index: 1, kind: output, shape index: {0}]
  %s2 = inlined_call_operand.vmem [shape: f32[2,1,32], index: 2, kind: output, shape index: {1}]
  %3 = xla_tuple %s1, %s2
  %s4 = sld [smem:[#allocation0]]
  $region53: #{encoder_forward.28} parent=0
    _
  %s6 = ssub.s32 1, %s4
  %s7 = scalar_select 0, %s6, %s4
  loop: start=0, step=1, limit=4
  $region2: #{encoder_forward.28} parent=0 // loop_pre_header
    _
  $region3: #{encoder_forward.28} parent=0 // loop_header
    %s9 = sphi 0, %s13
    %p10 = scmp.ge.s32.totalorder %s9, 4
    %s16 = sphi 0, %s28
    %s17 = sphi 0, %s24
    %s18 = sphi 0, %s16
    %s19 = sphi 0, %s17
    %s20 = sphi 0, %s18
    %s21 = sphi 0, %s19
    %s33 = sphi 0, %s35
    %s36 = sphi 0, %s33
    %s37 = sphi 0, %s36
    %s53 = sphi 0, %s37
    %s59 = sphi 0, %s61
    %s62 = sphi 0, %s59
    %s63 = sphi 0, %s62
    %s79 = sphi 0, %s63
    %s85 = sphi 0, %s87
    %s88 = sphi 0, %s85
    %s89 = sphi 0, %s88
    %s105 = sphi 0, %s89
  $region4: #{encoder_forward.28} parent=0 // loop_header_branch
    %12 = sbr.rel (%p10) target = $region8
  $region5: #{encoder_forward.28} parent=0 // loop_body
    %s14 = ssub.s32 %s9, 1
    %s15 = ssub.s32 %s9, 2
    %s22 = sadd.s32 1, %s17
    %p23 = scmp.ge.s32.totalorder %s22, 1
    %s24 = scalar_select %p23, 0, %s22
    %s25 = sadd.s32 1, %s16
    %s26 = scalar_select %p23, %s25, %s16
    %p27 = scmp.ge.s32.totalorder %s26, 2
    %s28 = scalar_select %p27, 0, %s26
    %s29 = ssub.s32 %s16, %s28
    %s30 = ssub.s32 %s17, %s24
    %s31 = sor.u32 %s29, %s30
    %p32 = scmp.eq.s32.totalorder %s31, 0
    %s34 = sadd.s32 %s33, 1
    %s35 = scalar_select %p32, %s33, %s34
    %p38 = pneg %p32
    %p39 = scmp.eq.s32.totalorder %s9, 1
    %p40 = por %p38, %p39
    %p41 = scmp.ne.s32.totalorder %s33, %s36
    %p42 = scmp.eq.s32.totalorder %s9, 0
    %p43 = por %p41, %p42
    %p44 = scmp.ne.s32.totalorder %s33, %s36
    %p45 = scmp.eq.s32.totalorder %s14, 1
    %p46 = por %p44, %p45
    %p47 = scmp.ne.s32.totalorder %s36, %s37
    %p48 = scmp.eq.s32.totalorder %s14, 0
    %p49 = por %p47, %p48
    %p50 = scmp.ne.s32.totalorder %s36, %s37
    %p51 = scmp.eq.s32.totalorder %s15, 1
    %p52 = por %p50, %p51
    %p54 = scmp.ne.s32.totalorder %s37, %s53
    %p55 = scmp.eq.s32.totalorder %s15, 0
    %p56 = por %p54, %p55
    %s57 = ssub.s32 %s16, %s28
    %p58 = scmp.eq.s32.totalorder %s57, 0
    %s60 = sadd.s32 %s59, 1
    %s61 = scalar_select %p58, %s59, %s60
    %p64 = pneg %p58
    %p65 = scmp.eq.s32.totalorder %s9, 1
    %p66 = por %p64, %p65
    %p67 = scmp.ne.s32.totalorder %s59, %s62
    %p68 = scmp.eq.s32.totalorder %s9, 0
    %p69 = por %p67, %p68
    %p70 = scmp.ne.s32.totalorder %s59, %s62
    %p71 = scmp.eq.s32.totalorder %s14, 1
    %p72 = por %p70, %p71
    %p73 = scmp.ne.s32.totalorder %s62, %s63
    %p74 = scmp.eq.s32.totalorder %s14, 0
    %p75 = por %p73, %p74
    %p76 = scmp.ne.s32.totalorder %s62, %s63
    %p77 = scmp.eq.s32.totalorder %s15, 1
    %p78 = por %p76, %p77
    %p80 = scmp.ne.s32.totalorder %s63, %s79
    %p81 = scmp.eq.s32.totalorder %s15, 0
    %p82 = por %p80, %p81
    %s83 = ssub.s32 %s16, %s28
    %p84 = scmp.eq.s32.totalorder %s83, 0
    %s86 = sadd.s32 %s85, 1
    %s87 = scalar_select %p84, %s85, %s86
    %p90 = pneg %p84
    %p91 = scmp.eq.s32.totalorder %s9, 1
    %p92 = por %p90, %p91
    %p93 = scmp.ne.s32.totalorder %s85, %s88
    %p94 = scmp.eq.s32.totalorder %s9, 0
    %p95 = por %p93, %p94
    %p96 = scmp.ne.s32.totalorder %s85, %s88
    %p97 = scmp.eq.s32.totalorder %s14, 1
    %p98 = por %p96, %p97
    %p99 = scmp.ne.s32.totalorder %s88, %s89
    %p100 = scmp.eq.s32.totalorder %s14, 0
    %p101 = por %p99, %p100
    %p102 = scmp.ne.s32.totalorder %s88, %s89
    %p103 = scmp.eq.s32.totalorder %s15, 1
    %p104 = por %p102, %p103
    %p106 = scmp.ne.s32.totalorder %s89, %s105
    %p107 = scmp.eq.s32.totalorder %s15, 0
    %p108 = por %p106, %p107
    %p109 = scmp.le.s32.totalorder 1, %s9
    %p110 = scmp.lt.s32.totalorder %s9, 3
    %p111 = pnand %p109, %p110
    %p112 = pneg %p111
    // Predicated region
    $region9: #{encoder_forward.28} parent=5 // pred_check
      _
    $region10: #{encoder_forward.28} parent=5 // pred_check_branch
      %114 = sbr.rel (%p111) target = $region12
    $region11: #{encoder_forward.28} parent=5 // pred_region
      %s115 = ssub.s32 %s9, 1
    $region12: #{encoder_forward.28} parent=5 // pred_fallthru
      _
    %p116 = scmp.lt.s32.totalorder %s9, 2
    // Predicated region
    $region13: #{encoder_forward.28} parent=5 // pred_check
      %p117 = pneg %p116
    $region14: #{encoder_forward.28} parent=5 // pred_check_branch
      %119 = sbr.rel (%p117) target = $region16
    $region15: #{encoder_forward.28} parent=5 // pred_region
      // Predicated region
      $region17: #{encoder_forward.28} parent=15 // pred_check
        %p120 = pneg %p43
      $region18: #{encoder_forward.28} parent=15 // pred_check_branch
        %122 = sbr.rel (%p120) target = $region20
      $region19: #{encoder_forward.28} parent=15 // pred_region
        %s123 = smul.u32 2, %s17
        %p124 = scmp.lt.s32.totalorder %s16, 1
        %s125 = scalar_select %p124, %s16, 1
        %p126 = scmp.lt.s32.totalorder %s123, 1
        %s127 = scalar_select %p126, %s123, 1
        %s128 = smul.addr %s125, 2
        %s129 = sadd.s32 %s127, %s128
        %s130 = smul.addr %s129, 8
        %s131 = scalar_lea.vmem %s0, %s130
        %s132 = smul.u32 2, %s17
      $region20: #{encoder_forward.28} parent=15 // pred_fallthru
        _
    $region16: #{encoder_forward.28} parent=5 // pred_fallthru
      _
    %p133 = scmp.le.s32.totalorder 1, %s9
    %p134 = scmp.lt.s32.totalorder %s9, 3
    %p135 = pnand %p133, %p134
    %p136 = pneg %p135
    // Predicated region
    $region21: #{encoder_forward.28} parent=5 // pred_check
      _
    $region22: #{encoder_forward.28} parent=5 // pred_check_branch
      %138 = sbr.rel (%p135) target = $region24
    $region23: #{encoder_forward.28} parent=5 // pred_region
      %s139 = ssub.s32 %s9, 1
      %s140 = smul.u32 2, %s19
      %p141 = scmp.lt.s32.totalorder %s18, 1
      %s142 = scalar_select %p141, %s18, 1
      %p143 = scmp.lt.s32.totalorder %s140, 1
      %s144 = scalar_select %p143, %s140, 1
      %s145 = smul.addr %s142, 2
      %s146 = sadd.s32 %s144, %s145
      %s147 = smul.addr %s146, 8
      %s148 = scalar_lea.vmem %s0, %s147
      %p149 = pneg %p49
      %p150 = pneg %p46
      %p151 = pneg %p75
      %p152 = pneg %p72
      %p153 = scmp.lt.s32.totalorder %s18, 1
      %s154 = scalar_select %p153, %s18, 1
      %s155 = scalar_lea.vmem %s1, %s154
      %p156 = pneg %p101
      %p157 = pneg %p98
      %p158 = scmp.lt.s32.totalorder %s18, 1
      %s159 = scalar_select %p158, %s18, 1
      %s160 = scalar_lea.vmem %s2, %s159
      %s161 = smul.u32 2, %s19
      %p162 = scmp.lt.s32.totalorder %s18, 1
      %s163 = scalar_select %p162, %s18, 1
      %p164 = scmp.lt.s32.totalorder %s161, 1
      %s165 = scalar_select %p164, %s161, 1
      %s166 = smul.addr %s163, 2
      %s167 = sadd.s32 %s165, %s166
      %s168 = smul.addr %s167, 8
      %s169 = scalar_lea.vmem %s0, %s168
      %s170 = smul.u32 2, %s19
      %p171 = scmp.lt.s32.totalorder %s18, 1
      %s172 = scalar_select %p171, %s18, 1
      %s173 = scalar_lea.vmem %s1, %s172
      %p174 = scmp.lt.s32.totalorder %s18, 1
      %s175 = scalar_select %p174, %s18, 1
      %s176 = scalar_lea.vmem %s2, %s175
      %p177 = scmp.eq.s32.totalorder %s19, 0
      // Predicated region
      $region25: #{encoder_forward.28} parent=23 // pred_check
        %p178 = pneg %p177
      $region26: #{encoder_forward.28} parent=23 // pred_check_branch
        %180 = sbr.rel (%p178) target = $region28
      $region27: #{encoder_forward.28} parent=23 // pred_region
        %vm181 = vcmask 253952
        %182 = vst.msk [vmem:[#allocation2] sm:$0x1] %vm181, 0.0
        %183 = vst.msk [vmem:[#allocation3] sm:$0x1] %vm181, 0.0
      $region28: #{encoder_forward.28} parent=23 // pred_fallthru
        _
      %v184 = vld [vmem:[%s169] sm:$0xff]
      %v185 = vld [vmem:[%s169 + $0x8] sm:$0xff]
      %v186 = vld [vmem:[#allocation2] sm:$0x1]
      %vm187 = vcmask 261120
      %v188 = vsel %vm187, %v184, 0.0
      %v189 = vsel %vm187, %v185, 0.0
      %v190 = vadd.f32 %v188, %v189
      %v191 = vrot.slane %v190, 4
      %v192 = vadd.f32 %v190, %v191
      %v193 = vrot.slane %v192, 2
      %v194 = vadd.f32 %v192, %v193
      %v195 = vrot.slane %v194, 1
      %v196 = vadd.f32 %v194, %v195
      %v197 = vadd.f32 %v186, %v196
      %vm198 = vcmask 253952
      %199 = vst.msk [vmem:[#allocation2] sm:$0x1] %vm198, %v197
      %v200 = vld [vmem:[#allocation3] sm:$0x1]
      %v201 = vmul.f32 %v184, %v184
      %v202 = vmul.f32 %v185, %v185
      %v203 = vsel %vm187, %v201, 0.0
      %v204 = vsel %vm187, %v202, 0.0
      %v205 = vadd.f32 %v203, %v204
      %v206 = vrot.slane %v205, 4
      %v207 = vadd.f32 %v205, %v206
      %v208 = vrot.slane %v207, 2
      %v209 = vadd.f32 %v207, %v208
      %v210 = vrot.slane %v209, 1
      %v211 = vadd.f32 %v209, %v210
      %v212 = vadd.f32 %v200, %v211
      %213 = vst.msk [vmem:[#allocation3] sm:$0x1] %vm198, %v212
      // Predicated region
      $region29: #{encoder_forward.28} parent=23 // pred_check
        %p214 = pneg %p177
      $region30: #{encoder_forward.28} parent=23 // pred_check_branch
        %216 = sbr.rel (%p214) target = $region32
      $region31: #{encoder_forward.28} parent=23 // pred_region
        %v217 = vld [vmem:[#allocation2] sm:$0x1]
        %v218 = vmul.f32 %v217, 0.0625
        %v219 = vld [vmem:[#allocation3] sm:$0x1]
        %v220 = vmul.f32 %v219, 0.0625
        %v221 = vmul.f32 %v218, %v218
        %v222 = vsub.f32 %v220, %v221
        %223 = vst.msk [vmem:[%s173] sm:$0x1] %vm198, %v218
        %v224 = vmax.f32 %v222, 0.0
        %v225 = vadd.f32 %v224, 1e-05
        %v226 = vrsqrt.pop %v225
        %227 = vst.msk [vmem:[%s176] sm:$0x1] %vm198, %v226
      $region32: #{encoder_forward.28} parent=23 // pred_fallthru
        _
      %p228 = scmp.lt.s32.totalorder %s18, 1
      %s229 = scalar_select %p228, %s18, 1
      %s230 = scalar_lea.vmem %s1, %s229
      %p231 = scmp.lt.s32.totalorder %s18, 1
      %s232 = scalar_select %p231, %s18, 1
      %s233 = scalar_lea.vmem %s2, %s232
      // Predicated region
      $region33: #{encoder_forward.28} parent=23 // pred_check
        %p234 = pneg %p72
      $region34: #{encoder_forward.28} parent=23 // pred_check_branch
        %236 = sbr.rel (%p234) target = $region36
      $region35: #{encoder_forward.28} parent=23 // pred_region
        _
      $region36: #{encoder_forward.28} parent=23 // pred_fallthru
        _
      // Predicated region
      $region37: #{encoder_forward.28} parent=23 // pred_check
        %p237 = pneg %p98
      $region38: #{encoder_forward.28} parent=23 // pred_check_branch
        %239 = sbr.rel (%p237) target = $region40
      $region39: #{encoder_forward.28} parent=23 // pred_region
        _
      $region40: #{encoder_forward.28} parent=23 // pred_fallthru
        _
    $region24: #{encoder_forward.28} parent=5 // pred_fallthru
      _
    %p240 = scmp.le.s32.totalorder 2, %s9
    // Predicated region
    $region41: #{encoder_forward.28} parent=5 // pred_check
      %p241 = pneg %p240
    $region42: #{encoder_forward.28} parent=5 // pred_check_branch
      %243 = sbr.rel (%p241) target = $region44
    $region43: #{encoder_forward.28} parent=5 // pred_region
      %s244 = ssub.s32 %s9, 2
      // Predicated region
      $region45: #{encoder_forward.28} parent=43 // pred_check
        %p245 = pneg %p78
      $region46: #{encoder_forward.28} parent=43 // pred_check_branch
        %247 = sbr.rel (%p245) target = $region48
      $region47: #{encoder_forward.28} parent=43 // pred_region
        %p248 = scmp.lt.s32.totalorder %s20, 1
        %s249 = scalar_select %p248, %s20, 1
        %s250 = scalar_lea.vmem %s1, %s249
      $region48: #{encoder_forward.28} parent=43 // pred_fallthru
        _
      // Predicated region
      $region49: #{encoder_forward.28} parent=43 // pred_check
        %p251 = pneg %p104
      $region50: #{encoder_forward.28} parent=43 // pred_check_branch
        %253 = sbr.rel (%p251) target = $region52
      $region51: #{encoder_forward.28} parent=43 // pred_region
        %p254 = scmp.lt.s32.totalorder %s20, 1
        %s255 = scalar_select %p254, %s20, 1
        %s256 = scalar_lea.vmem %s2, %s255
      $region52: #{encoder_forward.28} parent=43 // pred_fallthru
        _
    $region44: #{encoder_forward.28} parent=5 // pred_fallthru
      _
  $region6: #{encoder_forward.28} parent=0 // loop_footer
    %s13 = sadd.s32 1, %s9
  $region7: #{encoder_forward.28} parent=0 // loop_footer_branch
    %8 = sbr.rel target = $region3
  $region8: #{encoder_forward.28} parent=0 // loop_exit
    _

// kernel: encoder_forward.29
$region0: #{encoder_forward.29}
  #allocation0 [shape = 'u32[]', space=smem, size = 0x4, offset = 0x4, fixed_abs, tag = 'smem constant byte address 0x4 - core index']
  #allocation1 [shape = 'u32[144,128]{1,0:T(1,128)}', space=vmem, size = 0x12000, scoped, tag = 'internal scratch']
  %s0 = inlined_call_operand.vmem [shape: f32[2,16,32], index: 0, kind: input, shape index: {}]
  %s1 = inlined_call_operand.vmem [shape: f32[2,1,32], index: 1, kind: input, shape index: {}]
  %s2 = inlined_call_operand.vmem [shape: f32[2,1,32], index: 2, kind: input, shape index: {}]
  %s3 = inlined_call_operand.vmem [shape: f32[2,16,32], index: 3, kind: output, shape index: {}]
  %s4 = sld [smem:[#allocation0]]
  $region45: #{encoder_forward.29} parent=0
    _
  %s6 = ssub.s32 1, %s4
  %s7 = scalar_select 0, %s6, %s4
  loop: start=0, step=1, limit=4
  $region2: #{encoder_forward.29} parent=0 // loop_pre_header
    _
  $region3: #{encoder_forward.29} parent=0 // loop_header
    %s9 = sphi 0, %s13
    %p10 = scmp.ge.s32.totalorder %s9, 4
    %s16 = sphi 0, %s28
    %s17 = sphi 0, %s24
    %s18 = sphi 0, %s16
    %s19 = sphi 0, %s17
    %s20 = sphi 0, %s18
    %s21 = sphi 0, %s19
    %s33 = sphi 0, %s35
    %s36 = sphi 0, %s33
    %s37 = sphi 0, %s36
    %s53 = sphi 0, %s37
    %s59 = sphi 0, %s61
    %s62 = sphi 0, %s59
    %s63 = sphi 0, %s62
    %s79 = sphi 0, %s63
    %s85 = sphi 0, %s87
    %s88 = sphi 0, %s85
    %s89 = sphi 0, %s88
    %s105 = sphi 0, %s89
    %s113 = sphi 0, %s115
    %s116 = sphi 0, %s113
    %s117 = sphi 0, %s116
    %s133 = sphi 0, %s117
  $region4: #{encoder_forward.29} parent=0 // loop_header_branch
    %12 = sbr.rel (%p10) target = $region8
  $region5: #{encoder_forward.29} parent=0 // loop_body
    %s14 = ssub.s32 %s9, 1
    %s15 = ssub.s32 %s9, 2
    %s22 = sadd.s32 1, %s17
    %p23 = scmp.ge.s32.totalorder %s22, 1
    %s24 = scalar_select %p23, 0, %s22
    %s25 = sadd.s32 1, %s16
    %s26 = scalar_select %p23, %s25, %s16
    %p27 = scmp.ge.s32.totalorder %s26, 2
    %s28 = scalar_select %p27, 0, %s26
    %s29 = ssub.s32 %s16, %s28
    %s30 = ssub.s32 %s17, %s24
    %s31 = sor.u32 %s29, %s30
    %p32 = scmp.eq.s32.totalorder %s31, 0
    %s34 = sadd.s32 %s33, 1
    %s35 = scalar_select %p32, %s33, %s34
    %p38 = pneg %p32
    %p39 = scmp.eq.s32.totalorder %s9, 1
    %p40 = por %p38, %p39
    %p41 = scmp.ne.s32.totalorder %s33, %s36
    %p42 = scmp.eq.s32.totalorder %s9, 0
    %p43 = por %p41, %p42
    %p44 = scmp.ne.s32.totalorder %s33, %s36
    %p45 = scmp.eq.s32.totalorder %s14, 1
    %p46 = por %p44, %p45
    %p47 = scmp.ne.s32.totalorder %s36, %s37
    %p48 = scmp.eq.s32.totalorder %s14, 0
    %p49 = por %p47, %p48
    %p50 = scmp.ne.s32.totalorder %s36, %s37
    %p51 = scmp.eq.s32.totalorder %s15, 1
    %p52 = por %p50, %p51
    %p54 = scmp.ne.s32.totalorder %s37, %s53
    %p55 = scmp.eq.s32.totalorder %s15, 0
    %p56 = por %p54, %p55
    %s57 = ssub.s32 %s16, %s28
    %p58 = scmp.eq.s32.totalorder %s57, 0
    %s60 = sadd.s32 %s59, 1
    %s61 = scalar_select %p58, %s59, %s60
    %p64 = pneg %p58
    %p65 = scmp.eq.s32.totalorder %s9, 1
    %p66 = por %p64, %p65
    %p67 = scmp.ne.s32.totalorder %s59, %s62
    %p68 = scmp.eq.s32.totalorder %s9, 0
    %p69 = por %p67, %p68
    %p70 = scmp.ne.s32.totalorder %s59, %s62
    %p71 = scmp.eq.s32.totalorder %s14, 1
    %p72 = por %p70, %p71
    %p73 = scmp.ne.s32.totalorder %s62, %s63
    %p74 = scmp.eq.s32.totalorder %s14, 0
    %p75 = por %p73, %p74
    %p76 = scmp.ne.s32.totalorder %s62, %s63
    %p77 = scmp.eq.s32.totalorder %s15, 1
    %p78 = por %p76, %p77
    %p80 = scmp.ne.s32.totalorder %s63, %s79
    %p81 = scmp.eq.s32.totalorder %s15, 0
    %p82 = por %p80, %p81
    %s83 = ssub.s32 %s16, %s28
    %p84 = scmp.eq.s32.totalorder %s83, 0
    %s86 = sadd.s32 %s85, 1
    %s87 = scalar_select %p84, %s85, %s86
    %p90 = pneg %p84
    %p91 = scmp.eq.s32.totalorder %s9, 1
    %p92 = por %p90, %p91
    %p93 = scmp.ne.s32.totalorder %s85, %s88
    %p94 = scmp.eq.s32.totalorder %s9, 0
    %p95 = por %p93, %p94
    %p96 = scmp.ne.s32.totalorder %s85, %s88
    %p97 = scmp.eq.s32.totalorder %s14, 1
    %p98 = por %p96, %p97
    %p99 = scmp.ne.s32.totalorder %s88, %s89
    %p100 = scmp.eq.s32.totalorder %s14, 0
    %p101 = por %p99, %p100
    %p102 = scmp.ne.s32.totalorder %s88, %s89
    %p103 = scmp.eq.s32.totalorder %s15, 1
    %p104 = por %p102, %p103
    %p106 = scmp.ne.s32.totalorder %s89, %s105
    %p107 = scmp.eq.s32.totalorder %s15, 0
    %p108 = por %p106, %p107
    %s109 = ssub.s32 %s16, %s28
    %s110 = ssub.s32 %s17, %s24
    %s111 = sor.u32 %s109, %s110
    %p112 = scmp.eq.s32.totalorder %s111, 0
    %s114 = sadd.s32 %s113, 1
    %s115 = scalar_select %p112, %s113, %s114
    %p118 = pneg %p112
    %p119 = scmp.eq.s32.totalorder %s9, 1
    %p120 = por %p118, %p119
    %p121 = scmp.ne.s32.totalorder %s113, %s116
    %p122 = scmp.eq.s32.totalorder %s9, 0
    %p123 = por %p121, %p122
    %p124 = scmp.ne.s32.totalorder %s113, %s116
    %p125 = scmp.eq.s32.totalorder %s14, 1
    %p126 = por %p124, %p125
    %p127 = scmp.ne.s32.totalorder %s116, %s117
    %p128 = scmp.eq.s32.totalorder %s14, 0
    %p129 = por %p127, %p128
    %p130 = scmp.ne.s32.totalorder %s116, %s117
    %p131 = scmp.eq.s32.totalorder %s15, 1
    %p132 = por %p130, %p131
    %p134 = scmp.ne.s32.totalorder %s117, %s133
    %p135 = scmp.eq.s32.totalorder %s15, 0
    %p136 = por %p134, %p135
    %p137 = scmp.le.s32.totalorder 1, %s9
    %p138 = scmp.lt.s32.totalorder %s9, 3
    %p139 = pnand %p137, %p138
    %p140 = pneg %p139
    // Predicated region
    $region9: #{encoder_forward.29} parent=5 // pred_check
      _
    $region10: #{encoder_forward.29} parent=5 // pred_check_branch
      %142 = sbr.rel (%p139) target = $region12
    $region11: #{encoder_forward.29} parent=5 // pred_region
      %s143 = ssub.s32 %s9, 1
    $region12: #{encoder_forward.29} parent=5 // pred_fallthru
      _
    %p144 = scmp.lt.s32.totalorder %s9, 2
    // Predicated region
    $region13: #{encoder_forward.29} parent=5 // pred_check
      %p145 = pneg %p144
    $region14: #{encoder_forward.29} parent=5 // pred_check_branch
      %147 = sbr.rel (%p145) target = $region16
    $region15: #{encoder_forward.29} parent=5 // pred_region
      // Predicated region
      $region17: #{encoder_forward.29} parent=15 // pred_check
        %p148 = pneg %p43
      $region18: #{encoder_forward.29} parent=15 // pred_check_branch
        %150 = sbr.rel (%p148) target = $region20
      $region19: #{encoder_forward.29} parent=15 // pred_region
        %s151 = smul.u32 2, %s17
        %p152 = scmp.lt.s32.totalorder %s16, 1
        %s153 = scalar_select %p152, %s16, 1
        %p154 = scmp.lt.s32.totalorder %s151, 1
        %s155 = scalar_select %p154, %s151, 1
        %s156 = smul.addr %s153, 2
        %s157 = sadd.s32 %s155, %s156
        %s158 = smul.addr %s157, 8
        %s159 = scalar_lea.vmem %s0, %s158
        %s160 = smul.u32 2, %s17
      $region20: #{encoder_forward.29} parent=15 // pred_fallthru
        _
      // Predicated region
      $region21: #{encoder_forward.29} parent=15 // pred_check
        %p161 = pneg %p69
      $region22: #{encoder_forward.29} parent=15 // pred_check_branch
        %163 = sbr.rel (%p161) target = $region24
      $region23: #{encoder_forward.29} parent=15 // pred_region
        %p164 = scmp.lt.s32.totalorder %s16, 1
        %s165 = scalar_select %p164, %s16, 1
        %s166 = scalar_lea.vmem %s1, %s165
      $region24: #{encoder_forward.29} parent=15 // pred_fallthru
        _
      // Predicated region
      $region25: #{encoder_forward.29} parent=15 // pred_check
        %p167 = pneg %p95
      $region26: #{encoder_forward.29} parent=15 // pred_check_branch
        %169 = sbr.rel (%p167) target = $region28
      $region27: #{encoder_forward.29} parent=15 // pred_region
        %p170 = scmp.lt.s32.totalorder %s16, 1
        %s171 = scalar_select %p170, %s16, 1
        %s172 = scalar_lea.vmem %s2, %s171
      $region28: #{encoder_forward.29} parent=15 // pred_fallthru
        _
    $region16: #{encoder_forward.29} parent=5 // pred_fallthru
      _
    %p173 = scmp.le.s32.totalorder 1, %s9
    %p174 = scmp.lt.s32.totalorder %s9, 3
    %p175 = pnand %p173, %p174
    %p176 = pneg %p175
    // Predicated region
    $region29: #{encoder_forward.29} parent=5 // pred_check
      _
    $region30: #{encoder_forward.29} parent=5 // pred_check_branch
      %178 = sbr.rel (%p175) target = $region32
    $region31: #{encoder_forward.29} parent=5 // pred_region
      %s179 = ssub.s32 %s9, 1
      %s180 = smul.u32 2, %s19
      %p181 = scmp.lt.s32.totalorder %s18, 1
      %s182 = scalar_select %p181, %s18, 1
      %p183 = scmp.lt.s32.totalorder %s180, 1
      %s184 = scalar_select %p183, %s180, 1
      %s185 = smul.addr %s182, 2
      %s186 = sadd.s32 %s184, %s185
      %s187 = smul.addr %s186, 8
      %s188 = scalar_lea.vmem %s0, %s187
      %p189 = pneg %p49
      %p190 = pneg %p46
      %p191 = scmp.lt.s32.totalorder %s18, 1
      %s192 = scalar_select %p191, %s18, 1
      %s193 = scalar_lea.vmem %s1, %s192
      %p194 = pneg %p75
      %p195 = pneg %p72
      %p196 = scmp.lt.s32.totalorder %s18, 1
      %s197 = scalar_select %p196, %s18, 1
      %s198 = scalar_lea.vmem %s2, %s197
      %p199 = pneg %p101
      %p200 = pneg %p98
      %p201 = pneg %p129
      %p202 = pneg %p126
      %s203 = smul.u32 2, %s19
      %p204 = scmp.lt.s32.totalorder %s18, 1
      %s205 = scalar_select %p204, %s18, 1
      %p206 = scmp.lt.s32.totalorder %s203, 1
      %s207 = scalar_select %p206, %s203, 1
      %s208 = smul.addr %s205, 2
      %s209 = sadd.s32 %s207, %s208
      %s210 = smul.addr %s209, 8
      %s211 = scalar_lea.vmem %s3, %s210
      %s212 = smul.u32 2, %s19
      %p213 = scmp.lt.s32.totalorder %s18, 1
      %s214 = scalar_select %p213, %s18, 1
      %p215 = scmp.lt.s32.totalorder %s212, 1
      %s216 = scalar_select %p215, %s212, 1
      %s217 = smul.addr %s214, 2
      %s218 = sadd.s32 %s216, %s217
      %s219 = smul.addr %s218, 8
      %s220 = scalar_lea.vmem %s0, %s219
      %s221 = smul.u32 2, %s19
      %p222 = scmp.lt.s32.totalorder %s18, 1
      %s223 = scalar_select %p222, %s18, 1
      %s224 = scalar_lea.vmem %s1, %s223
      %p225 = scmp.lt.s32.totalorder %s18, 1
      %s226 = scalar_select %p225, %s18, 1
      %s227 = scalar_lea.vmem %s2, %s226
      %s228 = smul.u32 2, %s19
      %p229 = scmp.lt.s32.totalorder %s18, 1
      %s230 = scalar_select %p229, %s18, 1
      %p231 = scmp.lt.s32.totalorder %s228, 1
      %s232 = scalar_select %p231, %s228, 1
      %s233 = smul.addr %s230, 2
      %s234 = sadd.s32 %s232, %s233
      %s235 = smul.addr %s234, 8
      %s236 = scalar_lea.vmem %s3, %s235
      %s237 = smul.u32 2, %s19
      %v238 = vld [vmem:[%s220] sm:$0xff]
      %v239 = vld [vmem:[%s220 + $0x8] sm:$0xff]
      %v240 = vld [vmem:[%s224] sm:$0x1]
      %v242 = vlaneseq
      %v243 = vshrl.u32 %v242, 7
      %v244 = vsub.s32 0, %v243
      %v245 = vrot.slane %v240, %v244
      %v247 = vsub.f32 %v238, %v245
      %v248 = vsub.f32 %v239, %v245
      %v249 = vld [vmem:[%s227] sm:$0x1]
      %v251 = vlaneseq
      %v252 = vshrl.u32 %v251, 7
      %v253 = vsub.s32 0, %v252
      %v254 = vrot.slane %v249, %v253
      %v256 = vmul.f32 %v247, %v254
      %v257 = vmul.f32 %v248, %v254
      %v258 = vmax.f32 %v256, 0.0
      %v259 = vmax.f32 %v257, 0.0
      %vm260 = vcmask 261120
      %261 = vst.msk [vmem:[%s236] sm:$0xff] %vm260, %v258
      %262 = vst.msk [vmem:[%s236 + $0x8] sm:$0xff] %vm260, %v259
      %s263 = smul.u32 2, %s19
      %p264 = scmp.lt.s32.totalorder %s18, 1
      %s265 = scalar_select %p264, %s18, 1
      %p266 = scmp.lt.s32.totalorder %s263, 1
      %s267 = scalar_select %p266, %s263, 1
      %s268 = smul.addr %s265, 2
      %s269 = sadd.s32 %s267, %s268
      %s270 = smul.addr %s269, 8
      %s271 = scalar_lea.vmem %s3, %s270
      // Predicated region
      $region33: #{encoder_forward.29} parent=31 // pred_check
        %p272 = pneg %p126
      $region34: #{encoder_forward.29} parent=31 // pred_check_branch
        %274 = sbr.rel (%p272) target = $region36
      $region35: #{encoder_forward.29} parent=31 // pred_region
        %s275 = smul.u32 2, %s19
      $region36: #{encoder_forward.29} parent=31 // pred_fallthru
        _
    $region32: #{encoder_forward.29} parent=5 // pred_fallthru
      _
    %p276 = scmp.le.s32.totalorder 2, %s9
    // Predicated region
    $region37: #{encoder_forward.29} parent=5 // pred_check
      %p277 = pneg %p276
    $region38: #{encoder_forward.29} parent=5 // pred_check_branch
      %279 = sbr.rel (%p277) target = $region40
    $region39: #{encoder_forward.29} parent=5 // pred_region
      %s280 = ssub.s32 %s9, 2
      // Predicated region
      $region41: #{encoder_forward.29} parent=39 // pred_check
        %p281 = pneg %p132
      $region42: #{encoder_forward.29} parent=39 // pred_check_branch
        %283 = sbr.rel (%p281) target = $region44
      $region43: #{encoder_forward.29} parent=39 // pred_region
        %s284 = smul.u32 2, %s21
        %p285 = scmp.lt.s32.totalorder %s20, 1
        %s286 = scalar_select %p285, %s20, 1
        %p287 = scmp.lt.s32.totalorder %s284, 1
        %s288 = scalar_select %p287, %s284, 1
        %s289 = smul.addr %s286, 2
        %s290 = sadd.s32 %s288, %s289
        %s291 = smul.addr %s290, 8
        %s292 = scalar_lea.vmem %s3, %s291
      $region44: #{encoder_forward.29} parent=39 // pred_fallthru
        _
    $region40: #{encoder_forward.29} parent=5 // pred_fallthru
      _
  $region6: #{encoder_forward.29} parent=0 // loop_footer
    %s13 = sadd.s32 1, %s9
  $region7: #{encoder_forward.29} parent=0 // loop_footer_branch
    %8 = sbr.rel target = $region3
  $region8: #{encoder_forward.29} parent=0 // loop_exit
    _

// kernel: encoder_forward.35
$region0: #{encoder_forward.35}
  #allocation0 [shape = 'u32[]', space=smem, size = 0x4, offset = 0x4, fixed_abs, tag = 'smem constant byte address 0x4 - core index']
  #allocation1 [shape = 'u32[144,128]{1,0:T(1,128)}', space=vmem, size = 0x12000, scoped, tag = 'internal scratch']
  %s0 = inlined_call_operand.vmem [shape: f32[2,16,32], index: 0, kind: input, shape index: {}]
  %s1 = inlined_call_operand.vmem [shape: f32[2,1,32], index: 1, kind: input, shape index: {}]
  %s2 = inlined_call_operand.vmem [shape: f32[2,1,32], index: 2, kind: input, shape index: {}]
  %s3 = inlined_call_operand.vmem [shape: f32[2,16,32], index: 3, kind: input, shape index: {}]
  %s4 = inlined_call_operand.vmem [shape: f32[2,16,32], index: 4, kind: output, shape index: {}]
  %s5 = sld [smem:[#allocation0]]
  $region49: #{encoder_forward.35} parent=0
    _
  %s7 = ssub.s32 1, %s5
  %s8 = scalar_select 0, %s7, %s5
  loop: start=0, step=1, limit=4
  $region2: #{encoder_forward.35} parent=0 // loop_pre_header
    _
  $region3: #{encoder_forward.35} parent=0 // loop_header
    %s10 = sphi 0, %s14
    %p11 = scmp.ge.s32.totalorder %s10, 4
    %s17 = sphi 0, %s29
    %s18 = sphi 0, %s25
    %s19 = sphi 0, %s17
    %s20 = sphi 0, %s18
    %s21 = sphi 0, %s19
    %s22 = sphi 0, %s20
    %s34 = sphi 0, %s36
    %s37 = sphi 0, %s34
    %s38 = sphi 0, %s37
    %s54 = sphi 0, %s38
    %s60 = sphi 0, %s62
    %s63 = sphi 0, %s60
    %s64 = sphi 0, %s63
    %s80 = sphi 0, %s64
    %s86 = sphi 0, %s88
    %s89 = sphi 0, %s86
    %s90 = sphi 0, %s89
    %s106 = sphi 0, %s90
    %s114 = sphi 0, %s116
    %s117 = sphi 0, %s114
    %s118 = sphi 0, %s117
    %s134 = sphi 0, %s118
    %s142 = sphi 0, %s144
    %s145 = sphi 0, %s142
    %s146 = sphi 0, %s145
    %s162 = sphi 0, %s146
  $region4: #{encoder_forward.35} parent=0 // loop_header_branch
    %13 = sbr.rel (%p11) target = $region8
  $region5: #{encoder_forward.35} parent=0 // loop_body
    %s15 = ssub.s32 %s10, 1
    %s16 = ssub.s32 %s10, 2
    %s23 = sadd.s32 1, %s18
    %p24 = scmp.ge.s32.totalorder %s23, 1
    %s25 = scalar_select %p24, 0, %s23
    %s26 = sadd.s32 1, %s17
    %s27 = scalar_select %p24, %s26, %s17
    %p28 = scmp.ge.s32.totalorder %s27, 2
    %s29 = scalar_select %p28, 0, %s27
    %s30 = ssub.s32 %s17, %s29
    %s31 = ssub.s32 %s18, %s25
    %s32 = sor.u32 %s30, %s31
    %p33 = scmp.eq.s32.totalorder %s32, 0
    %s35 = sadd.s32 %s34, 1
    %s36 = scalar_select %p33, %s34, %s35
    %p39 = pneg %p33
    %p40 = scmp.eq.s32.totalorder %s10, 1
    %p41 = por %p39, %p40
    %p42 = scmp.ne.s32.totalorder %s34, %s37
    %p43 = scmp.eq.s32.totalorder %s10, 0
    %p44 = por %p42, %p43
    %p45 = scmp.ne.s32.totalorder %s34, %s37
    %p46 = scmp.eq.s32.totalorder %s15, 1
    %p47 = por %p45, %p46
    %p48 = scmp.ne.s32.totalorder %s37, %s38
    %p49 = scmp.eq.s32.totalorder %s15, 0
    %p50 = por %p48, %p49
    %p51 = scmp.ne.s32.totalorder %s37, %s38
    %p52 = scmp.eq.s32.totalorder %s16, 1
    %p53 = por %p51, %p52
    %p55 = scmp.ne.s32.totalorder %s38, %s54
    %p56 = scmp.eq.s32.totalorder %s16, 0
    %p57 = por %p55, %p56
    %s58 = ssub.s32 %s17, %s29
    %p59 = scmp.eq.s32.totalorder %s58, 0
    %s61 = sadd.s32 %s60, 1
    %s62 = scalar_select %p59, %s60, %s61
    %p65 = pneg %p59
    %p66 = scmp.eq.s32.totalorder %s10, 1
    %p67 = por %p65, %p66
    %p68 = scmp.ne.s32.totalorder %s60, %s63
    %p69 = scmp.eq.s32.totalorder %s10, 0
    %p70 = por %p68, %p69
    %p71 = scmp.ne.s32.totalorder %s60, %s63
    %p72 = scmp.eq.s32.totalorder %s15, 1
    %p73 = por %p71, %p72
    %p74 = scmp.ne.s32.totalorder %s63, %s64
    %p75 = scmp.eq.s32.totalorder %s15, 0
    %p76 = por %p74, %p75
    %p77 = scmp.ne.s32.totalorder %s63, %s64
    %p78 = scmp.eq.s32.totalorder %s16, 1
    %p79 = por %p77, %p78
    %p81 = scmp.ne.s32.totalorder %s64, %s80
    %p82 = scmp.eq.s32.totalorder %s16, 0
    %p83 = por %p81, %p82
    %s84 = ssub.s32 %s17, %s29
    %p85 = scmp.eq.s32.totalorder %s84, 0
    %s87 = sadd.s32 %s86, 1
    %s88 = scalar_select %p85, %s86, %s87
    %p91 = pneg %p85
    %p92 = scmp.eq.s32.totalorder %s10, 1
    %p93 = por %p91, %p92
    %p94 = scmp.ne.s32.totalorder %s86, %s89
    %p95 = scmp.eq.s32.totalorder %s10, 0
    %p96 = por %p94, %p95
    %p97 = scmp.ne.s32.totalorder %s86, %s89
    %p98 = scmp.eq.s32.totalorder %s15, 1
    %p99 = por %p97, %p98
    %p100 = scmp.ne.s32.totalorder %s89, %s90
    %p101 = scmp.eq.s32.totalorder %s15, 0
    %p102 = por %p100, %p101
    %p103 = scmp.ne.s32.totalorder %s89, %s90
    %p104 = scmp.eq.s32.totalorder %s16, 1
    %p105 = por %p103, %p104
    %p107 = scmp.ne.s32.totalorder %s90, %s106
    %p108 = scmp.eq.s32.totalorder %s16, 0
    %p109 = por %p107, %p108
    %s110 = ssub.s32 %s17, %s29
    %s111 = ssub.s32 %s18, %s25
    %s112 = sor.u32 %s110, %s111
    %p113 = scmp.eq.s32.totalorder %s112, 0
    %s115 = sadd.s32 %s114, 1
    %s116 = scalar_select %p113, %s114, %s115
    %p119 = pneg %p113
    %p120 = scmp.eq.s32.totalorder %s10, 1
    %p121 = por %p119, %p120
    %p122 = scmp.ne.s32.totalorder %s114, %s117
    %p123 = scmp.eq.s32.totalorder %s10, 0
    %p124 = por %p122, %p123
    %p125 = scmp.ne.s32.totalorder %s114, %s117
    %p126 = scmp.eq.s32.totalorder %s15, 1
    %p127 = por %p125, %p126
    %p128 = scmp.ne.s32.totalorder %s117, %s118
    %p129 = scmp.eq.s32.totalorder %s15, 0
    %p130 = por %p128, %p129
    %p131 = scmp.ne.s32.totalorder %s117, %s118
    %p132 = scmp.eq.s32.totalorder %s16, 1
    %p133 = por %p131, %p132
    %p135 = scmp.ne.s32.totalorder %s118, %s134
    %p136 = scmp.eq.s32.totalorder %s16, 0
    %p137 = por %p135, %p136
    %s138 = ssub.s32 %s17, %s29
    %s139 = ssub.s32 %s18, %s25
    %s140 = sor.u32 %s138, %s139
    %p141 = scmp.eq.s32.totalorder %s140, 0
    %s143 = sadd.s32 %s142, 1
    %s144 = scalar_select %p141, %s142, %s143
    %p147 = pneg %p141
    %p148 = scmp.eq.s32.totalorder %s10, 1
    %p149 = por %p147, %p148
    %p150 = scmp.ne.s32.totalorder %s142, %s145
    %p151 = scmp.eq.s32.totalorder %s10, 0
    %p152 = por %p150, %p151
    %p153 = scmp.ne.s32.totalorder %s142, %s145
    %p154 = scmp.eq.s32.totalorder %s15, 1
    %p155 = por %p153, %p154
    %p156 = scmp.ne.s32.totalorder %s145, %s146
    %p157 = scmp.eq.s32.totalorder %s15, 0
    %p158 = por %p156, %p157
    %p159 = scmp.ne.s32.totalorder %s145, %s146
    %p160 = scmp.eq.s32.totalorder %s16, 1
    %p161 = por %p159, %p160
    %p163 = scmp.ne.s32.totalorder %s146, %s162
    %p164 = scmp.eq.s32.totalorder %s16, 0
    %p165 = por %p163, %p164
    %p166 = scmp.le.s32.totalorder 1, %s10
    %p167 = scmp.lt.s32.totalorder %s10, 3
    %p168 = pnand %p166, %p167
    %p169 = pneg %p168
    // Predicated region
    $region9: #{encoder_forward.35} parent=5 // pred_check
      _
    $region10: #{encoder_forward.35} parent=5 // pred_check_branch
      %171 = sbr.rel (%p168) target = $region12
    $region11: #{encoder_forward.35} parent=5 // pred_region
      %s172 = ssub.s32 %s10, 1
    $region12: #{encoder_forward.35} parent=5 // pred_fallthru
      _
    %p173 = scmp.lt.s32.totalorder %s10, 2
    // Predicated region
    $region13: #{encoder_forward.35} parent=5 // pred_check
      %p174 = pneg %p173
    $region14: #{encoder_forward.35} parent=5 // pred_check_branch
      %176 = sbr.rel (%p174) target = $region16
    $region15: #{encoder_forward.35} parent=5 // pred_region
      // Predicated region
      $region17: #{encoder_forward.35} parent=15 // pred_check
        %p177 = pneg %p44
      $region18: #{encoder_forward.35} parent=15 // pred_check_branch
        %179 = sbr.rel (%p177) target = $region20
      $region19: #{encoder_forward.35} parent=15 // pred_region
        %s180 = smul.u32 2, %s18
        %p181 = scmp.lt.s32.totalorder %s17, 1
        %s182 = scalar_select %p181, %s17, 1
        %p183 = scmp.lt.s32.totalorder %s180, 1
        %s184 = scalar_select %p183, %s180, 1
        %s185 = smul.addr %s182, 2
        %s186 = sadd.s32 %s184, %s185
        %s187 = smul.addr %s186, 8
        %s188 = scalar_lea.vmem %s0, %s187
        %s189 = smul.u32 2, %s18
      $region20: #{encoder_forward.35} parent=15 // pred_fallthru
        _
      // Predicated region
      $region21: #{encoder_forward.35} parent=15 // pred_check
        %p190 = pneg %p70
      $region22: #{encoder_forward.35} parent=15 // pred_check_branch
        %192 = sbr.rel (%p190) target = $region24
      $region23: #{encoder_forward.35} parent=15 // pred_region
        %p193 = scmp.lt.s32.totalorder %s17, 1
        %s194 = scalar_select %p193, %s17, 1
        %s195 = scalar_lea.vmem %s1, %s194
      $region24: #{encoder_forward.35} parent=15 // pred_fallthru
        _
      // Predicated region
      $region25: #{encoder_forward.35} parent=15 // pred_check
        %p196 = pneg %p96
      $region26: #{encoder_forward.35} parent=15 // pred_check_branch
        %198 = sbr.rel (%p196) target = $region28
      $region27: #{encoder_forward.35} parent=15 // pred_region
        %p199 = scmp.lt.s32.totalorder %s17, 1
        %s200 = scalar_select %p199, %s17, 1
        %s201 = scalar_lea.vmem %s2, %s200
      $region28: #{encoder_forward.35} parent=15 // pred_fallthru
        _
      // Predicated region
      $region29: #{encoder_forward.35} parent=15 // pred_check
        %p202 = pneg %p124
      $region30: #{encoder_forward.35} parent=15 // pred_check_branch
        %204 = sbr.rel (%p202) target = $region32
      $region31: #{encoder_forward.35} parent=15 // pred_region
        %s205 = smul.u32 2, %s18
        %p206 = scmp.lt.s32.totalorder %s17, 1
        %s207 = scalar_select %p206, %s17, 1
        %p208 = scmp.lt.s32.totalorder %s205, 1
        %s209 = scalar_select %p208, %s205, 1
        %s210 = smul.addr %s207, 2
        %s211 = sadd.s32 %s209, %s210
        %s212 = smul.addr %s211, 8
        %s213 = scalar_lea.vmem %s3, %s212
        %s214 = smul.u32 2, %s18
      $region32: #{encoder_forward.35} parent=15 // pred_fallthru
        _
    $region16: #{encoder_forward.35} parent=5 // pred_fallthru
      _
    %p215 = scmp.le.s32.totalorder 1, %s10
    %p216 = scmp.lt.s32.totalorder %s10, 3
    %p217 = pnand %p215, %p216
    %p218 = pneg %p217
    // Predicated region
    $region33: #{encoder_forward.35} parent=5 // pred_check
      _
    $region34: #{encoder_forward.35} parent=5 // pred_check_branch
      %220 = sbr.rel (%p217) target = $region36
    $region35: #{encoder_forward.35} parent=5 // pred_region
      %s221 = ssub.s32 %s10, 1
      %s222 = smul.u32 2, %s20
      %p223 = scmp.lt.s32.totalorder %s19, 1
      %s224 = scalar_select %p223, %s19, 1
      %p225 = scmp.lt.s32.totalorder %s222, 1
      %s226 = scalar_select %p225, %s222, 1
      %s227 = smul.addr %s224, 2
      %s228 = sadd.s32 %s226, %s227
      %s229 = smul.addr %s228, 8
      %s230 = scalar_lea.vmem %s0, %s229
      %p231 = pneg %p50
      %p232 = pneg %p47
      %p233 = scmp.lt.s32.totalorder %s19, 1
      %s234 = scalar_select %p233, %s19, 1
      %s235 = scalar_lea.vmem %s1, %s234
      %p236 = pneg %p76
      %p237 = pneg %p73
      %p238 = scmp.lt.s32.totalorder %s19, 1
      %s239 = scalar_select %p238, %s19, 1
      %s240 = scalar_lea.vmem %s2, %s239
      %p241 = pneg %p102
      %p242 = pneg %p99
      %s243 = smul.u32 2, %s20
      %p244 = scmp.lt.s32.totalorder %s19, 1
      %s245 = scalar_select %p244, %s19, 1
      %p246 = scmp.lt.s32.totalorder %s243, 1
      %s247 = scalar_select %p246, %s243, 1
      %s248 = smul.addr %s245, 2
      %s249 = sadd.s32 %s247, %s248
      %s250 = smul.addr %s249, 8
      %s251 = scalar_lea.vmem %s3, %s250
      %p252 = pneg %p130
      %p253 = pneg %p127
      %p254 = pneg %p158
      %p255 = pneg %p155
      %s256 = smul.u32 2, %s20
      %p257 = scmp.lt.s32.totalorder %s19, 1
      %s258 = scalar_select %p257, %s19, 1
      %p259 = scmp.lt.s32.totalorder %s256, 1
      %s260 = scalar_select %p259, %s256, 1
      %s261 = smul.addr %s258, 2
      %s262 = sadd.s32 %s260, %s261
      %s263 = smul.addr %s262, 8
      %s264 = scalar_lea.vmem %s4, %s263
      %s265 = smul.u32 2, %s20
      %p266 = scmp.lt.s32.totalorder %s19, 1
      %s267 = scalar_select %p266, %s19, 1
      %p268 = scmp.lt.s32.totalorder %s265, 1
      %s269 = scalar_select %p268, %s265, 1
      %s270 = smul.addr %s267, 2
      %s271 = sadd.s32 %s269, %s270
      %s272 = smul.addr %s271, 8
      %s273 = scalar_lea.vmem %s0, %s272
      %s274 = smul.u32 2, %s20
      %p275 = scmp.lt.s32.totalorder %s19, 1
      %s276 = scalar_select %p275, %s19, 1
      %s277 = scalar_lea.vmem %s1, %s276
      %p278 = scmp.lt.s32.totalorder %s19, 1
      %s279 = scalar_select %p278, %s19, 1
      %s280 = scalar_lea.vmem %s2, %s279
      %s281 = smul.u32 2, %s20
      %p282 = scmp.lt.s32.totalorder %s19, 1
      %s283 = scalar_select %p282, %s19, 1
      %p284 = scmp.lt.s32.totalorder %s281, 1
      %s285 = scalar_select %p284, %s281, 1
      %s286 = smul.addr %s283, 2
      %s287 = sadd.s32 %s285, %s286
      %s288 = smul.addr %s287, 8
      %s289 = scalar_lea.vmem %s3, %s288
      %s290 = smul.u32 2, %s20
      %s291 = smul.u32 2, %s20
      %p292 = scmp.lt.s32.totalorder %s19, 1
      %s293 = scalar_select %p292, %s19, 1
      %p294 = scmp.lt.s32.totalorder %s291, 1
      %s295 = scalar_select %p294, %s291, 1
      %s296 = smul.addr %s293, 2
      %s297 = sadd.s32 %s295, %s296
      %s298 = smul.addr %s297, 8
      %s299 = scalar_lea.vmem %s4, %s298
      %s300 = smul.u32 2, %s20
      %v301 = vld [vmem:[%s289] sm:$0xff]
      %v302 = vld [vmem:[%s289 + $0x8] sm:$0xff]
      %v303 = vld [vmem:[%s273] sm:$0xff]
      %v304 = vld [vmem:[%s273 + $0x8] sm:$0xff]
      %v305 = vld [vmem:[%s277] sm:$0x1]
      %v307 = vlaneseq
      %v308 = vshrl.u32 %v307, 7
      %v309 = vsub.s32 0, %v308
      %v310 = vrot.slane %v305, %v309
      %v312 = vsub.f32 %v303, %v310
      %v313 = vsub.f32 %v304, %v310
      %v314 = vld [vmem:[%s280] sm:$0x1]
      %v316 = vlaneseq
      %v317 = vshrl.u32 %v316, 7
      %v318 = vsub.s32 0, %v317
      %v319 = vrot.slane %v314, %v318
      %v321 = vmul.f32 %v312, %v319
      %v322 = vmul.f32 %v313, %v319
      %v323 = vadd.f32 %v301, %v321
      %v324 = vadd.f32 %v302, %v322
      %vm325 = vcmask 261120
      %326 = vst.msk [vmem:[%s299] sm:$0xff] %vm325, %v323
      %327 = vst.msk [vmem:[%s299 + $0x8] sm:$0xff] %vm325, %v324
      %s328 = smul.u32 2, %s20
      %p329 = scmp.lt.s32.totalorder %s19, 1
      %s330 = scalar_select %p329, %s19, 1
      %p331 = scmp.lt.s32.totalorder %s328, 1
      %s332 = scalar_select %p331, %s328, 1
      %s333 = smul.addr %s330, 2
      %s334 = sadd.s32 %s332, %s333
      %s335 = smul.addr %s334, 8
      %s336 = scalar_lea.vmem %s4, %s335
      // Predicated region
      $region37: #{encoder_forward.35} parent=35 // pred_check
        %p337 = pneg %p155
      $region38: #{encoder_forward.35} parent=35 // pred_check_branch
        %339 = sbr.rel (%p337) target = $region40
      $region39: #{encoder_forward.35} parent=35 // pred_region
        %s340 = smul.u32 2, %s20
      $region40: #{encoder_forward.35} parent=35 // pred_fallthru
        _
    $region36: #{encoder_forward.35} parent=5 // pred_fallthru
      _
    %p341 = scmp.le.s32.totalorder 2, %s10
    // Predicated region
    $region41: #{encoder_forward.35} parent=5 // pred_check
      %p342 = pneg %p341
    $region42: #{encoder_forward.35} parent=5 // pred_check_branch
      %344 = sbr.rel (%p342) target = $region44
    $region43: #{encoder_forward.35} parent=5 // pred_region
      %s345 = ssub.s32 %s10, 2
      // Predicated region
      $region45: #{encoder_forward.35} parent=43 // pred_check
        %p346 = pneg %p161
      $region46: #{encoder_forward.35} parent=43 // pred_check_branch
        %348 = sbr.rel (%p346) target = $region48
      $region47: #{encoder_forward.35} parent=43 // pred_region
        %s349 = smul.u32 2, %s22
        %p350 = scmp.lt.s32.totalorder %s21, 1
        %s351 = scalar_select %p350, %s21, 1
        %p352 = scmp.lt.s32.totalorder %s349, 1
        %s353 = scalar_select %p352, %s349, 1
        %s354 = smul.addr %s351, 2
        %s355 = sadd.s32 %s353, %s354
        %s356 = smul.addr %s355, 8
        %s357 = scalar_lea.vmem %s4, %s356
      $region48: #{encoder_forward.35} parent=43 // pred_fallthru
        _
    $region44: #{encoder_forward.35} parent=5 // pred_fallthru
      _
  $region6: #{encoder_forward.35} parent=0 // loop_footer
    %s14 = sadd.s32 1, %s10
  $region7: #{encoder_forward.35} parent=0 // loop_footer_branch
    %9 = sbr.rel target = $region3
  $region8: #{encoder_forward.35} parent=0 // loop_exit
    _

// kernel: encoder_forward.41
$region0: #{encoder_forward.41}
  #allocation0 [shape = 'u32[]', space=smem, size = 0x4, offset = 0x4, fixed_abs, tag = 'smem constant byte address 0x4 - core index']
  #allocation1 [shape = 'u32[144,128]{1,0:T(1,128)}', space=vmem, size = 0x12000, scoped, tag = 'internal scratch']
  %s0 = inlined_call_operand.vmem [shape: f32[2,16,32], index: 0, kind: input, shape index: {}]
  %s1 = inlined_call_operand.vmem [shape: f32[2,1,32], index: 1, kind: input, shape index: {}]
  %s2 = inlined_call_operand.vmem [shape: f32[2,1,32], index: 2, kind: input, shape index: {}]
  %s3 = inlined_call_operand.vmem [shape: f32[2,16,32], index: 3, kind: input, shape index: {}]
  %s4 = inlined_call_operand.hbm [shape: f32[2,16,32], index: 4, kind: output, shape index: {}]
  %s5 = sld [smem:[#allocation0]]
  $region49: #{encoder_forward.41} parent=0
    _
  %s7 = ssub.s32 1, %s5
  %s8 = scalar_select 0, %s7, %s5
  $region1: #{encoder_forward.41} parent=0
    #allocation2 [shape = 'u8[16384]{0}', space=vmem, size = 0x4000, scoped, tag = 'output window, operand 0']
    #allocation3 [shape = 's32[2]{0}', space=sflag, size = 0x8, scoped, tag = 'scoped memory for encoder_forward.41']
    %9 = vsyncpa [#allocation3], 0
    %s10 = scalar_lea.sflag [#allocation3], 1
    %11 = vsyncpa %s10, 0
    loop: start=0, step=1, limit=4
    $region2: #{encoder_forward.41} parent=1 // loop_pre_header
      _
    $region3: #{encoder_forward.41} parent=1 // loop_header
      %s13 = sphi 0, %s17
      %p14 = scmp.ge.s32.totalorder %s13, 4
      %s20 = sphi 0, %s32
      %s21 = sphi 0, %s28
      %s22 = sphi 0, %s20
      %s23 = sphi 0, %s21
      %s24 = sphi 0, %s22
      %s25 = sphi 0, %s23
      %s37 = sphi 0, %s39
      %s40 = sphi 0, %s37
      %s41 = sphi 0, %s40
      %s57 = sphi 0, %s41
      %s63 = sphi 0, %s65
      %s66 = sphi 0, %s63
      %s67 = sphi 0, %s66
      %s83 = sphi 0, %s67
      %s89 = sphi 0, %s91
      %s92 = sphi 0, %s89
      %s93 = sphi 0, %s92
      %s109 = sphi 0, %s93
      %s117 = sphi 0, %s119
      %s120 = sphi 0, %s117
      %s121 = sphi 0, %s120
      %s137 = sphi 0, %s121
      %s145 = sphi 0, %s147
      %s148 = sphi 0, %s145
      %s149 = sphi 0, %s148
      %s165 = sphi 0, %s149
    $region4: #{encoder_forward.41} parent=1 // loop_header_branch
      %16 = sbr.rel (%p14) target = $region8
    $region5: #{encoder_forward.41} parent=1 // loop_body
      %s18 = ssub.s32 %s13, 1
      %s19 = ssub.s32 %s13, 2
      %s26 = sadd.s32 1, %s21
      %p27 = scmp.ge.s32.totalorder %s26, 1
      %s28 = scalar_select %p27, 0, %s26
      %s29 = sadd.s32 1, %s20
      %s30 = scalar_select %p27, %s29, %s20
      %p31 = scmp.ge.s32.totalorder %s30, 2
      %s32 = scalar_select %p31, 0, %s30
      %s33 = ssub.s32 %s20, %s32
      %s34 = ssub.s32 %s21, %s28
      %s35 = sor.u32 %s33, %s34
      %p36 = scmp.eq.s32.totalorder %s35, 0
      %s38 = sadd.s32 %s37, 1
      %s39 = scalar_select %p36, %s37, %s38
      %p42 = pneg %p36
      %p43 = scmp.eq.s32.totalorder %s13, 1
      %p44 = por %p42, %p43
      %p45 = scmp.ne.s32.totalorder %s37, %s40
      %p46 = scmp.eq.s32.totalorder %s13, 0
      %p47 = por %p45, %p46
      %p48 = scmp.ne.s32.totalorder %s37, %s40
      %p49 = scmp.eq.s32.totalorder %s18, 1
      %p50 = por %p48, %p49
      %p51 = scmp.ne.s32.totalorder %s40, %s41
      %p52 = scmp.eq.s32.totalorder %s18, 0
      %p53 = por %p51, %p52
      %p54 = scmp.ne.s32.totalorder %s40, %s41
      %p55 = scmp.eq.s32.totalorder %s19, 1
      %p56 = por %p54, %p55
      %p58 = scmp.ne.s32.totalorder %s41, %s57
      %p59 = scmp.eq.s32.totalorder %s19, 0
      %p60 = por %p58, %p59
      %s61 = ssub.s32 %s20, %s32
      %p62 = scmp.eq.s32.totalorder %s61, 0
      %s64 = sadd.s32 %s63, 1
      %s65 = scalar_select %p62, %s63, %s64
      %p68 = pneg %p62
      %p69 = scmp.eq.s32.totalorder %s13, 1
      %p70 = por %p68, %p69
      %p71 = scmp.ne.s32.totalorder %s63, %s66
      %p72 = scmp.eq.s32.totalorder %s13, 0
      %p73 = por %p71, %p72
      %p74 = scmp.ne.s32.totalorder %s63, %s66
      %p75 = scmp.eq.s32.totalorder %s18, 1
      %p76 = por %p74, %p75
      %p77 = scmp.ne.s32.totalorder %s66, %s67
      %p78 = scmp.eq.s32.totalorder %s18, 0
      %p79 = por %p77, %p78
      %p80 = scmp.ne.s32.totalorder %s66, %s67
      %p81 = scmp.eq.s32.totalorder %s19, 1
      %p82 = por %p80, %p81
      %p84 = scmp.ne.s32.totalorder %s67, %s83
      %p85 = scmp.eq.s32.totalorder %s19, 0
      %p86 = por %p84, %p85
      %s87 = ssub.s32 %s20, %s32
      %p88 = scmp.eq.s32.totalorder %s87, 0
      %s90 = sadd.s32 %s89, 1
      %s91 = scalar_select %p88, %s89, %s90
      %p94 = pneg %p88
      %p95 = scmp.eq.s32.totalorder %s13, 1
      %p96 = por %p94, %p95
      %p97 = scmp.ne.s32.totalorder %s89, %s92
      %p98 = scmp.eq.s32.totalorder %s13, 0
      %p99 = por %p97, %p98
      %p100 = scmp.ne.s32.totalorder %s89, %s92
      %p101 = scmp.eq.s32.totalorder %s18, 1
      %p102 = por %p100, %p101
      %p103 = scmp.ne.s32.totalorder %s92, %s93
      %p104 = scmp.eq.s32.totalorder %s18, 0
      %p105 = por %p103, %p104
      %p106 = scmp.ne.s32.totalorder %s92, %s93
      %p107 = scmp.eq.s32.totalorder %s19, 1
      %p108 = por %p106, %p107
      %p110 = scmp.ne.s32.totalorder %s93, %s109
      %p111 = scmp.eq.s32.totalorder %s19, 0
      %p112 = por %p110, %p111
      %s113 = ssub.s32 %s20, %s32
      %s114 = ssub.s32 %s21, %s28
      %s115 = sor.u32 %s113, %s114
      %p116 = scmp.eq.s32.totalorder %s115, 0
      %s118 = sadd.s32 %s117, 1
      %s119 = scalar_select %p116, %s117, %s118
      %p122 = pneg %p116
      %p123 = scmp.eq.s32.totalorder %s13, 1
      %p124 = por %p122, %p123
      %p125 = scmp.ne.s32.totalorder %s117, %s120
      %p126 = scmp.eq.s32.totalorder %s13, 0
      %p127 = por %p125, %p126
      %p128 = scmp.ne.s32.totalorder %s117, %s120
      %p129 = scmp.eq.s32.totalorder %s18, 1
      %p130 = por %p128, %p129
      %p131 = scmp.ne.s32.totalorder %s120, %s121
      %p132 = scmp.eq.s32.totalorder %s18, 0
      %p133 = por %p131, %p132
      %p134 = scmp.ne.s32.totalorder %s120, %s121
      %p135 = scmp.eq.s32.totalorder %s19, 1
      %p136 = por %p134, %p135
      %p138 = scmp.ne.s32.totalorder %s121, %s137
      %p139 = scmp.eq.s32.totalorder %s19, 0
      %p140 = por %p138, %p139
      %s141 = ssub.s32 %s20, %s32
      %s142 = ssub.s32 %s21, %s28
      %s143 = sor.u32 %s141, %s142
      %p144 = scmp.eq.s32.totalorder %s143, 0
      %s146 = sadd.s32 %s145, 1
      %s147 = scalar_select %p144, %s145, %s146
      %p150 = pneg %p144
      %p151 = scmp.eq.s32.totalorder %s13, 1
      %p152 = por %p150, %p151
      %p153 = scmp.ne.s32.totalorder %s145, %s148
      %p154 = scmp.eq.s32.totalorder %s13, 0
      %p155 = por %p153, %p154
      %p156 = scmp.ne.s32.totalorder %s145, %s148
      %p157 = scmp.eq.s32.totalorder %s18, 1
      %p158 = por %p156, %p157
      %p159 = scmp.ne.s32.totalorder %s148, %s149
      %p160 = scmp.eq.s32.totalorder %s18, 0
      %p161 = por %p159, %p160
      %p162 = scmp.ne.s32.totalorder %s148, %s149
      %p163 = scmp.eq.s32.totalorder %s19, 1
      %p164 = por %p162, %p163
      %p166 = scmp.ne.s32.totalorder %s149, %s165
      %p167 = scmp.eq.s32.totalorder %s19, 0
      %p168 = por %p166, %p167
      %p169 = scmp.le.s32.totalorder 1, %s13
      %p170 = scmp.lt.s32.totalorder %s13, 3
      %p171 = pnand %p169, %p170
      %p172 = pneg %p171
      // Predicated region
      $region9: #{encoder_forward.41} parent=5 // pred_check
        _
      $region10: #{encoder_forward.41} parent=5 // pred_check_branch
        %174 = sbr.rel (%p171) target = $region12
      $region11: #{encoder_forward.41} parent=5 // pred_region
        %s175 = ssub.s32 %s13, 1
      $region12: #{encoder_forward.41} parent=5 // pred_fallthru
        _
      %p176 = scmp.lt.s32.totalorder %s13, 2
      // Predicated region
      $region13: #{encoder_forward.41} parent=5 // pred_check
        %p177 = pneg %p176
      $region14: #{encoder_forward.41} parent=5 // pred_check_branch
        %179 = sbr.rel (%p177) target = $region16
      $region15: #{encoder_forward.41} parent=5 // pred_region
        // Predicated region
        $region17: #{encoder_forward.41} parent=15 // pred_check
          %p180 = pneg %p47
        $region18: #{encoder_forward.41} parent=15 // pred_check_branch
          %182 = sbr.rel (%p180) target = $region20
        $region19: #{encoder_forward.41} parent=15 // pred_region
          %s183 = smul.u32 2, %s21
          %p184 = scmp.lt.s32.totalorder %s20, 1
          %s185 = scalar_select %p184, %s20, 1
          %p186 = scmp.lt.s32.totalorder %s183, 1
          %s187 = scalar_select %p186, %s183, 1
          %s188 = smul.addr %s185, 2
          %s189 = sadd.s32 %s187, %s188
          %s190 = smul.addr %s189, 8
          %s191 = scalar_lea.vmem %s0, %s190
          %s192 = smul.u32 2, %s21
        $region20: #{encoder_forward.41} parent=15 // pred_fallthru
          _
        // Predicated region
        $region21: #{encoder_forward.41} parent=15 // pred_check
          %p193 = pneg %p73
        $region22: #{encoder_forward.41} parent=15 // pred_check_branch
          %195 = sbr.rel (%p193) target = $region24
        $region23: #{encoder_forward.41} parent=15 // pred_region
          %p196 = scmp.lt.s32.totalorder %s20, 1
          %s197 = scalar_select %p196, %s20, 1
          %s198 = scalar_lea.vmem %s1, %s197
        $region24: #{encoder_forward.41} parent=15 // pred_fallthru
          _
        // Predicated region
        $region25: #{encoder_forward.41} parent=15 // pred_check
          %p199 = pneg %p99
        $region26: #{encoder_forward.41} parent=15 // pred_check_branch
          %201 = sbr.rel (%p199) target = $region28
        $region27: #{encoder_forward.41} parent=15 // pred_region
          %p202 = scmp.lt.s32.totalorder %s20, 1
          %s203 = scalar_select %p202, %s20, 1
          %s204 = scalar_lea.vmem %s2, %s203
        $region28: #{encoder_forward.41} parent=15 // pred_fallthru
          _
        // Predicated region
        $region29: #{encoder_forward.41} parent=15 // pred_check
          %p205 = pneg %p127
        $region30: #{encoder_forward.41} parent=15 // pred_check_branch
          %207 = sbr.rel (%p205) target = $region32
        $region31: #{encoder_forward.41} parent=15 // pred_region
          %s208 = smul.u32 2, %s21
          %p209 = scmp.lt.s32.totalorder %s20, 1
          %s210 = scalar_select %p209, %s20, 1
          %p211 = scmp.lt.s32.totalorder %s208, 1
          %s212 = scalar_select %p211, %s208, 1
          %s213 = smul.addr %s210, 2
          %s214 = sadd.s32 %s212, %s213
          %s215 = smul.addr %s214, 8
          %s216 = scalar_lea.vmem %s3, %s215
          %s217 = smul.u32 2, %s21
        $region32: #{encoder_forward.41} parent=15 // pred_fallthru
          _
      $region16: #{encoder_forward.41} parent=5 // pred_fallthru
        _
      %p218 = scmp.le.s32.totalorder 1, %s13
      %p219 = scmp.lt.s32.totalorder %s13, 3
      %p220 = pnand %p218, %p219
      %p221 = pneg %p220
      // Predicated region
      $region33: #{encoder_forward.41} parent=5 // pred_check
        _
      $region34: #{encoder_forward.41} parent=5 // pred_check_branch
        %223 = sbr.rel (%p220) target = $region36
      $region35: #{encoder_forward.41} parent=5 // pred_region
        %s224 = ssub.s32 %s13, 1
        %s225 = smul.u32 2, %s23
        %p226 = scmp.lt.s32.totalorder %s22, 1
        %s227 = scalar_select %p226, %s22, 1
        %p228 = scmp.lt.s32.totalorder %s225, 1
        %s229 = scalar_select %p228, %s225, 1
        %s230 = smul.addr %s227, 2
        %s231 = sadd.s32 %s229, %s230
        %s232 = smul.addr %s231, 8
        %s233 = scalar_lea.vmem %s0, %s232
        %p234 = pneg %p53
        %p235 = pneg %p50
        %p236 = scmp.lt.s32.totalorder %s22, 1
        %s237 = scalar_select %p236, %s22, 1
        %s238 = scalar_lea.vmem %s1, %s237
        %p239 = pneg %p79
        %p240 = pneg %p76
        %p241 = scmp.lt.s32.totalorder %s22, 1
        %s242 = scalar_select %p241, %s22, 1
        %s243 = scalar_lea.vmem %s2, %s242
        %p244 = pneg %p105
        %p245 = pneg %p102
        %s246 = smul.u32 2, %s23
        %p247 = scmp.lt.s32.totalorder %s22, 1
        %s248 = scalar_select %p247, %s22, 1
        %p249 = scmp.lt.s32.totalorder %s246, 1
        %s250 = scalar_select %p249, %s246, 1
        %s251 = smul.addr %s248, 2
        %s252 = sadd.s32 %s250, %s251
        %s253 = smul.addr %s252, 8
        %s254 = scalar_lea.vmem %s3, %s253
        %p255 = pneg %p133
        %p256 = pneg %p130
        %p257 = pneg %p161
        %p258 = pneg %p158
        %s259 = sand.u32 %s148, 1
        %s260 = scalar_lea.sflag [#allocation3], %s259
        %s261 = sand.u32 %s148, 1
        %s262 = smul.addr %s261, 16
        %s263 = scalar_lea.vmem [#allocation2], %s262
        %s264 = smul.u32 2, %s23
        %p265 = scmp.lt.s32.totalorder %s22, 1
        %s266 = scalar_select %p265, %s22, 1
        %p267 = scmp.lt.s32.totalorder %s264, 1
        %s268 = scalar_select %p267, %s264, 1
        %s269 = smul.addr %s266, 2
        %s270 = sadd.s32 %s268, %s269
        %s271 = smul.addr %s270, 8
        %s272 = scalar_lea.vmem %s0, %s271
        %s273 = smul.u32 2, %s23
        %p274 = scmp.lt.s32.totalorder %s22, 1
        %s275 = scalar_select %p274, %s22, 1
        %s276 = scalar_lea.vmem %s1, %s275
        %p277 = scmp.lt.s32.totalorder %s22, 1
        %s278 = scalar_select %p277, %s22, 1
        %s279 = scalar_lea.vmem %s2, %s278
        %s280 = smul.u32 2, %s23
        %p281 = scmp.lt.s32.totalorder %s22, 1
        %s282 = scalar_select %p281, %s22, 1
        %p283 = scmp.lt.s32.totalorder %s280, 1
        %s284 = scalar_select %p283, %s280, 1
        %s285 = smul.addr %s282, 2
        %s286 = sadd.s32 %s284, %s285
        %s287 = smul.addr %s286, 8
        %s288 = scalar_lea.vmem %s3, %s287
        %s289 = smul.u32 2, %s23
        %s290 = smul.u32 2, %s23
        %v291 = vld [vmem:[%s288] sm:$0xff]
        %v292 = vld [vmem:[%s288 + $0x8] sm:$0xff]
        %v293 = vld [vmem:[%s272] sm:$0xff]
        %v294 = vld [vmem:[%s272 + $0x8] sm:$0xff]
        %v295 = vld [vmem:[%s276] sm:$0x1]
        %v297 = vlaneseq
        %v298 = vshrl.u32 %v297, 7
        %v299 = vsub.s32 0, %v298
        %v300 = vrot.slane %v295, %v299
        %v302 = vsub.f32 %v293, %v300
        %v303 = vsub.f32 %v294, %v300
        %v304 = vld [vmem:[%s279] sm:$0x1]
        %v306 = vlaneseq
        %v307 = vshrl.u32 %v306, 7
        %v308 = vsub.s32 0, %v307
        %v309 = vrot.slane %v304, %v308
        %v311 = vmul.f32 %v302, %v309
        %v312 = vmul.f32 %v303, %v309
        %v313 = vadd.f32 %v291, %v311
        %v314 = vadd.f32 %v292, %v312
        %vm315 = vcmask 261120
        %316 = vst.msk [vmem:[%s263] sm:$0xff] %vm315, %v313
        %317 = vst.msk [vmem:[%s263 + $0x8] sm:$0xff] %vm315, %v314
        %s318 = sand.u32 %s148, 1
        %s319 = scalar_lea.sflag [#allocation3], %s318
        %s320 = sand.u32 %s148, 1
        %s321 = smul.addr %s320, 16
        %s322 = scalar_lea.vmem [#allocation2], %s321
        // Predicated region
        $region37: #{encoder_forward.41} parent=35 // pred_check
          %p323 = pneg %p158
        $region38: #{encoder_forward.41} parent=35 // pred_check_branch
          %325 = sbr.rel (%p323) target = $region40
        $region39: #{encoder_forward.41} parent=35 // pred_region
          %s326 = smul.u32 2, %s23
          %s328 = ssub.s32 256, 256
          %329 = vsyncadd %s319, %s328
          %s330 = smul.addr %s22, 2
          %s331 = sadd.s32 %s326, %s330
          %s332 = smul.addr %s331, 128
          %s333 = scalar_lea.hbm %s4, %s332
          %s334 = sshll.u32 %s322, 4
          %s335 = int_to_ptr.vmem [resolvable:$true] %s334
          %340 = dma.vmem_to_hbm [thread:$0]  %s335, 256, %s333, %s319, 128, 128, 8
        $region40: #{encoder_forward.41} parent=35 // pred_fallthru
          _
      $region36: #{encoder_forward.41} parent=5 // pred_fallthru
        _
      %p341 = scmp.le.s32.totalorder 2, %s13
      // Predicated region
      $region41: #{encoder_forward.41} parent=5 // pred_check
        %p342 = pneg %p341
      $region42: #{encoder_forward.41} parent=5 // pred_check_branch
        %344 = sbr.rel (%p342) target = $region44
      $region43: #{encoder_forward.41} parent=5 // pred_region
        %s345 = ssub.s32 %s13, 2
        // Predicated region
        $region45: #{encoder_forward.41} parent=43 // pred_check
          %p346 = pneg %p164
        $region46: #{encoder_forward.41} parent=43 // pred_check_branch
          %348 = sbr.rel (%p346) target = $region48
        $region47: #{encoder_forward.41} parent=43 // pred_region
          %s349 = sand.u32 %s149, 1
          %s350 = scalar_lea.sflag [#allocation3], %s349
          %s351 = sand.u32 %s149, 1
          %s352 = smul.addr %s351, 16
          %s353 = scalar_lea.vmem [#allocation2], %s352
          %354 = dma.done %s350, 256
        $region48: #{encoder_forward.41} parent=43 // pred_fallthru
          _
      $region44: #{encoder_forward.41} parent=5 // pred_fallthru
        _
    $region6: #{encoder_forward.41} parent=1 // loop_footer
      %s17 = sadd.s32 1, %s13
    $region7: #{encoder_forward.41} parent=1 // loop_footer_branch
      %12 = sbr.rel target = $region3
    $region8: #{encoder_forward.41} parent=1 // loop_exit
      _
    %355 = vsyncpa [#allocation3], 1
    %s356 = scalar_lea.sflag [#allocation3], 1
    %357 = vsyncpa %s356, 1

// kernel: encoder_forward.30
$region0: #{encoder_forward.30}
  #allocation0 [shape = 'u32[]', space=smem, size = 0x4, offset = 0x4, fixed_abs, tag = 'smem constant byte address 0x4 - core index']
  #allocation1 [shape = 'u32[144,128]{1,0:T(1,128)}', space=vmem, size = 0x12000, scoped, tag = 'internal scratch']
  #allocation2 [shape = 'f32[128,128]{1,0:T(8,128)}', space=vmem, size = 0x10000, scoped, tag = 'scratch operand']
  %s0 = inlined_call_operand.vmem [shape: bf16[128,384], index: 0, kind: input, shape index: {}]
  %s1 = inlined_call_operand.vmem [shape: bf16[384,128], index: 1, kind: input, shape index: {}]
  %s2 = inlined_call_operand.vmem [shape: f32[1,128], index: 2, kind: input, shape index: {}]
  %s3 = inlined_call_operand.vmem [shape: f32[128,128], index: 3, kind: output, shape index: {}]
  %s4 = sld [smem:[#allocation0]]
  $region30: #{encoder_forward.30} parent=0
    _
  %s6 = ssub.s32 1, %s4
  %s7 = scalar_select 0, %s6, %s4
  // Predicated region
  $region2: #{encoder_forward.30} parent=0 // pred_check
    _
  $region3: #{encoder_forward.30} parent=0 // pred_check_branch
    %9 = sbr.rel (0) target = $region5
  $region4: #{encoder_forward.30} parent=0 // pred_region
    _
  $region5: #{encoder_forward.30} parent=0 // pred_fallthru
    _
  // Predicated region
  $region6: #{encoder_forward.30} parent=0 // pred_check
    _
  $region7: #{encoder_forward.30} parent=0 // pred_check_branch
    %11 = sbr.rel (0) target = $region9
  $region8: #{encoder_forward.30} parent=0 // pred_region
    _
  $region9: #{encoder_forward.30} parent=0 // pred_fallthru
    _
  // Predicated region
  $region10: #{encoder_forward.30} parent=0 // pred_check
    _
  $region11: #{encoder_forward.30} parent=0 // pred_check_branch
    %13 = sbr.rel (0) target = $region13
  $region12: #{encoder_forward.30} parent=0 // pred_region
    _
  $region13: #{encoder_forward.30} parent=0 // pred_fallthru
    _
  %p15 = scmp.eq.s32.totalorder 0, 0
  // Predicated region
  $region14: #{encoder_forward.30} parent=0 // pred_check
    %p16 = pneg %p15
  $region15: #{encoder_forward.30} parent=0 // pred_check_branch
    %18 = sbr.rel (%p16) target = $region17
  $region16: #{encoder_forward.30} parent=0 // pred_region
    %19 = vst [vmem:[#allocation2] sm:$0xff] 0.0
    %20 = vst [vmem:[#allocation2 + $0x8] sm:$0xff] 0.0
    %21 = vst [vmem:[#allocation2 + $0x10] sm:$0xff] 0.0
    %22 = vst [vmem:[#allocation2 + $0x18] sm:$0xff] 0.0
    %23 = vst [vmem:[#allocation2 + $0x20] sm:$0xff] 0.0
    %24 = vst [vmem:[#allocation2 + $0x28] sm:$0xff] 0.0
    %25 = vst [vmem:[#allocation2 + $0x30] sm:$0xff] 0.0
    %26 = vst [vmem:[#allocation2 + $0x38] sm:$0xff] 0.0
    %27 = vst [vmem:[#allocation2 + $0x40] sm:$0xff] 0.0
    %28 = vst [vmem:[#allocation2 + $0x48] sm:$0xff] 0.0
    %29 = vst [vmem:[#allocation2 + $0x50] sm:$0xff] 0.0
    %30 = vst [vmem:[#allocation2 + $0x58] sm:$0xff] 0.0
    %31 = vst [vmem:[#allocation2 + $0x60] sm:$0xff] 0.0
    %32 = vst [vmem:[#allocation2 + $0x68] sm:$0xff] 0.0
    %33 = vst [vmem:[#allocation2 + $0x70] sm:$0xff] 0.0
    %34 = vst [vmem:[#allocation2 + $0x78] sm:$0xff] 0.0
  $region17: #{encoder_forward.30} parent=0 // pred_fallthru
    _
  %v35 = vld [vmem:[#allocation2] sm:$0xff]
  %v36 = vld [vmem:[#allocation2 + $0x8] sm:$0xff]
  %v37 = vld [vmem:[#allocation2 + $0x10] sm:$0xff]
  %v38 = vld [vmem:[#allocation2 + $0x18] sm:$0xff]
  %v39 = vld [vmem:[#allocation2 + $0x20] sm:$0xff]
  %v40 = vld [vmem:[#allocation2 + $0x28] sm:$0xff]
  %v41 = vld [vmem:[#allocation2 + $0x30] sm:$0xff]
  %v42 = vld [vmem:[#allocation2 + $0x38] sm:$0xff]
  %v43 = vld [vmem:[#allocation2 + $0x40] sm:$0xff]
  %v44 = vld [vmem:[#allocation2 + $0x48] sm:$0xff]
  %v45 = vld [vmem:[#allocation2 + $0x50] sm:$0xff]
  %v46 = vld [vmem:[#allocation2 + $0x58] sm:$0xff]
  %v47 = vld [vmem:[#allocation2 + $0x60] sm:$0xff]
  %v48 = vld [vmem:[#allocation2 + $0x68] sm:$0xff]
  %v49 = vld [vmem:[#allocation2 + $0x70] sm:$0xff]
  %v50 = vld [vmem:[#allocation2 + $0x78] sm:$0xff]
  %v51 = vld [vmem:[%s0] sm:$0xff]
  %v52 = vld [vmem:[%s0 + $0x8] sm:$0xf]
  %v53 = vld [vmem:[%s0 + $0xc] sm:$0xff]
  %v54 = vld [vmem:[%s0 + $0x14] sm:$0xf]
  %v55 = vld [vmem:[%s0 + $0x18] sm:$0xff]
  %v56 = vld [vmem:[%s0 + $0x20] sm:$0xf]
  %v57 = vld [vmem:[%s0 + $0x24] sm:$0xff]
  %v58 = vld [vmem:[%s0 + $0x2c] sm:$0xf]
  %v59 = vld [vmem:[%s0 + $0x30] sm:$0xff]
  %v60 = vld [vmem:[%s0 + $0x38] sm:$0xf]
  %v61 = vld [vmem:[%s0 + $0x3c] sm:$0xff]
  %v62 = vld [vmem:[%s0 + $0x44] sm:$0xf]
  %v63 = vld [vmem:[%s0 + $0x48] sm:$0xff]
  %v64 = vld [vmem:[%s0 + $0x50] sm:$0xf]
  %v65 = vld [vmem:[%s0 + $0x54] sm:$0xff]
  %v66 = vld [vmem:[%s0 + $0x5c] sm:$0xf]
  %v67 = vld [vmem:[%s0 + $0x60] sm:$0xff]
  %v68 = vld [vmem:[%s0 + $0x68] sm:$0xf]
  %v69 = vld [vmem:[%s0 + $0x6c] sm:$0xff]
  %v70 = vld [vmem:[%s0 + $0x74] sm:$0xf]
  %v71 = vld [vmem:[%s0 + $0x78] sm:$0xff]
  %v72 = vld [vmem:[%s0 + $0x80] sm:$0xf]
  %v73 = vld [vmem:[%s0 + $0x84] sm:$0xff]
  %v74 = vld [vmem:[%s0 + $0x8c] sm:$0xf]
  %v75 = vld [vmem:[%s0 + $0x90] sm:$0xff]
  %v76 = vld [vmem:[%s0 + $0x98] sm:$0xf]
  %v77 = vld [vmem:[%s0 + $0x9c] sm:$0xff]
  %v78 = vld [vmem:[%s0 + $0xa4] sm:$0xf]
  %v79 = vld [vmem:[%s0 + $0xa8] sm:$0xff]
  %v80 = vld [vmem:[%s0 + $0xb0] sm:$0xf]
  %v81 = vld [vmem:[%s0 + $0xb4] sm:$0xff]
  %v82 = vld [vmem:[%s0 + $0xbc] sm:$0xf]
  %v83 = vld [vmem:[%s1] sm:$0xf]
  %v84 = vld [vmem:[%s1 + $0x4] sm:$0xf]
  %v85 = vld [vmem:[%s1 + $0x8] sm:$0xf]
  %v86 = vld [vmem:[%s1 + $0xc] sm:$0xf]
  %v87 = vld [vmem:[%s1 + $0x10] sm:$0xf]
  %v88 = vld [vmem:[%s1 + $0x14] sm:$0xf]
  %v89 = vld [vmem:[%s1 + $0x18] sm:$0xf]
  %v90 = vld [vmem:[%s1 + $0x1c] sm:$0xf]
  %v91 = vld [vmem:[%s1 + $0x20] sm:$0xf]
  %v92 = vld [vmem:[%s1 + $0x24] sm:$0xf]
  %v93 = vld [vmem:[%s1 + $0x28] sm:$0xf]
  %v94 = vld [vmem:[%s1 + $0x2c] sm:$0xf]
  %v95 = vld [vmem:[%s1 + $0x30] sm:$0xf]
  %v96 = vld [vmem:[%s1 + $0x34] sm:$0xf]
  %v97 = vld [vmem:[%s1 + $0x38] sm:$0xf]
  %v98 = vld [vmem:[%s1 + $0x3c] sm:$0xf]
  %v99 = vld [vmem:[%s1 + $0x40] sm:$0xf]
  %v100 = vld [vmem:[%s1 + $0x44] sm:$0xf]
  %v101 = vld [vmem:[%s1 + $0x48] sm:$0xf]
  %v102 = vld [vmem:[%s1 + $0x4c] sm:$0xf]
  %v103 = vld [vmem:[%s1 + $0x50] sm:$0xf]
  %v104 = vld [vmem:[%s1 + $0x54] sm:$0xf]
  %v105 = vld [vmem:[%s1 + $0x58] sm:$0xf]
  %v106 = vld [vmem:[%s1 + $0x5c] sm:$0xf]
  %v107 = vld [vmem:[%s1 + $0x60] sm:$0xf]
  %v108 = vld [vmem:[%s1 + $0x64] sm:$0xf]
  %v109 = vld [vmem:[%s1 + $0x68] sm:$0xf]
  %v110 = vld [vmem:[%s1 + $0x6c] sm:$0xf]
  %v111 = vld [vmem:[%s1 + $0x70] sm:$0xf]
  %v112 = vld [vmem:[%s1 + $0x74] sm:$0xf]
  %v113 = vld [vmem:[%s1 + $0x78] sm:$0xf]
  %v114 = vld [vmem:[%s1 + $0x7c] sm:$0xf]
  %v115 = vld [vmem:[%s1 + $0x80] sm:$0xf]
  %v116 = vld [vmem:[%s1 + $0x84] sm:$0xf]
  %v117 = vld [vmem:[%s1 + $0x88] sm:$0xf]
  %v118 = vld [vmem:[%s1 + $0x8c] sm:$0xf]
  %v119 = vld [vmem:[%s1 + $0x90] sm:$0xf]
  %v120 = vld [vmem:[%s1 + $0x94] sm:$0xf]
  %v121 = vld [vmem:[%s1 + $0x98] sm:$0xf]
  %v122 = vld [vmem:[%s1 + $0x9c] sm:$0xf]
  %v123 = vld [vmem:[%s1 + $0xa0] sm:$0xf]
  %v124 = vld [vmem:[%s1 + $0xa4] sm:$0xf]
  %v125 = vld [vmem:[%s1 + $0xa8] sm:$0xf]
  %v126 = vld [vmem:[%s1 + $0xac] sm:$0xf]
  %v127 = vld [vmem:[%s1 + $0xb0] sm:$0xf]
  %v128 = vld [vmem:[%s1 + $0xb4] sm:$0xf]
  %v129 = vld [vmem:[%s1 + $0xb8] sm:$0xf]
  %v130 = vld [vmem:[%s1 + $0xbc] sm:$0xf]
  %v163 = vunpack.c.l.b16 %v51
  %v164 = vunpack.c.h.b16 %v51
  %v165 = vunpack.c.l.b16 %v52
  %v166 = vunpack.c.l.b16 %v53
  %v167 = vunpack.c.h.b16 %v53
  %v168 = vunpack.c.l.b16 %v54
  %v169 = vunpack.c.l.b16 %v55
  %v170 = vunpack.c.h.b16 %v55
  %v171 = vunpack.c.l.b16 %v56
  %v172 = vunpack.c.l.b16 %v57
  %v173 = vunpack.c.h.b16 %v57
  %v174 = vunpack.c.l.b16 %v58
  %v175 = vunpack.c.l.b16 %v59
  %v176 = vunpack.c.h.b16 %v59
  %v177 = vunpack.c.l.b16 %v60
  %v178 = vunpack.c.l.b16 %v61
  %v179 = vunpack.c.h.b16 %v61
  %v180 = vunpack.c.l.b16 %v62
  %v181 = vunpack.c.l.b16 %v63
  %v182 = vunpack.c.h.b16 %v63
  %v183 = vunpack.c.l.b16 %v64
  %v184 = vunpack.c.l.b16 %v65
  %v185 = vunpack.c.h.b16 %v65
  %v186 = vunpack.c.l.b16 %v66
  %v187 = vunpack.c.l.b16 %v67
  %v188 = vunpack.c.h.b16 %v67
  %v189 = vunpack.c.l.b16 %v68
  %v190 = vunpack.c.l.b16 %v69
  %v191 = vunpack.c.h.b16 %v69
  %v192 = vunpack.c.l.b16 %v70
  %v193 = vunpack.c.l.b16 %v71
  %v194 = vunpack.c.h.b16 %v71
  %v195 = vunpack.c.l.b16 %v72
  %v196 = vunpack.c.l.b16 %v73
  %v197 = vunpack.c.h.b16 %v73
  %v198 = vunpack.c.l.b16 %v74
  %v199 = vunpack.c.l.b16 %v75
  %v200 = vunpack.c.h.b16 %v75
  %v201 = vunpack.c.l.b16 %v76
  %v202 = vunpack.c.l.b16 %v77
  %v203 = vunpack.c.h.b16 %v77
  %v204 = vunpack.c.l.b16 %v78
  %v205 = vunpack.c.l.b16 %v79
  %v206 = vunpack.c.h.b16 %v79
  %v207 = vunpack.c.l.b16 %v80
  %v208 = vunpack.c.l.b16 %v81
  %v209 = vunpack.c.h.b16 %v81
  %v210 = vunpack.c.l.b16 %v82
  %v211 = vpack.c.b16 %v166, %v163
  %v212 = vpack.c.b16 %v167, %v164
  %v213 = vpack.c.b16 %v168, %v165
  %v214 = vpack.c.b16 %v172, %v169
  %v215 = vpack.c.b16 %v173, %v170
  %v216 = vpack.c.b16 %v174, %v171
  %v217 = vpack.c.b16 %v178, %v175
  %v218 = vpack.c.b16 %v179, %v176
  %v219 = vpack.c.b16 %v180, %v177
  %v220 = vpack.c.b16 %v184, %v181
  %v221 = vpack.c.b16 %v185, %v182
  %v222 = vpack.c.b16 %v186, %v183
  %v223 = vpack.c.b16 %v190, %v187
  %v224 = vpack.c.b16 %v191, %v188
  %v225 = vpack.c.b16 %v192, %v189
  %v226 = vpack.c.b16 %v196, %v193
  %v227 = vpack.c.b16 %v197, %v194
  %v228 = vpack.c.b16 %v198, %v195
  %v229 = vpack.c.b16 %v202, %v199
  %v230 = vpack.c.b16 %v203, %v200
  %v231 = vpack.c.b16 %v204, %v201
  %v232 = vpack.c.b16 %v208, %v205
  %v233 = vpack.c.b16 %v209, %v206
  %v234 = vpack.c.b16 %v210, %v207
  %v307 = vunpack.c.l.b16 %v83
  %v308 = vunpack.c.l.b16 %v84
  %v309 = vunpack.c.l.b16 %v85
  %v310 = vunpack.c.l.b16 %v86
  %v311 = vunpack.c.l.b16 %v87
  %v312 = vunpack.c.l.b16 %v88
  %v313 = vunpack.c.l.b16 %v89
  %v314 = vunpack.c.l.b16 %v90
  %v315 = vunpack.c.l.b16 %v91
  %v316 = vunpack.c.l.b16 %v92
  %v317 = vunpack.c.l.b16 %v93
  %v318 = vunpack.c.l.b16 %v94
  %v319 = vunpack.c.l.b16 %v95
  %v320 = vunpack.c.l.b16 %v96
  %v321 = vunpack.c.l.b16 %v97
  %v322 = vunpack.c.l.b16 %v98
  %v323 = vunpack.c.l.b16 %v99
  %v324 = vunpack.c.l.b16 %v100
  %v325 = vunpack.c.l.b16 %v101
  %v326 = vunpack.c.l.b16 %v102
  %v327 = vunpack.c.l.b16 %v103
  %v328 = vunpack.c.l.b16 %v104
  %v329 = vunpack.c.l.b16 %v105
  %v330 = vunpack.c.l.b16 %v106
  %v331 = vunpack.c.l.b16 %v107
  %v332 = vunpack.c.l.b16 %v108
  %v333 = vunpack.c.l.b16 %v109
  %v334 = vunpack.c.l.b16 %v110
  %v335 = vunpack.c.l.b16 %v111
  %v336 = vunpack.c.l.b16 %v112
  %v337 = vunpack.c.l.b16 %v113
  %v338 = vunpack.c.l.b16 %v114
  %v339 = vunpack.c.l.b16 %v115
  %v340 = vunpack.c.l.b16 %v116
  %v341 = vunpack.c.l.b16 %v117
  %v342 = vunpack.c.l.b16 %v118
  %v343 = vunpack.c.l.b16 %v119
  %v344 = vunpack.c.l.b16 %v120
  %v345 = vunpack.c.l.b16 %v121
  %v346 = vunpack.c.l.b16 %v122
  %v347 = vunpack.c.l.b16 %v123
  %v348 = vunpack.c.l.b16 %v124
  %v349 = vunpack.c.l.b16 %v125
  %v350 = vunpack.c.l.b16 %v126
  %v351 = vunpack.c.l.b16 %v127
  %v352 = vunpack.c.l.b16 %v128
  %v353 = vunpack.c.l.b16 %v129
  %v354 = vunpack.c.l.b16 %v130
  %v355 = vpack.c.b16 %v308, %v307
  %v356 = vpack.c.b16 %v310, %v309
  %v357 = vpack.c.b16 %v312, %v311
  %v358 = vpack.c.b16 %v314, %v313
  %v359 = vpack.c.b16 %v316, %v315
  %v360 = vpack.c.b16 %v318, %v317
  %v361 = vpack.c.b16 %v320, %v319
  %v362 = vpack.c.b16 %v322, %v321
  %v363 = vpack.c.b16 %v324, %v323
  %v364 = vpack.c.b16 %v326, %v325
  %v365 = vpack.c.b16 %v328, %v327
  %v366 = vpack.c.b16 %v330, %v329
  %v367 = vpack.c.b16 %v332, %v331
  %v368 = vpack.c.b16 %v334, %v333
  %v369 = vpack.c.b16 %v336, %v335
  %v370 = vpack.c.b16 %v338, %v337
  %v371 = vpack.c.b16 %v340, %v339
  %v372 = vpack.c.b16 %v342, %v341
  %v373 = vpack.c.b16 %v344, %v343
  %v374 = vpack.c.b16 %v346, %v345
  %v375 = vpack.c.b16 %v348, %v347
  %v376 = vpack.c.b16 %v350, %v349
  %v377 = vpack.c.b16 %v352, %v351
  %v378 = vpack.c.b16 %v354, %v353
  %403 = vmatprep.subr.bf16.mxu0 0
  %404 = vmatpush1.bf16.msra.mxu0 %v362
  %405 = vmatprep.subr.bf16.mxu0 0
  %406 = vmatpush1.bf16.msra.mxu0 %v361
  %407 = vmatprep.subr.bf16.mxu0 0
  %408 = vmatpush1.bf16.msra.mxu0 %v360
  %409 = vmatprep.subr.bf16.mxu0 0
  %410 = vmatpush1.bf16.msra.mxu0 %v359
  %411 = vmatprep.subr.bf16.mxu0 0
  %412 = vmatpush1.bf16.msra.mxu0 %v358
  %413 = vmatprep.subr.bf16.mxu0 0
  %414 = vmatpush1.bf16.msra.mxu0 %v357
  %415 = vmatprep.subr.bf16.mxu0 0
  %416 = vmatpush1.bf16.msra.mxu0 %v356
  %417 = vmatprep.subr.bf16.mxu0 0
  %418 = vmatpush1.bf16.msra.mxu0 %v355
  %419 = vmatprep.subr.bf16.mxu0 0
  %420 = vmatpush2.bf16.msra.mxu0 %v370
  %421 = vmatprep.subr.bf16.mxu0 0
  %422 = vmatpush2.bf16.msra.mxu0 %v369
  %423 = vmatprep.subr.bf16.mxu0 0
  %424 = vmatpush2.bf16.msra.mxu0 %v368
  %425 = vmatprep.subr.bf16.mxu0 0
  %426 = vmatpush2.bf16.msra.mxu0 %v367
  %427 = vmatprep.subr.bf16.mxu0 0
  %428 = vmatpush2.bf16.msra.mxu0 %v366
  %429 = vmatprep.subr.bf16.mxu0 0
  %430 = vmatpush2.bf16.msra.mxu0 %v365
  %431 = vmatprep.subr.bf16.mxu0 0
  %432 = vmatpush2.bf16.msra.mxu0 %v364
  %433 = vmatprep.subr.bf16.mxu0 0
  %434 = vmatpush2.bf16.msra.mxu0 %v363
  %435 = vmatprep.mubr.bf16.mxu0 %v212
  %436 = vmatmul.mubr.bf16.gmra.mxu0 %v211
  %v437 = vpop.f32.mrf.mxu0
  %v438 = vadd.f32 0.0, %v437
  %v439 = vpop.f32.mrf.mxu0
  %v440 = vpop.f32.mrf.mxu0
  %v441 = vadd.f32 0.0, %v440
  %v442 = vpop.f32.mrf.mxu0
  %443 = vmatprep.mubr.bf16.mxu0 %v215
  %444 = vmatmul.mubr.bf16.gmra.mxu0 %v214
  %v445 = vpop.f32.mrf.mxu0
  %v446 = vadd.f32 0.0, %v445
  %v447 = vpop.f32.mrf.mxu0
  %v448 = vpop.f32.mrf.mxu0
  %v449 = vadd.f32 0.0, %v448
  %v450 = vpop.f32.mrf.mxu0
  %451 = vmatprep.mubr.bf16.mxu0 %v218
  %452 = vmatmul.mubr.bf16.gmra.mxu0 %v217
  %v453 = vpop.f32.mrf.mxu0
  %v454 = vadd.f32 0.0, %v453
  %v455 = vpop.f32.mrf.mxu0
  %v456 = vpop.f32.mrf.mxu0
  %v457 = vadd.f32 0.0, %v456
  %v458 = vpop.f32.mrf.mxu0
  %459 = vmatprep.mubr.bf16.mxu0 %v221
  %460 = vmatmul.mubr.bf16.gmra.mxu0 %v220
  %v461 = vpop.f32.mrf.mxu0
  %v462 = vadd.f32 0.0, %v461
  %v463 = vpop.f32.mrf.mxu0
  %v464 = vpop.f32.mrf.mxu0
  %v465 = vadd.f32 0.0, %v464
  %v466 = vpop.f32.mrf.mxu0
  %467 = vmatprep.mubr.bf16.mxu0 %v224
  %468 = vmatmul.mubr.bf16.gmra.mxu0 %v223
  %v469 = vpop.f32.mrf.mxu0
  %v470 = vadd.f32 0.0, %v469
  %v471 = vpop.f32.mrf.mxu0
  %v472 = vpop.f32.mrf.mxu0
  %v473 = vadd.f32 0.0, %v472
  %v474 = vpop.f32.mrf.mxu0
  %475 = vmatprep.mubr.bf16.mxu0 %v227
  %476 = vmatmul.mubr.bf16.gmra.mxu0 %v226
  %v477 = vpop.f32.mrf.mxu0
  %v478 = vadd.f32 0.0, %v477
  %v479 = vpop.f32.mrf.mxu0
  %v480 = vpop.f32.mrf.mxu0
  %v481 = vadd.f32 0.0, %v480
  %v482 = vpop.f32.mrf.mxu0
  %483 = vmatprep.mubr.bf16.mxu0 %v230
  %484 = vmatmul.mubr.bf16.gmra.mxu0 %v229
  %v485 = vpop.f32.mrf.mxu0
  %v486 = vadd.f32 0.0, %v485
  %v487 = vpop.f32.mrf.mxu0
  %v488 = vpop.f32.mrf.mxu0
  %v489 = vadd.f32 0.0, %v488
  %v490 = vpop.f32.mrf.mxu0
  %491 = vmatprep.mubr.bf16.mxu0 %v233
  %492 = vmatmul.mubr.bf16.gmra.mxu0 %v232
  %v493 = vpop.f32.mrf.mxu0
  %v494 = vadd.f32 0.0, %v493
  %v495 = vpop.f32.mrf.mxu0
  %v496 = vpop.f32.mrf.mxu0
  %v497 = vadd.f32 0.0, %v496
  %v498 = vpop.f32.mrf.mxu0
  %499 = vdwg.mxu0
  %500 = vmatprep.subr.bf16.mxu0 0
  %501 = vmatpush1.bf16.msra.mxu0 %v378
  %502 = vmatprep.subr.bf16.mxu0 0
  %503 = vmatpush1.bf16.msra.mxu0 %v377
  %504 = vmatprep.subr.bf16.mxu0 0
  %505 = vmatpush1.bf16.msra.mxu0 %v376
  %506 = vmatprep.subr.bf16.mxu0 0
  %507 = vmatpush1.bf16.msra.mxu0 %v375
  %508 = vmatprep.subr.bf16.mxu0 0
  %509 = vmatpush1.bf16.msra.mxu0 %v374
  %510 = vmatprep.subr.bf16.mxu0 0
  %511 = vmatpush1.bf16.msra.mxu0 %v373
  %512 = vmatprep.subr.bf16.mxu0 0
  %513 = vmatpush1.bf16.msra.mxu0 %v372
  %514 = vmatprep.subr.bf16.mxu0 0
  %515 = vmatpush1.bf16.msra.mxu0 %v371
  %516 = vmatprep.subr.bf16.mxu0 0
  %517 = vmatpush2.bf16.msra.mxu0 0
  %518 = vmatprep.subr.bf16.mxu0 0
  %519 = vmatpush2.bf16.msra.mxu0 0
  %520 = vmatprep.subr.bf16.mxu0 0
  %521 = vmatpush2.bf16.msra.mxu0 0
  %522 = vmatprep.subr.bf16.mxu0 0
  %523 = vmatpush2.bf16.msra.mxu0 0
  %524 = vmatprep.subr.bf16.mxu0 0
  %525 = vmatpush2.bf16.msra.mxu0 0
  %526 = vmatprep.subr.bf16.mxu0 0
  %527 = vmatpush2.bf16.msra.mxu0 0
  %528 = vmatprep.subr.bf16.mxu0 0
  %529 = vmatpush2.bf16.msra.mxu0 0
  %530 = vmatprep.subr.bf16.mxu0 0
  %531 = vmatpush2.bf16.msra.mxu0 0
  %532 = vmatprep.mubr.bf16.mxu0 0
  %533 = vmatmul.mubr.bf16.gmra.mxu0 %v213
  %v534 = vpop.f32.mrf.mxu0
  %v535 = vadd.f32 %v438, %v534
  %v536 = vpop.f32.mrf.mxu0
  %v537 = vpop.f32.mrf.mxu0
  %v538 = vadd.f32 %v441, %v537
  %v539 = vpop.f32.mrf.mxu0
  %540 = vmatprep.mubr.bf16.mxu0 0
  %541 = vmatmul.mubr.bf16.gmra.mxu0 %v216
  %v542 = vpop.f32.mrf.mxu0
  %v543 = vadd.f32 %v446, %v542
  %v544 = vpop.f32.mrf.mxu0
  %v545 = vpop.f32.mrf.mxu0
  %v546 = vadd.f32 %v449, %v545
  %v547 = vpop.f32.mrf.mxu0
  %548 = vmatprep.mubr.bf16.mxu0 0
  %549 = vmatmul.mubr.bf16.gmra.mxu0 %v219
  %v550 = vpop.f32.mrf.mxu0
  %v551 = vadd.f32 %v454, %v550
  %v552 = vpop.f32.mrf.mxu0
  %v553 = vpop.f32.mrf.mxu0
  %v554 = vadd.f32 %v457, %v553
  %v555 = vpop.f32.mrf.mxu0
  %556 = vmatprep.mubr.bf16.mxu0 0
  %557 = vmatmul.mubr.bf16.gmra.mxu0 %v222
  %v558 = vpop.f32.mrf.mxu0
  %v559 = vadd.f32 %v462, %v558
  %v560 = vpop.f32.mrf.mxu0
  %v561 = vpop.f32.mrf.mxu0
  %v562 = vadd.f32 %v465, %v561
  %v563 = vpop.f32.mrf.mxu0
  %564 = vmatprep.mubr.bf16.mxu0 0
  %565 = vmatmul.mubr.bf16.gmra.mxu0 %v225
  %v566 = vpop.f32.mrf.mxu0
  %v567 = vadd.f32 %v470, %v566
  %v568 = vpop.f32.mrf.mxu0
  %v569 = vpop.f32.mrf.mxu0
  %v570 = vadd.f32 %v473, %v569
  %v571 = vpop.f32.mrf.mxu0
  %572 = vmatprep.mubr.bf16.mxu0 0
  %573 = vmatmul.mubr.bf16.gmra.mxu0 %v228
  %v574 = vpop.f32.mrf.mxu0
  %v575 = vadd.f32 %v478, %v574
  %v576 = vpop.f32.mrf.mxu0
  %v577 = vpop.f32.mrf.mxu0
  %v578 = vadd.f32 %v481, %v577
  %v579 = vpop.f32.mrf.mxu0
  %580 = vmatprep.mubr.bf16.mxu0 0
  %581 = vmatmul.mubr.bf16.gmra.mxu0 %v231
  %v582 = vpop.f32.mrf.mxu0
  %v583 = vadd.f32 %v486, %v582
  %v584 = vpop.f32.mrf.mxu0
  %v585 = vpop.f32.mrf.mxu0
  %v586 = vadd.f32 %v489, %v585
  %v587 = vpop.f32.mrf.mxu0
  %588 = vmatprep.mubr.bf16.mxu0 0
  %589 = vmatmul.mubr.bf16.gmra.mxu0 %v234
  %v590 = vpop.f32.mrf.mxu0
  %v591 = vadd.f32 %v494, %v590
  %v592 = vpop.f32.mrf.mxu0
  %v593 = vpop.f32.mrf.mxu0
  %v594 = vadd.f32 %v497, %v593
  %v595 = vpop.f32.mrf.mxu0
  %596 = vdwg.mxu0
  %v597 = vadd.f32 %v35, %v535
  %v598 = vadd.f32 %v36, %v538
  %v599 = vadd.f32 %v37, %v543
  %v600 = vadd.f32 %v38, %v546
  %v601 = vadd.f32 %v39, %v551
  %v602 = vadd.f32 %v40, %v554
  %v603 = vadd.f32 %v41, %v559
  %v604 = vadd.f32 %v42, %v562
  %v605 = vadd.f32 %v43, %v567
  %v606 = vadd.f32 %v44, %v570
  %v607 = vadd.f32 %v45, %v575
  %v608 = vadd.f32 %v46, %v578
  %v609 = vadd.f32 %v47, %v583
  %v610 = vadd.f32 %v48, %v586
  %v611 = vadd.f32 %v49, %v591
  %v612 = vadd.f32 %v50, %v594
  %613 = vst [vmem:[#allocation2] sm:$0xff] %v597
  %614 = vst [vmem:[#allocation2 + $0x8] sm:$0xff] %v598
  %615 = vst [vmem:[#allocation2 + $0x10] sm:$0xff] %v599
  %616 = vst [vmem:[#allocation2 + $0x18] sm:$0xff] %v600
  %617 = vst [vmem:[#allocation2 + $0x20] sm:$0xff] %v601
  %618 = vst [vmem:[#allocation2 + $0x28] sm:$0xff] %v602
  %619 = vst [vmem:[#allocation2 + $0x30] sm:$0xff] %v603
  %620 = vst [vmem:[#allocation2 + $0x38] sm:$0xff] %v604
  %621 = vst [vmem:[#allocation2 + $0x40] sm:$0xff] %v605
  %622 = vst [vmem:[#allocation2 + $0x48] sm:$0xff] %v606
  %623 = vst [vmem:[#allocation2 + $0x50] sm:$0xff] %v607
  %624 = vst [vmem:[#allocation2 + $0x58] sm:$0xff] %v608
  %625 = vst [vmem:[#allocation2 + $0x60] sm:$0xff] %v609
  %626 = vst [vmem:[#allocation2 + $0x68] sm:$0xff] %v610
  %627 = vst [vmem:[#allocation2 + $0x70] sm:$0xff] %v611
  %628 = vst [vmem:[#allocation2 + $0x78] sm:$0xff] %v612
  // Predicated region
  $region18: #{encoder_forward.30} parent=0 // pred_check
    %p629 = pneg %p15
  $region19: #{encoder_forward.30} parent=0 // pred_check_branch
    %631 = sbr.rel (%p629) target = $region21
  $region20: #{encoder_forward.30} parent=0 // pred_region
    %v632 = vld [vmem:[#allocation2] sm:$0xff]
    %v633 = vld [vmem:[#allocation2 + $0x8] sm:$0xff]
    %v634 = vld [vmem:[#allocation2 + $0x10] sm:$0xff]
    %v635 = vld [vmem:[#allocation2 + $0x18] sm:$0xff]
    %v636 = vld [vmem:[#allocation2 + $0x20] sm:$0xff]
    %v637 = vld [vmem:[#allocation2 + $0x28] sm:$0xff]
    %v638 = vld [vmem:[#allocation2 + $0x30] sm:$0xff]
    %v639 = vld [vmem:[#allocation2 + $0x38] sm:$0xff]
    %v640 = vld [vmem:[#allocation2 + $0x40] sm:$0xff]
    %v641 = vld [vmem:[#allocation2 + $0x48] sm:$0xff]
    %v642 = vld [vmem:[#allocation2 + $0x50] sm:$0xff]
    %v643 = vld [vmem:[#allocation2 + $0x58] sm:$0xff]
    %v644 = vld [vmem:[#allocation2 + $0x60] sm:$0xff]
    %v645 = vld [vmem:[#allocation2 + $0x68] sm:$0xff]
    %v646 = vld [vmem:[#allocation2 + $0x70] sm:$0xff]
    %v647 = vld [vmem:[#allocation2 + $0x78] sm:$0xff]
    %v648 = vld [vmem:[%s2] sm:$0x1]
    %v650 = vlaneseq
    %v651 = vshrl.u32 %v650, 7
    %v652 = vsub.s32 0, %v651
    %v653 = vrot.slane %v648, %v652
    %v655 = vadd.f32 %v632, %v653
    %v656 = vadd.f32 %v633, %v653
    %v657 = vadd.f32 %v634, %v653
    %v658 = vadd.f32 %v635, %v653
    %v659 = vadd.f32 %v636, %v653
    %v660 = vadd.f32 %v637, %v653
    %v661 = vadd.f32 %v638, %v653
    %v662 = vadd.f32 %v639, %v653
    %v663 = vadd.f32 %v640, %v653
    %v664 = vadd.f32 %v641, %v653
    %v665 = vadd.f32 %v642, %v653
    %v666 = vadd.f32 %v643, %v653
    %v667 = vadd.f32 %v644, %v653
    %v668 = vadd.f32 %v645, %v653
    %v669 = vadd.f32 %v646, %v653
    %v670 = vadd.f32 %v647, %v653
    %671 = vst [vmem:[%s3] sm:$0xff] %v655
    %672 = vst [vmem:[%s3 + $0x8] sm:$0xff] %v656
    %673 = vst [vmem:[%s3 + $0x10] sm:$0xff] %v657
    %674 = vst [vmem:[%s3 + $0x18] sm:$0xff] %v658
    %675 = vst [vmem:[%s3 + $0x20] sm:$0xff] %v659
    %676 = vst [vmem:[%s3 + $0x28] sm:$0xff] %v660
    %677 = vst [vmem:[%s3 + $0x30] sm:$0xff] %v661
    %678 = vst [vmem:[%s3 + $0x38] sm:$0xff] %v662
    %679 = vst [vmem:[%s3 + $0x40] sm:$0xff] %v663
    %680 = vst [vmem:[%s3 + $0x48] sm:$0xff] %v664
    %681 = vst [vmem:[%s3 + $0x50] sm:$0xff] %v665
    %682 = vst [vmem:[%s3 + $0x58] sm:$0xff] %v666
    %683 = vst [vmem:[%s3 + $0x60] sm:$0xff] %v667
    %684 = vst [vmem:[%s3 + $0x68] sm:$0xff] %v668
    %685 = vst [vmem:[%s3 + $0x70] sm:$0xff] %v669
    %686 = vst [vmem:[%s3 + $0x78] sm:$0xff] %v670
  $region21: #{encoder_forward.30} parent=0 // pred_fallthru
    _
  // Predicated region
  $region22: #{encoder_forward.30} parent=0 // pred_check
    _
  $region23: #{encoder_forward.30} parent=0 // pred_check_branch
    %688 = sbr.rel (0) target = $region25
  $region24: #{encoder_forward.30} parent=0 // pred_region
    _
  $region25: #{encoder_forward.30} parent=0 // pred_fallthru
    _
  // Predicated region
  $region26: #{encoder_forward.30} parent=0 // pred_check
    _
  $region27: #{encoder_forward.30} parent=0 // pred_check_branch
    %690 = sbr.rel (0) target = $region29
  $region28: #{encoder_forward.30} parent=0 // pred_region
    _
  $region29: #{encoder_forward.30} parent=0 // pred_fallthru
    _

</llo_original>
